<compile_context>
chip_gen: v5e
topology: v5e:2x2
jax: 0.10.0
libtpu: 0.0.40
codegen_flags: <defaults>
</compile_context>

<pallas_src>
import jax
import jax.numpy as jnp
from jax.experimental import pallas as pl
from jax.experimental.pallas import tpu as pltpu


# ---------------------------------------------------------------------------
# Fused Pallas kernel: one grid step == one image.
# ---------------------------------------------------------------------------
def _lenet_kernel(xp_ref, t1_ref, b1_ref, sh_ref, sw_ref,
                  w2_ref, b2_ref, s10_ref,
                  wfc1_ref, bfc1_ref, wfc2_ref, bfc2_ref, wfc3_ref, bfc3_ref,
                  out_ref, p1_scr, p2_scr):
    f32 = jnp.float32

    # ---- conv1 (width-Toeplitz MXU matmuls) + sigmoid + 2x2 avg-pool ------
    # xp_ref block is (1, 32, 32) (input padded by 2 on the host).
    xk = [xp_ref[0, pl.ds(ki, 28), :] for ki in range(5)]        # 5 x (28, 32)
    for c in range(6):
        acc = jnp.zeros((28, 28), f32)
        for ki in range(5):
            acc = acc + jnp.dot(xk[ki], t1_ref[c, ki, :, :],
                                preferred_element_type=f32)      # (28, 28)
        z = jax.nn.sigmoid(acc + b1_ref[pl.ds(c, 1), :])         # (28, 28)
        # 2x2 average pool via two small matmuls (0.5 * 0.5 = 0.25 window avg)
        zp = jnp.dot(sh_ref[...],
                     jnp.dot(z, sw_ref[...], preferred_element_type=f32),
                     preferred_element_type=f32)                 # (14, 14)
        # flatten (14, 14) row-major into row c of p1_scr (6, 196)
        for r in range(14):
            p1_scr[pl.ds(c, 1), pl.ds(r * 14, 14)] = zp[r:r + 1, :]

    # ---- conv2 (+sigmoid), patches formed in VMEM, fused 2x2 avg-pool -----
    def conv2_row(i):
        # patch matrix rows ordered (ki, kj, c) to match the prepped weights
        taps = [p1_scr[:, pl.ds((i + ki) * 14 + kj, 10)]
                for ki in range(5) for kj in range(5)]           # 25 x (6, 10)
        pmat = jnp.concatenate(taps, axis=0)                     # (150, 10)
        row = jnp.dot(w2_ref[...], pmat, preferred_element_type=f32)  # (16,10)
        return jax.nn.sigmoid(row + b2_ref[...])

    for r2 in range(5):
        a = conv2_row(2 * r2)
        b = conv2_row(2 * r2 + 1)
        p2_scr[:, pl.ds(r2 * 5, 5)] = jnp.dot(a + b, s10_ref[...],
                                              preferred_element_type=f32)

    # ---- fully connected head (all VMEM resident) -------------------------
    y = bfc1_ref[...]                                            # (1, 120)
    for c in range(16):
        y = y + jnp.dot(p2_scr[pl.ds(c, 1), :], wfc1_ref[c, :, :],
                        preferred_element_type=f32)
    y = jax.nn.sigmoid(y)
    y = jax.nn.sigmoid(jnp.dot(y, wfc2_ref[...], preferred_element_type=f32)
                       + bfc2_ref[...])
    y = jnp.dot(y, wfc3_ref[...], preferred_element_type=f32) + bfc3_ref[...]
    out_ref[0, :, :] = y                                         # (1, 10)


# ---------------------------------------------------------------------------
# One-time parameter preparation (host side, weights only).
# ---------------------------------------------------------------------------
def _prepare(params):
    f32 = jnp.float32
    w1 = params["conv1_w"].astype(f32)                # (6, 1, 5, 5)

    # width-Toeplitz: t1[c, ki, q, j] = w1[c, 0, ki, q - j] if 0 <= q-j < 5
    q = jnp.arange(32)[:, None]
    j = jnp.arange(28)[None, :]
    d = q - j
    band = (d >= 0) & (d <= 4)
    t1 = jnp.where(band[None, None], w1[:, 0][:, :, jnp.clip(d, 0, 4)], 0.0)

    sh = 0.5 * (jnp.arange(28)[None, :] // 2 == jnp.arange(14)[:, None]).astype(f32)
    sw = 0.5 * (jnp.arange(28)[:, None] // 2 == jnp.arange(14)[None, :]).astype(f32)
    s10 = 0.25 * (jnp.arange(10)[:, None] // 2 == jnp.arange(5)[None, :]).astype(f32)

    # conv2 weights with columns ordered (ki, kj, c) to match in-kernel patches
    w2 = params["conv2_w"].astype(f32).transpose(0, 2, 3, 1).reshape(16, 150)
    # fc1 weights split per input channel: (16, 25, 120)
    wfc1 = params["fc1_w"].astype(f32).reshape(120, 16, 25).transpose(1, 2, 0)

    return dict(
        t1=t1,
        b1=params["conv1_b"].astype(f32).reshape(6, 1),
        sh=sh, sw=sw, s10=s10,
        w2=w2,
        b2=params["conv2_b"].astype(f32).reshape(16, 1),
        wfc1=wfc1,
        bfc1=params["fc1_b"].astype(f32).reshape(1, 120),
        wfc2=params["fc2_w"].astype(f32).T,           # (120, 84)
        bfc2=params["fc2_b"].astype(f32).reshape(1, 84),
        wfc3=params["fc3_w"].astype(f32).T,           # (84, 10)
        bfc3=params["fc3_b"].astype(f32).reshape(1, 10),
    )


# ---------------------------------------------------------------------------
# Forward: one fused pallas_call, batch on the grid.
# ---------------------------------------------------------------------------
def lenet_forward(x, params):
    n = x.shape[0]
    p = _prepare(params)
    xp = jnp.pad(x[:, 0].astype(jnp.float32), ((0, 0), (2, 2), (2, 2)))  # (N,32,32)

    def full(a):
        return pl.BlockSpec(a.shape, lambda i: (0,) * a.ndim)

    weights = [p["t1"], p["b1"], p["sh"], p["sw"], p["w2"], p["b2"], p["s10"],
               p["wfc1"], p["bfc1"], p["wfc2"], p["bfc2"], p["wfc3"], p["bfc3"]]

    out = pl.pallas_call(
        _lenet_kernel,
        out_shape=jax.ShapeDtypeStruct((n, 1, 10), jnp.float32),
        grid=(n,),
        in_specs=[pl.BlockSpec((1, 32, 32), lambda i: (i, 0, 0))]
                 + [full(w) for w in weights],
        out_specs=pl.BlockSpec((1, 1, 10), lambda i: (i, 0, 0)),
        scratch_shapes=[pltpu.VMEM((6, 196), jnp.float32),   # pool1 activations
                        pltpu.VMEM((16, 25), jnp.float32)],  # pool2 activations
        compiler_params=pltpu.CompilerParams(
            dimension_semantics=("parallel",)),
    )(xp, *weights)
    return out.reshape(n, 10)


# ---------------------------------------------------------------------------
# Parameters / pure-JAX reference (for a sanity check).
# ---------------------------------------------------------------------------
def init_params(key):
    ks = jax.random.split(key, 10)
    s = 0.1
    return {
        "conv1_w": s * jax.random.normal(ks[0], (6, 1, 5, 5), jnp.float32),
        "conv1_b": s * jax.random.normal(ks[1], (6,), jnp.float32),
        "conv2_w": s * jax.random.normal(ks[2], (16, 6, 5, 5), jnp.float32),
        "conv2_b": s * jax.random.normal(ks[3], (16,), jnp.float32),
        "fc1_w":   s * jax.random.normal(ks[4], (120, 400), jnp.float32),
        "fc1_b":   s * jax.random.normal(ks[5], (120,), jnp.float32),
        "fc2_w":   s * jax.random.normal(ks[6], (84, 120), jnp.float32),
        "fc2_b":   s * jax.random.normal(ks[7], (84,), jnp.float32),
        "fc3_w":   s * jax.random.normal(ks[8], (10, 84), jnp.float32),
        "fc3_b":   s * jax.random.normal(ks[9], (10,), jnp.float32),
    }


def lenet_reference(x, params):
    hp = jax.lax.Precision.HIGHEST
    dn = ("NCHW", "OIHW", "NCHW")
    y = jax.lax.conv_general_dilated(x, params["conv1_w"], (1, 1),
                                     ((2, 2), (2, 2)), dimension_numbers=dn,
                                     precision=hp)
    y = jax.nn.sigmoid(y + params["conv1_b"][None, :, None, None])
    n, c, h, w = y.shape
    y = y.reshape(n, c, h // 2, 2, w // 2, 2).mean(axis=(3, 5))
    y = jax.lax.conv_general_dilated(y, params["conv2_w"], (1, 1),
                                     ((0, 0), (0, 0)), dimension_numbers=dn,
                                     precision=hp)
    y = jax.nn.sigmoid(y + params["conv2_b"][None, :, None, None])
    n, c, h, w = y.shape
    y = y.reshape(n, c, h // 2, 2, w // 2, 2).mean(axis=(3, 5))
    y = y.reshape(n, 400)
    y = jax.nn.sigmoid(jnp.dot(y, params["fc1_w"].T, precision=hp) + params["fc1_b"])
    y = jax.nn.sigmoid(jnp.dot(y, params["fc2_w"].T, precision=hp) + params["fc2_b"])
    return jnp.dot(y, params["fc3_w"].T, precision=hp) + params["fc3_b"]


if __name__ == "__main__":
    key = jax.random.PRNGKey(0)
    k_in, k_par = jax.random.split(key)

    # LeNet's 16*5*5 flatten forces 1x28x28 inputs; batch = 2.
    x = jax.random.normal(k_in, (2, 1, 28, 28), jnp.float32)
    params = init_params(k_par)

    out = jax.jit(lenet_forward)(x, params)
    out = jax.block_until_ready(out)

    assert out.shape == (2, 10), out.shape
    assert out.dtype == jnp.float32
    assert bool(jnp.all(jnp.isfinite(out)))

    ref = lenet_reference(x, params)
    err = float(jnp.max(jnp.abs(out - ref)))
    assert err < 2e-2, f"max |pallas - reference| = {err}"
    print("KERNEL_OK")
</pallas_src>

<mosaic_0001>
module attributes {stable_mosaic.version = 11 : i64} {
  func.func @_lenet_kernel(%arg0: i32, %arg1: memref<1x32x32xf32, #tpu.memory_space<vmem>>, %arg2: memref<6x5x32x28xf32, #tpu.memory_space<vmem>>, %arg3: memref<6x1xf32, #tpu.memory_space<vmem>>, %arg4: memref<14x28xf32, #tpu.memory_space<vmem>>, %arg5: memref<28x14xf32, #tpu.memory_space<vmem>>, %arg6: memref<16x150xf32, #tpu.memory_space<vmem>>, %arg7: memref<16x1xf32, #tpu.memory_space<vmem>>, %arg8: memref<10x5xf32, #tpu.memory_space<vmem>>, %arg9: memref<16x25x120xf32, #tpu.memory_space<vmem>>, %arg10: memref<1x120xf32, #tpu.memory_space<vmem>>, %arg11: memref<120x84xf32, #tpu.memory_space<vmem>>, %arg12: memref<1x84xf32, #tpu.memory_space<vmem>>, %arg13: memref<84x10xf32, #tpu.memory_space<vmem>>, %arg14: memref<1x10xf32, #tpu.memory_space<vmem>>, %arg15: memref<1x1x10xf32, #tpu.memory_space<vmem>>, %arg16: memref<6x196xf32, #tpu.memory_space<vmem>>, %arg17: memref<16x25xf32, #tpu.memory_space<vmem>>) attributes {dimension_semantics = [#tpu.dimension_semantics<parallel>], iteration_bounds = array<i64: 2>, scalar_prefetch = 0 : i64, scratch_operands = 2 : i64, tpu.core_type = #tpu.core_type<tc>, window_params = [{transform_indices = @transform_0, window_bounds = array<i64: 1, 32, 32>}, {pipeline_mode = #tpu.pipeline_mode<synchronous>, transform_indices = @transform_1, window_bounds = array<i64: 6, 5, 32, 28>}, {pipeline_mode = #tpu.pipeline_mode<synchronous>, transform_indices = @transform_2, window_bounds = array<i64: 6, 1>}, {pipeline_mode = #tpu.pipeline_mode<synchronous>, transform_indices = @transform_3, window_bounds = array<i64: 14, 28>}, {pipeline_mode = #tpu.pipeline_mode<synchronous>, transform_indices = @transform_4, window_bounds = array<i64: 28, 14>}, {pipeline_mode = #tpu.pipeline_mode<synchronous>, transform_indices = @transform_5, window_bounds = array<i64: 16, 150>}, {pipeline_mode = #tpu.pipeline_mode<synchronous>, transform_indices = @transform_6, window_bounds = array<i64: 16, 1>}, {pipeline_mode = #tpu.pipeline_mode<synchronous>, transform_indices = @transform_7, window_bounds = array<i64: 10, 5>}, {pipeline_mode = #tpu.pipeline_mode<synchronous>, transform_indices = @transform_8, window_bounds = array<i64: 16, 25, 120>}, {pipeline_mode = #tpu.pipeline_mode<synchronous>, transform_indices = @transform_9, window_bounds = array<i64: 1, 120>}, {pipeline_mode = #tpu.pipeline_mode<synchronous>, transform_indices = @transform_10, window_bounds = array<i64: 120, 84>}, {pipeline_mode = #tpu.pipeline_mode<synchronous>, transform_indices = @transform_11, window_bounds = array<i64: 1, 84>}, {pipeline_mode = #tpu.pipeline_mode<synchronous>, transform_indices = @transform_12, window_bounds = array<i64: 84, 10>}, {pipeline_mode = #tpu.pipeline_mode<synchronous>, transform_indices = @transform_13, window_bounds = array<i64: 1, 10>}, {transform_indices = @transform_14, window_bounds = array<i64: 1, 1, 10>}]} {
    %c0 = arith.constant 0 : index
    %c0_0 = arith.constant 0 : index
    %c0_1 = arith.constant 0 : index
    %0 = vector.load %arg1[%c0, %c0_0, %c0_1] : memref<1x32x32xf32, #tpu.memory_space<vmem>>, vector<1x28x32xf32>
    %1 = vector.shape_cast %0 : vector<1x28x32xf32> to vector<28x32xf32>
    %c0_2 = arith.constant 0 : index
    %c1 = arith.constant 1 : index
    %c0_3 = arith.constant 0 : index
    %2 = vector.load %arg1[%c0_2, %c1, %c0_3] : memref<1x32x32xf32, #tpu.memory_space<vmem>>, vector<1x28x32xf32>
    %3 = vector.shape_cast %2 : vector<1x28x32xf32> to vector<28x32xf32>
    %c0_4 = arith.constant 0 : index
    %c2 = arith.constant 2 : index
    %c0_5 = arith.constant 0 : index
    %4 = vector.load %arg1[%c0_4, %c2, %c0_5] : memref<1x32x32xf32, #tpu.memory_space<vmem>>, vector<1x28x32xf32>
    %5 = vector.shape_cast %4 : vector<1x28x32xf32> to vector<28x32xf32>
    %c0_6 = arith.constant 0 : index
    %c3 = arith.constant 3 : index
    %c0_7 = arith.constant 0 : index
    %6 = vector.load %arg1[%c0_6, %c3, %c0_7] : memref<1x32x32xf32, #tpu.memory_space<vmem>>, vector<1x28x32xf32>
    %7 = vector.shape_cast %6 : vector<1x28x32xf32> to vector<28x32xf32>
    %c0_8 = arith.constant 0 : index
    %c4 = arith.constant 4 : index
    %c0_9 = arith.constant 0 : index
    %8 = vector.load %arg1[%c0_8, %c4, %c0_9] : memref<1x32x32xf32, #tpu.memory_space<vmem>>, vector<1x28x32xf32>
    %9 = vector.shape_cast %8 : vector<1x28x32xf32> to vector<28x32xf32>
    %cst = arith.constant 0.000000e+00 : f32
    %10 = vector.broadcast %cst : f32 to vector<28x28xf32>
    %c0_10 = arith.constant 0 : index
    %c0_11 = arith.constant 0 : index
    %c0_12 = arith.constant 0 : index
    %c0_13 = arith.constant 0 : index
    %11 = vector.load %arg2[%c0_10, %c0_11, %c0_12, %c0_13] : memref<6x5x32x28xf32, #tpu.memory_space<vmem>>, vector<1x1x32x28xf32>
    %12 = vector.shape_cast %11 : vector<1x1x32x28xf32> to vector<32x28xf32>
    %cst_14 = arith.constant dense<0.000000e+00> : vector<28x28xf32>
    %13 = tpu.matmul %1, %12, %cst_14 {dimension_numbers = #tpu.dot_dimension_numbers<[1], [0], [0], [1], [0, 0, 1, 1], [], []>} : vector<28x32xf32>, vector<32x28xf32>, vector<28x28xf32> -> vector<28x28xf32>
    %14 = arith.addf %10, %13 : vector<28x28xf32>
    %c0_15 = arith.constant 0 : index
    %c1_16 = arith.constant 1 : index
    %c0_17 = arith.constant 0 : index
    %c0_18 = arith.constant 0 : index
    %15 = vector.load %arg2[%c0_15, %c1_16, %c0_17, %c0_18] : memref<6x5x32x28xf32, #tpu.memory_space<vmem>>, vector<1x1x32x28xf32>
    %16 = vector.shape_cast %15 : vector<1x1x32x28xf32> to vector<32x28xf32>
    %cst_19 = arith.constant dense<0.000000e+00> : vector<28x28xf32>
    %17 = tpu.matmul %3, %16, %cst_19 {dimension_numbers = #tpu.dot_dimension_numbers<[1], [0], [0], [1], [0, 0, 1, 1], [], []>} : vector<28x32xf32>, vector<32x28xf32>, vector<28x28xf32> -> vector<28x28xf32>
    %18 = arith.addf %14, %17 : vector<28x28xf32>
    %c0_20 = arith.constant 0 : index
    %c2_21 = arith.constant 2 : index
    %c0_22 = arith.constant 0 : index
    %c0_23 = arith.constant 0 : index
    %19 = vector.load %arg2[%c0_20, %c2_21, %c0_22, %c0_23] : memref<6x5x32x28xf32, #tpu.memory_space<vmem>>, vector<1x1x32x28xf32>
    %20 = vector.shape_cast %19 : vector<1x1x32x28xf32> to vector<32x28xf32>
    %cst_24 = arith.constant dense<0.000000e+00> : vector<28x28xf32>
    %21 = tpu.matmul %5, %20, %cst_24 {dimension_numbers = #tpu.dot_dimension_numbers<[1], [0], [0], [1], [0, 0, 1, 1], [], []>} : vector<28x32xf32>, vector<32x28xf32>, vector<28x28xf32> -> vector<28x28xf32>
    %22 = arith.addf %18, %21 : vector<28x28xf32>
    %c0_25 = arith.constant 0 : index
    %c3_26 = arith.constant 3 : index
    %c0_27 = arith.constant 0 : index
    %c0_28 = arith.constant 0 : index
    %23 = vector.load %arg2[%c0_25, %c3_26, %c0_27, %c0_28] : memref<6x5x32x28xf32, #tpu.memory_space<vmem>>, vector<1x1x32x28xf32>
    %24 = vector.shape_cast %23 : vector<1x1x32x28xf32> to vector<32x28xf32>
    %cst_29 = arith.constant dense<0.000000e+00> : vector<28x28xf32>
    %25 = tpu.matmul %7, %24, %cst_29 {dimension_numbers = #tpu.dot_dimension_numbers<[1], [0], [0], [1], [0, 0, 1, 1], [], []>} : vector<28x32xf32>, vector<32x28xf32>, vector<28x28xf32> -> vector<28x28xf32>
    %26 = arith.addf %22, %25 : vector<28x28xf32>
    %c0_30 = arith.constant 0 : index
    %c4_31 = arith.constant 4 : index
    %c0_32 = arith.constant 0 : index
    %c0_33 = arith.constant 0 : index
    %27 = vector.load %arg2[%c0_30, %c4_31, %c0_32, %c0_33] : memref<6x5x32x28xf32, #tpu.memory_space<vmem>>, vector<1x1x32x28xf32>
    %28 = vector.shape_cast %27 : vector<1x1x32x28xf32> to vector<32x28xf32>
    %cst_34 = arith.constant dense<0.000000e+00> : vector<28x28xf32>
    %29 = tpu.matmul %9, %28, %cst_34 {dimension_numbers = #tpu.dot_dimension_numbers<[1], [0], [0], [1], [0, 0, 1, 1], [], []>} : vector<28x32xf32>, vector<32x28xf32>, vector<28x28xf32> -> vector<28x28xf32>
    %30 = arith.addf %26, %29 : vector<28x28xf32>
    %c0_35 = arith.constant 0 : index
    %c0_36 = arith.constant 0 : index
    %31 = vector.load %arg3[%c0_35, %c0_36] : memref<6x1xf32, #tpu.memory_space<vmem>>, vector<1x1xf32>
    %32 = vector.broadcast %31 : vector<1x1xf32> to vector<28x28xf32>
    %33 = arith.addf %30, %32 : vector<28x28xf32>
    %34 = arith.negf %33 : vector<28x28xf32>
    %35 = math.exp %34 : vector<28x28xf32>
    %cst_37 = arith.constant 1.000000e+00 : f32
    %36 = vector.broadcast %cst_37 : f32 to vector<28x28xf32>
    %37 = arith.addf %36, %35 : vector<28x28xf32>
    %38 = arith.divf %36, %37 : vector<28x28xf32>
    %c0_38 = arith.constant 0 : index
    %c0_39 = arith.constant 0 : index
    %39 = vector.load %arg4[%c0_38, %c0_39] : memref<14x28xf32, #tpu.memory_space<vmem>>, vector<14x28xf32>
    %c0_40 = arith.constant 0 : index
    %c0_41 = arith.constant 0 : index
    %40 = vector.load %arg5[%c0_40, %c0_41] : memref<28x14xf32, #tpu.memory_space<vmem>>, vector<28x14xf32>
    %cst_42 = arith.constant dense<0.000000e+00> : vector<28x14xf32>
    %41 = tpu.matmul %38, %40, %cst_42 {dimension_numbers = #tpu.dot_dimension_numbers<[1], [0], [0], [1], [0, 0, 1, 1], [], []>} : vector<28x28xf32>, vector<28x14xf32>, vector<28x14xf32> -> vector<28x14xf32>
    %cst_43 = arith.constant dense<0.000000e+00> : vector<14x14xf32>
    %42 = tpu.matmul %39, %41, %cst_43 {dimension_numbers = #tpu.dot_dimension_numbers<[1], [0], [0], [1], [0, 0, 1, 1], [], []>} : vector<14x28xf32>, vector<28x14xf32>, vector<14x14xf32> -> vector<14x14xf32>
    %43 = vector.extract_strided_slice %42 {offsets = [0, 0], sizes = [1, 14], strides = [1, 1]} : vector<14x14xf32> to vector<1x14xf32>
    %c0_44 = arith.constant 0 : index
    %c0_45 = arith.constant 0 : index
    %44 = vector.load %arg16[%c0_44, %c0_45] : memref<6x196xf32, #tpu.memory_space<vmem>>, vector<1x14xf32>
    tpu.vector_store %arg16[%c0_44, %c0_45], %43 {strides = array<i32>} : memref<6x196xf32, #tpu.memory_space<vmem>>, vector<1x14xf32>,
    %45 = vector.extract_strided_slice %42 {offsets = [1, 0], sizes = [1, 14], strides = [1, 1]} : vector<14x14xf32> to vector<1x14xf32>
    %c0_46 = arith.constant 0 : index
    %c14 = arith.constant 14 : index
    %46 = vector.load %arg16[%c0_46, %c14] : memref<6x196xf32, #tpu.memory_space<vmem>>, vector<1x14xf32>
    tpu.vector_store %arg16[%c0_46, %c14], %45 {strides = array<i32>} : memref<6x196xf32, #tpu.memory_space<vmem>>, vector<1x14xf32>,
    %47 = vector.extract_strided_slice %42 {offsets = [2, 0], sizes = [1, 14], strides = [1, 1]} : vector<14x14xf32> to vector<1x14xf32>
    %c0_47 = arith.constant 0 : index
    %c28 = arith.constant 28 : index
    %48 = vector.load %arg16[%c0_47, %c28] : memref<6x196xf32, #tpu.memory_space<vmem>>, vector<1x14xf32>
    tpu.vector_store %arg16[%c0_47, %c28], %47 {strides = array<i32>} : memref<6x196xf32, #tpu.memory_space<vmem>>, vector<1x14xf32>,
    %49 = vector.extract_strided_slice %42 {offsets = [3, 0], sizes = [1, 14], strides = [1, 1]} : vector<14x14xf32> to vector<1x14xf32>
    %c0_48 = arith.constant 0 : index
    %c42 = arith.constant 42 : index
    %50 = vector.load %arg16[%c0_48, %c42] : memref<6x196xf32, #tpu.memory_space<vmem>>, vector<1x14xf32>
    tpu.vector_store %arg16[%c0_48, %c42], %49 {strides = array<i32>} : memref<6x196xf32, #tpu.memory_space<vmem>>, vector<1x14xf32>,
    %51 = vector.extract_strided_slice %42 {offsets = [4, 0], sizes = [1, 14], strides = [1, 1]} : vector<14x14xf32> to vector<1x14xf32>
    %c0_49 = arith.constant 0 : index
    %c56 = arith.constant 56 : index
    %52 = vector.load %arg16[%c0_49, %c56] : memref<6x196xf32, #tpu.memory_space<vmem>>, vector<1x14xf32>
    tpu.vector_store %arg16[%c0_49, %c56], %51 {strides = array<i32>} : memref<6x196xf32, #tpu.memory_space<vmem>>, vector<1x14xf32>,
    %53 = vector.extract_strided_slice %42 {offsets = [5, 0], sizes = [1, 14], strides = [1, 1]} : vector<14x14xf32> to vector<1x14xf32>
    %c0_50 = arith.constant 0 : index
    %c70 = arith.constant 70 : index
    %54 = vector.load %arg16[%c0_50, %c70] : memref<6x196xf32, #tpu.memory_space<vmem>>, vector<1x14xf32>
    tpu.vector_store %arg16[%c0_50, %c70], %53 {strides = array<i32>} : memref<6x196xf32, #tpu.memory_space<vmem>>, vector<1x14xf32>,
    %55 = vector.extract_strided_slice %42 {offsets = [6, 0], sizes = [1, 14], strides = [1, 1]} : vector<14x14xf32> to vector<1x14xf32>
    %c0_51 = arith.constant 0 : index
    %c84 = arith.constant 84 : index
    %56 = vector.load %arg16[%c0_51, %c84] : memref<6x196xf32, #tpu.memory_space<vmem>>, vector<1x14xf32>
    tpu.vector_store %arg16[%c0_51, %c84], %55 {strides = array<i32>} : memref<6x196xf32, #tpu.memory_space<vmem>>, vector<1x14xf32>,
    %57 = vector.extract_strided_slice %42 {offsets = [7, 0], sizes = [1, 14], strides = [1, 1]} : vector<14x14xf32> to vector<1x14xf32>
    %c0_52 = arith.constant 0 : index
    %c98 = arith.constant 98 : index
    %58 = vector.load %arg16[%c0_52, %c98] : memref<6x196xf32, #tpu.memory_space<vmem>>, vector<1x14xf32>
    tpu.vector_store %arg16[%c0_52, %c98], %57 {strides = array<i32>} : memref<6x196xf32, #tpu.memory_space<vmem>>, vector<1x14xf32>,
    %59 = vector.extract_strided_slice %42 {offsets = [8, 0], sizes = [1, 14], strides = [1, 1]} : vector<14x14xf32> to vector<1x14xf32>
    %c0_53 = arith.constant 0 : index
    %c112 = arith.constant 112 : index
    %60 = vector.load %arg16[%c0_53, %c112] : memref<6x196xf32, #tpu.memory_space<vmem>>, vector<1x14xf32>
    tpu.vector_store %arg16[%c0_53, %c112], %59 {strides = array<i32>} : memref<6x196xf32, #tpu.memory_space<vmem>>, vector<1x14xf32>,
    %61 = vector.extract_strided_slice %42 {offsets = [9, 0], sizes = [1, 14], strides = [1, 1]} : vector<14x14xf32> to vector<1x14xf32>
    %c0_54 = arith.constant 0 : index
    %c126 = arith.constant 126 : index
    %62 = vector.load %arg16[%c0_54, %c126] : memref<6x196xf32, #tpu.memory_space<vmem>>, vector<1x14xf32>
    tpu.vector_store %arg16[%c0_54, %c126], %61 {strides = array<i32>} : memref<6x196xf32, #tpu.memory_space<vmem>>, vector<1x14xf32>,
    %63 = vector.extract_strided_slice %42 {offsets = [10, 0], sizes = [1, 14], strides = [1, 1]} : vector<14x14xf32> to vector<1x14xf32>
    %c0_55 = arith.constant 0 : index
    %c140 = arith.constant 140 : index
    %64 = vector.load %arg16[%c0_55, %c140] : memref<6x196xf32, #tpu.memory_space<vmem>>, vector<1x14xf32>
    tpu.vector_store %arg16[%c0_55, %c140], %63 {strides = array<i32>} : memref<6x196xf32, #tpu.memory_space<vmem>>, vector<1x14xf32>,
    %65 = vector.extract_strided_slice %42 {offsets = [11, 0], sizes = [1, 14], strides = [1, 1]} : vector<14x14xf32> to vector<1x14xf32>
    %c0_56 = arith.constant 0 : index
    %c154 = arith.constant 154 : index
    %66 = vector.load %arg16[%c0_56, %c154] : memref<6x196xf32, #tpu.memory_space<vmem>>, vector<1x14xf32>
    tpu.vector_store %arg16[%c0_56, %c154], %65 {strides = array<i32>} : memref<6x196xf32, #tpu.memory_space<vmem>>, vector<1x14xf32>,
    %67 = vector.extract_strided_slice %42 {offsets = [12, 0], sizes = [1, 14], strides = [1, 1]} : vector<14x14xf32> to vector<1x14xf32>
    %c0_57 = arith.constant 0 : index
    %c168 = arith.constant 168 : index
    %68 = vector.load %arg16[%c0_57, %c168] : memref<6x196xf32, #tpu.memory_space<vmem>>, vector<1x14xf32>
    tpu.vector_store %arg16[%c0_57, %c168], %67 {strides = array<i32>} : memref<6x196xf32, #tpu.memory_space<vmem>>, vector<1x14xf32>,
    %69 = vector.extract_strided_slice %42 {offsets = [13, 0], sizes = [1, 14], strides = [1, 1]} : vector<14x14xf32> to vector<1x14xf32>
    %c0_58 = arith.constant 0 : index
    %c182 = arith.constant 182 : index
    %70 = vector.load %arg16[%c0_58, %c182] : memref<6x196xf32, #tpu.memory_space<vmem>>, vector<1x14xf32>
    tpu.vector_store %arg16[%c0_58, %c182], %69 {strides = array<i32>} : memref<6x196xf32, #tpu.memory_space<vmem>>, vector<1x14xf32>,
    %cst_59 = arith.constant 0.000000e+00 : f32
    %71 = vector.broadcast %cst_59 : f32 to vector<28x28xf32>
    %c1_60 = arith.constant 1 : index
    %c0_61 = arith.constant 0 : index
    %c0_62 = arith.constant 0 : index
    %c0_63 = arith.constant 0 : index
    %72 = vector.load %arg2[%c1_60, %c0_61, %c0_62, %c0_63] : memref<6x5x32x28xf32, #tpu.memory_space<vmem>>, vector<1x1x32x28xf32>
    %73 = vector.shape_cast %72 : vector<1x1x32x28xf32> to vector<32x28xf32>
    %cst_64 = arith.constant dense<0.000000e+00> : vector<28x28xf32>
    %74 = tpu.matmul %1, %73, %cst_64 {dimension_numbers = #tpu.dot_dimension_numbers<[1], [0], [0], [1], [0, 0, 1, 1], [], []>} : vector<28x32xf32>, vector<32x28xf32>, vector<28x28xf32> -> vector<28x28xf32>
    %75 = arith.addf %71, %74 : vector<28x28xf32>
    %c1_65 = arith.constant 1 : index
    %c1_66 = arith.constant 1 : index
    %c0_67 = arith.constant 0 : index
    %c0_68 = arith.constant 0 : index
    %76 = vector.load %arg2[%c1_65, %c1_66, %c0_67, %c0_68] : memref<6x5x32x28xf32, #tpu.memory_space<vmem>>, vector<1x1x32x28xf32>
    %77 = vector.shape_cast %76 : vector<1x1x32x28xf32> to vector<32x28xf32>
    %cst_69 = arith.constant dense<0.000000e+00> : vector<28x28xf32>
    %78 = tpu.matmul %3, %77, %cst_69 {dimension_numbers = #tpu.dot_dimension_numbers<[1], [0], [0], [1], [0, 0, 1, 1], [], []>} : vector<28x32xf32>, vector<32x28xf32>, vector<28x28xf32> -> vector<28x28xf32>
    %79 = arith.addf %75, %78 : vector<28x28xf32>
    %c1_70 = arith.constant 1 : index
    %c2_71 = arith.constant 2 : index
    %c0_72 = arith.constant 0 : index
    %c0_73 = arith.constant 0 : index
    %80 = vector.load %arg2[%c1_70, %c2_71, %c0_72, %c0_73] : memref<6x5x32x28xf32, #tpu.memory_space<vmem>>, vector<1x1x32x28xf32>
    %81 = vector.shape_cast %80 : vector<1x1x32x28xf32> to vector<32x28xf32>
    %cst_74 = arith.constant dense<0.000000e+00> : vector<28x28xf32>
    %82 = tpu.matmul %5, %81, %cst_74 {dimension_numbers = #tpu.dot_dimension_numbers<[1], [0], [0], [1], [0, 0, 1, 1], [], []>} : vector<28x32xf32>, vector<32x28xf32>, vector<28x28xf32> -> vector<28x28xf32>
    %83 = arith.addf %79, %82 : vector<28x28xf32>
    %c1_75 = arith.constant 1 : index
    %c3_76 = arith.constant 3 : index
    %c0_77 = arith.constant 0 : index
    %c0_78 = arith.constant 0 : index
    %84 = vector.load %arg2[%c1_75, %c3_76, %c0_77, %c0_78] : memref<6x5x32x28xf32, #tpu.memory_space<vmem>>, vector<1x1x32x28xf32>
    %85 = vector.shape_cast %84 : vector<1x1x32x28xf32> to vector<32x28xf32>
    %cst_79 = arith.constant dense<0.000000e+00> : vector<28x28xf32>
    %86 = tpu.matmul %7, %85, %cst_79 {dimension_numbers = #tpu.dot_dimension_numbers<[1], [0], [0], [1], [0, 0, 1, 1], [], []>} : vector<28x32xf32>, vector<32x28xf32>, vector<28x28xf32> -> vector<28x28xf32>
    %87 = arith.addf %83, %86 : vector<28x28xf32>
    %c1_80 = arith.constant 1 : index
    %c4_81 = arith.constant 4 : index
    %c0_82 = arith.constant 0 : index
    %c0_83 = arith.constant 0 : index
    %88 = vector.load %arg2[%c1_80, %c4_81, %c0_82, %c0_83] : memref<6x5x32x28xf32, #tpu.memory_space<vmem>>, vector<1x1x32x28xf32>
    %89 = vector.shape_cast %88 : vector<1x1x32x28xf32> to vector<32x28xf32>
    %cst_84 = arith.constant dense<0.000000e+00> : vector<28x28xf32>
    %90 = tpu.matmul %9, %89, %cst_84 {dimension_numbers = #tpu.dot_dimension_numbers<[1], [0], [0], [1], [0, 0, 1, 1], [], []>} : vector<28x32xf32>, vector<32x28xf32>, vector<28x28xf32> -> vector<28x28xf32>
    %91 = arith.addf %87, %90 : vector<28x28xf32>
    %c1_85 = arith.constant 1 : index
    %c0_86 = arith.constant 0 : index
    %92 = vector.load %arg3[%c1_85, %c0_86] : memref<6x1xf32, #tpu.memory_space<vmem>>, vector<1x1xf32>
    %93 = vector.broadcast %92 : vector<1x1xf32> to vector<28x28xf32>
    %94 = arith.addf %91, %93 : vector<28x28xf32>
    %95 = arith.negf %94 : vector<28x28xf32>
    %96 = math.exp %95 : vector<28x28xf32>
    %cst_87 = arith.constant 1.000000e+00 : f32
    %97 = vector.broadcast %cst_87 : f32 to vector<28x28xf32>
    %98 = arith.addf %97, %96 : vector<28x28xf32>
    %99 = arith.divf %97, %98 : vector<28x28xf32>
    %c0_88 = arith.constant 0 : index
    %c0_89 = arith.constant 0 : index
    %100 = vector.load %arg4[%c0_88, %c0_89] : memref<14x28xf32, #tpu.memory_space<vmem>>, vector<14x28xf32>
    %c0_90 = arith.constant 0 : index
    %c0_91 = arith.constant 0 : index
    %101 = vector.load %arg5[%c0_90, %c0_91] : memref<28x14xf32, #tpu.memory_space<vmem>>, vector<28x14xf32>
    %cst_92 = arith.constant dense<0.000000e+00> : vector<28x14xf32>
    %102 = tpu.matmul %99, %101, %cst_92 {dimension_numbers = #tpu.dot_dimension_numbers<[1], [0], [0], [1], [0, 0, 1, 1], [], []>} : vector<28x28xf32>, vector<28x14xf32>, vector<28x14xf32> -> vector<28x14xf32>
    %cst_93 = arith.constant dense<0.000000e+00> : vector<14x14xf32>
    %103 = tpu.matmul %100, %102, %cst_93 {dimension_numbers = #tpu.dot_dimension_numbers<[1], [0], [0], [1], [0, 0, 1, 1], [], []>} : vector<14x28xf32>, vector<28x14xf32>, vector<14x14xf32> -> vector<14x14xf32>
    %104 = vector.extract_strided_slice %103 {offsets = [0, 0], sizes = [1, 14], strides = [1, 1]} : vector<14x14xf32> to vector<1x14xf32>
    %c1_94 = arith.constant 1 : index
    %c0_95 = arith.constant 0 : index
    %105 = vector.load %arg16[%c1_94, %c0_95] : memref<6x196xf32, #tpu.memory_space<vmem>>, vector<1x14xf32>
    tpu.vector_store %arg16[%c1_94, %c0_95], %104 {strides = array<i32>} : memref<6x196xf32, #tpu.memory_space<vmem>>, vector<1x14xf32>,
    %106 = vector.extract_strided_slice %103 {offsets = [1, 0], sizes = [1, 14], strides = [1, 1]} : vector<14x14xf32> to vector<1x14xf32>
    %c1_96 = arith.constant 1 : index
    %c14_97 = arith.constant 14 : index
    %107 = vector.load %arg16[%c1_96, %c14_97] : memref<6x196xf32, #tpu.memory_space<vmem>>, vector<1x14xf32>
    tpu.vector_store %arg16[%c1_96, %c14_97], %106 {strides = array<i32>} : memref<6x196xf32, #tpu.memory_space<vmem>>, vector<1x14xf32>,
    %108 = vector.extract_strided_slice %103 {offsets = [2, 0], sizes = [1, 14], strides = [1, 1]} : vector<14x14xf32> to vector<1x14xf32>
    %c1_98 = arith.constant 1 : index
    %c28_99 = arith.constant 28 : index
    %109 = vector.load %arg16[%c1_98, %c28_99] : memref<6x196xf32, #tpu.memory_space<vmem>>, vector<1x14xf32>
    tpu.vector_store %arg16[%c1_98, %c28_99], %108 {strides = array<i32>} : memref<6x196xf32, #tpu.memory_space<vmem>>, vector<1x14xf32>,
    %110 = vector.extract_strided_slice %103 {offsets = [3, 0], sizes = [1, 14], strides = [1, 1]} : vector<14x14xf32> to vector<1x14xf32>
    %c1_100 = arith.constant 1 : index
    %c42_101 = arith.constant 42 : index
    %111 = vector.load %arg16[%c1_100, %c42_101] : memref<6x196xf32, #tpu.memory_space<vmem>>, vector<1x14xf32>
    tpu.vector_store %arg16[%c1_100, %c42_101], %110 {strides = array<i32>} : memref<6x196xf32, #tpu.memory_space<vmem>>, vector<1x14xf32>,
    %112 = vector.extract_strided_slice %103 {offsets = [4, 0], sizes = [1, 14], strides = [1, 1]} : vector<14x14xf32> to vector<1x14xf32>
    %c1_102 = arith.constant 1 : index
    %c56_103 = arith.constant 56 : index
    %113 = vector.load %arg16[%c1_102, %c56_103] : memref<6x196xf32, #tpu.memory_space<vmem>>, vector<1x14xf32>
    tpu.vector_store %arg16[%c1_102, %c56_103], %112 {strides = array<i32>} : memref<6x196xf32, #tpu.memory_space<vmem>>, vector<1x14xf32>,
    %114 = vector.extract_strided_slice %103 {offsets = [5, 0], sizes = [1, 14], strides = [1, 1]} : vector<14x14xf32> to vector<1x14xf32>
    %c1_104 = arith.constant 1 : index
    %c70_105 = arith.constant 70 : index
    %115 = vector.load %arg16[%c1_104, %c70_105] : memref<6x196xf32, #tpu.memory_space<vmem>>, vector<1x14xf32>
    tpu.vector_store %arg16[%c1_104, %c70_105], %114 {strides = array<i32>} : memref<6x196xf32, #tpu.memory_space<vmem>>, vector<1x14xf32>,
    %116 = vector.extract_strided_slice %103 {offsets = [6, 0], sizes = [1, 14], strides = [1, 1]} : vector<14x14xf32> to vector<1x14xf32>
    %c1_106 = arith.constant 1 : index
    %c84_107 = arith.constant 84 : index
    %117 = vector.load %arg16[%c1_106, %c84_107] : memref<6x196xf32, #tpu.memory_space<vmem>>, vector<1x14xf32>
    tpu.vector_store %arg16[%c1_106, %c84_107], %116 {strides = array<i32>} : memref<6x196xf32, #tpu.memory_space<vmem>>, vector<1x14xf32>,
    %118 = vector.extract_strided_slice %103 {offsets = [7, 0], sizes = [1, 14], strides = [1, 1]} : vector<14x14xf32> to vector<1x14xf32>
    %c1_108 = arith.constant 1 : index
    %c98_109 = arith.constant 98 : index
    %119 = vector.load %arg16[%c1_108, %c98_109] : memref<6x196xf32, #tpu.memory_space<vmem>>, vector<1x14xf32>
    tpu.vector_store %arg16[%c1_108, %c98_109], %118 {strides = array<i32>} : memref<6x196xf32, #tpu.memory_space<vmem>>, vector<1x14xf32>,
    %120 = vector.extract_strided_slice %103 {offsets = [8, 0], sizes = [1, 14], strides = [1, 1]} : vector<14x14xf32> to vector<1x14xf32>
    %c1_110 = arith.constant 1 : index
    %c112_111 = arith.constant 112 : index
    %121 = vector.load %arg16[%c1_110, %c112_111] : memref<6x196xf32, #tpu.memory_space<vmem>>, vector<1x14xf32>
    tpu.vector_store %arg16[%c1_110, %c112_111], %120 {strides = array<i32>} : memref<6x196xf32, #tpu.memory_space<vmem>>, vector<1x14xf32>,
    %122 = vector.extract_strided_slice %103 {offsets = [9, 0], sizes = [1, 14], strides = [1, 1]} : vector<14x14xf32> to vector<1x14xf32>
    %c1_112 = arith.constant 1 : index
    %c126_113 = arith.constant 126 : index
    %123 = vector.load %arg16[%c1_112, %c126_113] : memref<6x196xf32, #tpu.memory_space<vmem>>, vector<1x14xf32>
    tpu.vector_store %arg16[%c1_112, %c126_113], %122 {strides = array<i32>} : memref<6x196xf32, #tpu.memory_space<vmem>>, vector<1x14xf32>,
    %124 = vector.extract_strided_slice %103 {offsets = [10, 0], sizes = [1, 14], strides = [1, 1]} : vector<14x14xf32> to vector<1x14xf32>
    %c1_114 = arith.constant 1 : index
    %c140_115 = arith.constant 140 : index
    %125 = vector.load %arg16[%c1_114, %c140_115] : memref<6x196xf32, #tpu.memory_space<vmem>>, vector<1x14xf32>
    tpu.vector_store %arg16[%c1_114, %c140_115], %124 {strides = array<i32>} : memref<6x196xf32, #tpu.memory_space<vmem>>, vector<1x14xf32>,
    %126 = vector.extract_strided_slice %103 {offsets = [11, 0], sizes = [1, 14], strides = [1, 1]} : vector<14x14xf32> to vector<1x14xf32>
    %c1_116 = arith.constant 1 : index
    %c154_117 = arith.constant 154 : index
    %127 = vector.load %arg16[%c1_116, %c154_117] : memref<6x196xf32, #tpu.memory_space<vmem>>, vector<1x14xf32>
    tpu.vector_store %arg16[%c1_116, %c154_117], %126 {strides = array<i32>} : memref<6x196xf32, #tpu.memory_space<vmem>>, vector<1x14xf32>,
    %128 = vector.extract_strided_slice %103 {offsets = [12, 0], sizes = [1, 14], strides = [1, 1]} : vector<14x14xf32> to vector<1x14xf32>
    %c1_118 = arith.constant 1 : index
    %c168_119 = arith.constant 168 : index
    %129 = vector.load %arg16[%c1_118, %c168_119] : memref<6x196xf32, #tpu.memory_space<vmem>>, vector<1x14xf32>
    tpu.vector_store %arg16[%c1_118, %c168_119], %128 {strides = array<i32>} : memref<6x196xf32, #tpu.memory_space<vmem>>, vector<1x14xf32>,
    %130 = vector.extract_strided_slice %103 {offsets = [13, 0], sizes = [1, 14], strides = [1, 1]} : vector<14x14xf32> to vector<1x14xf32>
    %c1_120 = arith.constant 1 : index
    %c182_121 = arith.constant 182 : index
    %131 = vector.load %arg16[%c1_120, %c182_121] : memref<6x196xf32, #tpu.memory_space<vmem>>, vector<1x14xf32>
    tpu.vector_store %arg16[%c1_120, %c182_121], %130 {strides = array<i32>} : memref<6x196xf32, #tpu.memory_space<vmem>>, vector<1x14xf32>,
    %cst_122 = arith.constant 0.000000e+00 : f32
    %132 = vector.broadcast %cst_122 : f32 to vector<28x28xf32>
    %c2_123 = arith.constant 2 : index
    %c0_124 = arith.constant 0 : index
    %c0_125 = arith.constant 0 : index
    %c0_126 = arith.constant 0 : index
    %133 = vector.load %arg2[%c2_123, %c0_124, %c0_125, %c0_126] : memref<6x5x32x28xf32, #tpu.memory_space<vmem>>, vector<1x1x32x28xf32>
    %134 = vector.shape_cast %133 : vector<1x1x32x28xf32> to vector<32x28xf32>
    %cst_127 = arith.constant dense<0.000000e+00> : vector<28x28xf32>
    %135 = tpu.matmul %1, %134, %cst_127 {dimension_numbers = #tpu.dot_dimension_numbers<[1], [0], [0], [1], [0, 0, 1, 1], [], []>} : vector<28x32xf32>, vector<32x28xf32>, vector<28x28xf32> -> vector<28x28xf32>
    %136 = arith.addf %132, %135 : vector<28x28xf32>
    %c2_128 = arith.constant 2 : index
    %c1_129 = arith.constant 1 : index
    %c0_130 = arith.constant 0 : index
    %c0_131 = arith.constant 0 : index
    %137 = vector.load %arg2[%c2_128, %c1_129, %c0_130, %c0_131] : memref<6x5x32x28xf32, #tpu.memory_space<vmem>>, vector<1x1x32x28xf32>
    %138 = vector.shape_cast %137 : vector<1x1x32x28xf32> to vector<32x28xf32>
    %cst_132 = arith.constant dense<0.000000e+00> : vector<28x28xf32>
    %139 = tpu.matmul %3, %138, %cst_132 {dimension_numbers = #tpu.dot_dimension_numbers<[1], [0], [0], [1], [0, 0, 1, 1], [], []>} : vector<28x32xf32>, vector<32x28xf32>, vector<28x28xf32> -> vector<28x28xf32>
    %140 = arith.addf %136, %139 : vector<28x28xf32>
    %c2_133 = arith.constant 2 : index
    %c2_134 = arith.constant 2 : index
    %c0_135 = arith.constant 0 : index
    %c0_136 = arith.constant 0 : index
    %141 = vector.load %arg2[%c2_133, %c2_134, %c0_135, %c0_136] : memref<6x5x32x28xf32, #tpu.memory_space<vmem>>, vector<1x1x32x28xf32>
    %142 = vector.shape_cast %141 : vector<1x1x32x28xf32> to vector<32x28xf32>
    %cst_137 = arith.constant dense<0.000000e+00> : vector<28x28xf32>
    %143 = tpu.matmul %5, %142, %cst_137 {dimension_numbers = #tpu.dot_dimension_numbers<[1], [0], [0], [1], [0, 0, 1, 1], [], []>} : vector<28x32xf32>, vector<32x28xf32>, vector<28x28xf32> -> vector<28x28xf32>
    %144 = arith.addf %140, %143 : vector<28x28xf32>
    %c2_138 = arith.constant 2 : index
    %c3_139 = arith.constant 3 : index
    %c0_140 = arith.constant 0 : index
    %c0_141 = arith.constant 0 : index
    %145 = vector.load %arg2[%c2_138, %c3_139, %c0_140, %c0_141] : memref<6x5x32x28xf32, #tpu.memory_space<vmem>>, vector<1x1x32x28xf32>
    %146 = vector.shape_cast %145 : vector<1x1x32x28xf32> to vector<32x28xf32>
    %cst_142 = arith.constant dense<0.000000e+00> : vector<28x28xf32>
    %147 = tpu.matmul %7, %146, %cst_142 {dimension_numbers = #tpu.dot_dimension_numbers<[1], [0], [0], [1], [0, 0, 1, 1], [], []>} : vector<28x32xf32>, vector<32x28xf32>, vector<28x28xf32> -> vector<28x28xf32>
    %148 = arith.addf %144, %147 : vector<28x28xf32>
    %c2_143 = arith.constant 2 : index
    %c4_144 = arith.constant 4 : index
    %c0_145 = arith.constant 0 : index
    %c0_146 = arith.constant 0 : index
    %149 = vector.load %arg2[%c2_143, %c4_144, %c0_145, %c0_146] : memref<6x5x32x28xf32, #tpu.memory_space<vmem>>, vector<1x1x32x28xf32>
    %150 = vector.shape_cast %149 : vector<1x1x32x28xf32> to vector<32x28xf32>
    %cst_147 = arith.constant dense<0.000000e+00> : vector<28x28xf32>
    %151 = tpu.matmul %9, %150, %cst_147 {dimension_numbers = #tpu.dot_dimension_numbers<[1], [0], [0], [1], [0, 0, 1, 1], [], []>} : vector<28x32xf32>, vector<32x28xf32>, vector<28x28xf32> -> vector<28x28xf32>
    %152 = arith.addf %148, %151 : vector<28x28xf32>
    %c2_148 = arith.constant 2 : index
    %c0_149 = arith.constant 0 : index
    %153 = vector.load %arg3[%c2_148, %c0_149] : memref<6x1xf32, #tpu.memory_space<vmem>>, vector<1x1xf32>
    %154 = vector.broadcast %153 : vector<1x1xf32> to vector<28x28xf32>
    %155 = arith.addf %152, %154 : vector<28x28xf32>
    %156 = arith.negf %155 : vector<28x28xf32>
    %157 = math.exp %156 : vector<28x28xf32>
    %cst_150 = arith.constant 1.000000e+00 : f32
    %158 = vector.broadcast %cst_150 : f32 to vector<28x28xf32>
    %159 = arith.addf %158, %157 : vector<28x28xf32>
    %160 = arith.divf %158, %159 : vector<28x28xf32>
    %c0_151 = arith.constant 0 : index
    %c0_152 = arith.constant 0 : index
    %161 = vector.load %arg4[%c0_151, %c0_152] : memref<14x28xf32, #tpu.memory_space<vmem>>, vector<14x28xf32>
    %c0_153 = arith.constant 0 : index
    %c0_154 = arith.constant 0 : index
    %162 = vector.load %arg5[%c0_153, %c0_154] : memref<28x14xf32, #tpu.memory_space<vmem>>, vector<28x14xf32>
    %cst_155 = arith.constant dense<0.000000e+00> : vector<28x14xf32>
    %163 = tpu.matmul %160, %162, %cst_155 {dimension_numbers = #tpu.dot_dimension_numbers<[1], [0], [0], [1], [0, 0, 1, 1], [], []>} : vector<28x28xf32>, vector<28x14xf32>, vector<28x14xf32> -> vector<28x14xf32>
    %cst_156 = arith.constant dense<0.000000e+00> : vector<14x14xf32>
    %164 = tpu.matmul %161, %163, %cst_156 {dimension_numbers = #tpu.dot_dimension_numbers<[1], [0], [0], [1], [0, 0, 1, 1], [], []>} : vector<14x28xf32>, vector<28x14xf32>, vector<14x14xf32> -> vector<14x14xf32>
    %165 = vector.extract_strided_slice %164 {offsets = [0, 0], sizes = [1, 14], strides = [1, 1]} : vector<14x14xf32> to vector<1x14xf32>
    %c2_157 = arith.constant 2 : index
    %c0_158 = arith.constant 0 : index
    %166 = vector.load %arg16[%c2_157, %c0_158] : memref<6x196xf32, #tpu.memory_space<vmem>>, vector<1x14xf32>
    tpu.vector_store %arg16[%c2_157, %c0_158], %165 {strides = array<i32>} : memref<6x196xf32, #tpu.memory_space<vmem>>, vector<1x14xf32>,
    %167 = vector.extract_strided_slice %164 {offsets = [1, 0], sizes = [1, 14], strides = [1, 1]} : vector<14x14xf32> to vector<1x14xf32>
    %c2_159 = arith.constant 2 : index
    %c14_160 = arith.constant 14 : index
    %168 = vector.load %arg16[%c2_159, %c14_160] : memref<6x196xf32, #tpu.memory_space<vmem>>, vector<1x14xf32>
    tpu.vector_store %arg16[%c2_159, %c14_160], %167 {strides = array<i32>} : memref<6x196xf32, #tpu.memory_space<vmem>>, vector<1x14xf32>,
    %169 = vector.extract_strided_slice %164 {offsets = [2, 0], sizes = [1, 14], strides = [1, 1]} : vector<14x14xf32> to vector<1x14xf32>
    %c2_161 = arith.constant 2 : index
    %c28_162 = arith.constant 28 : index
    %170 = vector.load %arg16[%c2_161, %c28_162] : memref<6x196xf32, #tpu.memory_space<vmem>>, vector<1x14xf32>
    tpu.vector_store %arg16[%c2_161, %c28_162], %169 {strides = array<i32>} : memref<6x196xf32, #tpu.memory_space<vmem>>, vector<1x14xf32>,
    %171 = vector.extract_strided_slice %164 {offsets = [3, 0], sizes = [1, 14], strides = [1, 1]} : vector<14x14xf32> to vector<1x14xf32>
    %c2_163 = arith.constant 2 : index
    %c42_164 = arith.constant 42 : index
    %172 = vector.load %arg16[%c2_163, %c42_164] : memref<6x196xf32, #tpu.memory_space<vmem>>, vector<1x14xf32>
    tpu.vector_store %arg16[%c2_163, %c42_164], %171 {strides = array<i32>} : memref<6x196xf32, #tpu.memory_space<vmem>>, vector<1x14xf32>,
    %173 = vector.extract_strided_slice %164 {offsets = [4, 0], sizes = [1, 14], strides = [1, 1]} : vector<14x14xf32> to vector<1x14xf32>
    %c2_165 = arith.constant 2 : index
    %c56_166 = arith.constant 56 : index
    %174 = vector.load %arg16[%c2_165, %c56_166] : memref<6x196xf32, #tpu.memory_space<vmem>>, vector<1x14xf32>
    tpu.vector_store %arg16[%c2_165, %c56_166], %173 {strides = array<i32>} : memref<6x196xf32, #tpu.memory_space<vmem>>, vector<1x14xf32>,
    %175 = vector.extract_strided_slice %164 {offsets = [5, 0], sizes = [1, 14], strides = [1, 1]} : vector<14x14xf32> to vector<1x14xf32>
    %c2_167 = arith.constant 2 : index
    %c70_168 = arith.constant 70 : index
    %176 = vector.load %arg16[%c2_167, %c70_168] : memref<6x196xf32, #tpu.memory_space<vmem>>, vector<1x14xf32>
    tpu.vector_store %arg16[%c2_167, %c70_168], %175 {strides = array<i32>} : memref<6x196xf32, #tpu.memory_space<vmem>>, vector<1x14xf32>,
    %177 = vector.extract_strided_slice %164 {offsets = [6, 0], sizes = [1, 14], strides = [1, 1]} : vector<14x14xf32> to vector<1x14xf32>
    %c2_169 = arith.constant 2 : index
    %c84_170 = arith.constant 84 : index
    %178 = vector.load %arg16[%c2_169, %c84_170] : memref<6x196xf32, #tpu.memory_space<vmem>>, vector<1x14xf32>
    tpu.vector_store %arg16[%c2_169, %c84_170], %177 {strides = array<i32>} : memref<6x196xf32, #tpu.memory_space<vmem>>, vector<1x14xf32>,
    %179 = vector.extract_strided_slice %164 {offsets = [7, 0], sizes = [1, 14], strides = [1, 1]} : vector<14x14xf32> to vector<1x14xf32>
    %c2_171 = arith.constant 2 : index
    %c98_172 = arith.constant 98 : index
    %180 = vector.load %arg16[%c2_171, %c98_172] : memref<6x196xf32, #tpu.memory_space<vmem>>, vector<1x14xf32>
    tpu.vector_store %arg16[%c2_171, %c98_172], %179 {strides = array<i32>} : memref<6x196xf32, #tpu.memory_space<vmem>>, vector<1x14xf32>,
    %181 = vector.extract_strided_slice %164 {offsets = [8, 0], sizes = [1, 14], strides = [1, 1]} : vector<14x14xf32> to vector<1x14xf32>
    %c2_173 = arith.constant 2 : index
    %c112_174 = arith.constant 112 : index
    %182 = vector.load %arg16[%c2_173, %c112_174] : memref<6x196xf32, #tpu.memory_space<vmem>>, vector<1x14xf32>
    tpu.vector_store %arg16[%c2_173, %c112_174], %181 {strides = array<i32>} : memref<6x196xf32, #tpu.memory_space<vmem>>, vector<1x14xf32>,
    %183 = vector.extract_strided_slice %164 {offsets = [9, 0], sizes = [1, 14], strides = [1, 1]} : vector<14x14xf32> to vector<1x14xf32>
    %c2_175 = arith.constant 2 : index
    %c126_176 = arith.constant 126 : index
    %184 = vector.load %arg16[%c2_175, %c126_176] : memref<6x196xf32, #tpu.memory_space<vmem>>, vector<1x14xf32>
    tpu.vector_store %arg16[%c2_175, %c126_176], %183 {strides = array<i32>} : memref<6x196xf32, #tpu.memory_space<vmem>>, vector<1x14xf32>,
    %185 = vector.extract_strided_slice %164 {offsets = [10, 0], sizes = [1, 14], strides = [1, 1]} : vector<14x14xf32> to vector<1x14xf32>
    %c2_177 = arith.constant 2 : index
    %c140_178 = arith.constant 140 : index
    %186 = vector.load %arg16[%c2_177, %c140_178] : memref<6x196xf32, #tpu.memory_space<vmem>>, vector<1x14xf32>
    tpu.vector_store %arg16[%c2_177, %c140_178], %185 {strides = array<i32>} : memref<6x196xf32, #tpu.memory_space<vmem>>, vector<1x14xf32>,
    %187 = vector.extract_strided_slice %164 {offsets = [11, 0], sizes = [1, 14], strides = [1, 1]} : vector<14x14xf32> to vector<1x14xf32>
    %c2_179 = arith.constant 2 : index
    %c154_180 = arith.constant 154 : index
    %188 = vector.load %arg16[%c2_179, %c154_180] : memref<6x196xf32, #tpu.memory_space<vmem>>, vector<1x14xf32>
    tpu.vector_store %arg16[%c2_179, %c154_180], %187 {strides = array<i32>} : memref<6x196xf32, #tpu.memory_space<vmem>>, vector<1x14xf32>,
    %189 = vector.extract_strided_slice %164 {offsets = [12, 0], sizes = [1, 14], strides = [1, 1]} : vector<14x14xf32> to vector<1x14xf32>
    %c2_181 = arith.constant 2 : index
    %c168_182 = arith.constant 168 : index
    %190 = vector.load %arg16[%c2_181, %c168_182] : memref<6x196xf32, #tpu.memory_space<vmem>>, vector<1x14xf32>
    tpu.vector_store %arg16[%c2_181, %c168_182], %189 {strides = array<i32>} : memref<6x196xf32, #tpu.memory_space<vmem>>, vector<1x14xf32>,
    %191 = vector.extract_strided_slice %164 {offsets = [13, 0], sizes = [1, 14], strides = [1, 1]} : vector<14x14xf32> to vector<1x14xf32>
    %c2_183 = arith.constant 2 : index
    %c182_184 = arith.constant 182 : index
    %192 = vector.load %arg16[%c2_183, %c182_184] : memref<6x196xf32, #tpu.memory_space<vmem>>, vector<1x14xf32>
    tpu.vector_store %arg16[%c2_183, %c182_184], %191 {strides = array<i32>} : memref<6x196xf32, #tpu.memory_space<vmem>>, vector<1x14xf32>,
    %cst_185 = arith.constant 0.000000e+00 : f32
    %193 = vector.broadcast %cst_185 : f32 to vector<28x28xf32>
    %c3_186 = arith.constant 3 : index
    %c0_187 = arith.constant 0 : index
    %c0_188 = arith.constant 0 : index
    %c0_189 = arith.constant 0 : index
    %194 = vector.load %arg2[%c3_186, %c0_187, %c0_188, %c0_189] : memref<6x5x32x28xf32, #tpu.memory_space<vmem>>, vector<1x1x32x28xf32>
    %195 = vector.shape_cast %194 : vector<1x1x32x28xf32> to vector<32x28xf32>
    %cst_190 = arith.constant dense<0.000000e+00> : vector<28x28xf32>
    %196 = tpu.matmul %1, %195, %cst_190 {dimension_numbers = #tpu.dot_dimension_numbers<[1], [0], [0], [1], [0, 0, 1, 1], [], []>} : vector<28x32xf32>, vector<32x28xf32>, vector<28x28xf32> -> vector<28x28xf32>
    %197 = arith.addf %193, %196 : vector<28x28xf32>
    %c3_191 = arith.constant 3 : index
    %c1_192 = arith.constant 1 : index
    %c0_193 = arith.constant 0 : index
    %c0_194 = arith.constant 0 : index
    %198 = vector.load %arg2[%c3_191, %c1_192, %c0_193, %c0_194] : memref<6x5x32x28xf32, #tpu.memory_space<vmem>>, vector<1x1x32x28xf32>
    %199 = vector.shape_cast %198 : vector<1x1x32x28xf32> to vector<32x28xf32>
    %cst_195 = arith.constant dense<0.000000e+00> : vector<28x28xf32>
    %200 = tpu.matmul %3, %199, %cst_195 {dimension_numbers = #tpu.dot_dimension_numbers<[1], [0], [0], [1], [0, 0, 1, 1], [], []>} : vector<28x32xf32>, vector<32x28xf32>, vector<28x28xf32> -> vector<28x28xf32>
    %201 = arith.addf %197, %200 : vector<28x28xf32>
    %c3_196 = arith.constant 3 : index
    %c2_197 = arith.constant 2 : index
    %c0_198 = arith.constant 0 : index
    %c0_199 = arith.constant 0 : index
    %202 = vector.load %arg2[%c3_196, %c2_197, %c0_198, %c0_199] : memref<6x5x32x28xf32, #tpu.memory_space<vmem>>, vector<1x1x32x28xf32>
    %203 = vector.shape_cast %202 : vector<1x1x32x28xf32> to vector<32x28xf32>
    %cst_200 = arith.constant dense<0.000000e+00> : vector<28x28xf32>
    %204 = tpu.matmul %5, %203, %cst_200 {dimension_numbers = #tpu.dot_dimension_numbers<[1], [0], [0], [1], [0, 0, 1, 1], [], []>} : vector<28x32xf32>, vector<32x28xf32>, vector<28x28xf32> -> vector<28x28xf32>
    %205 = arith.addf %201, %204 : vector<28x28xf32>
    %c3_201 = arith.constant 3 : index
    %c3_202 = arith.constant 3 : index
    %c0_203 = arith.constant 0 : index
    %c0_204 = arith.constant 0 : index
    %206 = vector.load %arg2[%c3_201, %c3_202, %c0_203, %c0_204] : memref<6x5x32x28xf32, #tpu.memory_space<vmem>>, vector<1x1x32x28xf32>
    %207 = vector.shape_cast %206 : vector<1x1x32x28xf32> to vector<32x28xf32>
    %cst_205 = arith.constant dense<0.000000e+00> : vector<28x28xf32>
    %208 = tpu.matmul %7, %207, %cst_205 {dimension_numbers = #tpu.dot_dimension_numbers<[1], [0], [0], [1], [0, 0, 1, 1], [], []>} : vector<28x32xf32>, vector<32x28xf32>, vector<28x28xf32> -> vector<28x28xf32>
    %209 = arith.addf %205, %208 : vector<28x28xf32>
    %c3_206 = arith.constant 3 : index
    %c4_207 = arith.constant 4 : index
    %c0_208 = arith.constant 0 : index
    %c0_209 = arith.constant 0 : index
    %210 = vector.load %arg2[%c3_206, %c4_207, %c0_208, %c0_209] : memref<6x5x32x28xf32, #tpu.memory_space<vmem>>, vector<1x1x32x28xf32>
    %211 = vector.shape_cast %210 : vector<1x1x32x28xf32> to vector<32x28xf32>
    %cst_210 = arith.constant dense<0.000000e+00> : vector<28x28xf32>
    %212 = tpu.matmul %9, %211, %cst_210 {dimension_numbers = #tpu.dot_dimension_numbers<[1], [0], [0], [1], [0, 0, 1, 1], [], []>} : vector<28x32xf32>, vector<32x28xf32>, vector<28x28xf32> -> vector<28x28xf32>
    %213 = arith.addf %209, %212 : vector<28x28xf32>
    %c3_211 = arith.constant 3 : index
    %c0_212 = arith.constant 0 : index
    %214 = vector.load %arg3[%c3_211, %c0_212] : memref<6x1xf32, #tpu.memory_space<vmem>>, vector<1x1xf32>
    %215 = vector.broadcast %214 : vector<1x1xf32> to vector<28x28xf32>
    %216 = arith.addf %213, %215 : vector<28x28xf32>
    %217 = arith.negf %216 : vector<28x28xf32>
    %218 = math.exp %217 : vector<28x28xf32>
    %cst_213 = arith.constant 1.000000e+00 : f32
    %219 = vector.broadcast %cst_213 : f32 to vector<28x28xf32>
    %220 = arith.addf %219, %218 : vector<28x28xf32>
    %221 = arith.divf %219, %220 : vector<28x28xf32>
    %c0_214 = arith.constant 0 : index
    %c0_215 = arith.constant 0 : index
    %222 = vector.load %arg4[%c0_214, %c0_215] : memref<14x28xf32, #tpu.memory_space<vmem>>, vector<14x28xf32>
    %c0_216 = arith.constant 0 : index
    %c0_217 = arith.constant 0 : index
    %223 = vector.load %arg5[%c0_216, %c0_217] : memref<28x14xf32, #tpu.memory_space<vmem>>, vector<28x14xf32>
    %cst_218 = arith.constant dense<0.000000e+00> : vector<28x14xf32>
    %224 = tpu.matmul %221, %223, %cst_218 {dimension_numbers = #tpu.dot_dimension_numbers<[1], [0], [0], [1], [0, 0, 1, 1], [], []>} : vector<28x28xf32>, vector<28x14xf32>, vector<28x14xf32> -> vector<28x14xf32>
    %cst_219 = arith.constant dense<0.000000e+00> : vector<14x14xf32>
    %225 = tpu.matmul %222, %224, %cst_219 {dimension_numbers = #tpu.dot_dimension_numbers<[1], [0], [0], [1], [0, 0, 1, 1], [], []>} : vector<14x28xf32>, vector<28x14xf32>, vector<14x14xf32> -> vector<14x14xf32>
    %226 = vector.extract_strided_slice %225 {offsets = [0, 0], sizes = [1, 14], strides = [1, 1]} : vector<14x14xf32> to vector<1x14xf32>
    %c3_220 = arith.constant 3 : index
    %c0_221 = arith.constant 0 : index
    %227 = vector.load %arg16[%c3_220, %c0_221] : memref<6x196xf32, #tpu.memory_space<vmem>>, vector<1x14xf32>
    tpu.vector_store %arg16[%c3_220, %c0_221], %226 {strides = array<i32>} : memref<6x196xf32, #tpu.memory_space<vmem>>, vector<1x14xf32>,
    %228 = vector.extract_strided_slice %225 {offsets = [1, 0], sizes = [1, 14], strides = [1, 1]} : vector<14x14xf32> to vector<1x14xf32>
    %c3_222 = arith.constant 3 : index
    %c14_223 = arith.constant 14 : index
    %229 = vector.load %arg16[%c3_222, %c14_223] : memref<6x196xf32, #tpu.memory_space<vmem>>, vector<1x14xf32>
    tpu.vector_store %arg16[%c3_222, %c14_223], %228 {strides = array<i32>} : memref<6x196xf32, #tpu.memory_space<vmem>>, vector<1x14xf32>,
    %230 = vector.extract_strided_slice %225 {offsets = [2, 0], sizes = [1, 14], strides = [1, 1]} : vector<14x14xf32> to vector<1x14xf32>
    %c3_224 = arith.constant 3 : index
    %c28_225 = arith.constant 28 : index
    %231 = vector.load %arg16[%c3_224, %c28_225] : memref<6x196xf32, #tpu.memory_space<vmem>>, vector<1x14xf32>
    tpu.vector_store %arg16[%c3_224, %c28_225], %230 {strides = array<i32>} : memref<6x196xf32, #tpu.memory_space<vmem>>, vector<1x14xf32>,
    %232 = vector.extract_strided_slice %225 {offsets = [3, 0], sizes = [1, 14], strides = [1, 1]} : vector<14x14xf32> to vector<1x14xf32>
    %c3_226 = arith.constant 3 : index
    %c42_227 = arith.constant 42 : index
    %233 = vector.load %arg16[%c3_226, %c42_227] : memref<6x196xf32, #tpu.memory_space<vmem>>, vector<1x14xf32>
    tpu.vector_store %arg16[%c3_226, %c42_227], %232 {strides = array<i32>} : memref<6x196xf32, #tpu.memory_space<vmem>>, vector<1x14xf32>,
    %234 = vector.extract_strided_slice %225 {offsets = [4, 0], sizes = [1, 14], strides = [1, 1]} : vector<14x14xf32> to vector<1x14xf32>
    %c3_228 = arith.constant 3 : index
    %c56_229 = arith.constant 56 : index
    %235 = vector.load %arg16[%c3_228, %c56_229] : memref<6x196xf32, #tpu.memory_space<vmem>>, vector<1x14xf32>
    tpu.vector_store %arg16[%c3_228, %c56_229], %234 {strides = array<i32>} : memref<6x196xf32, #tpu.memory_space<vmem>>, vector<1x14xf32>,
    %236 = vector.extract_strided_slice %225 {offsets = [5, 0], sizes = [1, 14], strides = [1, 1]} : vector<14x14xf32> to vector<1x14xf32>
    %c3_230 = arith.constant 3 : index
    %c70_231 = arith.constant 70 : index
    %237 = vector.load %arg16[%c3_230, %c70_231] : memref<6x196xf32, #tpu.memory_space<vmem>>, vector<1x14xf32>
    tpu.vector_store %arg16[%c3_230, %c70_231], %236 {strides = array<i32>} : memref<6x196xf32, #tpu.memory_space<vmem>>, vector<1x14xf32>,
    %238 = vector.extract_strided_slice %225 {offsets = [6, 0], sizes = [1, 14], strides = [1, 1]} : vector<14x14xf32> to vector<1x14xf32>
    %c3_232 = arith.constant 3 : index
    %c84_233 = arith.constant 84 : index
    %239 = vector.load %arg16[%c3_232, %c84_233] : memref<6x196xf32, #tpu.memory_space<vmem>>, vector<1x14xf32>
    tpu.vector_store %arg16[%c3_232, %c84_233], %238 {strides = array<i32>} : memref<6x196xf32, #tpu.memory_space<vmem>>, vector<1x14xf32>,
    %240 = vector.extract_strided_slice %225 {offsets = [7, 0], sizes = [1, 14], strides = [1, 1]} : vector<14x14xf32> to vector<1x14xf32>
    %c3_234 = arith.constant 3 : index
    %c98_235 = arith.constant 98 : index
    %241 = vector.load %arg16[%c3_234, %c98_235] : memref<6x196xf32, #tpu.memory_space<vmem>>, vector<1x14xf32>
    tpu.vector_store %arg16[%c3_234, %c98_235], %240 {strides = array<i32>} : memref<6x196xf32, #tpu.memory_space<vmem>>, vector<1x14xf32>,
    %242 = vector.extract_strided_slice %225 {offsets = [8, 0], sizes = [1, 14], strides = [1, 1]} : vector<14x14xf32> to vector<1x14xf32>
    %c3_236 = arith.constant 3 : index
    %c112_237 = arith.constant 112 : index
    %243 = vector.load %arg16[%c3_236, %c112_237] : memref<6x196xf32, #tpu.memory_space<vmem>>, vector<1x14xf32>
    tpu.vector_store %arg16[%c3_236, %c112_237], %242 {strides = array<i32>} : memref<6x196xf32, #tpu.memory_space<vmem>>, vector<1x14xf32>,
    %244 = vector.extract_strided_slice %225 {offsets = [9, 0], sizes = [1, 14], strides = [1, 1]} : vector<14x14xf32> to vector<1x14xf32>
    %c3_238 = arith.constant 3 : index
    %c126_239 = arith.constant 126 : index
    %245 = vector.load %arg16[%c3_238, %c126_239] : memref<6x196xf32, #tpu.memory_space<vmem>>, vector<1x14xf32>
    tpu.vector_store %arg16[%c3_238, %c126_239], %244 {strides = array<i32>} : memref<6x196xf32, #tpu.memory_space<vmem>>, vector<1x14xf32>,
    %246 = vector.extract_strided_slice %225 {offsets = [10, 0], sizes = [1, 14], strides = [1, 1]} : vector<14x14xf32> to vector<1x14xf32>
    %c3_240 = arith.constant 3 : index
    %c140_241 = arith.constant 140 : index
    %247 = vector.load %arg16[%c3_240, %c140_241] : memref<6x196xf32, #tpu.memory_space<vmem>>, vector<1x14xf32>
    tpu.vector_store %arg16[%c3_240, %c140_241], %246 {strides = array<i32>} : memref<6x196xf32, #tpu.memory_space<vmem>>, vector<1x14xf32>,
    %248 = vector.extract_strided_slice %225 {offsets = [11, 0], sizes = [1, 14], strides = [1, 1]} : vector<14x14xf32> to vector<1x14xf32>
    %c3_242 = arith.constant 3 : index
    %c154_243 = arith.constant 154 : index
    %249 = vector.load %arg16[%c3_242, %c154_243] : memref<6x196xf32, #tpu.memory_space<vmem>>, vector<1x14xf32>
    tpu.vector_store %arg16[%c3_242, %c154_243], %248 {strides = array<i32>} : memref<6x196xf32, #tpu.memory_space<vmem>>, vector<1x14xf32>,
    %250 = vector.extract_strided_slice %225 {offsets = [12, 0], sizes = [1, 14], strides = [1, 1]} : vector<14x14xf32> to vector<1x14xf32>
    %c3_244 = arith.constant 3 : index
    %c168_245 = arith.constant 168 : index
    %251 = vector.load %arg16[%c3_244, %c168_245] : memref<6x196xf32, #tpu.memory_space<vmem>>, vector<1x14xf32>
    tpu.vector_store %arg16[%c3_244, %c168_245], %250 {strides = array<i32>} : memref<6x196xf32, #tpu.memory_space<vmem>>, vector<1x14xf32>,
    %252 = vector.extract_strided_slice %225 {offsets = [13, 0], sizes = [1, 14], strides = [1, 1]} : vector<14x14xf32> to vector<1x14xf32>
    %c3_246 = arith.constant 3 : index
    %c182_247 = arith.constant 182 : index
    %253 = vector.load %arg16[%c3_246, %c182_247] : memref<6x196xf32, #tpu.memory_space<vmem>>, vector<1x14xf32>
    tpu.vector_store %arg16[%c3_246, %c182_247], %252 {strides = array<i32>} : memref<6x196xf32, #tpu.memory_space<vmem>>, vector<1x14xf32>,
    %cst_248 = arith.constant 0.000000e+00 : f32
    %254 = vector.broadcast %cst_248 : f32 to vector<28x28xf32>
    %c4_249 = arith.constant 4 : index
    %c0_250 = arith.constant 0 : index
    %c0_251 = arith.constant 0 : index
    %c0_252 = arith.constant 0 : index
    %255 = vector.load %arg2[%c4_249, %c0_250, %c0_251, %c0_252] : memref<6x5x32x28xf32, #tpu.memory_space<vmem>>, vector<1x1x32x28xf32>
    %256 = vector.shape_cast %255 : vector<1x1x32x28xf32> to vector<32x28xf32>
    %cst_253 = arith.constant dense<0.000000e+00> : vector<28x28xf32>
    %257 = tpu.matmul %1, %256, %cst_253 {dimension_numbers = #tpu.dot_dimension_numbers<[1], [0], [0], [1], [0, 0, 1, 1], [], []>} : vector<28x32xf32>, vector<32x28xf32>, vector<28x28xf32> -> vector<28x28xf32>
    %258 = arith.addf %254, %257 : vector<28x28xf32>
    %c4_254 = arith.constant 4 : index
    %c1_255 = arith.constant 1 : index
    %c0_256 = arith.constant 0 : index
    %c0_257 = arith.constant 0 : index
    %259 = vector.load %arg2[%c4_254, %c1_255, %c0_256, %c0_257] : memref<6x5x32x28xf32, #tpu.memory_space<vmem>>, vector<1x1x32x28xf32>
    %260 = vector.shape_cast %259 : vector<1x1x32x28xf32> to vector<32x28xf32>
    %cst_258 = arith.constant dense<0.000000e+00> : vector<28x28xf32>
    %261 = tpu.matmul %3, %260, %cst_258 {dimension_numbers = #tpu.dot_dimension_numbers<[1], [0], [0], [1], [0, 0, 1, 1], [], []>} : vector<28x32xf32>, vector<32x28xf32>, vector<28x28xf32> -> vector<28x28xf32>
    %262 = arith.addf %258, %261 : vector<28x28xf32>
    %c4_259 = arith.constant 4 : index
    %c2_260 = arith.constant 2 : index
    %c0_261 = arith.constant 0 : index
    %c0_262 = arith.constant 0 : index
    %263 = vector.load %arg2[%c4_259, %c2_260, %c0_261, %c0_262] : memref<6x5x32x28xf32, #tpu.memory_space<vmem>>, vector<1x1x32x28xf32>
    %264 = vector.shape_cast %263 : vector<1x1x32x28xf32> to vector<32x28xf32>
    %cst_263 = arith.constant dense<0.000000e+00> : vector<28x28xf32>
    %265 = tpu.matmul %5, %264, %cst_263 {dimension_numbers = #tpu.dot_dimension_numbers<[1], [0], [0], [1], [0, 0, 1, 1], [], []>} : vector<28x32xf32>, vector<32x28xf32>, vector<28x28xf32> -> vector<28x28xf32>
    %266 = arith.addf %262, %265 : vector<28x28xf32>
    %c4_264 = arith.constant 4 : index
    %c3_265 = arith.constant 3 : index
    %c0_266 = arith.constant 0 : index
    %c0_267 = arith.constant 0 : index
    %267 = vector.load %arg2[%c4_264, %c3_265, %c0_266, %c0_267] : memref<6x5x32x28xf32, #tpu.memory_space<vmem>>, vector<1x1x32x28xf32>
    %268 = vector.shape_cast %267 : vector<1x1x32x28xf32> to vector<32x28xf32>
    %cst_268 = arith.constant dense<0.000000e+00> : vector<28x28xf32>
    %269 = tpu.matmul %7, %268, %cst_268 {dimension_numbers = #tpu.dot_dimension_numbers<[1], [0], [0], [1], [0, 0, 1, 1], [], []>} : vector<28x32xf32>, vector<32x28xf32>, vector<28x28xf32> -> vector<28x28xf32>
    %270 = arith.addf %266, %269 : vector<28x28xf32>
    %c4_269 = arith.constant 4 : index
    %c4_270 = arith.constant 4 : index
    %c0_271 = arith.constant 0 : index
    %c0_272 = arith.constant 0 : index
    %271 = vector.load %arg2[%c4_269, %c4_270, %c0_271, %c0_272] : memref<6x5x32x28xf32, #tpu.memory_space<vmem>>, vector<1x1x32x28xf32>
    %272 = vector.shape_cast %271 : vector<1x1x32x28xf32> to vector<32x28xf32>
    %cst_273 = arith.constant dense<0.000000e+00> : vector<28x28xf32>
    %273 = tpu.matmul %9, %272, %cst_273 {dimension_numbers = #tpu.dot_dimension_numbers<[1], [0], [0], [1], [0, 0, 1, 1], [], []>} : vector<28x32xf32>, vector<32x28xf32>, vector<28x28xf32> -> vector<28x28xf32>
    %274 = arith.addf %270, %273 : vector<28x28xf32>
    %c4_274 = arith.constant 4 : index
    %c0_275 = arith.constant 0 : index
    %275 = vector.load %arg3[%c4_274, %c0_275] : memref<6x1xf32, #tpu.memory_space<vmem>>, vector<1x1xf32>
    %276 = vector.broadcast %275 : vector<1x1xf32> to vector<28x28xf32>
    %277 = arith.addf %274, %276 : vector<28x28xf32>
    %278 = arith.negf %277 : vector<28x28xf32>
    %279 = math.exp %278 : vector<28x28xf32>
    %cst_276 = arith.constant 1.000000e+00 : f32
    %280 = vector.broadcast %cst_276 : f32 to vector<28x28xf32>
    %281 = arith.addf %280, %279 : vector<28x28xf32>
    %282 = arith.divf %280, %281 : vector<28x28xf32>
    %c0_277 = arith.constant 0 : index
    %c0_278 = arith.constant 0 : index
    %283 = vector.load %arg4[%c0_277, %c0_278] : memref<14x28xf32, #tpu.memory_space<vmem>>, vector<14x28xf32>
    %c0_279 = arith.constant 0 : index
    %c0_280 = arith.constant 0 : index
    %284 = vector.load %arg5[%c0_279, %c0_280] : memref<28x14xf32, #tpu.memory_space<vmem>>, vector<28x14xf32>
    %cst_281 = arith.constant dense<0.000000e+00> : vector<28x14xf32>
    %285 = tpu.matmul %282, %284, %cst_281 {dimension_numbers = #tpu.dot_dimension_numbers<[1], [0], [0], [1], [0, 0, 1, 1], [], []>} : vector<28x28xf32>, vector<28x14xf32>, vector<28x14xf32> -> vector<28x14xf32>
    %cst_282 = arith.constant dense<0.000000e+00> : vector<14x14xf32>
    %286 = tpu.matmul %283, %285, %cst_282 {dimension_numbers = #tpu.dot_dimension_numbers<[1], [0], [0], [1], [0, 0, 1, 1], [], []>} : vector<14x28xf32>, vector<28x14xf32>, vector<14x14xf32> -> vector<14x14xf32>
    %287 = vector.extract_strided_slice %286 {offsets = [0, 0], sizes = [1, 14], strides = [1, 1]} : vector<14x14xf32> to vector<1x14xf32>
    %c4_283 = arith.constant 4 : index
    %c0_284 = arith.constant 0 : index
    %288 = vector.load %arg16[%c4_283, %c0_284] : memref<6x196xf32, #tpu.memory_space<vmem>>, vector<1x14xf32>
    tpu.vector_store %arg16[%c4_283, %c0_284], %287 {strides = array<i32>} : memref<6x196xf32, #tpu.memory_space<vmem>>, vector<1x14xf32>,
    %289 = vector.extract_strided_slice %286 {offsets = [1, 0], sizes = [1, 14], strides = [1, 1]} : vector<14x14xf32> to vector<1x14xf32>
    %c4_285 = arith.constant 4 : index
    %c14_286 = arith.constant 14 : index
    %290 = vector.load %arg16[%c4_285, %c14_286] : memref<6x196xf32, #tpu.memory_space<vmem>>, vector<1x14xf32>
    tpu.vector_store %arg16[%c4_285, %c14_286], %289 {strides = array<i32>} : memref<6x196xf32, #tpu.memory_space<vmem>>, vector<1x14xf32>,
    %291 = vector.extract_strided_slice %286 {offsets = [2, 0], sizes = [1, 14], strides = [1, 1]} : vector<14x14xf32> to vector<1x14xf32>
    %c4_287 = arith.constant 4 : index
    %c28_288 = arith.constant 28 : index
    %292 = vector.load %arg16[%c4_287, %c28_288] : memref<6x196xf32, #tpu.memory_space<vmem>>, vector<1x14xf32>
    tpu.vector_store %arg16[%c4_287, %c28_288], %291 {strides = array<i32>} : memref<6x196xf32, #tpu.memory_space<vmem>>, vector<1x14xf32>,
    %293 = vector.extract_strided_slice %286 {offsets = [3, 0], sizes = [1, 14], strides = [1, 1]} : vector<14x14xf32> to vector<1x14xf32>
    %c4_289 = arith.constant 4 : index
    %c42_290 = arith.constant 42 : index
    %294 = vector.load %arg16[%c4_289, %c42_290] : memref<6x196xf32, #tpu.memory_space<vmem>>, vector<1x14xf32>
    tpu.vector_store %arg16[%c4_289, %c42_290], %293 {strides = array<i32>} : memref<6x196xf32, #tpu.memory_space<vmem>>, vector<1x14xf32>,
    %295 = vector.extract_strided_slice %286 {offsets = [4, 0], sizes = [1, 14], strides = [1, 1]} : vector<14x14xf32> to vector<1x14xf32>
    %c4_291 = arith.constant 4 : index
    %c56_292 = arith.constant 56 : index
    %296 = vector.load %arg16[%c4_291, %c56_292] : memref<6x196xf32, #tpu.memory_space<vmem>>, vector<1x14xf32>
    tpu.vector_store %arg16[%c4_291, %c56_292], %295 {strides = array<i32>} : memref<6x196xf32, #tpu.memory_space<vmem>>, vector<1x14xf32>,
    %297 = vector.extract_strided_slice %286 {offsets = [5, 0], sizes = [1, 14], strides = [1, 1]} : vector<14x14xf32> to vector<1x14xf32>
    %c4_293 = arith.constant 4 : index
    %c70_294 = arith.constant 70 : index
    %298 = vector.load %arg16[%c4_293, %c70_294] : memref<6x196xf32, #tpu.memory_space<vmem>>, vector<1x14xf32>
    tpu.vector_store %arg16[%c4_293, %c70_294], %297 {strides = array<i32>} : memref<6x196xf32, #tpu.memory_space<vmem>>, vector<1x14xf32>,
    %299 = vector.extract_strided_slice %286 {offsets = [6, 0], sizes = [1, 14], strides = [1, 1]} : vector<14x14xf32> to vector<1x14xf32>
    %c4_295 = arith.constant 4 : index
    %c84_296 = arith.constant 84 : index
    %300 = vector.load %arg16[%c4_295, %c84_296] : memref<6x196xf32, #tpu.memory_space<vmem>>, vector<1x14xf32>
    tpu.vector_store %arg16[%c4_295, %c84_296], %299 {strides = array<i32>} : memref<6x196xf32, #tpu.memory_space<vmem>>, vector<1x14xf32>,
    %301 = vector.extract_strided_slice %286 {offsets = [7, 0], sizes = [1, 14], strides = [1, 1]} : vector<14x14xf32> to vector<1x14xf32>
    %c4_297 = arith.constant 4 : index
    %c98_298 = arith.constant 98 : index
    %302 = vector.load %arg16[%c4_297, %c98_298] : memref<6x196xf32, #tpu.memory_space<vmem>>, vector<1x14xf32>
    tpu.vector_store %arg16[%c4_297, %c98_298], %301 {strides = array<i32>} : memref<6x196xf32, #tpu.memory_space<vmem>>, vector<1x14xf32>,
    %303 = vector.extract_strided_slice %286 {offsets = [8, 0], sizes = [1, 14], strides = [1, 1]} : vector<14x14xf32> to vector<1x14xf32>
    %c4_299 = arith.constant 4 : index
    %c112_300 = arith.constant 112 : index
    %304 = vector.load %arg16[%c4_299, %c112_300] : memref<6x196xf32, #tpu.memory_space<vmem>>, vector<1x14xf32>
    tpu.vector_store %arg16[%c4_299, %c112_300], %303 {strides = array<i32>} : memref<6x196xf32, #tpu.memory_space<vmem>>, vector<1x14xf32>,
    %305 = vector.extract_strided_slice %286 {offsets = [9, 0], sizes = [1, 14], strides = [1, 1]} : vector<14x14xf32> to vector<1x14xf32>
    %c4_301 = arith.constant 4 : index
    %c126_302 = arith.constant 126 : index
    %306 = vector.load %arg16[%c4_301, %c126_302] : memref<6x196xf32, #tpu.memory_space<vmem>>, vector<1x14xf32>
    tpu.vector_store %arg16[%c4_301, %c126_302], %305 {strides = array<i32>} : memref<6x196xf32, #tpu.memory_space<vmem>>, vector<1x14xf32>,
    %307 = vector.extract_strided_slice %286 {offsets = [10, 0], sizes = [1, 14], strides = [1, 1]} : vector<14x14xf32> to vector<1x14xf32>
    %c4_303 = arith.constant 4 : index
    %c140_304 = arith.constant 140 : index
    %308 = vector.load %arg16[%c4_303, %c140_304] : memref<6x196xf32, #tpu.memory_space<vmem>>, vector<1x14xf32>
    tpu.vector_store %arg16[%c4_303, %c140_304], %307 {strides = array<i32>} : memref<6x196xf32, #tpu.memory_space<vmem>>, vector<1x14xf32>,
    %309 = vector.extract_strided_slice %286 {offsets = [11, 0], sizes = [1, 14], strides = [1, 1]} : vector<14x14xf32> to vector<1x14xf32>
    %c4_305 = arith.constant 4 : index
    %c154_306 = arith.constant 154 : index
    %310 = vector.load %arg16[%c4_305, %c154_306] : memref<6x196xf32, #tpu.memory_space<vmem>>, vector<1x14xf32>
    tpu.vector_store %arg16[%c4_305, %c154_306], %309 {strides = array<i32>} : memref<6x196xf32, #tpu.memory_space<vmem>>, vector<1x14xf32>,
    %311 = vector.extract_strided_slice %286 {offsets = [12, 0], sizes = [1, 14], strides = [1, 1]} : vector<14x14xf32> to vector<1x14xf32>
    %c4_307 = arith.constant 4 : index
    %c168_308 = arith.constant 168 : index
    %312 = vector.load %arg16[%c4_307, %c168_308] : memref<6x196xf32, #tpu.memory_space<vmem>>, vector<1x14xf32>
    tpu.vector_store %arg16[%c4_307, %c168_308], %311 {strides = array<i32>} : memref<6x196xf32, #tpu.memory_space<vmem>>, vector<1x14xf32>,
    %313 = vector.extract_strided_slice %286 {offsets = [13, 0], sizes = [1, 14], strides = [1, 1]} : vector<14x14xf32> to vector<1x14xf32>
    %c4_309 = arith.constant 4 : index
    %c182_310 = arith.constant 182 : index
    %314 = vector.load %arg16[%c4_309, %c182_310] : memref<6x196xf32, #tpu.memory_space<vmem>>, vector<1x14xf32>
    tpu.vector_store %arg16[%c4_309, %c182_310], %313 {strides = array<i32>} : memref<6x196xf32, #tpu.memory_space<vmem>>, vector<1x14xf32>,
    %cst_311 = arith.constant 0.000000e+00 : f32
    %315 = vector.broadcast %cst_311 : f32 to vector<28x28xf32>
    %c5 = arith.constant 5 : index
    %c0_312 = arith.constant 0 : index
    %c0_313 = arith.constant 0 : index
    %c0_314 = arith.constant 0 : index
    %316 = vector.load %arg2[%c5, %c0_312, %c0_313, %c0_314] : memref<6x5x32x28xf32, #tpu.memory_space<vmem>>, vector<1x1x32x28xf32>
    %317 = vector.shape_cast %316 : vector<1x1x32x28xf32> to vector<32x28xf32>
    %cst_315 = arith.constant dense<0.000000e+00> : vector<28x28xf32>
    %318 = tpu.matmul %1, %317, %cst_315 {dimension_numbers = #tpu.dot_dimension_numbers<[1], [0], [0], [1], [0, 0, 1, 1], [], []>} : vector<28x32xf32>, vector<32x28xf32>, vector<28x28xf32> -> vector<28x28xf32>
    %319 = arith.addf %315, %318 : vector<28x28xf32>
    %c5_316 = arith.constant 5 : index
    %c1_317 = arith.constant 1 : index
    %c0_318 = arith.constant 0 : index
    %c0_319 = arith.constant 0 : index
    %320 = vector.load %arg2[%c5_316, %c1_317, %c0_318, %c0_319] : memref<6x5x32x28xf32, #tpu.memory_space<vmem>>, vector<1x1x32x28xf32>
    %321 = vector.shape_cast %320 : vector<1x1x32x28xf32> to vector<32x28xf32>
    %cst_320 = arith.constant dense<0.000000e+00> : vector<28x28xf32>
    %322 = tpu.matmul %3, %321, %cst_320 {dimension_numbers = #tpu.dot_dimension_numbers<[1], [0], [0], [1], [0, 0, 1, 1], [], []>} : vector<28x32xf32>, vector<32x28xf32>, vector<28x28xf32> -> vector<28x28xf32>
    %323 = arith.addf %319, %322 : vector<28x28xf32>
    %c5_321 = arith.constant 5 : index
    %c2_322 = arith.constant 2 : index
    %c0_323 = arith.constant 0 : index
    %c0_324 = arith.constant 0 : index
    %324 = vector.load %arg2[%c5_321, %c2_322, %c0_323, %c0_324] : memref<6x5x32x28xf32, #tpu.memory_space<vmem>>, vector<1x1x32x28xf32>
    %325 = vector.shape_cast %324 : vector<1x1x32x28xf32> to vector<32x28xf32>
    %cst_325 = arith.constant dense<0.000000e+00> : vector<28x28xf32>
    %326 = tpu.matmul %5, %325, %cst_325 {dimension_numbers = #tpu.dot_dimension_numbers<[1], [0], [0], [1], [0, 0, 1, 1], [], []>} : vector<28x32xf32>, vector<32x28xf32>, vector<28x28xf32> -> vector<28x28xf32>
    %327 = arith.addf %323, %326 : vector<28x28xf32>
    %c5_326 = arith.constant 5 : index
    %c3_327 = arith.constant 3 : index
    %c0_328 = arith.constant 0 : index
    %c0_329 = arith.constant 0 : index
    %328 = vector.load %arg2[%c5_326, %c3_327, %c0_328, %c0_329] : memref<6x5x32x28xf32, #tpu.memory_space<vmem>>, vector<1x1x32x28xf32>
    %329 = vector.shape_cast %328 : vector<1x1x32x28xf32> to vector<32x28xf32>
    %cst_330 = arith.constant dense<0.000000e+00> : vector<28x28xf32>
    %330 = tpu.matmul %7, %329, %cst_330 {dimension_numbers = #tpu.dot_dimension_numbers<[1], [0], [0], [1], [0, 0, 1, 1], [], []>} : vector<28x32xf32>, vector<32x28xf32>, vector<28x28xf32> -> vector<28x28xf32>
    %331 = arith.addf %327, %330 : vector<28x28xf32>
    %c5_331 = arith.constant 5 : index
    %c4_332 = arith.constant 4 : index
    %c0_333 = arith.constant 0 : index
    %c0_334 = arith.constant 0 : index
    %332 = vector.load %arg2[%c5_331, %c4_332, %c0_333, %c0_334] : memref<6x5x32x28xf32, #tpu.memory_space<vmem>>, vector<1x1x32x28xf32>
    %333 = vector.shape_cast %332 : vector<1x1x32x28xf32> to vector<32x28xf32>
    %cst_335 = arith.constant dense<0.000000e+00> : vector<28x28xf32>
    %334 = tpu.matmul %9, %333, %cst_335 {dimension_numbers = #tpu.dot_dimension_numbers<[1], [0], [0], [1], [0, 0, 1, 1], [], []>} : vector<28x32xf32>, vector<32x28xf32>, vector<28x28xf32> -> vector<28x28xf32>
    %335 = arith.addf %331, %334 : vector<28x28xf32>
    %c5_336 = arith.constant 5 : index
    %c0_337 = arith.constant 0 : index
    %336 = vector.load %arg3[%c5_336, %c0_337] : memref<6x1xf32, #tpu.memory_space<vmem>>, vector<1x1xf32>
    %337 = vector.broadcast %336 : vector<1x1xf32> to vector<28x28xf32>
    %338 = arith.addf %335, %337 : vector<28x28xf32>
    %339 = arith.negf %338 : vector<28x28xf32>
    %340 = math.exp %339 : vector<28x28xf32>
    %cst_338 = arith.constant 1.000000e+00 : f32
    %341 = vector.broadcast %cst_338 : f32 to vector<28x28xf32>
    %342 = arith.addf %341, %340 : vector<28x28xf32>
    %343 = arith.divf %341, %342 : vector<28x28xf32>
    %c0_339 = arith.constant 0 : index
    %c0_340 = arith.constant 0 : index
    %344 = vector.load %arg4[%c0_339, %c0_340] : memref<14x28xf32, #tpu.memory_space<vmem>>, vector<14x28xf32>
    %c0_341 = arith.constant 0 : index
    %c0_342 = arith.constant 0 : index
    %345 = vector.load %arg5[%c0_341, %c0_342] : memref<28x14xf32, #tpu.memory_space<vmem>>, vector<28x14xf32>
    %cst_343 = arith.constant dense<0.000000e+00> : vector<28x14xf32>
    %346 = tpu.matmul %343, %345, %cst_343 {dimension_numbers = #tpu.dot_dimension_numbers<[1], [0], [0], [1], [0, 0, 1, 1], [], []>} : vector<28x28xf32>, vector<28x14xf32>, vector<28x14xf32> -> vector<28x14xf32>
    %cst_344 = arith.constant dense<0.000000e+00> : vector<14x14xf32>
    %347 = tpu.matmul %344, %346, %cst_344 {dimension_numbers = #tpu.dot_dimension_numbers<[1], [0], [0], [1], [0, 0, 1, 1], [], []>} : vector<14x28xf32>, vector<28x14xf32>, vector<14x14xf32> -> vector<14x14xf32>
    %348 = vector.extract_strided_slice %347 {offsets = [0, 0], sizes = [1, 14], strides = [1, 1]} : vector<14x14xf32> to vector<1x14xf32>
    %c5_345 = arith.constant 5 : index
    %c0_346 = arith.constant 0 : index
    %349 = vector.load %arg16[%c5_345, %c0_346] : memref<6x196xf32, #tpu.memory_space<vmem>>, vector<1x14xf32>
    tpu.vector_store %arg16[%c5_345, %c0_346], %348 {strides = array<i32>} : memref<6x196xf32, #tpu.memory_space<vmem>>, vector<1x14xf32>,
    %350 = vector.extract_strided_slice %347 {offsets = [1, 0], sizes = [1, 14], strides = [1, 1]} : vector<14x14xf32> to vector<1x14xf32>
    %c5_347 = arith.constant 5 : index
    %c14_348 = arith.constant 14 : index
    %351 = vector.load %arg16[%c5_347, %c14_348] : memref<6x196xf32, #tpu.memory_space<vmem>>, vector<1x14xf32>
    tpu.vector_store %arg16[%c5_347, %c14_348], %350 {strides = array<i32>} : memref<6x196xf32, #tpu.memory_space<vmem>>, vector<1x14xf32>,
    %352 = vector.extract_strided_slice %347 {offsets = [2, 0], sizes = [1, 14], strides = [1, 1]} : vector<14x14xf32> to vector<1x14xf32>
    %c5_349 = arith.constant 5 : index
    %c28_350 = arith.constant 28 : index
    %353 = vector.load %arg16[%c5_349, %c28_350] : memref<6x196xf32, #tpu.memory_space<vmem>>, vector<1x14xf32>
    tpu.vector_store %arg16[%c5_349, %c28_350], %352 {strides = array<i32>} : memref<6x196xf32, #tpu.memory_space<vmem>>, vector<1x14xf32>,
    %354 = vector.extract_strided_slice %347 {offsets = [3, 0], sizes = [1, 14], strides = [1, 1]} : vector<14x14xf32> to vector<1x14xf32>
    %c5_351 = arith.constant 5 : index
    %c42_352 = arith.constant 42 : index
    %355 = vector.load %arg16[%c5_351, %c42_352] : memref<6x196xf32, #tpu.memory_space<vmem>>, vector<1x14xf32>
    tpu.vector_store %arg16[%c5_351, %c42_352], %354 {strides = array<i32>} : memref<6x196xf32, #tpu.memory_space<vmem>>, vector<1x14xf32>,
    %356 = vector.extract_strided_slice %347 {offsets = [4, 0], sizes = [1, 14], strides = [1, 1]} : vector<14x14xf32> to vector<1x14xf32>
    %c5_353 = arith.constant 5 : index
    %c56_354 = arith.constant 56 : index
    %357 = vector.load %arg16[%c5_353, %c56_354] : memref<6x196xf32, #tpu.memory_space<vmem>>, vector<1x14xf32>
    tpu.vector_store %arg16[%c5_353, %c56_354], %356 {strides = array<i32>} : memref<6x196xf32, #tpu.memory_space<vmem>>, vector<1x14xf32>,
    %358 = vector.extract_strided_slice %347 {offsets = [5, 0], sizes = [1, 14], strides = [1, 1]} : vector<14x14xf32> to vector<1x14xf32>
    %c5_355 = arith.constant 5 : index
    %c70_356 = arith.constant 70 : index
    %359 = vector.load %arg16[%c5_355, %c70_356] : memref<6x196xf32, #tpu.memory_space<vmem>>, vector<1x14xf32>
    tpu.vector_store %arg16[%c5_355, %c70_356], %358 {strides = array<i32>} : memref<6x196xf32, #tpu.memory_space<vmem>>, vector<1x14xf32>,
    %360 = vector.extract_strided_slice %347 {offsets = [6, 0], sizes = [1, 14], strides = [1, 1]} : vector<14x14xf32> to vector<1x14xf32>
    %c5_357 = arith.constant 5 : index
    %c84_358 = arith.constant 84 : index
    %361 = vector.load %arg16[%c5_357, %c84_358] : memref<6x196xf32, #tpu.memory_space<vmem>>, vector<1x14xf32>
    tpu.vector_store %arg16[%c5_357, %c84_358], %360 {strides = array<i32>} : memref<6x196xf32, #tpu.memory_space<vmem>>, vector<1x14xf32>,
    %362 = vector.extract_strided_slice %347 {offsets = [7, 0], sizes = [1, 14], strides = [1, 1]} : vector<14x14xf32> to vector<1x14xf32>
    %c5_359 = arith.constant 5 : index
    %c98_360 = arith.constant 98 : index
    %363 = vector.load %arg16[%c5_359, %c98_360] : memref<6x196xf32, #tpu.memory_space<vmem>>, vector<1x14xf32>
    tpu.vector_store %arg16[%c5_359, %c98_360], %362 {strides = array<i32>} : memref<6x196xf32, #tpu.memory_space<vmem>>, vector<1x14xf32>,
    %364 = vector.extract_strided_slice %347 {offsets = [8, 0], sizes = [1, 14], strides = [1, 1]} : vector<14x14xf32> to vector<1x14xf32>
    %c5_361 = arith.constant 5 : index
    %c112_362 = arith.constant 112 : index
    %365 = vector.load %arg16[%c5_361, %c112_362] : memref<6x196xf32, #tpu.memory_space<vmem>>, vector<1x14xf32>
    tpu.vector_store %arg16[%c5_361, %c112_362], %364 {strides = array<i32>} : memref<6x196xf32, #tpu.memory_space<vmem>>, vector<1x14xf32>,
    %366 = vector.extract_strided_slice %347 {offsets = [9, 0], sizes = [1, 14], strides = [1, 1]} : vector<14x14xf32> to vector<1x14xf32>
    %c5_363 = arith.constant 5 : index
    %c126_364 = arith.constant 126 : index
    %367 = vector.load %arg16[%c5_363, %c126_364] : memref<6x196xf32, #tpu.memory_space<vmem>>, vector<1x14xf32>
    tpu.vector_store %arg16[%c5_363, %c126_364], %366 {strides = array<i32>} : memref<6x196xf32, #tpu.memory_space<vmem>>, vector<1x14xf32>,
    %368 = vector.extract_strided_slice %347 {offsets = [10, 0], sizes = [1, 14], strides = [1, 1]} : vector<14x14xf32> to vector<1x14xf32>
    %c5_365 = arith.constant 5 : index
    %c140_366 = arith.constant 140 : index
    %369 = vector.load %arg16[%c5_365, %c140_366] : memref<6x196xf32, #tpu.memory_space<vmem>>, vector<1x14xf32>
    tpu.vector_store %arg16[%c5_365, %c140_366], %368 {strides = array<i32>} : memref<6x196xf32, #tpu.memory_space<vmem>>, vector<1x14xf32>,
    %370 = vector.extract_strided_slice %347 {offsets = [11, 0], sizes = [1, 14], strides = [1, 1]} : vector<14x14xf32> to vector<1x14xf32>
    %c5_367 = arith.constant 5 : index
    %c154_368 = arith.constant 154 : index
    %371 = vector.load %arg16[%c5_367, %c154_368] : memref<6x196xf32, #tpu.memory_space<vmem>>, vector<1x14xf32>
    tpu.vector_store %arg16[%c5_367, %c154_368], %370 {strides = array<i32>} : memref<6x196xf32, #tpu.memory_space<vmem>>, vector<1x14xf32>,
    %372 = vector.extract_strided_slice %347 {offsets = [12, 0], sizes = [1, 14], strides = [1, 1]} : vector<14x14xf32> to vector<1x14xf32>
    %c5_369 = arith.constant 5 : index
    %c168_370 = arith.constant 168 : index
    %373 = vector.load %arg16[%c5_369, %c168_370] : memref<6x196xf32, #tpu.memory_space<vmem>>, vector<1x14xf32>
    tpu.vector_store %arg16[%c5_369, %c168_370], %372 {strides = array<i32>} : memref<6x196xf32, #tpu.memory_space<vmem>>, vector<1x14xf32>,
    %374 = vector.extract_strided_slice %347 {offsets = [13, 0], sizes = [1, 14], strides = [1, 1]} : vector<14x14xf32> to vector<1x14xf32>
    %c5_371 = arith.constant 5 : index
    %c182_372 = arith.constant 182 : index
    %375 = vector.load %arg16[%c5_371, %c182_372] : memref<6x196xf32, #tpu.memory_space<vmem>>, vector<1x14xf32>
    tpu.vector_store %arg16[%c5_371, %c182_372], %374 {strides = array<i32>} : memref<6x196xf32, #tpu.memory_space<vmem>>, vector<1x14xf32>,
    %c0_373 = arith.constant 0 : index
    %c0_374 = arith.constant 0 : index
    %376 = vector.load %arg16[%c0_373, %c0_374] : memref<6x196xf32, #tpu.memory_space<vmem>>, vector<6x10xf32>
    %c0_375 = arith.constant 0 : index
    %c1_376 = arith.constant 1 : index
    %377 = vector.load %arg16[%c0_375, %c1_376] : memref<6x196xf32, #tpu.memory_space<vmem>>, vector<6x10xf32>
    %c0_377 = arith.constant 0 : index
    %c2_378 = arith.constant 2 : index
    %378 = vector.load %arg16[%c0_377, %c2_378] : memref<6x196xf32, #tpu.memory_space<vmem>>, vector<6x10xf32>
    %c0_379 = arith.constant 0 : index
    %c3_380 = arith.constant 3 : index
    %379 = vector.load %arg16[%c0_379, %c3_380] : memref<6x196xf32, #tpu.memory_space<vmem>>, vector<6x10xf32>
    %c0_381 = arith.constant 0 : index
    %c4_382 = arith.constant 4 : index
    %380 = vector.load %arg16[%c0_381, %c4_382] : memref<6x196xf32, #tpu.memory_space<vmem>>, vector<6x10xf32>
    %c0_383 = arith.constant 0 : index
    %c14_384 = arith.constant 14 : index
    %381 = vector.load %arg16[%c0_383, %c14_384] : memref<6x196xf32, #tpu.memory_space<vmem>>, vector<6x10xf32>
    %c0_385 = arith.constant 0 : index
    %c15 = arith.constant 15 : index
    %382 = vector.load %arg16[%c0_385, %c15] : memref<6x196xf32, #tpu.memory_space<vmem>>, vector<6x10xf32>
    %c0_386 = arith.constant 0 : index
    %c16 = arith.constant 16 : index
    %383 = vector.load %arg16[%c0_386, %c16] : memref<6x196xf32, #tpu.memory_space<vmem>>, vector<6x10xf32>
    %c0_387 = arith.constant 0 : index
    %c17 = arith.constant 17 : index
    %384 = vector.load %arg16[%c0_387, %c17] : memref<6x196xf32, #tpu.memory_space<vmem>>, vector<6x10xf32>
    %c0_388 = arith.constant 0 : index
    %c18 = arith.constant 18 : index
    %385 = vector.load %arg16[%c0_388, %c18] : memref<6x196xf32, #tpu.memory_space<vmem>>, vector<6x10xf32>
    %c0_389 = arith.constant 0 : index
    %c28_390 = arith.constant 28 : index
    %386 = vector.load %arg16[%c0_389, %c28_390] : memref<6x196xf32, #tpu.memory_space<vmem>>, vector<6x10xf32>
    %c0_391 = arith.constant 0 : index
    %c29 = arith.constant 29 : index
    %387 = vector.load %arg16[%c0_391, %c29] : memref<6x196xf32, #tpu.memory_space<vmem>>, vector<6x10xf32>
    %c0_392 = arith.constant 0 : index
    %c30 = arith.constant 30 : index
    %388 = vector.load %arg16[%c0_392, %c30] : memref<6x196xf32, #tpu.memory_space<vmem>>, vector<6x10xf32>
    %c0_393 = arith.constant 0 : index
    %c31 = arith.constant 31 : index
    %389 = vector.load %arg16[%c0_393, %c31] : memref<6x196xf32, #tpu.memory_space<vmem>>, vector<6x10xf32>
    %c0_394 = arith.constant 0 : index
    %c32 = arith.constant 32 : index
    %390 = vector.load %arg16[%c0_394, %c32] : memref<6x196xf32, #tpu.memory_space<vmem>>, vector<6x10xf32>
    %c0_395 = arith.constant 0 : index
    %c42_396 = arith.constant 42 : index
    %391 = vector.load %arg16[%c0_395, %c42_396] : memref<6x196xf32, #tpu.memory_space<vmem>>, vector<6x10xf32>
    %c0_397 = arith.constant 0 : index
    %c43 = arith.constant 43 : index
    %392 = vector.load %arg16[%c0_397, %c43] : memref<6x196xf32, #tpu.memory_space<vmem>>, vector<6x10xf32>
    %c0_398 = arith.constant 0 : index
    %c44 = arith.constant 44 : index
    %393 = vector.load %arg16[%c0_398, %c44] : memref<6x196xf32, #tpu.memory_space<vmem>>, vector<6x10xf32>
    %c0_399 = arith.constant 0 : index
    %c45 = arith.constant 45 : index
    %394 = vector.load %arg16[%c0_399, %c45] : memref<6x196xf32, #tpu.memory_space<vmem>>, vector<6x10xf32>
    %c0_400 = arith.constant 0 : index
    %c46 = arith.constant 46 : index
    %395 = vector.load %arg16[%c0_400, %c46] : memref<6x196xf32, #tpu.memory_space<vmem>>, vector<6x10xf32>
    %c0_401 = arith.constant 0 : index
    %c56_402 = arith.constant 56 : index
    %396 = vector.load %arg16[%c0_401, %c56_402] : memref<6x196xf32, #tpu.memory_space<vmem>>, vector<6x10xf32>
    %c0_403 = arith.constant 0 : index
    %c57 = arith.constant 57 : index
    %397 = vector.load %arg16[%c0_403, %c57] : memref<6x196xf32, #tpu.memory_space<vmem>>, vector<6x10xf32>
    %c0_404 = arith.constant 0 : index
    %c58 = arith.constant 58 : index
    %398 = vector.load %arg16[%c0_404, %c58] : memref<6x196xf32, #tpu.memory_space<vmem>>, vector<6x10xf32>
    %c0_405 = arith.constant 0 : index
    %c59 = arith.constant 59 : index
    %399 = vector.load %arg16[%c0_405, %c59] : memref<6x196xf32, #tpu.memory_space<vmem>>, vector<6x10xf32>
    %c0_406 = arith.constant 0 : index
    %c60 = arith.constant 60 : index
    %400 = vector.load %arg16[%c0_406, %c60] : memref<6x196xf32, #tpu.memory_space<vmem>>, vector<6x10xf32>
    %401 = tpu.concatenate %376, %377, %378, %379, %380, %381, %382, %383, %384, %385, %386, %387, %388, %389, %390, %391 in 0 : vector<6x10xf32>, vector<6x10xf32>, vector<6x10xf32>, vector<6x10xf32>, vector<6x10xf32>, vector<6x10xf32>, vector<6x10xf32>, vector<6x10xf32>, vector<6x10xf32>, vector<6x10xf32>, vector<6x10xf32>, vector<6x10xf32>, vector<6x10xf32>, vector<6x10xf32>, vector<6x10xf32>, vector<6x10xf32> -> vector<96x10xf32>
    %402 = tpu.concatenate %392, %393, %394, %395, %396, %397, %398, %399, %400 in 0 : vector<6x10xf32>, vector<6x10xf32>, vector<6x10xf32>, vector<6x10xf32>, vector<6x10xf32>, vector<6x10xf32>, vector<6x10xf32>, vector<6x10xf32>, vector<6x10xf32> -> vector<54x10xf32>
    %403 = tpu.concatenate %401, %402 in 0 : vector<96x10xf32>, vector<54x10xf32> -> vector<150x10xf32>
    %c0_407 = arith.constant 0 : index
    %c0_408 = arith.constant 0 : index
    %404 = vector.load %arg6[%c0_407, %c0_408] : memref<16x150xf32, #tpu.memory_space<vmem>>, vector<16x150xf32>
    %cst_409 = arith.constant dense<0.000000e+00> : vector<16x10xf32>
    %405 = tpu.matmul %404, %403, %cst_409 {dimension_numbers = #tpu.dot_dimension_numbers<[1], [0], [0], [1], [0, 0, 1, 1], [], []>} : vector<16x150xf32>, vector<150x10xf32>, vector<16x10xf32> -> vector<16x10xf32>
    %c0_410 = arith.constant 0 : index
    %c0_411 = arith.constant 0 : index
    %406 = vector.load %arg7[%c0_410, %c0_411] : memref<16x1xf32, #tpu.memory_space<vmem>>, vector<16x1xf32>
    %407 = vector.broadcast %406 : vector<16x1xf32> to vector<16x10xf32>
    %408 = arith.addf %405, %407 : vector<16x10xf32>
    %409 = arith.negf %408 : vector<16x10xf32>
    %410 = math.exp %409 : vector<16x10xf32>
    %cst_412 = arith.constant 1.000000e+00 : f32
    %411 = vector.broadcast %cst_412 : f32 to vector<16x10xf32>
    %412 = arith.addf %411, %410 : vector<16x10xf32>
    %413 = arith.divf %411, %412 : vector<16x10xf32>
    %c0_413 = arith.constant 0 : index
    %c14_414 = arith.constant 14 : index
    %414 = vector.load %arg16[%c0_413, %c14_414] : memref<6x196xf32, #tpu.memory_space<vmem>>, vector<6x10xf32>
    %c0_415 = arith.constant 0 : index
    %c15_416 = arith.constant 15 : index
    %415 = vector.load %arg16[%c0_415, %c15_416] : memref<6x196xf32, #tpu.memory_space<vmem>>, vector<6x10xf32>
    %c0_417 = arith.constant 0 : index
    %c16_418 = arith.constant 16 : index
    %416 = vector.load %arg16[%c0_417, %c16_418] : memref<6x196xf32, #tpu.memory_space<vmem>>, vector<6x10xf32>
    %c0_419 = arith.constant 0 : index
    %c17_420 = arith.constant 17 : index
    %417 = vector.load %arg16[%c0_419, %c17_420] : memref<6x196xf32, #tpu.memory_space<vmem>>, vector<6x10xf32>
    %c0_421 = arith.constant 0 : index
    %c18_422 = arith.constant 18 : index
    %418 = vector.load %arg16[%c0_421, %c18_422] : memref<6x196xf32, #tpu.memory_space<vmem>>, vector<6x10xf32>
    %c0_423 = arith.constant 0 : index
    %c28_424 = arith.constant 28 : index
    %419 = vector.load %arg16[%c0_423, %c28_424] : memref<6x196xf32, #tpu.memory_space<vmem>>, vector<6x10xf32>
    %c0_425 = arith.constant 0 : index
    %c29_426 = arith.constant 29 : index
    %420 = vector.load %arg16[%c0_425, %c29_426] : memref<6x196xf32, #tpu.memory_space<vmem>>, vector<6x10xf32>
    %c0_427 = arith.constant 0 : index
    %c30_428 = arith.constant 30 : index
    %421 = vector.load %arg16[%c0_427, %c30_428] : memref<6x196xf32, #tpu.memory_space<vmem>>, vector<6x10xf32>
    %c0_429 = arith.constant 0 : index
    %c31_430 = arith.constant 31 : index
    %422 = vector.load %arg16[%c0_429, %c31_430] : memref<6x196xf32, #tpu.memory_space<vmem>>, vector<6x10xf32>
    %c0_431 = arith.constant 0 : index
    %c32_432 = arith.constant 32 : index
    %423 = vector.load %arg16[%c0_431, %c32_432] : memref<6x196xf32, #tpu.memory_space<vmem>>, vector<6x10xf32>
    %c0_433 = arith.constant 0 : index
    %c42_434 = arith.constant 42 : index
    %424 = vector.load %arg16[%c0_433, %c42_434] : memref<6x196xf32, #tpu.memory_space<vmem>>, vector<6x10xf32>
    %c0_435 = arith.constant 0 : index
    %c43_436 = arith.constant 43 : index
    %425 = vector.load %arg16[%c0_435, %c43_436] : memref<6x196xf32, #tpu.memory_space<vmem>>, vector<6x10xf32>
    %c0_437 = arith.constant 0 : index
    %c44_438 = arith.constant 44 : index
    %426 = vector.load %arg16[%c0_437, %c44_438] : memref<6x196xf32, #tpu.memory_space<vmem>>, vector<6x10xf32>
    %c0_439 = arith.constant 0 : index
    %c45_440 = arith.constant 45 : index
    %427 = vector.load %arg16[%c0_439, %c45_440] : memref<6x196xf32, #tpu.memory_space<vmem>>, vector<6x10xf32>
    %c0_441 = arith.constant 0 : index
    %c46_442 = arith.constant 46 : index
    %428 = vector.load %arg16[%c0_441, %c46_442] : memref<6x196xf32, #tpu.memory_space<vmem>>, vector<6x10xf32>
    %c0_443 = arith.constant 0 : index
    %c56_444 = arith.constant 56 : index
    %429 = vector.load %arg16[%c0_443, %c56_444] : memref<6x196xf32, #tpu.memory_space<vmem>>, vector<6x10xf32>
    %c0_445 = arith.constant 0 : index
    %c57_446 = arith.constant 57 : index
    %430 = vector.load %arg16[%c0_445, %c57_446] : memref<6x196xf32, #tpu.memory_space<vmem>>, vector<6x10xf32>
    %c0_447 = arith.constant 0 : index
    %c58_448 = arith.constant 58 : index
    %431 = vector.load %arg16[%c0_447, %c58_448] : memref<6x196xf32, #tpu.memory_space<vmem>>, vector<6x10xf32>
    %c0_449 = arith.constant 0 : index
    %c59_450 = arith.constant 59 : index
    %432 = vector.load %arg16[%c0_449, %c59_450] : memref<6x196xf32, #tpu.memory_space<vmem>>, vector<6x10xf32>
    %c0_451 = arith.constant 0 : index
    %c60_452 = arith.constant 60 : index
    %433 = vector.load %arg16[%c0_451, %c60_452] : memref<6x196xf32, #tpu.memory_space<vmem>>, vector<6x10xf32>
    %c0_453 = arith.constant 0 : index
    %c70_454 = arith.constant 70 : index
    %434 = vector.load %arg16[%c0_453, %c70_454] : memref<6x196xf32, #tpu.memory_space<vmem>>, vector<6x10xf32>
    %c0_455 = arith.constant 0 : index
    %c71 = arith.constant 71 : index
    %435 = vector.load %arg16[%c0_455, %c71] : memref<6x196xf32, #tpu.memory_space<vmem>>, vector<6x10xf32>
    %c0_456 = arith.constant 0 : index
    %c72 = arith.constant 72 : index
    %436 = vector.load %arg16[%c0_456, %c72] : memref<6x196xf32, #tpu.memory_space<vmem>>, vector<6x10xf32>
    %c0_457 = arith.constant 0 : index
    %c73 = arith.constant 73 : index
    %437 = vector.load %arg16[%c0_457, %c73] : memref<6x196xf32, #tpu.memory_space<vmem>>, vector<6x10xf32>
    %c0_458 = arith.constant 0 : index
    %c74 = arith.constant 74 : index
    %438 = vector.load %arg16[%c0_458, %c74] : memref<6x196xf32, #tpu.memory_space<vmem>>, vector<6x10xf32>
    %439 = tpu.concatenate %414, %415, %416, %417, %418, %419, %420, %421, %422, %423, %424, %425, %426, %427, %428, %429 in 0 : vector<6x10xf32>, vector<6x10xf32>, vector<6x10xf32>, vector<6x10xf32>, vector<6x10xf32>, vector<6x10xf32>, vector<6x10xf32>, vector<6x10xf32>, vector<6x10xf32>, vector<6x10xf32>, vector<6x10xf32>, vector<6x10xf32>, vector<6x10xf32>, vector<6x10xf32>, vector<6x10xf32>, vector<6x10xf32> -> vector<96x10xf32>
    %440 = tpu.concatenate %430, %431, %432, %433, %434, %435, %436, %437, %438 in 0 : vector<6x10xf32>, vector<6x10xf32>, vector<6x10xf32>, vector<6x10xf32>, vector<6x10xf32>, vector<6x10xf32>, vector<6x10xf32>, vector<6x10xf32>, vector<6x10xf32> -> vector<54x10xf32>
    %441 = tpu.concatenate %439, %440 in 0 : vector<96x10xf32>, vector<54x10xf32> -> vector<150x10xf32>
    %c0_459 = arith.constant 0 : index
    %c0_460 = arith.constant 0 : index
    %442 = vector.load %arg6[%c0_459, %c0_460] : memref<16x150xf32, #tpu.memory_space<vmem>>, vector<16x150xf32>
    %cst_461 = arith.constant dense<0.000000e+00> : vector<16x10xf32>
    %443 = tpu.matmul %442, %441, %cst_461 {dimension_numbers = #tpu.dot_dimension_numbers<[1], [0], [0], [1], [0, 0, 1, 1], [], []>} : vector<16x150xf32>, vector<150x10xf32>, vector<16x10xf32> -> vector<16x10xf32>
    %c0_462 = arith.constant 0 : index
    %c0_463 = arith.constant 0 : index
    %444 = vector.load %arg7[%c0_462, %c0_463] : memref<16x1xf32, #tpu.memory_space<vmem>>, vector<16x1xf32>
    %445 = vector.broadcast %444 : vector<16x1xf32> to vector<16x10xf32>
    %446 = arith.addf %443, %445 : vector<16x10xf32>
    %447 = arith.negf %446 : vector<16x10xf32>
    %448 = math.exp %447 : vector<16x10xf32>
    %cst_464 = arith.constant 1.000000e+00 : f32
    %449 = vector.broadcast %cst_464 : f32 to vector<16x10xf32>
    %450 = arith.addf %449, %448 : vector<16x10xf32>
    %451 = arith.divf %449, %450 : vector<16x10xf32>
    %452 = arith.addf %413, %451 : vector<16x10xf32>
    %c0_465 = arith.constant 0 : index
    %c0_466 = arith.constant 0 : index
    %453 = vector.load %arg8[%c0_465, %c0_466] : memref<10x5xf32, #tpu.memory_space<vmem>>, vector<10x5xf32>
    %cst_467 = arith.constant dense<0.000000e+00> : vector<16x5xf32>
    %454 = tpu.matmul %452, %453, %cst_467 {dimension_numbers = #tpu.dot_dimension_numbers<[1], [0], [0], [1], [0, 0, 1, 1], [], []>} : vector<16x10xf32>, vector<10x5xf32>, vector<16x5xf32> -> vector<16x5xf32>
    %c0_468 = arith.constant 0 : index
    %c0_469 = arith.constant 0 : index
    %455 = vector.load %arg17[%c0_468, %c0_469] : memref<16x25xf32, #tpu.memory_space<vmem>>, vector<16x5xf32>
    tpu.vector_store %arg17[%c0_468, %c0_469], %454 {strides = array<i32>} : memref<16x25xf32, #tpu.memory_space<vmem>>, vector<16x5xf32>,
    %c0_470 = arith.constant 0 : index
    %c28_471 = arith.constant 28 : index
    %456 = vector.load %arg16[%c0_470, %c28_471] : memref<6x196xf32, #tpu.memory_space<vmem>>, vector<6x10xf32>
    %c0_472 = arith.constant 0 : index
    %c29_473 = arith.constant 29 : index
    %457 = vector.load %arg16[%c0_472, %c29_473] : memref<6x196xf32, #tpu.memory_space<vmem>>, vector<6x10xf32>
    %c0_474 = arith.constant 0 : index
    %c30_475 = arith.constant 30 : index
    %458 = vector.load %arg16[%c0_474, %c30_475] : memref<6x196xf32, #tpu.memory_space<vmem>>, vector<6x10xf32>
    %c0_476 = arith.constant 0 : index
    %c31_477 = arith.constant 31 : index
    %459 = vector.load %arg16[%c0_476, %c31_477] : memref<6x196xf32, #tpu.memory_space<vmem>>, vector<6x10xf32>
    %c0_478 = arith.constant 0 : index
    %c32_479 = arith.constant 32 : index
    %460 = vector.load %arg16[%c0_478, %c32_479] : memref<6x196xf32, #tpu.memory_space<vmem>>, vector<6x10xf32>
    %c0_480 = arith.constant 0 : index
    %c42_481 = arith.constant 42 : index
    %461 = vector.load %arg16[%c0_480, %c42_481] : memref<6x196xf32, #tpu.memory_space<vmem>>, vector<6x10xf32>
    %c0_482 = arith.constant 0 : index
    %c43_483 = arith.constant 43 : index
    %462 = vector.load %arg16[%c0_482, %c43_483] : memref<6x196xf32, #tpu.memory_space<vmem>>, vector<6x10xf32>
    %c0_484 = arith.constant 0 : index
    %c44_485 = arith.constant 44 : index
    %463 = vector.load %arg16[%c0_484, %c44_485] : memref<6x196xf32, #tpu.memory_space<vmem>>, vector<6x10xf32>
    %c0_486 = arith.constant 0 : index
    %c45_487 = arith.constant 45 : index
    %464 = vector.load %arg16[%c0_486, %c45_487] : memref<6x196xf32, #tpu.memory_space<vmem>>, vector<6x10xf32>
    %c0_488 = arith.constant 0 : index
    %c46_489 = arith.constant 46 : index
    %465 = vector.load %arg16[%c0_488, %c46_489] : memref<6x196xf32, #tpu.memory_space<vmem>>, vector<6x10xf32>
    %c0_490 = arith.constant 0 : index
    %c56_491 = arith.constant 56 : index
    %466 = vector.load %arg16[%c0_490, %c56_491] : memref<6x196xf32, #tpu.memory_space<vmem>>, vector<6x10xf32>
    %c0_492 = arith.constant 0 : index
    %c57_493 = arith.constant 57 : index
    %467 = vector.load %arg16[%c0_492, %c57_493] : memref<6x196xf32, #tpu.memory_space<vmem>>, vector<6x10xf32>
    %c0_494 = arith.constant 0 : index
    %c58_495 = arith.constant 58 : index
    %468 = vector.load %arg16[%c0_494, %c58_495] : memref<6x196xf32, #tpu.memory_space<vmem>>, vector<6x10xf32>
    %c0_496 = arith.constant 0 : index
    %c59_497 = arith.constant 59 : index
    %469 = vector.load %arg16[%c0_496, %c59_497] : memref<6x196xf32, #tpu.memory_space<vmem>>, vector<6x10xf32>
    %c0_498 = arith.constant 0 : index
    %c60_499 = arith.constant 60 : index
    %470 = vector.load %arg16[%c0_498, %c60_499] : memref<6x196xf32, #tpu.memory_space<vmem>>, vector<6x10xf32>
    %c0_500 = arith.constant 0 : index
    %c70_501 = arith.constant 70 : index
    %471 = vector.load %arg16[%c0_500, %c70_501] : memref<6x196xf32, #tpu.memory_space<vmem>>, vector<6x10xf32>
    %c0_502 = arith.constant 0 : index
    %c71_503 = arith.constant 71 : index
    %472 = vector.load %arg16[%c0_502, %c71_503] : memref<6x196xf32, #tpu.memory_space<vmem>>, vector<6x10xf32>
    %c0_504 = arith.constant 0 : index
    %c72_505 = arith.constant 72 : index
    %473 = vector.load %arg16[%c0_504, %c72_505] : memref<6x196xf32, #tpu.memory_space<vmem>>, vector<6x10xf32>
    %c0_506 = arith.constant 0 : index
    %c73_507 = arith.constant 73 : index
    %474 = vector.load %arg16[%c0_506, %c73_507] : memref<6x196xf32, #tpu.memory_space<vmem>>, vector<6x10xf32>
    %c0_508 = arith.constant 0 : index
    %c74_509 = arith.constant 74 : index
    %475 = vector.load %arg16[%c0_508, %c74_509] : memref<6x196xf32, #tpu.memory_space<vmem>>, vector<6x10xf32>
    %c0_510 = arith.constant 0 : index
    %c84_511 = arith.constant 84 : index
    %476 = vector.load %arg16[%c0_510, %c84_511] : memref<6x196xf32, #tpu.memory_space<vmem>>, vector<6x10xf32>
    %c0_512 = arith.constant 0 : index
    %c85 = arith.constant 85 : index
    %477 = vector.load %arg16[%c0_512, %c85] : memref<6x196xf32, #tpu.memory_space<vmem>>, vector<6x10xf32>
    %c0_513 = arith.constant 0 : index
    %c86 = arith.constant 86 : index
    %478 = vector.load %arg16[%c0_513, %c86] : memref<6x196xf32, #tpu.memory_space<vmem>>, vector<6x10xf32>
    %c0_514 = arith.constant 0 : index
    %c87 = arith.constant 87 : index
    %479 = vector.load %arg16[%c0_514, %c87] : memref<6x196xf32, #tpu.memory_space<vmem>>, vector<6x10xf32>
    %c0_515 = arith.constant 0 : index
    %c88 = arith.constant 88 : index
    %480 = vector.load %arg16[%c0_515, %c88] : memref<6x196xf32, #tpu.memory_space<vmem>>, vector<6x10xf32>
    %481 = tpu.concatenate %456, %457, %458, %459, %460, %461, %462, %463, %464, %465, %466, %467, %468, %469, %470, %471 in 0 : vector<6x10xf32>, vector<6x10xf32>, vector<6x10xf32>, vector<6x10xf32>, vector<6x10xf32>, vector<6x10xf32>, vector<6x10xf32>, vector<6x10xf32>, vector<6x10xf32>, vector<6x10xf32>, vector<6x10xf32>, vector<6x10xf32>, vector<6x10xf32>, vector<6x10xf32>, vector<6x10xf32>, vector<6x10xf32> -> vector<96x10xf32>
    %482 = tpu.concatenate %472, %473, %474, %475, %476, %477, %478, %479, %480 in 0 : vector<6x10xf32>, vector<6x10xf32>, vector<6x10xf32>, vector<6x10xf32>, vector<6x10xf32>, vector<6x10xf32>, vector<6x10xf32>, vector<6x10xf32>, vector<6x10xf32> -> vector<54x10xf32>
    %483 = tpu.concatenate %481, %482 in 0 : vector<96x10xf32>, vector<54x10xf32> -> vector<150x10xf32>
    %c0_516 = arith.constant 0 : index
    %c0_517 = arith.constant 0 : index
    %484 = vector.load %arg6[%c0_516, %c0_517] : memref<16x150xf32, #tpu.memory_space<vmem>>, vector<16x150xf32>
    %cst_518 = arith.constant dense<0.000000e+00> : vector<16x10xf32>
    %485 = tpu.matmul %484, %483, %cst_518 {dimension_numbers = #tpu.dot_dimension_numbers<[1], [0], [0], [1], [0, 0, 1, 1], [], []>} : vector<16x150xf32>, vector<150x10xf32>, vector<16x10xf32> -> vector<16x10xf32>
    %c0_519 = arith.constant 0 : index
    %c0_520 = arith.constant 0 : index
    %486 = vector.load %arg7[%c0_519, %c0_520] : memref<16x1xf32, #tpu.memory_space<vmem>>, vector<16x1xf32>
    %487 = vector.broadcast %486 : vector<16x1xf32> to vector<16x10xf32>
    %488 = arith.addf %485, %487 : vector<16x10xf32>
    %489 = arith.negf %488 : vector<16x10xf32>
    %490 = math.exp %489 : vector<16x10xf32>
    %cst_521 = arith.constant 1.000000e+00 : f32
    %491 = vector.broadcast %cst_521 : f32 to vector<16x10xf32>
    %492 = arith.addf %491, %490 : vector<16x10xf32>
    %493 = arith.divf %491, %492 : vector<16x10xf32>
    %c0_522 = arith.constant 0 : index
    %c42_523 = arith.constant 42 : index
    %494 = vector.load %arg16[%c0_522, %c42_523] : memref<6x196xf32, #tpu.memory_space<vmem>>, vector<6x10xf32>
    %c0_524 = arith.constant 0 : index
    %c43_525 = arith.constant 43 : index
    %495 = vector.load %arg16[%c0_524, %c43_525] : memref<6x196xf32, #tpu.memory_space<vmem>>, vector<6x10xf32>
    %c0_526 = arith.constant 0 : index
    %c44_527 = arith.constant 44 : index
    %496 = vector.load %arg16[%c0_526, %c44_527] : memref<6x196xf32, #tpu.memory_space<vmem>>, vector<6x10xf32>
    %c0_528 = arith.constant 0 : index
    %c45_529 = arith.constant 45 : index
    %497 = vector.load %arg16[%c0_528, %c45_529] : memref<6x196xf32, #tpu.memory_space<vmem>>, vector<6x10xf32>
    %c0_530 = arith.constant 0 : index
    %c46_531 = arith.constant 46 : index
    %498 = vector.load %arg16[%c0_530, %c46_531] : memref<6x196xf32, #tpu.memory_space<vmem>>, vector<6x10xf32>
    %c0_532 = arith.constant 0 : index
    %c56_533 = arith.constant 56 : index
    %499 = vector.load %arg16[%c0_532, %c56_533] : memref<6x196xf32, #tpu.memory_space<vmem>>, vector<6x10xf32>
    %c0_534 = arith.constant 0 : index
    %c57_535 = arith.constant 57 : index
    %500 = vector.load %arg16[%c0_534, %c57_535] : memref<6x196xf32, #tpu.memory_space<vmem>>, vector<6x10xf32>
    %c0_536 = arith.constant 0 : index
    %c58_537 = arith.constant 58 : index
    %501 = vector.load %arg16[%c0_536, %c58_537] : memref<6x196xf32, #tpu.memory_space<vmem>>, vector<6x10xf32>
    %c0_538 = arith.constant 0 : index
    %c59_539 = arith.constant 59 : index
    %502 = vector.load %arg16[%c0_538, %c59_539] : memref<6x196xf32, #tpu.memory_space<vmem>>, vector<6x10xf32>
    %c0_540 = arith.constant 0 : index
    %c60_541 = arith.constant 60 : index
    %503 = vector.load %arg16[%c0_540, %c60_541] : memref<6x196xf32, #tpu.memory_space<vmem>>, vector<6x10xf32>
    %c0_542 = arith.constant 0 : index
    %c70_543 = arith.constant 70 : index
    %504 = vector.load %arg16[%c0_542, %c70_543] : memref<6x196xf32, #tpu.memory_space<vmem>>, vector<6x10xf32>
    %c0_544 = arith.constant 0 : index
    %c71_545 = arith.constant 71 : index
    %505 = vector.load %arg16[%c0_544, %c71_545] : memref<6x196xf32, #tpu.memory_space<vmem>>, vector<6x10xf32>
    %c0_546 = arith.constant 0 : index
    %c72_547 = arith.constant 72 : index
    %506 = vector.load %arg16[%c0_546, %c72_547] : memref<6x196xf32, #tpu.memory_space<vmem>>, vector<6x10xf32>
    %c0_548 = arith.constant 0 : index
    %c73_549 = arith.constant 73 : index
    %507 = vector.load %arg16[%c0_548, %c73_549] : memref<6x196xf32, #tpu.memory_space<vmem>>, vector<6x10xf32>
    %c0_550 = arith.constant 0 : index
    %c74_551 = arith.constant 74 : index
    %508 = vector.load %arg16[%c0_550, %c74_551] : memref<6x196xf32, #tpu.memory_space<vmem>>, vector<6x10xf32>
    %c0_552 = arith.constant 0 : index
    %c84_553 = arith.constant 84 : index
    %509 = vector.load %arg16[%c0_552, %c84_553] : memref<6x196xf32, #tpu.memory_space<vmem>>, vector<6x10xf32>
    %c0_554 = arith.constant 0 : index
    %c85_555 = arith.constant 85 : index
    %510 = vector.load %arg16[%c0_554, %c85_555] : memref<6x196xf32, #tpu.memory_space<vmem>>, vector<6x10xf32>
    %c0_556 = arith.constant 0 : index
    %c86_557 = arith.constant 86 : index
    %511 = vector.load %arg16[%c0_556, %c86_557] : memref<6x196xf32, #tpu.memory_space<vmem>>, vector<6x10xf32>
    %c0_558 = arith.constant 0 : index
    %c87_559 = arith.constant 87 : index
    %512 = vector.load %arg16[%c0_558, %c87_559] : memref<6x196xf32, #tpu.memory_space<vmem>>, vector<6x10xf32>
    %c0_560 = arith.constant 0 : index
    %c88_561 = arith.constant 88 : index
    %513 = vector.load %arg16[%c0_560, %c88_561] : memref<6x196xf32, #tpu.memory_space<vmem>>, vector<6x10xf32>
    %c0_562 = arith.constant 0 : index
    %c98_563 = arith.constant 98 : index
    %514 = vector.load %arg16[%c0_562, %c98_563] : memref<6x196xf32, #tpu.memory_space<vmem>>, vector<6x10xf32>
    %c0_564 = arith.constant 0 : index
    %c99 = arith.constant 99 : index
    %515 = vector.load %arg16[%c0_564, %c99] : memref<6x196xf32, #tpu.memory_space<vmem>>, vector<6x10xf32>
    %c0_565 = arith.constant 0 : index
    %c100 = arith.constant 100 : index
    %516 = vector.load %arg16[%c0_565, %c100] : memref<6x196xf32, #tpu.memory_space<vmem>>, vector<6x10xf32>
    %c0_566 = arith.constant 0 : index
    %c101 = arith.constant 101 : index
    %517 = vector.load %arg16[%c0_566, %c101] : memref<6x196xf32, #tpu.memory_space<vmem>>, vector<6x10xf32>
    %c0_567 = arith.constant 0 : index
    %c102 = arith.constant 102 : index
    %518 = vector.load %arg16[%c0_567, %c102] : memref<6x196xf32, #tpu.memory_space<vmem>>, vector<6x10xf32>
    %519 = tpu.concatenate %494, %495, %496, %497, %498, %499, %500, %501, %502, %503, %504, %505, %506, %507, %508, %509 in 0 : vector<6x10xf32>, vector<6x10xf32>, vector<6x10xf32>, vector<6x10xf32>, vector<6x10xf32>, vector<6x10xf32>, vector<6x10xf32>, vector<6x10xf32>, vector<6x10xf32>, vector<6x10xf32>, vector<6x10xf32>, vector<6x10xf32>, vector<6x10xf32>, vector<6x10xf32>, vector<6x10xf32>, vector<6x10xf32> -> vector<96x10xf32>
    %520 = tpu.concatenate %510, %511, %512, %513, %514, %515, %516, %517, %518 in 0 : vector<6x10xf32>, vector<6x10xf32>, vector<6x10xf32>, vector<6x10xf32>, vector<6x10xf32>, vector<6x10xf32>, vector<6x10xf32>, vector<6x10xf32>, vector<6x10xf32> -> vector<54x10xf32>
    %521 = tpu.concatenate %519, %520 in 0 : vector<96x10xf32>, vector<54x10xf32> -> vector<150x10xf32>
    %c0_568 = arith.constant 0 : index
    %c0_569 = arith.constant 0 : index
    %522 = vector.load %arg6[%c0_568, %c0_569] : memref<16x150xf32, #tpu.memory_space<vmem>>, vector<16x150xf32>
    %cst_570 = arith.constant dense<0.000000e+00> : vector<16x10xf32>
    %523 = tpu.matmul %522, %521, %cst_570 {dimension_numbers = #tpu.dot_dimension_numbers<[1], [0], [0], [1], [0, 0, 1, 1], [], []>} : vector<16x150xf32>, vector<150x10xf32>, vector<16x10xf32> -> vector<16x10xf32>
    %c0_571 = arith.constant 0 : index
    %c0_572 = arith.constant 0 : index
    %524 = vector.load %arg7[%c0_571, %c0_572] : memref<16x1xf32, #tpu.memory_space<vmem>>, vector<16x1xf32>
    %525 = vector.broadcast %524 : vector<16x1xf32> to vector<16x10xf32>
    %526 = arith.addf %523, %525 : vector<16x10xf32>
    %527 = arith.negf %526 : vector<16x10xf32>
    %528 = math.exp %527 : vector<16x10xf32>
    %cst_573 = arith.constant 1.000000e+00 : f32
    %529 = vector.broadcast %cst_573 : f32 to vector<16x10xf32>
    %530 = arith.addf %529, %528 : vector<16x10xf32>
    %531 = arith.divf %529, %530 : vector<16x10xf32>
    %532 = arith.addf %493, %531 : vector<16x10xf32>
    %c0_574 = arith.constant 0 : index
    %c0_575 = arith.constant 0 : index
    %533 = vector.load %arg8[%c0_574, %c0_575] : memref<10x5xf32, #tpu.memory_space<vmem>>, vector<10x5xf32>
    %cst_576 = arith.constant dense<0.000000e+00> : vector<16x5xf32>
    %534 = tpu.matmul %532, %533, %cst_576 {dimension_numbers = #tpu.dot_dimension_numbers<[1], [0], [0], [1], [0, 0, 1, 1], [], []>} : vector<16x10xf32>, vector<10x5xf32>, vector<16x5xf32> -> vector<16x5xf32>
    %c0_577 = arith.constant 0 : index
    %c5_578 = arith.constant 5 : index
    %535 = vector.load %arg17[%c0_577, %c5_578] : memref<16x25xf32, #tpu.memory_space<vmem>>, vector<16x5xf32>
    tpu.vector_store %arg17[%c0_577, %c5_578], %534 {strides = array<i32>} : memref<16x25xf32, #tpu.memory_space<vmem>>, vector<16x5xf32>,
    %c0_579 = arith.constant 0 : index
    %c56_580 = arith.constant 56 : index
    %536 = vector.load %arg16[%c0_579, %c56_580] : memref<6x196xf32, #tpu.memory_space<vmem>>, vector<6x10xf32>
    %c0_581 = arith.constant 0 : index
    %c57_582 = arith.constant 57 : index
    %537 = vector.load %arg16[%c0_581, %c57_582] : memref<6x196xf32, #tpu.memory_space<vmem>>, vector<6x10xf32>
    %c0_583 = arith.constant 0 : index
    %c58_584 = arith.constant 58 : index
    %538 = vector.load %arg16[%c0_583, %c58_584] : memref<6x196xf32, #tpu.memory_space<vmem>>, vector<6x10xf32>
    %c0_585 = arith.constant 0 : index
    %c59_586 = arith.constant 59 : index
    %539 = vector.load %arg16[%c0_585, %c59_586] : memref<6x196xf32, #tpu.memory_space<vmem>>, vector<6x10xf32>
    %c0_587 = arith.constant 0 : index
    %c60_588 = arith.constant 60 : index
    %540 = vector.load %arg16[%c0_587, %c60_588] : memref<6x196xf32, #tpu.memory_space<vmem>>, vector<6x10xf32>
    %c0_589 = arith.constant 0 : index
    %c70_590 = arith.constant 70 : index
    %541 = vector.load %arg16[%c0_589, %c70_590] : memref<6x196xf32, #tpu.memory_space<vmem>>, vector<6x10xf32>
    %c0_591 = arith.constant 0 : index
    %c71_592 = arith.constant 71 : index
    %542 = vector.load %arg16[%c0_591, %c71_592] : memref<6x196xf32, #tpu.memory_space<vmem>>, vector<6x10xf32>
    %c0_593 = arith.constant 0 : index
    %c72_594 = arith.constant 72 : index
    %543 = vector.load %arg16[%c0_593, %c72_594] : memref<6x196xf32, #tpu.memory_space<vmem>>, vector<6x10xf32>
    %c0_595 = arith.constant 0 : index
    %c73_596 = arith.constant 73 : index
    %544 = vector.load %arg16[%c0_595, %c73_596] : memref<6x196xf32, #tpu.memory_space<vmem>>, vector<6x10xf32>
    %c0_597 = arith.constant 0 : index
    %c74_598 = arith.constant 74 : index
    %545 = vector.load %arg16[%c0_597, %c74_598] : memref<6x196xf32, #tpu.memory_space<vmem>>, vector<6x10xf32>
    %c0_599 = arith.constant 0 : index
    %c84_600 = arith.constant 84 : index
    %546 = vector.load %arg16[%c0_599, %c84_600] : memref<6x196xf32, #tpu.memory_space<vmem>>, vector<6x10xf32>
    %c0_601 = arith.constant 0 : index
    %c85_602 = arith.constant 85 : index
    %547 = vector.load %arg16[%c0_601, %c85_602] : memref<6x196xf32, #tpu.memory_space<vmem>>, vector<6x10xf32>
    %c0_603 = arith.constant 0 : index
    %c86_604 = arith.constant 86 : index
    %548 = vector.load %arg16[%c0_603, %c86_604] : memref<6x196xf32, #tpu.memory_space<vmem>>, vector<6x10xf32>
    %c0_605 = arith.constant 0 : index
    %c87_606 = arith.constant 87 : index
    %549 = vector.load %arg16[%c0_605, %c87_606] : memref<6x196xf32, #tpu.memory_space<vmem>>, vector<6x10xf32>
    %c0_607 = arith.constant 0 : index
    %c88_608 = arith.constant 88 : index
    %550 = vector.load %arg16[%c0_607, %c88_608] : memref<6x196xf32, #tpu.memory_space<vmem>>, vector<6x10xf32>
    %c0_609 = arith.constant 0 : index
    %c98_610 = arith.constant 98 : index
    %551 = vector.load %arg16[%c0_609, %c98_610] : memref<6x196xf32, #tpu.memory_space<vmem>>, vector<6x10xf32>
    %c0_611 = arith.constant 0 : index
    %c99_612 = arith.constant 99 : index
    %552 = vector.load %arg16[%c0_611, %c99_612] : memref<6x196xf32, #tpu.memory_space<vmem>>, vector<6x10xf32>
    %c0_613 = arith.constant 0 : index
    %c100_614 = arith.constant 100 : index
    %553 = vector.load %arg16[%c0_613, %c100_614] : memref<6x196xf32, #tpu.memory_space<vmem>>, vector<6x10xf32>
    %c0_615 = arith.constant 0 : index
    %c101_616 = arith.constant 101 : index
    %554 = vector.load %arg16[%c0_615, %c101_616] : memref<6x196xf32, #tpu.memory_space<vmem>>, vector<6x10xf32>
    %c0_617 = arith.constant 0 : index
    %c102_618 = arith.constant 102 : index
    %555 = vector.load %arg16[%c0_617, %c102_618] : memref<6x196xf32, #tpu.memory_space<vmem>>, vector<6x10xf32>
    %c0_619 = arith.constant 0 : index
    %c112_620 = arith.constant 112 : index
    %556 = vector.load %arg16[%c0_619, %c112_620] : memref<6x196xf32, #tpu.memory_space<vmem>>, vector<6x10xf32>
    %c0_621 = arith.constant 0 : index
    %c113 = arith.constant 113 : index
    %557 = vector.load %arg16[%c0_621, %c113] : memref<6x196xf32, #tpu.memory_space<vmem>>, vector<6x10xf32>
    %c0_622 = arith.constant 0 : index
    %c114 = arith.constant 114 : index
    %558 = vector.load %arg16[%c0_622, %c114] : memref<6x196xf32, #tpu.memory_space<vmem>>, vector<6x10xf32>
    %c0_623 = arith.constant 0 : index
    %c115 = arith.constant 115 : index
    %559 = vector.load %arg16[%c0_623, %c115] : memref<6x196xf32, #tpu.memory_space<vmem>>, vector<6x10xf32>
    %c0_624 = arith.constant 0 : index
    %c116 = arith.constant 116 : index
    %560 = vector.load %arg16[%c0_624, %c116] : memref<6x196xf32, #tpu.memory_space<vmem>>, vector<6x10xf32>
    %561 = tpu.concatenate %536, %537, %538, %539, %540, %541, %542, %543, %544, %545, %546, %547, %548, %549, %550, %551 in 0 : vector<6x10xf32>, vector<6x10xf32>, vector<6x10xf32>, vector<6x10xf32>, vector<6x10xf32>, vector<6x10xf32>, vector<6x10xf32>, vector<6x10xf32>, vector<6x10xf32>, vector<6x10xf32>, vector<6x10xf32>, vector<6x10xf32>, vector<6x10xf32>, vector<6x10xf32>, vector<6x10xf32>, vector<6x10xf32> -> vector<96x10xf32>
    %562 = tpu.concatenate %552, %553, %554, %555, %556, %557, %558, %559, %560 in 0 : vector<6x10xf32>, vector<6x10xf32>, vector<6x10xf32>, vector<6x10xf32>, vector<6x10xf32>, vector<6x10xf32>, vector<6x10xf32>, vector<6x10xf32>, vector<6x10xf32> -> vector<54x10xf32>
    %563 = tpu.concatenate %561, %562 in 0 : vector<96x10xf32>, vector<54x10xf32> -> vector<150x10xf32>
    %c0_625 = arith.constant 0 : index
    %c0_626 = arith.constant 0 : index
    %564 = vector.load %arg6[%c0_625, %c0_626] : memref<16x150xf32, #tpu.memory_space<vmem>>, vector<16x150xf32>
    %cst_627 = arith.constant dense<0.000000e+00> : vector<16x10xf32>
    %565 = tpu.matmul %564, %563, %cst_627 {dimension_numbers = #tpu.dot_dimension_numbers<[1], [0], [0], [1], [0, 0, 1, 1], [], []>} : vector<16x150xf32>, vector<150x10xf32>, vector<16x10xf32> -> vector<16x10xf32>
    %c0_628 = arith.constant 0 : index
    %c0_629 = arith.constant 0 : index
    %566 = vector.load %arg7[%c0_628, %c0_629] : memref<16x1xf32, #tpu.memory_space<vmem>>, vector<16x1xf32>
    %567 = vector.broadcast %566 : vector<16x1xf32> to vector<16x10xf32>
    %568 = arith.addf %565, %567 : vector<16x10xf32>
    %569 = arith.negf %568 : vector<16x10xf32>
    %570 = math.exp %569 : vector<16x10xf32>
    %cst_630 = arith.constant 1.000000e+00 : f32
    %571 = vector.broadcast %cst_630 : f32 to vector<16x10xf32>
    %572 = arith.addf %571, %570 : vector<16x10xf32>
    %573 = arith.divf %571, %572 : vector<16x10xf32>
    %c0_631 = arith.constant 0 : index
    %c70_632 = arith.constant 70 : index
    %574 = vector.load %arg16[%c0_631, %c70_632] : memref<6x196xf32, #tpu.memory_space<vmem>>, vector<6x10xf32>
    %c0_633 = arith.constant 0 : index
    %c71_634 = arith.constant 71 : index
    %575 = vector.load %arg16[%c0_633, %c71_634] : memref<6x196xf32, #tpu.memory_space<vmem>>, vector<6x10xf32>
    %c0_635 = arith.constant 0 : index
    %c72_636 = arith.constant 72 : index
    %576 = vector.load %arg16[%c0_635, %c72_636] : memref<6x196xf32, #tpu.memory_space<vmem>>, vector<6x10xf32>
    %c0_637 = arith.constant 0 : index
    %c73_638 = arith.constant 73 : index
    %577 = vector.load %arg16[%c0_637, %c73_638] : memref<6x196xf32, #tpu.memory_space<vmem>>, vector<6x10xf32>
    %c0_639 = arith.constant 0 : index
    %c74_640 = arith.constant 74 : index
    %578 = vector.load %arg16[%c0_639, %c74_640] : memref<6x196xf32, #tpu.memory_space<vmem>>, vector<6x10xf32>
    %c0_641 = arith.constant 0 : index
    %c84_642 = arith.constant 84 : index
    %579 = vector.load %arg16[%c0_641, %c84_642] : memref<6x196xf32, #tpu.memory_space<vmem>>, vector<6x10xf32>
    %c0_643 = arith.constant 0 : index
    %c85_644 = arith.constant 85 : index
    %580 = vector.load %arg16[%c0_643, %c85_644] : memref<6x196xf32, #tpu.memory_space<vmem>>, vector<6x10xf32>
    %c0_645 = arith.constant 0 : index
    %c86_646 = arith.constant 86 : index
    %581 = vector.load %arg16[%c0_645, %c86_646] : memref<6x196xf32, #tpu.memory_space<vmem>>, vector<6x10xf32>
    %c0_647 = arith.constant 0 : index
    %c87_648 = arith.constant 87 : index
    %582 = vector.load %arg16[%c0_647, %c87_648] : memref<6x196xf32, #tpu.memory_space<vmem>>, vector<6x10xf32>
    %c0_649 = arith.constant 0 : index
    %c88_650 = arith.constant 88 : index
    %583 = vector.load %arg16[%c0_649, %c88_650] : memref<6x196xf32, #tpu.memory_space<vmem>>, vector<6x10xf32>
    %c0_651 = arith.constant 0 : index
    %c98_652 = arith.constant 98 : index
    %584 = vector.load %arg16[%c0_651, %c98_652] : memref<6x196xf32, #tpu.memory_space<vmem>>, vector<6x10xf32>
    %c0_653 = arith.constant 0 : index
    %c99_654 = arith.constant 99 : index
    %585 = vector.load %arg16[%c0_653, %c99_654] : memref<6x196xf32, #tpu.memory_space<vmem>>, vector<6x10xf32>
    %c0_655 = arith.constant 0 : index
    %c100_656 = arith.constant 100 : index
    %586 = vector.load %arg16[%c0_655, %c100_656] : memref<6x196xf32, #tpu.memory_space<vmem>>, vector<6x10xf32>
    %c0_657 = arith.constant 0 : index
    %c101_658 = arith.constant 101 : index
    %587 = vector.load %arg16[%c0_657, %c101_658] : memref<6x196xf32, #tpu.memory_space<vmem>>, vector<6x10xf32>
    %c0_659 = arith.constant 0 : index
    %c102_660 = arith.constant 102 : index
    %588 = vector.load %arg16[%c0_659, %c102_660] : memref<6x196xf32, #tpu.memory_space<vmem>>, vector<6x10xf32>
    %c0_661 = arith.constant 0 : index
    %c112_662 = arith.constant 112 : index
    %589 = vector.load %arg16[%c0_661, %c112_662] : memref<6x196xf32, #tpu.memory_space<vmem>>, vector<6x10xf32>
    %c0_663 = arith.constant 0 : index
    %c113_664 = arith.constant 113 : index
    %590 = vector.load %arg16[%c0_663, %c113_664] : memref<6x196xf32, #tpu.memory_space<vmem>>, vector<6x10xf32>
    %c0_665 = arith.constant 0 : index
    %c114_666 = arith.constant 114 : index
    %591 = vector.load %arg16[%c0_665, %c114_666] : memref<6x196xf32, #tpu.memory_space<vmem>>, vector<6x10xf32>
    %c0_667 = arith.constant 0 : index
    %c115_668 = arith.constant 115 : index
    %592 = vector.load %arg16[%c0_667, %c115_668] : memref<6x196xf32, #tpu.memory_space<vmem>>, vector<6x10xf32>
    %c0_669 = arith.constant 0 : index
    %c116_670 = arith.constant 116 : index
    %593 = vector.load %arg16[%c0_669, %c116_670] : memref<6x196xf32, #tpu.memory_space<vmem>>, vector<6x10xf32>
    %c0_671 = arith.constant 0 : index
    %c126_672 = arith.constant 126 : index
    %594 = vector.load %arg16[%c0_671, %c126_672] : memref<6x196xf32, #tpu.memory_space<vmem>>, vector<6x10xf32>
    %c0_673 = arith.constant 0 : index
    %c127 = arith.constant 127 : index
    %595 = vector.load %arg16[%c0_673, %c127] : memref<6x196xf32, #tpu.memory_space<vmem>>, vector<6x10xf32>
    %c0_674 = arith.constant 0 : index
    %c128 = arith.constant 128 : index
    %596 = vector.load %arg16[%c0_674, %c128] : memref<6x196xf32, #tpu.memory_space<vmem>>, vector<6x10xf32>
    %c0_675 = arith.constant 0 : index
    %c129 = arith.constant 129 : index
    %597 = vector.load %arg16[%c0_675, %c129] : memref<6x196xf32, #tpu.memory_space<vmem>>, vector<6x10xf32>
    %c0_676 = arith.constant 0 : index
    %c130 = arith.constant 130 : index
    %598 = vector.load %arg16[%c0_676, %c130] : memref<6x196xf32, #tpu.memory_space<vmem>>, vector<6x10xf32>
    %599 = tpu.concatenate %574, %575, %576, %577, %578, %579, %580, %581, %582, %583, %584, %585, %586, %587, %588, %589 in 0 : vector<6x10xf32>, vector<6x10xf32>, vector<6x10xf32>, vector<6x10xf32>, vector<6x10xf32>, vector<6x10xf32>, vector<6x10xf32>, vector<6x10xf32>, vector<6x10xf32>, vector<6x10xf32>, vector<6x10xf32>, vector<6x10xf32>, vector<6x10xf32>, vector<6x10xf32>, vector<6x10xf32>, vector<6x10xf32> -> vector<96x10xf32>
    %600 = tpu.concatenate %590, %591, %592, %593, %594, %595, %596, %597, %598 in 0 : vector<6x10xf32>, vector<6x10xf32>, vector<6x10xf32>, vector<6x10xf32>, vector<6x10xf32>, vector<6x10xf32>, vector<6x10xf32>, vector<6x10xf32>, vector<6x10xf32> -> vector<54x10xf32>
    %601 = tpu.concatenate %599, %600 in 0 : vector<96x10xf32>, vector<54x10xf32> -> vector<150x10xf32>
    %c0_677 = arith.constant 0 : index
    %c0_678 = arith.constant 0 : index
    %602 = vector.load %arg6[%c0_677, %c0_678] : memref<16x150xf32, #tpu.memory_space<vmem>>, vector<16x150xf32>
    %cst_679 = arith.constant dense<0.000000e+00> : vector<16x10xf32>
    %603 = tpu.matmul %602, %601, %cst_679 {dimension_numbers = #tpu.dot_dimension_numbers<[1], [0], [0], [1], [0, 0, 1, 1], [], []>} : vector<16x150xf32>, vector<150x10xf32>, vector<16x10xf32> -> vector<16x10xf32>
    %c0_680 = arith.constant 0 : index
    %c0_681 = arith.constant 0 : index
    %604 = vector.load %arg7[%c0_680, %c0_681] : memref<16x1xf32, #tpu.memory_space<vmem>>, vector<16x1xf32>
    %605 = vector.broadcast %604 : vector<16x1xf32> to vector<16x10xf32>
    %606 = arith.addf %603, %605 : vector<16x10xf32>
    %607 = arith.negf %606 : vector<16x10xf32>
    %608 = math.exp %607 : vector<16x10xf32>
    %cst_682 = arith.constant 1.000000e+00 : f32
    %609 = vector.broadcast %cst_682 : f32 to vector<16x10xf32>
    %610 = arith.addf %609, %608 : vector<16x10xf32>
    %611 = arith.divf %609, %610 : vector<16x10xf32>
    %612 = arith.addf %573, %611 : vector<16x10xf32>
    %c0_683 = arith.constant 0 : index
    %c0_684 = arith.constant 0 : index
    %613 = vector.load %arg8[%c0_683, %c0_684] : memref<10x5xf32, #tpu.memory_space<vmem>>, vector<10x5xf32>
    %cst_685 = arith.constant dense<0.000000e+00> : vector<16x5xf32>
    %614 = tpu.matmul %612, %613, %cst_685 {dimension_numbers = #tpu.dot_dimension_numbers<[1], [0], [0], [1], [0, 0, 1, 1], [], []>} : vector<16x10xf32>, vector<10x5xf32>, vector<16x5xf32> -> vector<16x5xf32>
    %c0_686 = arith.constant 0 : index
    %c10 = arith.constant 10 : index
    %615 = vector.load %arg17[%c0_686, %c10] : memref<16x25xf32, #tpu.memory_space<vmem>>, vector<16x5xf32>
    tpu.vector_store %arg17[%c0_686, %c10], %614 {strides = array<i32>} : memref<16x25xf32, #tpu.memory_space<vmem>>, vector<16x5xf32>,
    %c0_687 = arith.constant 0 : index
    %c84_688 = arith.constant 84 : index
    %616 = vector.load %arg16[%c0_687, %c84_688] : memref<6x196xf32, #tpu.memory_space<vmem>>, vector<6x10xf32>
    %c0_689 = arith.constant 0 : index
    %c85_690 = arith.constant 85 : index
    %617 = vector.load %arg16[%c0_689, %c85_690] : memref<6x196xf32, #tpu.memory_space<vmem>>, vector<6x10xf32>
    %c0_691 = arith.constant 0 : index
    %c86_692 = arith.constant 86 : index
    %618 = vector.load %arg16[%c0_691, %c86_692] : memref<6x196xf32, #tpu.memory_space<vmem>>, vector<6x10xf32>
    %c0_693 = arith.constant 0 : index
    %c87_694 = arith.constant 87 : index
    %619 = vector.load %arg16[%c0_693, %c87_694] : memref<6x196xf32, #tpu.memory_space<vmem>>, vector<6x10xf32>
    %c0_695 = arith.constant 0 : index
    %c88_696 = arith.constant 88 : index
    %620 = vector.load %arg16[%c0_695, %c88_696] : memref<6x196xf32, #tpu.memory_space<vmem>>, vector<6x10xf32>
    %c0_697 = arith.constant 0 : index
    %c98_698 = arith.constant 98 : index
    %621 = vector.load %arg16[%c0_697, %c98_698] : memref<6x196xf32, #tpu.memory_space<vmem>>, vector<6x10xf32>
    %c0_699 = arith.constant 0 : index
    %c99_700 = arith.constant 99 : index
    %622 = vector.load %arg16[%c0_699, %c99_700] : memref<6x196xf32, #tpu.memory_space<vmem>>, vector<6x10xf32>
    %c0_701 = arith.constant 0 : index
    %c100_702 = arith.constant 100 : index
    %623 = vector.load %arg16[%c0_701, %c100_702] : memref<6x196xf32, #tpu.memory_space<vmem>>, vector<6x10xf32>
    %c0_703 = arith.constant 0 : index
    %c101_704 = arith.constant 101 : index
    %624 = vector.load %arg16[%c0_703, %c101_704] : memref<6x196xf32, #tpu.memory_space<vmem>>, vector<6x10xf32>
    %c0_705 = arith.constant 0 : index
    %c102_706 = arith.constant 102 : index
    %625 = vector.load %arg16[%c0_705, %c102_706] : memref<6x196xf32, #tpu.memory_space<vmem>>, vector<6x10xf32>
    %c0_707 = arith.constant 0 : index
    %c112_708 = arith.constant 112 : index
    %626 = vector.load %arg16[%c0_707, %c112_708] : memref<6x196xf32, #tpu.memory_space<vmem>>, vector<6x10xf32>
    %c0_709 = arith.constant 0 : index
    %c113_710 = arith.constant 113 : index
    %627 = vector.load %arg16[%c0_709, %c113_710] : memref<6x196xf32, #tpu.memory_space<vmem>>, vector<6x10xf32>
    %c0_711 = arith.constant 0 : index
    %c114_712 = arith.constant 114 : index
    %628 = vector.load %arg16[%c0_711, %c114_712] : memref<6x196xf32, #tpu.memory_space<vmem>>, vector<6x10xf32>
    %c0_713 = arith.constant 0 : index
    %c115_714 = arith.constant 115 : index
    %629 = vector.load %arg16[%c0_713, %c115_714] : memref<6x196xf32, #tpu.memory_space<vmem>>, vector<6x10xf32>
    %c0_715 = arith.constant 0 : index
    %c116_716 = arith.constant 116 : index
    %630 = vector.load %arg16[%c0_715, %c116_716] : memref<6x196xf32, #tpu.memory_space<vmem>>, vector<6x10xf32>
    %c0_717 = arith.constant 0 : index
    %c126_718 = arith.constant 126 : index
    %631 = vector.load %arg16[%c0_717, %c126_718] : memref<6x196xf32, #tpu.memory_space<vmem>>, vector<6x10xf32>
    %c0_719 = arith.constant 0 : index
    %c127_720 = arith.constant 127 : index
    %632 = vector.load %arg16[%c0_719, %c127_720] : memref<6x196xf32, #tpu.memory_space<vmem>>, vector<6x10xf32>
    %c0_721 = arith.constant 0 : index
    %c128_722 = arith.constant 128 : index
    %633 = vector.load %arg16[%c0_721, %c128_722] : memref<6x196xf32, #tpu.memory_space<vmem>>, vector<6x10xf32>
    %c0_723 = arith.constant 0 : index
    %c129_724 = arith.constant 129 : index
    %634 = vector.load %arg16[%c0_723, %c129_724] : memref<6x196xf32, #tpu.memory_space<vmem>>, vector<6x10xf32>
    %c0_725 = arith.constant 0 : index
    %c130_726 = arith.constant 130 : index
    %635 = vector.load %arg16[%c0_725, %c130_726] : memref<6x196xf32, #tpu.memory_space<vmem>>, vector<6x10xf32>
    %c0_727 = arith.constant 0 : index
    %c140_728 = arith.constant 140 : index
    %636 = vector.load %arg16[%c0_727, %c140_728] : memref<6x196xf32, #tpu.memory_space<vmem>>, vector<6x10xf32>
    %c0_729 = arith.constant 0 : index
    %c141 = arith.constant 141 : index
    %637 = vector.load %arg16[%c0_729, %c141] : memref<6x196xf32, #tpu.memory_space<vmem>>, vector<6x10xf32>
    %c0_730 = arith.constant 0 : index
    %c142 = arith.constant 142 : index
    %638 = vector.load %arg16[%c0_730, %c142] : memref<6x196xf32, #tpu.memory_space<vmem>>, vector<6x10xf32>
    %c0_731 = arith.constant 0 : index
    %c143 = arith.constant 143 : index
    %639 = vector.load %arg16[%c0_731, %c143] : memref<6x196xf32, #tpu.memory_space<vmem>>, vector<6x10xf32>
    %c0_732 = arith.constant 0 : index
    %c144 = arith.constant 144 : index
    %640 = vector.load %arg16[%c0_732, %c144] : memref<6x196xf32, #tpu.memory_space<vmem>>, vector<6x10xf32>
    %641 = tpu.concatenate %616, %617, %618, %619, %620, %621, %622, %623, %624, %625, %626, %627, %628, %629, %630, %631 in 0 : vector<6x10xf32>, vector<6x10xf32>, vector<6x10xf32>, vector<6x10xf32>, vector<6x10xf32>, vector<6x10xf32>, vector<6x10xf32>, vector<6x10xf32>, vector<6x10xf32>, vector<6x10xf32>, vector<6x10xf32>, vector<6x10xf32>, vector<6x10xf32>, vector<6x10xf32>, vector<6x10xf32>, vector<6x10xf32> -> vector<96x10xf32>
    %642 = tpu.concatenate %632, %633, %634, %635, %636, %637, %638, %639, %640 in 0 : vector<6x10xf32>, vector<6x10xf32>, vector<6x10xf32>, vector<6x10xf32>, vector<6x10xf32>, vector<6x10xf32>, vector<6x10xf32>, vector<6x10xf32>, vector<6x10xf32> -> vector<54x10xf32>
    %643 = tpu.concatenate %641, %642 in 0 : vector<96x10xf32>, vector<54x10xf32> -> vector<150x10xf32>
    %c0_733 = arith.constant 0 : index
    %c0_734 = arith.constant 0 : index
    %644 = vector.load %arg6[%c0_733, %c0_734] : memref<16x150xf32, #tpu.memory_space<vmem>>, vector<16x150xf32>
    %cst_735 = arith.constant dense<0.000000e+00> : vector<16x10xf32>
    %645 = tpu.matmul %644, %643, %cst_735 {dimension_numbers = #tpu.dot_dimension_numbers<[1], [0], [0], [1], [0, 0, 1, 1], [], []>} : vector<16x150xf32>, vector<150x10xf32>, vector<16x10xf32> -> vector<16x10xf32>
    %c0_736 = arith.constant 0 : index
    %c0_737 = arith.constant 0 : index
    %646 = vector.load %arg7[%c0_736, %c0_737] : memref<16x1xf32, #tpu.memory_space<vmem>>, vector<16x1xf32>
    %647 = vector.broadcast %646 : vector<16x1xf32> to vector<16x10xf32>
    %648 = arith.addf %645, %647 : vector<16x10xf32>
    %649 = arith.negf %648 : vector<16x10xf32>
    %650 = math.exp %649 : vector<16x10xf32>
    %cst_738 = arith.constant 1.000000e+00 : f32
    %651 = vector.broadcast %cst_738 : f32 to vector<16x10xf32>
    %652 = arith.addf %651, %650 : vector<16x10xf32>
    %653 = arith.divf %651, %652 : vector<16x10xf32>
    %c0_739 = arith.constant 0 : index
    %c98_740 = arith.constant 98 : index
    %654 = vector.load %arg16[%c0_739, %c98_740] : memref<6x196xf32, #tpu.memory_space<vmem>>, vector<6x10xf32>
    %c0_741 = arith.constant 0 : index
    %c99_742 = arith.constant 99 : index
    %655 = vector.load %arg16[%c0_741, %c99_742] : memref<6x196xf32, #tpu.memory_space<vmem>>, vector<6x10xf32>
    %c0_743 = arith.constant 0 : index
    %c100_744 = arith.constant 100 : index
    %656 = vector.load %arg16[%c0_743, %c100_744] : memref<6x196xf32, #tpu.memory_space<vmem>>, vector<6x10xf32>
    %c0_745 = arith.constant 0 : index
    %c101_746 = arith.constant 101 : index
    %657 = vector.load %arg16[%c0_745, %c101_746] : memref<6x196xf32, #tpu.memory_space<vmem>>, vector<6x10xf32>
    %c0_747 = arith.constant 0 : index
    %c102_748 = arith.constant 102 : index
    %658 = vector.load %arg16[%c0_747, %c102_748] : memref<6x196xf32, #tpu.memory_space<vmem>>, vector<6x10xf32>
    %c0_749 = arith.constant 0 : index
    %c112_750 = arith.constant 112 : index
    %659 = vector.load %arg16[%c0_749, %c112_750] : memref<6x196xf32, #tpu.memory_space<vmem>>, vector<6x10xf32>
    %c0_751 = arith.constant 0 : index
    %c113_752 = arith.constant 113 : index
    %660 = vector.load %arg16[%c0_751, %c113_752] : memref<6x196xf32, #tpu.memory_space<vmem>>, vector<6x10xf32>
    %c0_753 = arith.constant 0 : index
    %c114_754 = arith.constant 114 : index
    %661 = vector.load %arg16[%c0_753, %c114_754] : memref<6x196xf32, #tpu.memory_space<vmem>>, vector<6x10xf32>
    %c0_755 = arith.constant 0 : index
    %c115_756 = arith.constant 115 : index
    %662 = vector.load %arg16[%c0_755, %c115_756] : memref<6x196xf32, #tpu.memory_space<vmem>>, vector<6x10xf32>
    %c0_757 = arith.constant 0 : index
    %c116_758 = arith.constant 116 : index
    %663 = vector.load %arg16[%c0_757, %c116_758] : memref<6x196xf32, #tpu.memory_space<vmem>>, vector<6x10xf32>
    %c0_759 = arith.constant 0 : index
    %c126_760 = arith.constant 126 : index
    %664 = vector.load %arg16[%c0_759, %c126_760] : memref<6x196xf32, #tpu.memory_space<vmem>>, vector<6x10xf32>
    %c0_761 = arith.constant 0 : index
    %c127_762 = arith.constant 127 : index
    %665 = vector.load %arg16[%c0_761, %c127_762] : memref<6x196xf32, #tpu.memory_space<vmem>>, vector<6x10xf32>
    %c0_763 = arith.constant 0 : index
    %c128_764 = arith.constant 128 : index
    %666 = vector.load %arg16[%c0_763, %c128_764] : memref<6x196xf32, #tpu.memory_space<vmem>>, vector<6x10xf32>
    %c0_765 = arith.constant 0 : index
    %c129_766 = arith.constant 129 : index
    %667 = vector.load %arg16[%c0_765, %c129_766] : memref<6x196xf32, #tpu.memory_space<vmem>>, vector<6x10xf32>
    %c0_767 = arith.constant 0 : index
    %c130_768 = arith.constant 130 : index
    %668 = vector.load %arg16[%c0_767, %c130_768] : memref<6x196xf32, #tpu.memory_space<vmem>>, vector<6x10xf32>
    %c0_769 = arith.constant 0 : index
    %c140_770 = arith.constant 140 : index
    %669 = vector.load %arg16[%c0_769, %c140_770] : memref<6x196xf32, #tpu.memory_space<vmem>>, vector<6x10xf32>
    %c0_771 = arith.constant 0 : index
    %c141_772 = arith.constant 141 : index
    %670 = vector.load %arg16[%c0_771, %c141_772] : memref<6x196xf32, #tpu.memory_space<vmem>>, vector<6x10xf32>
    %c0_773 = arith.constant 0 : index
    %c142_774 = arith.constant 142 : index
    %671 = vector.load %arg16[%c0_773, %c142_774] : memref<6x196xf32, #tpu.memory_space<vmem>>, vector<6x10xf32>
    %c0_775 = arith.constant 0 : index
    %c143_776 = arith.constant 143 : index
    %672 = vector.load %arg16[%c0_775, %c143_776] : memref<6x196xf32, #tpu.memory_space<vmem>>, vector<6x10xf32>
    %c0_777 = arith.constant 0 : index
    %c144_778 = arith.constant 144 : index
    %673 = vector.load %arg16[%c0_777, %c144_778] : memref<6x196xf32, #tpu.memory_space<vmem>>, vector<6x10xf32>
    %c0_779 = arith.constant 0 : index
    %c154_780 = arith.constant 154 : index
    %674 = vector.load %arg16[%c0_779, %c154_780] : memref<6x196xf32, #tpu.memory_space<vmem>>, vector<6x10xf32>
    %c0_781 = arith.constant 0 : index
    %c155 = arith.constant 155 : index
    %675 = vector.load %arg16[%c0_781, %c155] : memref<6x196xf32, #tpu.memory_space<vmem>>, vector<6x10xf32>
    %c0_782 = arith.constant 0 : index
    %c156 = arith.constant 156 : index
    %676 = vector.load %arg16[%c0_782, %c156] : memref<6x196xf32, #tpu.memory_space<vmem>>, vector<6x10xf32>
    %c0_783 = arith.constant 0 : index
    %c157 = arith.constant 157 : index
    %677 = vector.load %arg16[%c0_783, %c157] : memref<6x196xf32, #tpu.memory_space<vmem>>, vector<6x10xf32>
    %c0_784 = arith.constant 0 : index
    %c158 = arith.constant 158 : index
    %678 = vector.load %arg16[%c0_784, %c158] : memref<6x196xf32, #tpu.memory_space<vmem>>, vector<6x10xf32>
    %679 = tpu.concatenate %654, %655, %656, %657, %658, %659, %660, %661, %662, %663, %664, %665, %666, %667, %668, %669 in 0 : vector<6x10xf32>, vector<6x10xf32>, vector<6x10xf32>, vector<6x10xf32>, vector<6x10xf32>, vector<6x10xf32>, vector<6x10xf32>, vector<6x10xf32>, vector<6x10xf32>, vector<6x10xf32>, vector<6x10xf32>, vector<6x10xf32>, vector<6x10xf32>, vector<6x10xf32>, vector<6x10xf32>, vector<6x10xf32> -> vector<96x10xf32>
    %680 = tpu.concatenate %670, %671, %672, %673, %674, %675, %676, %677, %678 in 0 : vector<6x10xf32>, vector<6x10xf32>, vector<6x10xf32>, vector<6x10xf32>, vector<6x10xf32>, vector<6x10xf32>, vector<6x10xf32>, vector<6x10xf32>, vector<6x10xf32> -> vector<54x10xf32>
    %681 = tpu.concatenate %679, %680 in 0 : vector<96x10xf32>, vector<54x10xf32> -> vector<150x10xf32>
    %c0_785 = arith.constant 0 : index
    %c0_786 = arith.constant 0 : index
    %682 = vector.load %arg6[%c0_785, %c0_786] : memref<16x150xf32, #tpu.memory_space<vmem>>, vector<16x150xf32>
    %cst_787 = arith.constant dense<0.000000e+00> : vector<16x10xf32>
    %683 = tpu.matmul %682, %681, %cst_787 {dimension_numbers = #tpu.dot_dimension_numbers<[1], [0], [0], [1], [0, 0, 1, 1], [], []>} : vector<16x150xf32>, vector<150x10xf32>, vector<16x10xf32> -> vector<16x10xf32>
    %c0_788 = arith.constant 0 : index
    %c0_789 = arith.constant 0 : index
    %684 = vector.load %arg7[%c0_788, %c0_789] : memref<16x1xf32, #tpu.memory_space<vmem>>, vector<16x1xf32>
    %685 = vector.broadcast %684 : vector<16x1xf32> to vector<16x10xf32>
    %686 = arith.addf %683, %685 : vector<16x10xf32>
    %687 = arith.negf %686 : vector<16x10xf32>
    %688 = math.exp %687 : vector<16x10xf32>
    %cst_790 = arith.constant 1.000000e+00 : f32
    %689 = vector.broadcast %cst_790 : f32 to vector<16x10xf32>
    %690 = arith.addf %689, %688 : vector<16x10xf32>
    %691 = arith.divf %689, %690 : vector<16x10xf32>
    %692 = arith.addf %653, %691 : vector<16x10xf32>
    %c0_791 = arith.constant 0 : index
    %c0_792 = arith.constant 0 : index
    %693 = vector.load %arg8[%c0_791, %c0_792] : memref<10x5xf32, #tpu.memory_space<vmem>>, vector<10x5xf32>
    %cst_793 = arith.constant dense<0.000000e+00> : vector<16x5xf32>
    %694 = tpu.matmul %692, %693, %cst_793 {dimension_numbers = #tpu.dot_dimension_numbers<[1], [0], [0], [1], [0, 0, 1, 1], [], []>} : vector<16x10xf32>, vector<10x5xf32>, vector<16x5xf32> -> vector<16x5xf32>
    %c0_794 = arith.constant 0 : index
    %c15_795 = arith.constant 15 : index
    %695 = vector.load %arg17[%c0_794, %c15_795] : memref<16x25xf32, #tpu.memory_space<vmem>>, vector<16x5xf32>
    tpu.vector_store %arg17[%c0_794, %c15_795], %694 {strides = array<i32>} : memref<16x25xf32, #tpu.memory_space<vmem>>, vector<16x5xf32>,
    %c0_796 = arith.constant 0 : index
    %c112_797 = arith.constant 112 : index
    %696 = vector.load %arg16[%c0_796, %c112_797] : memref<6x196xf32, #tpu.memory_space<vmem>>, vector<6x10xf32>
    %c0_798 = arith.constant 0 : index
    %c113_799 = arith.constant 113 : index
    %697 = vector.load %arg16[%c0_798, %c113_799] : memref<6x196xf32, #tpu.memory_space<vmem>>, vector<6x10xf32>
    %c0_800 = arith.constant 0 : index
    %c114_801 = arith.constant 114 : index
    %698 = vector.load %arg16[%c0_800, %c114_801] : memref<6x196xf32, #tpu.memory_space<vmem>>, vector<6x10xf32>
    %c0_802 = arith.constant 0 : index
    %c115_803 = arith.constant 115 : index
    %699 = vector.load %arg16[%c0_802, %c115_803] : memref<6x196xf32, #tpu.memory_space<vmem>>, vector<6x10xf32>
    %c0_804 = arith.constant 0 : index
    %c116_805 = arith.constant 116 : index
    %700 = vector.load %arg16[%c0_804, %c116_805] : memref<6x196xf32, #tpu.memory_space<vmem>>, vector<6x10xf32>
    %c0_806 = arith.constant 0 : index
    %c126_807 = arith.constant 126 : index
    %701 = vector.load %arg16[%c0_806, %c126_807] : memref<6x196xf32, #tpu.memory_space<vmem>>, vector<6x10xf32>
    %c0_808 = arith.constant 0 : index
    %c127_809 = arith.constant 127 : index
    %702 = vector.load %arg16[%c0_808, %c127_809] : memref<6x196xf32, #tpu.memory_space<vmem>>, vector<6x10xf32>
    %c0_810 = arith.constant 0 : index
    %c128_811 = arith.constant 128 : index
    %703 = vector.load %arg16[%c0_810, %c128_811] : memref<6x196xf32, #tpu.memory_space<vmem>>, vector<6x10xf32>
    %c0_812 = arith.constant 0 : index
    %c129_813 = arith.constant 129 : index
    %704 = vector.load %arg16[%c0_812, %c129_813] : memref<6x196xf32, #tpu.memory_space<vmem>>, vector<6x10xf32>
    %c0_814 = arith.constant 0 : index
    %c130_815 = arith.constant 130 : index
    %705 = vector.load %arg16[%c0_814, %c130_815] : memref<6x196xf32, #tpu.memory_space<vmem>>, vector<6x10xf32>
    %c0_816 = arith.constant 0 : index
    %c140_817 = arith.constant 140 : index
    %706 = vector.load %arg16[%c0_816, %c140_817] : memref<6x196xf32, #tpu.memory_space<vmem>>, vector<6x10xf32>
    %c0_818 = arith.constant 0 : index
    %c141_819 = arith.constant 141 : index
    %707 = vector.load %arg16[%c0_818, %c141_819] : memref<6x196xf32, #tpu.memory_space<vmem>>, vector<6x10xf32>
    %c0_820 = arith.constant 0 : index
    %c142_821 = arith.constant 142 : index
    %708 = vector.load %arg16[%c0_820, %c142_821] : memref<6x196xf32, #tpu.memory_space<vmem>>, vector<6x10xf32>
    %c0_822 = arith.constant 0 : index
    %c143_823 = arith.constant 143 : index
    %709 = vector.load %arg16[%c0_822, %c143_823] : memref<6x196xf32, #tpu.memory_space<vmem>>, vector<6x10xf32>
    %c0_824 = arith.constant 0 : index
    %c144_825 = arith.constant 144 : index
    %710 = vector.load %arg16[%c0_824, %c144_825] : memref<6x196xf32, #tpu.memory_space<vmem>>, vector<6x10xf32>
    %c0_826 = arith.constant 0 : index
    %c154_827 = arith.constant 154 : index
    %711 = vector.load %arg16[%c0_826, %c154_827] : memref<6x196xf32, #tpu.memory_space<vmem>>, vector<6x10xf32>
    %c0_828 = arith.constant 0 : index
    %c155_829 = arith.constant 155 : index
    %712 = vector.load %arg16[%c0_828, %c155_829] : memref<6x196xf32, #tpu.memory_space<vmem>>, vector<6x10xf32>
    %c0_830 = arith.constant 0 : index
    %c156_831 = arith.constant 156 : index
    %713 = vector.load %arg16[%c0_830, %c156_831] : memref<6x196xf32, #tpu.memory_space<vmem>>, vector<6x10xf32>
    %c0_832 = arith.constant 0 : index
    %c157_833 = arith.constant 157 : index
    %714 = vector.load %arg16[%c0_832, %c157_833] : memref<6x196xf32, #tpu.memory_space<vmem>>, vector<6x10xf32>
    %c0_834 = arith.constant 0 : index
    %c158_835 = arith.constant 158 : index
    %715 = vector.load %arg16[%c0_834, %c158_835] : memref<6x196xf32, #tpu.memory_space<vmem>>, vector<6x10xf32>
    %c0_836 = arith.constant 0 : index
    %c168_837 = arith.constant 168 : index
    %716 = vector.load %arg16[%c0_836, %c168_837] : memref<6x196xf32, #tpu.memory_space<vmem>>, vector<6x10xf32>
    %c0_838 = arith.constant 0 : index
    %c169 = arith.constant 169 : index
    %717 = vector.load %arg16[%c0_838, %c169] : memref<6x196xf32, #tpu.memory_space<vmem>>, vector<6x10xf32>
    %c0_839 = arith.constant 0 : index
    %c170 = arith.constant 170 : index
    %718 = vector.load %arg16[%c0_839, %c170] : memref<6x196xf32, #tpu.memory_space<vmem>>, vector<6x10xf32>
    %c0_840 = arith.constant 0 : index
    %c171 = arith.constant 171 : index
    %719 = vector.load %arg16[%c0_840, %c171] : memref<6x196xf32, #tpu.memory_space<vmem>>, vector<6x10xf32>
    %c0_841 = arith.constant 0 : index
    %c172 = arith.constant 172 : index
    %720 = vector.load %arg16[%c0_841, %c172] : memref<6x196xf32, #tpu.memory_space<vmem>>, vector<6x10xf32>
    %721 = tpu.concatenate %696, %697, %698, %699, %700, %701, %702, %703, %704, %705, %706, %707, %708, %709, %710, %711 in 0 : vector<6x10xf32>, vector<6x10xf32>, vector<6x10xf32>, vector<6x10xf32>, vector<6x10xf32>, vector<6x10xf32>, vector<6x10xf32>, vector<6x10xf32>, vector<6x10xf32>, vector<6x10xf32>, vector<6x10xf32>, vector<6x10xf32>, vector<6x10xf32>, vector<6x10xf32>, vector<6x10xf32>, vector<6x10xf32> -> vector<96x10xf32>
    %722 = tpu.concatenate %712, %713, %714, %715, %716, %717, %718, %719, %720 in 0 : vector<6x10xf32>, vector<6x10xf32>, vector<6x10xf32>, vector<6x10xf32>, vector<6x10xf32>, vector<6x10xf32>, vector<6x10xf32>, vector<6x10xf32>, vector<6x10xf32> -> vector<54x10xf32>
    %723 = tpu.concatenate %721, %722 in 0 : vector<96x10xf32>, vector<54x10xf32> -> vector<150x10xf32>
    %c0_842 = arith.constant 0 : index
    %c0_843 = arith.constant 0 : index
    %724 = vector.load %arg6[%c0_842, %c0_843] : memref<16x150xf32, #tpu.memory_space<vmem>>, vector<16x150xf32>
    %cst_844 = arith.constant dense<0.000000e+00> : vector<16x10xf32>
    %725 = tpu.matmul %724, %723, %cst_844 {dimension_numbers = #tpu.dot_dimension_numbers<[1], [0], [0], [1], [0, 0, 1, 1], [], []>} : vector<16x150xf32>, vector<150x10xf32>, vector<16x10xf32> -> vector<16x10xf32>
    %c0_845 = arith.constant 0 : index
    %c0_846 = arith.constant 0 : index
    %726 = vector.load %arg7[%c0_845, %c0_846] : memref<16x1xf32, #tpu.memory_space<vmem>>, vector<16x1xf32>
    %727 = vector.broadcast %726 : vector<16x1xf32> to vector<16x10xf32>
    %728 = arith.addf %725, %727 : vector<16x10xf32>
    %729 = arith.negf %728 : vector<16x10xf32>
    %730 = math.exp %729 : vector<16x10xf32>
    %cst_847 = arith.constant 1.000000e+00 : f32
    %731 = vector.broadcast %cst_847 : f32 to vector<16x10xf32>
    %732 = arith.addf %731, %730 : vector<16x10xf32>
    %733 = arith.divf %731, %732 : vector<16x10xf32>
    %c0_848 = arith.constant 0 : index
    %c126_849 = arith.constant 126 : index
    %734 = vector.load %arg16[%c0_848, %c126_849] : memref<6x196xf32, #tpu.memory_space<vmem>>, vector<6x10xf32>
    %c0_850 = arith.constant 0 : index
    %c127_851 = arith.constant 127 : index
    %735 = vector.load %arg16[%c0_850, %c127_851] : memref<6x196xf32, #tpu.memory_space<vmem>>, vector<6x10xf32>
    %c0_852 = arith.constant 0 : index
    %c128_853 = arith.constant 128 : index
    %736 = vector.load %arg16[%c0_852, %c128_853] : memref<6x196xf32, #tpu.memory_space<vmem>>, vector<6x10xf32>
    %c0_854 = arith.constant 0 : index
    %c129_855 = arith.constant 129 : index
    %737 = vector.load %arg16[%c0_854, %c129_855] : memref<6x196xf32, #tpu.memory_space<vmem>>, vector<6x10xf32>
    %c0_856 = arith.constant 0 : index
    %c130_857 = arith.constant 130 : index
    %738 = vector.load %arg16[%c0_856, %c130_857] : memref<6x196xf32, #tpu.memory_space<vmem>>, vector<6x10xf32>
    %c0_858 = arith.constant 0 : index
    %c140_859 = arith.constant 140 : index
    %739 = vector.load %arg16[%c0_858, %c140_859] : memref<6x196xf32, #tpu.memory_space<vmem>>, vector<6x10xf32>
    %c0_860 = arith.constant 0 : index
    %c141_861 = arith.constant 141 : index
    %740 = vector.load %arg16[%c0_860, %c141_861] : memref<6x196xf32, #tpu.memory_space<vmem>>, vector<6x10xf32>
    %c0_862 = arith.constant 0 : index
    %c142_863 = arith.constant 142 : index
    %741 = vector.load %arg16[%c0_862, %c142_863] : memref<6x196xf32, #tpu.memory_space<vmem>>, vector<6x10xf32>
    %c0_864 = arith.constant 0 : index
    %c143_865 = arith.constant 143 : index
    %742 = vector.load %arg16[%c0_864, %c143_865] : memref<6x196xf32, #tpu.memory_space<vmem>>, vector<6x10xf32>
    %c0_866 = arith.constant 0 : index
    %c144_867 = arith.constant 144 : index
    %743 = vector.load %arg16[%c0_866, %c144_867] : memref<6x196xf32, #tpu.memory_space<vmem>>, vector<6x10xf32>
    %c0_868 = arith.constant 0 : index
    %c154_869 = arith.constant 154 : index
    %744 = vector.load %arg16[%c0_868, %c154_869] : memref<6x196xf32, #tpu.memory_space<vmem>>, vector<6x10xf32>
    %c0_870 = arith.constant 0 : index
    %c155_871 = arith.constant 155 : index
    %745 = vector.load %arg16[%c0_870, %c155_871] : memref<6x196xf32, #tpu.memory_space<vmem>>, vector<6x10xf32>
    %c0_872 = arith.constant 0 : index
    %c156_873 = arith.constant 156 : index
    %746 = vector.load %arg16[%c0_872, %c156_873] : memref<6x196xf32, #tpu.memory_space<vmem>>, vector<6x10xf32>
    %c0_874 = arith.constant 0 : index
    %c157_875 = arith.constant 157 : index
    %747 = vector.load %arg16[%c0_874, %c157_875] : memref<6x196xf32, #tpu.memory_space<vmem>>, vector<6x10xf32>
    %c0_876 = arith.constant 0 : index
    %c158_877 = arith.constant 158 : index
    %748 = vector.load %arg16[%c0_876, %c158_877] : memref<6x196xf32, #tpu.memory_space<vmem>>, vector<6x10xf32>
    %c0_878 = arith.constant 0 : index
    %c168_879 = arith.constant 168 : index
    %749 = vector.load %arg16[%c0_878, %c168_879] : memref<6x196xf32, #tpu.memory_space<vmem>>, vector<6x10xf32>
    %c0_880 = arith.constant 0 : index
    %c169_881 = arith.constant 169 : index
    %750 = vector.load %arg16[%c0_880, %c169_881] : memref<6x196xf32, #tpu.memory_space<vmem>>, vector<6x10xf32>
    %c0_882 = arith.constant 0 : index
    %c170_883 = arith.constant 170 : index
    %751 = vector.load %arg16[%c0_882, %c170_883] : memref<6x196xf32, #tpu.memory_space<vmem>>, vector<6x10xf32>
    %c0_884 = arith.constant 0 : index
    %c171_885 = arith.constant 171 : index
    %752 = vector.load %arg16[%c0_884, %c171_885] : memref<6x196xf32, #tpu.memory_space<vmem>>, vector<6x10xf32>
    %c0_886 = arith.constant 0 : index
    %c172_887 = arith.constant 172 : index
    %753 = vector.load %arg16[%c0_886, %c172_887] : memref<6x196xf32, #tpu.memory_space<vmem>>, vector<6x10xf32>
    %c0_888 = arith.constant 0 : index
    %c182_889 = arith.constant 182 : index
    %754 = vector.load %arg16[%c0_888, %c182_889] : memref<6x196xf32, #tpu.memory_space<vmem>>, vector<6x10xf32>
    %c0_890 = arith.constant 0 : index
    %c183 = arith.constant 183 : index
    %755 = vector.load %arg16[%c0_890, %c183] : memref<6x196xf32, #tpu.memory_space<vmem>>, vector<6x10xf32>
    %c0_891 = arith.constant 0 : index
    %c184 = arith.constant 184 : index
    %756 = vector.load %arg16[%c0_891, %c184] : memref<6x196xf32, #tpu.memory_space<vmem>>, vector<6x10xf32>
    %c0_892 = arith.constant 0 : index
    %c185 = arith.constant 185 : index
    %757 = vector.load %arg16[%c0_892, %c185] : memref<6x196xf32, #tpu.memory_space<vmem>>, vector<6x10xf32>
    %c0_893 = arith.constant 0 : index
    %c186 = arith.constant 186 : index
    %758 = vector.load %arg16[%c0_893, %c186] : memref<6x196xf32, #tpu.memory_space<vmem>>, vector<6x10xf32>
    %759 = tpu.concatenate %734, %735, %736, %737, %738, %739, %740, %741, %742, %743, %744, %745, %746, %747, %748, %749 in 0 : vector<6x10xf32>, vector<6x10xf32>, vector<6x10xf32>, vector<6x10xf32>, vector<6x10xf32>, vector<6x10xf32>, vector<6x10xf32>, vector<6x10xf32>, vector<6x10xf32>, vector<6x10xf32>, vector<6x10xf32>, vector<6x10xf32>, vector<6x10xf32>, vector<6x10xf32>, vector<6x10xf32>, vector<6x10xf32> -> vector<96x10xf32>
    %760 = tpu.concatenate %750, %751, %752, %753, %754, %755, %756, %757, %758 in 0 : vector<6x10xf32>, vector<6x10xf32>, vector<6x10xf32>, vector<6x10xf32>, vector<6x10xf32>, vector<6x10xf32>, vector<6x10xf32>, vector<6x10xf32>, vector<6x10xf32> -> vector<54x10xf32>
    %761 = tpu.concatenate %759, %760 in 0 : vector<96x10xf32>, vector<54x10xf32> -> vector<150x10xf32>
    %c0_894 = arith.constant 0 : index
    %c0_895 = arith.constant 0 : index
    %762 = vector.load %arg6[%c0_894, %c0_895] : memref<16x150xf32, #tpu.memory_space<vmem>>, vector<16x150xf32>
    %cst_896 = arith.constant dense<0.000000e+00> : vector<16x10xf32>
    %763 = tpu.matmul %762, %761, %cst_896 {dimension_numbers = #tpu.dot_dimension_numbers<[1], [0], [0], [1], [0, 0, 1, 1], [], []>} : vector<16x150xf32>, vector<150x10xf32>, vector<16x10xf32> -> vector<16x10xf32>
    %c0_897 = arith.constant 0 : index
    %c0_898 = arith.constant 0 : index
    %764 = vector.load %arg7[%c0_897, %c0_898] : memref<16x1xf32, #tpu.memory_space<vmem>>, vector<16x1xf32>
    %765 = vector.broadcast %764 : vector<16x1xf32> to vector<16x10xf32>
    %766 = arith.addf %763, %765 : vector<16x10xf32>
    %767 = arith.negf %766 : vector<16x10xf32>
    %768 = math.exp %767 : vector<16x10xf32>
    %cst_899 = arith.constant 1.000000e+00 : f32
    %769 = vector.broadcast %cst_899 : f32 to vector<16x10xf32>
    %770 = arith.addf %769, %768 : vector<16x10xf32>
    %771 = arith.divf %769, %770 : vector<16x10xf32>
    %772 = arith.addf %733, %771 : vector<16x10xf32>
    %c0_900 = arith.constant 0 : index
    %c0_901 = arith.constant 0 : index
    %773 = vector.load %arg8[%c0_900, %c0_901] : memref<10x5xf32, #tpu.memory_space<vmem>>, vector<10x5xf32>
    %cst_902 = arith.constant dense<0.000000e+00> : vector<16x5xf32>
    %774 = tpu.matmul %772, %773, %cst_902 {dimension_numbers = #tpu.dot_dimension_numbers<[1], [0], [0], [1], [0, 0, 1, 1], [], []>} : vector<16x10xf32>, vector<10x5xf32>, vector<16x5xf32> -> vector<16x5xf32>
    %c0_903 = arith.constant 0 : index
    %c20 = arith.constant 20 : index
    %775 = vector.load %arg17[%c0_903, %c20] : memref<16x25xf32, #tpu.memory_space<vmem>>, vector<16x5xf32>
    tpu.vector_store %arg17[%c0_903, %c20], %774 {strides = array<i32>} : memref<16x25xf32, #tpu.memory_space<vmem>>, vector<16x5xf32>,
    %c0_904 = arith.constant 0 : index
    %c0_905 = arith.constant 0 : index
    %776 = vector.load %arg10[%c0_904, %c0_905] : memref<1x120xf32, #tpu.memory_space<vmem>>, vector<1x120xf32>
    %c0_906 = arith.constant 0 : index
    %c0_907 = arith.constant 0 : index
    %777 = vector.load %arg17[%c0_906, %c0_907] : memref<16x25xf32, #tpu.memory_space<vmem>>, vector<1x25xf32>
    %c0_908 = arith.constant 0 : index
    %c0_909 = arith.constant 0 : index
    %c0_910 = arith.constant 0 : index
    %778 = vector.load %arg9[%c0_908, %c0_909, %c0_910] : memref<16x25x120xf32, #tpu.memory_space<vmem>>, vector<1x25x120xf32>
    %779 = vector.shape_cast %778 : vector<1x25x120xf32> to vector<25x120xf32>
    %cst_911 = arith.constant dense<0.000000e+00> : vector<1x120xf32>
    %780 = tpu.matmul %777, %779, %cst_911 {dimension_numbers = #tpu.dot_dimension_numbers<[1], [0], [0], [1], [0, 0, 1, 1], [], []>} : vector<1x25xf32>, vector<25x120xf32>, vector<1x120xf32> -> vector<1x120xf32>
    %781 = arith.addf %776, %780 : vector<1x120xf32>
    %c1_912 = arith.constant 1 : index
    %c0_913 = arith.constant 0 : index
    %782 = vector.load %arg17[%c1_912, %c0_913] : memref<16x25xf32, #tpu.memory_space<vmem>>, vector<1x25xf32>
    %c1_914 = arith.constant 1 : index
    %c0_915 = arith.constant 0 : index
    %c0_916 = arith.constant 0 : index
    %783 = vector.load %arg9[%c1_914, %c0_915, %c0_916] : memref<16x25x120xf32, #tpu.memory_space<vmem>>, vector<1x25x120xf32>
    %784 = vector.shape_cast %783 : vector<1x25x120xf32> to vector<25x120xf32>
    %cst_917 = arith.constant dense<0.000000e+00> : vector<1x120xf32>
    %785 = tpu.matmul %782, %784, %cst_917 {dimension_numbers = #tpu.dot_dimension_numbers<[1], [0], [0], [1], [0, 0, 1, 1], [], []>} : vector<1x25xf32>, vector<25x120xf32>, vector<1x120xf32> -> vector<1x120xf32>
    %786 = arith.addf %781, %785 : vector<1x120xf32>
    %c2_918 = arith.constant 2 : index
    %c0_919 = arith.constant 0 : index
    %787 = vector.load %arg17[%c2_918, %c0_919] : memref<16x25xf32, #tpu.memory_space<vmem>>, vector<1x25xf32>
    %c2_920 = arith.constant 2 : index
    %c0_921 = arith.constant 0 : index
    %c0_922 = arith.constant 0 : index
    %788 = vector.load %arg9[%c2_920, %c0_921, %c0_922] : memref<16x25x120xf32, #tpu.memory_space<vmem>>, vector<1x25x120xf32>
    %789 = vector.shape_cast %788 : vector<1x25x120xf32> to vector<25x120xf32>
    %cst_923 = arith.constant dense<0.000000e+00> : vector<1x120xf32>
    %790 = tpu.matmul %787, %789, %cst_923 {dimension_numbers = #tpu.dot_dimension_numbers<[1], [0], [0], [1], [0, 0, 1, 1], [], []>} : vector<1x25xf32>, vector<25x120xf32>, vector<1x120xf32> -> vector<1x120xf32>
    %791 = arith.addf %786, %790 : vector<1x120xf32>
    %c3_924 = arith.constant 3 : index
    %c0_925 = arith.constant 0 : index
    %792 = vector.load %arg17[%c3_924, %c0_925] : memref<16x25xf32, #tpu.memory_space<vmem>>, vector<1x25xf32>
    %c3_926 = arith.constant 3 : index
    %c0_927 = arith.constant 0 : index
    %c0_928 = arith.constant 0 : index
    %793 = vector.load %arg9[%c3_926, %c0_927, %c0_928] : memref<16x25x120xf32, #tpu.memory_space<vmem>>, vector<1x25x120xf32>
    %794 = vector.shape_cast %793 : vector<1x25x120xf32> to vector<25x120xf32>
    %cst_929 = arith.constant dense<0.000000e+00> : vector<1x120xf32>
    %795 = tpu.matmul %792, %794, %cst_929 {dimension_numbers = #tpu.dot_dimension_numbers<[1], [0], [0], [1], [0, 0, 1, 1], [], []>} : vector<1x25xf32>, vector<25x120xf32>, vector<1x120xf32> -> vector<1x120xf32>
    %796 = arith.addf %791, %795 : vector<1x120xf32>
    %c4_930 = arith.constant 4 : index
    %c0_931 = arith.constant 0 : index
    %797 = vector.load %arg17[%c4_930, %c0_931] : memref<16x25xf32, #tpu.memory_space<vmem>>, vector<1x25xf32>
    %c4_932 = arith.constant 4 : index
    %c0_933 = arith.constant 0 : index
    %c0_934 = arith.constant 0 : index
    %798 = vector.load %arg9[%c4_932, %c0_933, %c0_934] : memref<16x25x120xf32, #tpu.memory_space<vmem>>, vector<1x25x120xf32>
    %799 = vector.shape_cast %798 : vector<1x25x120xf32> to vector<25x120xf32>
    %cst_935 = arith.constant dense<0.000000e+00> : vector<1x120xf32>
    %800 = tpu.matmul %797, %799, %cst_935 {dimension_numbers = #tpu.dot_dimension_numbers<[1], [0], [0], [1], [0, 0, 1, 1], [], []>} : vector<1x25xf32>, vector<25x120xf32>, vector<1x120xf32> -> vector<1x120xf32>
    %801 = arith.addf %796, %800 : vector<1x120xf32>
    %c5_936 = arith.constant 5 : index
    %c0_937 = arith.constant 0 : index
    %802 = vector.load %arg17[%c5_936, %c0_937] : memref<16x25xf32, #tpu.memory_space<vmem>>, vector<1x25xf32>
    %c5_938 = arith.constant 5 : index
    %c0_939 = arith.constant 0 : index
    %c0_940 = arith.constant 0 : index
    %803 = vector.load %arg9[%c5_938, %c0_939, %c0_940] : memref<16x25x120xf32, #tpu.memory_space<vmem>>, vector<1x25x120xf32>
    %804 = vector.shape_cast %803 : vector<1x25x120xf32> to vector<25x120xf32>
    %cst_941 = arith.constant dense<0.000000e+00> : vector<1x120xf32>
    %805 = tpu.matmul %802, %804, %cst_941 {dimension_numbers = #tpu.dot_dimension_numbers<[1], [0], [0], [1], [0, 0, 1, 1], [], []>} : vector<1x25xf32>, vector<25x120xf32>, vector<1x120xf32> -> vector<1x120xf32>
    %806 = arith.addf %801, %805 : vector<1x120xf32>
    %c6 = arith.constant 6 : index
    %c0_942 = arith.constant 0 : index
    %807 = vector.load %arg17[%c6, %c0_942] : memref<16x25xf32, #tpu.memory_space<vmem>>, vector<1x25xf32>
    %c6_943 = arith.constant 6 : index
    %c0_944 = arith.constant 0 : index
    %c0_945 = arith.constant 0 : index
    %808 = vector.load %arg9[%c6_943, %c0_944, %c0_945] : memref<16x25x120xf32, #tpu.memory_space<vmem>>, vector<1x25x120xf32>
    %809 = vector.shape_cast %808 : vector<1x25x120xf32> to vector<25x120xf32>
    %cst_946 = arith.constant dense<0.000000e+00> : vector<1x120xf32>
    %810 = tpu.matmul %807, %809, %cst_946 {dimension_numbers = #tpu.dot_dimension_numbers<[1], [0], [0], [1], [0, 0, 1, 1], [], []>} : vector<1x25xf32>, vector<25x120xf32>, vector<1x120xf32> -> vector<1x120xf32>
    %811 = arith.addf %806, %810 : vector<1x120xf32>
    %c7 = arith.constant 7 : index
    %c0_947 = arith.constant 0 : index
    %812 = vector.load %arg17[%c7, %c0_947] : memref<16x25xf32, #tpu.memory_space<vmem>>, vector<1x25xf32>
    %c7_948 = arith.constant 7 : index
    %c0_949 = arith.constant 0 : index
    %c0_950 = arith.constant 0 : index
    %813 = vector.load %arg9[%c7_948, %c0_949, %c0_950] : memref<16x25x120xf32, #tpu.memory_space<vmem>>, vector<1x25x120xf32>
    %814 = vector.shape_cast %813 : vector<1x25x120xf32> to vector<25x120xf32>
    %cst_951 = arith.constant dense<0.000000e+00> : vector<1x120xf32>
    %815 = tpu.matmul %812, %814, %cst_951 {dimension_numbers = #tpu.dot_dimension_numbers<[1], [0], [0], [1], [0, 0, 1, 1], [], []>} : vector<1x25xf32>, vector<25x120xf32>, vector<1x120xf32> -> vector<1x120xf32>
    %816 = arith.addf %811, %815 : vector<1x120xf32>
    %c8 = arith.constant 8 : index
    %c0_952 = arith.constant 0 : index
    %817 = vector.load %arg17[%c8, %c0_952] : memref<16x25xf32, #tpu.memory_space<vmem>>, vector<1x25xf32>
    %c8_953 = arith.constant 8 : index
    %c0_954 = arith.constant 0 : index
    %c0_955 = arith.constant 0 : index
    %818 = vector.load %arg9[%c8_953, %c0_954, %c0_955] : memref<16x25x120xf32, #tpu.memory_space<vmem>>, vector<1x25x120xf32>
    %819 = vector.shape_cast %818 : vector<1x25x120xf32> to vector<25x120xf32>
    %cst_956 = arith.constant dense<0.000000e+00> : vector<1x120xf32>
    %820 = tpu.matmul %817, %819, %cst_956 {dimension_numbers = #tpu.dot_dimension_numbers<[1], [0], [0], [1], [0, 0, 1, 1], [], []>} : vector<1x25xf32>, vector<25x120xf32>, vector<1x120xf32> -> vector<1x120xf32>
    %821 = arith.addf %816, %820 : vector<1x120xf32>
    %c9 = arith.constant 9 : index
    %c0_957 = arith.constant 0 : index
    %822 = vector.load %arg17[%c9, %c0_957] : memref<16x25xf32, #tpu.memory_space<vmem>>, vector<1x25xf32>
    %c9_958 = arith.constant 9 : index
    %c0_959 = arith.constant 0 : index
    %c0_960 = arith.constant 0 : index
    %823 = vector.load %arg9[%c9_958, %c0_959, %c0_960] : memref<16x25x120xf32, #tpu.memory_space<vmem>>, vector<1x25x120xf32>
    %824 = vector.shape_cast %823 : vector<1x25x120xf32> to vector<25x120xf32>
    %cst_961 = arith.constant dense<0.000000e+00> : vector<1x120xf32>
    %825 = tpu.matmul %822, %824, %cst_961 {dimension_numbers = #tpu.dot_dimension_numbers<[1], [0], [0], [1], [0, 0, 1, 1], [], []>} : vector<1x25xf32>, vector<25x120xf32>, vector<1x120xf32> -> vector<1x120xf32>
    %826 = arith.addf %821, %825 : vector<1x120xf32>
    %c10_962 = arith.constant 10 : index
    %c0_963 = arith.constant 0 : index
    %827 = vector.load %arg17[%c10_962, %c0_963] : memref<16x25xf32, #tpu.memory_space<vmem>>, vector<1x25xf32>
    %c10_964 = arith.constant 10 : index
    %c0_965 = arith.constant 0 : index
    %c0_966 = arith.constant 0 : index
    %828 = vector.load %arg9[%c10_964, %c0_965, %c0_966] : memref<16x25x120xf32, #tpu.memory_space<vmem>>, vector<1x25x120xf32>
    %829 = vector.shape_cast %828 : vector<1x25x120xf32> to vector<25x120xf32>
    %cst_967 = arith.constant dense<0.000000e+00> : vector<1x120xf32>
    %830 = tpu.matmul %827, %829, %cst_967 {dimension_numbers = #tpu.dot_dimension_numbers<[1], [0], [0], [1], [0, 0, 1, 1], [], []>} : vector<1x25xf32>, vector<25x120xf32>, vector<1x120xf32> -> vector<1x120xf32>
    %831 = arith.addf %826, %830 : vector<1x120xf32>
    %c11 = arith.constant 11 : index
    %c0_968 = arith.constant 0 : index
    %832 = vector.load %arg17[%c11, %c0_968] : memref<16x25xf32, #tpu.memory_space<vmem>>, vector<1x25xf32>
    %c11_969 = arith.constant 11 : index
    %c0_970 = arith.constant 0 : index
    %c0_971 = arith.constant 0 : index
    %833 = vector.load %arg9[%c11_969, %c0_970, %c0_971] : memref<16x25x120xf32, #tpu.memory_space<vmem>>, vector<1x25x120xf32>
    %834 = vector.shape_cast %833 : vector<1x25x120xf32> to vector<25x120xf32>
    %cst_972 = arith.constant dense<0.000000e+00> : vector<1x120xf32>
    %835 = tpu.matmul %832, %834, %cst_972 {dimension_numbers = #tpu.dot_dimension_numbers<[1], [0], [0], [1], [0, 0, 1, 1], [], []>} : vector<1x25xf32>, vector<25x120xf32>, vector<1x120xf32> -> vector<1x120xf32>
    %836 = arith.addf %831, %835 : vector<1x120xf32>
    %c12 = arith.constant 12 : index
    %c0_973 = arith.constant 0 : index
    %837 = vector.load %arg17[%c12, %c0_973] : memref<16x25xf32, #tpu.memory_space<vmem>>, vector<1x25xf32>
    %c12_974 = arith.constant 12 : index
    %c0_975 = arith.constant 0 : index
    %c0_976 = arith.constant 0 : index
    %838 = vector.load %arg9[%c12_974, %c0_975, %c0_976] : memref<16x25x120xf32, #tpu.memory_space<vmem>>, vector<1x25x120xf32>
    %839 = vector.shape_cast %838 : vector<1x25x120xf32> to vector<25x120xf32>
    %cst_977 = arith.constant dense<0.000000e+00> : vector<1x120xf32>
    %840 = tpu.matmul %837, %839, %cst_977 {dimension_numbers = #tpu.dot_dimension_numbers<[1], [0], [0], [1], [0, 0, 1, 1], [], []>} : vector<1x25xf32>, vector<25x120xf32>, vector<1x120xf32> -> vector<1x120xf32>
    %841 = arith.addf %836, %840 : vector<1x120xf32>
    %c13 = arith.constant 13 : index
    %c0_978 = arith.constant 0 : index
    %842 = vector.load %arg17[%c13, %c0_978] : memref<16x25xf32, #tpu.memory_space<vmem>>, vector<1x25xf32>
    %c13_979 = arith.constant 13 : index
    %c0_980 = arith.constant 0 : index
    %c0_981 = arith.constant 0 : index
    %843 = vector.load %arg9[%c13_979, %c0_980, %c0_981] : memref<16x25x120xf32, #tpu.memory_space<vmem>>, vector<1x25x120xf32>
    %844 = vector.shape_cast %843 : vector<1x25x120xf32> to vector<25x120xf32>
    %cst_982 = arith.constant dense<0.000000e+00> : vector<1x120xf32>
    %845 = tpu.matmul %842, %844, %cst_982 {dimension_numbers = #tpu.dot_dimension_numbers<[1], [0], [0], [1], [0, 0, 1, 1], [], []>} : vector<1x25xf32>, vector<25x120xf32>, vector<1x120xf32> -> vector<1x120xf32>
    %846 = arith.addf %841, %845 : vector<1x120xf32>
    %c14_983 = arith.constant 14 : index
    %c0_984 = arith.constant 0 : index
    %847 = vector.load %arg17[%c14_983, %c0_984] : memref<16x25xf32, #tpu.memory_space<vmem>>, vector<1x25xf32>
    %c14_985 = arith.constant 14 : index
    %c0_986 = arith.constant 0 : index
    %c0_987 = arith.constant 0 : index
    %848 = vector.load %arg9[%c14_985, %c0_986, %c0_987] : memref<16x25x120xf32, #tpu.memory_space<vmem>>, vector<1x25x120xf32>
    %849 = vector.shape_cast %848 : vector<1x25x120xf32> to vector<25x120xf32>
    %cst_988 = arith.constant dense<0.000000e+00> : vector<1x120xf32>
    %850 = tpu.matmul %847, %849, %cst_988 {dimension_numbers = #tpu.dot_dimension_numbers<[1], [0], [0], [1], [0, 0, 1, 1], [], []>} : vector<1x25xf32>, vector<25x120xf32>, vector<1x120xf32> -> vector<1x120xf32>
    %851 = arith.addf %846, %850 : vector<1x120xf32>
    %c15_989 = arith.constant 15 : index
    %c0_990 = arith.constant 0 : index
    %852 = vector.load %arg17[%c15_989, %c0_990] : memref<16x25xf32, #tpu.memory_space<vmem>>, vector<1x25xf32>
    %c15_991 = arith.constant 15 : index
    %c0_992 = arith.constant 0 : index
    %c0_993 = arith.constant 0 : index
    %853 = vector.load %arg9[%c15_991, %c0_992, %c0_993] : memref<16x25x120xf32, #tpu.memory_space<vmem>>, vector<1x25x120xf32>
    %854 = vector.shape_cast %853 : vector<1x25x120xf32> to vector<25x120xf32>
    %cst_994 = arith.constant dense<0.000000e+00> : vector<1x120xf32>
    %855 = tpu.matmul %852, %854, %cst_994 {dimension_numbers = #tpu.dot_dimension_numbers<[1], [0], [0], [1], [0, 0, 1, 1], [], []>} : vector<1x25xf32>, vector<25x120xf32>, vector<1x120xf32> -> vector<1x120xf32>
    %856 = arith.addf %851, %855 : vector<1x120xf32>
    %857 = arith.negf %856 : vector<1x120xf32>
    %858 = math.exp %857 : vector<1x120xf32>
    %cst_995 = arith.constant 1.000000e+00 : f32
    %859 = vector.broadcast %cst_995 : f32 to vector<1x120xf32>
    %860 = arith.addf %859, %858 : vector<1x120xf32>
    %861 = arith.divf %859, %860 : vector<1x120xf32>
    %c0_996 = arith.constant 0 : index
    %c0_997 = arith.constant 0 : index
    %862 = vector.load %arg11[%c0_996, %c0_997] : memref<120x84xf32, #tpu.memory_space<vmem>>, vector<120x84xf32>
    %cst_998 = arith.constant dense<0.000000e+00> : vector<1x84xf32>
    %863 = tpu.matmul %861, %862, %cst_998 {dimension_numbers = #tpu.dot_dimension_numbers<[1], [0], [0], [1], [0, 0, 1, 1], [], []>} : vector<1x120xf32>, vector<120x84xf32>, vector<1x84xf32> -> vector<1x84xf32>
    %c0_999 = arith.constant 0 : index
    %c0_1000 = arith.constant 0 : index
    %864 = vector.load %arg12[%c0_999, %c0_1000] : memref<1x84xf32, #tpu.memory_space<vmem>>, vector<1x84xf32>
    %865 = arith.addf %863, %864 : vector<1x84xf32>
    %866 = arith.negf %865 : vector<1x84xf32>
    %867 = math.exp %866 : vector<1x84xf32>
    %cst_1001 = arith.constant 1.000000e+00 : f32
    %868 = vector.broadcast %cst_1001 : f32 to vector<1x84xf32>
    %869 = arith.addf %868, %867 : vector<1x84xf32>
    %870 = arith.divf %868, %869 : vector<1x84xf32>
    %c0_1002 = arith.constant 0 : index
    %c0_1003 = arith.constant 0 : index
    %871 = vector.load %arg13[%c0_1002, %c0_1003] : memref<84x10xf32, #tpu.memory_space<vmem>>, vector<84x10xf32>
    %cst_1004 = arith.constant dense<0.000000e+00> : vector<1x10xf32>
    %872 = tpu.matmul %870, %871, %cst_1004 {dimension_numbers = #tpu.dot_dimension_numbers<[1], [0], [0], [1], [0, 0, 1, 1], [], []>} : vector<1x84xf32>, vector<84x10xf32>, vector<1x10xf32> -> vector<1x10xf32>
    %c0_1005 = arith.constant 0 : index
    %c0_1006 = arith.constant 0 : index
    %873 = vector.load %arg14[%c0_1005, %c0_1006] : memref<1x10xf32, #tpu.memory_space<vmem>>, vector<1x10xf32>
    %874 = arith.addf %872, %873 : vector<1x10xf32>
    %c0_1007 = arith.constant 0 : index
    %c0_1008 = arith.constant 0 : index
    %c0_1009 = arith.constant 0 : index
    %875 = vector.load %arg15[%c0_1007, %c0_1008, %c0_1009] : memref<1x1x10xf32, #tpu.memory_space<vmem>>, vector<1x1x10xf32>
    %876 = vector.shape_cast %875 : vector<1x1x10xf32> to vector<1x10xf32>
    %877 = vector.shape_cast %874 : vector<1x10xf32> to vector<1x1x10xf32>
    tpu.vector_store %arg15[%c0_1007, %c0_1008, %c0_1009], %877 {strides = array<i32>} : memref<1x1x10xf32, #tpu.memory_space<vmem>>, vector<1x1x10xf32>,
    return
  }
  func.func @transform_0(%arg0: i32) -> (i32, i32, i32) {
    %c0_i32 = arith.constant 0 : i32
    %c0_i32_0 = arith.constant 0 : i32
    %c0_i32_1 = arith.constant 0 : i32
    return %arg0, %c0_i32, %c0_i32_0 : i32, i32, i32
  }
  func.func @transform_1(%arg0: i32) -> (i32, i32, i32, i32) {
    %c0_i32 = arith.constant 0 : i32
    %c0_i32_0 = arith.constant 0 : i32
    %c0_i32_1 = arith.constant 0 : i32
    %c0_i32_2 = arith.constant 0 : i32
    %c0_i32_3 = arith.constant 0 : i32
    return %c0_i32, %c0_i32_0, %c0_i32_1, %c0_i32_2 : i32, i32, i32, i32
  }
  func.func @transform_2(%arg0: i32) -> (i32, i32) {
    %c0_i32 = arith.constant 0 : i32
    %c0_i32_0 = arith.constant 0 : i32
    %c0_i32_1 = arith.constant 0 : i32
    return %c0_i32, %c0_i32_0 : i32, i32
  }
  func.func @transform_3(%arg0: i32) -> (i32, i32) {
    %c0_i32 = arith.constant 0 : i32
    %c0_i32_0 = arith.constant 0 : i32
    %c0_i32_1 = arith.constant 0 : i32
    return %c0_i32, %c0_i32_0 : i32, i32
  }
  func.func @transform_4(%arg0: i32) -> (i32, i32) {
    %c0_i32 = arith.constant 0 : i32
    %c0_i32_0 = arith.constant 0 : i32
    %c0_i32_1 = arith.constant 0 : i32
    return %c0_i32, %c0_i32_0 : i32, i32
  }
  func.func @transform_5(%arg0: i32) -> (i32, i32) {
    %c0_i32 = arith.constant 0 : i32
    %c0_i32_0 = arith.constant 0 : i32
    %c0_i32_1 = arith.constant 0 : i32
    return %c0_i32, %c0_i32_0 : i32, i32
  }
  func.func @transform_6(%arg0: i32) -> (i32, i32) {
    %c0_i32 = arith.constant 0 : i32
    %c0_i32_0 = arith.constant 0 : i32
    %c0_i32_1 = arith.constant 0 : i32
    return %c0_i32, %c0_i32_0 : i32, i32
  }
  func.func @transform_7(%arg0: i32) -> (i32, i32) {
    %c0_i32 = arith.constant 0 : i32
    %c0_i32_0 = arith.constant 0 : i32
    %c0_i32_1 = arith.constant 0 : i32
    return %c0_i32, %c0_i32_0 : i32, i32
  }
  func.func @transform_8(%arg0: i32) -> (i32, i32, i32) {
    %c0_i32 = arith.constant 0 : i32
    %c0_i32_0 = arith.constant 0 : i32
    %c0_i32_1 = arith.constant 0 : i32
    %c0_i32_2 = arith.constant 0 : i32
    return %c0_i32, %c0_i32_0, %c0_i32_1 : i32, i32, i32
  }
  func.func @transform_9(%arg0: i32) -> (i32, i32) {
    %c0_i32 = arith.constant 0 : i32
    %c0_i32_0 = arith.constant 0 : i32
    %c0_i32_1 = arith.constant 0 : i32
    return %c0_i32, %c0_i32_0 : i32, i32
  }
  func.func @transform_10(%arg0: i32) -> (i32, i32) {
    %c0_i32 = arith.constant 0 : i32
    %c0_i32_0 = arith.constant 0 : i32
    %c0_i32_1 = arith.constant 0 : i32
    return %c0_i32, %c0_i32_0 : i32, i32
  }
  func.func @transform_11(%arg0: i32) -> (i32, i32) {
    %c0_i32 = arith.constant 0 : i32
    %c0_i32_0 = arith.constant 0 : i32
    %c0_i32_1 = arith.constant 0 : i32
    return %c0_i32, %c0_i32_0 : i32, i32
  }
  func.func @transform_12(%arg0: i32) -> (i32, i32) {
    %c0_i32 = arith.constant 0 : i32
    %c0_i32_0 = arith.constant 0 : i32
    %c0_i32_1 = arith.constant 0 : i32
    return %c0_i32, %c0_i32_0 : i32, i32
  }
  func.func @transform_13(%arg0: i32) -> (i32, i32) {
    %c0_i32 = arith.constant 0 : i32
    %c0_i32_0 = arith.constant 0 : i32
    %c0_i32_1 = arith.constant 0 : i32
    return %c0_i32, %c0_i32_0 : i32, i32
  }
  func.func @transform_14(%arg0: i32) -> (i32, i32, i32) {
    %c0_i32 = arith.constant 0 : i32
    %c0_i32_0 = arith.constant 0 : i32
    %c0_i32_1 = arith.constant 0 : i32
    return %arg0, %c0_i32, %c0_i32_0 : i32, i32, i32
  }
}

</mosaic_0001>

<llo_original>
// kernel: lenet_forward.1
$region0: #{lenet_forward.1}
  #allocation0 [shape = 'u32[]', space=smem, size = 0x4, offset = 0x4, fixed_abs, tag = 'smem constant byte address 0x4 - core index']
  #allocation1 [shape = 'u32[72,128]{1,0:T(1,128)}', space=vmem, size = 0x9000, scoped, tag = 'internal scratch']
  #allocation2 [shape = 'f32[6,196]{1,0:T(8,128)}', space=vmem, size = 0x2000, scoped, tag = 'scratch operand']
  #allocation3 [shape = 'f32[16,25]{1,0:T(8,128)}', space=vmem, size = 0x2000, scoped, tag = 'scratch operand']
  %s0 = inlined_call_operand.vmem [shape: f32[2,32,32], index: 0, kind: input, shape index: {}]
  %s1 = inlined_call_operand.vmem [shape: f32[6,5,32,28], index: 1, kind: input, shape index: {}]
  %s2 = inlined_call_operand.vmem [shape: f32[6,1], index: 2, kind: input, shape index: {}]
  %s3 = inlined_call_operand.vmem [shape: f32[14,28], index: 3, kind: input, shape index: {}]
  %s4 = inlined_call_operand.vmem [shape: f32[28,14], index: 4, kind: input, shape index: {}]
  %s5 = inlined_call_operand.vmem [shape: f32[16,150], index: 5, kind: input, shape index: {}]
  %s6 = inlined_call_operand.vmem [shape: f32[16,1], index: 6, kind: input, shape index: {}]
  %s7 = inlined_call_operand.vmem [shape: f32[10,5], index: 7, kind: input, shape index: {}]
  %s8 = inlined_call_operand.vmem [shape: f32[16,25,120], index: 8, kind: input, shape index: {}]
  %s9 = inlined_call_operand.vmem [shape: f32[1,120], index: 9, kind: input, shape index: {}]
  %s10 = inlined_call_operand.vmem [shape: f32[120,84], index: 10, kind: input, shape index: {}]
  %s11 = inlined_call_operand.vmem [shape: f32[1,84], index: 11, kind: input, shape index: {}]
  %s12 = inlined_call_operand.vmem [shape: f32[84,10], index: 12, kind: input, shape index: {}]
  %s13 = inlined_call_operand.vmem [shape: f32[1,10], index: 13, kind: input, shape index: {}]
  %s14 = inlined_call_operand.hbm [shape: f32[2,1,10], index: 14, kind: output, shape index: {}]
  %s15 = sld [smem:[#allocation0]]
  $region89: #{lenet_forward.1} parent=0
    _
  %s17 = ssub.s32 1, %s15
  %s18 = scalar_select 0, %s17, %s15
  $region1: #{lenet_forward.1} parent=0
    #allocation4 [shape = 'u8[1024]{0}', space=vmem, size = 0x400, scoped, tag = 'output window, operand 0']
    #allocation5 [shape = 's32[2]{0}', space=sflag, size = 0x8, scoped, tag = 'scoped memory for lenet_forward.1']
    %19 = vsyncpa [#allocation5], 0
    %s20 = scalar_lea.sflag [#allocation5], 1
    %21 = vsyncpa %s20, 0
    loop: start=0, step=1, limit=4
    $region2: #{lenet_forward.1} parent=1 // loop_pre_header
      _
    $region3: #{lenet_forward.1} parent=1 // loop_header
      %s23 = sphi 0, %s27
      %p24 = scmp.ge.s32.totalorder %s23, 4
      %s33 = sphi 0, %s35
      %s36 = sphi 0, %s33
      %s37 = sphi 0, %s36
      %s53 = sphi 0, %s37
      %s57 = sphi 0, %s57
      %s59 = sphi 0, %s57
      %s60 = sphi 0, %s59
      %s74 = sphi 0, %s60
      %s78 = sphi 0, %s78
      %s80 = sphi 0, %s78
      %s81 = sphi 0, %s80
      %s95 = sphi 0, %s81
      %s99 = sphi 0, %s99
      %s101 = sphi 0, %s99
      %s102 = sphi 0, %s101
      %s116 = sphi 0, %s102
      %s120 = sphi 0, %s120
      %s122 = sphi 0, %s120
      %s123 = sphi 0, %s122
      %s137 = sphi 0, %s123
      %s141 = sphi 0, %s141
      %s143 = sphi 0, %s141
      %s144 = sphi 0, %s143
      %s158 = sphi 0, %s144
      %s162 = sphi 0, %s162
      %s164 = sphi 0, %s162
      %s165 = sphi 0, %s164
      %s179 = sphi 0, %s165
      %s183 = sphi 0, %s183
      %s185 = sphi 0, %s183
      %s186 = sphi 0, %s185
      %s200 = sphi 0, %s186
      %s204 = sphi 0, %s204
      %s206 = sphi 0, %s204
      %s207 = sphi 0, %s206
      %s221 = sphi 0, %s207
      %s225 = sphi 0, %s225
      %s227 = sphi 0, %s225
      %s228 = sphi 0, %s227
      %s242 = sphi 0, %s228
      %s246 = sphi 0, %s246
      %s248 = sphi 0, %s246
      %s249 = sphi 0, %s248
      %s263 = sphi 0, %s249
      %s267 = sphi 0, %s267
      %s269 = sphi 0, %s267
      %s270 = sphi 0, %s269
      %s284 = sphi 0, %s270
      %s288 = sphi 0, %s288
      %s290 = sphi 0, %s288
      %s291 = sphi 0, %s290
      %s305 = sphi 0, %s291
      %s309 = sphi 0, %s309
      %s311 = sphi 0, %s309
      %s312 = sphi 0, %s311
      %s326 = sphi 0, %s312
      %s332 = sphi 0, %s334
      %s335 = sphi 0, %s332
      %s336 = sphi 0, %s335
      %s352 = sphi 0, %s336
    $region4: #{lenet_forward.1} parent=1 // loop_header_branch
      %26 = sbr.rel (%p24) target = $region8
    $region5: #{lenet_forward.1} parent=1 // loop_body
      %s28 = ssub.s32 %s23, 1
      %s29 = ssub.s32 %s23, 2
      %s30 = sadd.s32 %s23, 1
      %s31 = ssub.s32 %s23, %s30
      %p32 = scmp.eq.s32.totalorder %s31, 0
      %s34 = sadd.s32 %s33, 1
      %s35 = scalar_select %p32, %s33, %s34
      %p38 = pneg %p32
      %p39 = scmp.eq.s32.totalorder %s23, 1
      %p40 = por %p38, %p39
      %p41 = scmp.ne.s32.totalorder %s33, %s36
      %p42 = scmp.eq.s32.totalorder %s23, 0
      %p43 = por %p41, %p42
      %p44 = scmp.ne.s32.totalorder %s33, %s36
      %p45 = scmp.eq.s32.totalorder %s28, 1
      %p46 = por %p44, %p45
      %p47 = scmp.ne.s32.totalorder %s36, %s37
      %p48 = scmp.eq.s32.totalorder %s28, 0
      %p49 = por %p47, %p48
      %p50 = scmp.ne.s32.totalorder %s36, %s37
      %p51 = scmp.eq.s32.totalorder %s29, 1
      %p52 = por %p50, %p51
      %p54 = scmp.ne.s32.totalorder %s37, %s53
      %p55 = scmp.eq.s32.totalorder %s29, 0
      %p56 = por %p54, %p55
      %s58 = sadd.s32 %s57, 1
      %p61 = scmp.eq.s32.totalorder %s23, 1
      %p62 = scmp.ne.s32.totalorder %s57, %s59
      %p63 = scmp.eq.s32.totalorder %s23, 0
      %p64 = por %p62, %p63
      %p65 = scmp.ne.s32.totalorder %s57, %s59
      %p66 = scmp.eq.s32.totalorder %s28, 1
      %p67 = por %p65, %p66
      %p68 = scmp.ne.s32.totalorder %s59, %s60
      %p69 = scmp.eq.s32.totalorder %s28, 0
      %p70 = por %p68, %p69
      %p71 = scmp.ne.s32.totalorder %s59, %s60
      %p72 = scmp.eq.s32.totalorder %s29, 1
      %p73 = por %p71, %p72
      %p75 = scmp.ne.s32.totalorder %s60, %s74
      %p76 = scmp.eq.s32.totalorder %s29, 0
      %p77 = por %p75, %p76
      %s79 = sadd.s32 %s78, 1
      %p82 = scmp.eq.s32.totalorder %s23, 1
      %p83 = scmp.ne.s32.totalorder %s78, %s80
      %p84 = scmp.eq.s32.totalorder %s23, 0
      %p85 = por %p83, %p84
      %p86 = scmp.ne.s32.totalorder %s78, %s80
      %p87 = scmp.eq.s32.totalorder %s28, 1
      %p88 = por %p86, %p87
      %p89 = scmp.ne.s32.totalorder %s80, %s81
      %p90 = scmp.eq.s32.totalorder %s28, 0
      %p91 = por %p89, %p90
      %p92 = scmp.ne.s32.totalorder %s80, %s81
      %p93 = scmp.eq.s32.totalorder %s29, 1
      %p94 = por %p92, %p93
      %p96 = scmp.ne.s32.totalorder %s81, %s95
      %p97 = scmp.eq.s32.totalorder %s29, 0
      %p98 = por %p96, %p97
      %s100 = sadd.s32 %s99, 1
      %p103 = scmp.eq.s32.totalorder %s23, 1
      %p104 = scmp.ne.s32.totalorder %s99, %s101
      %p105 = scmp.eq.s32.totalorder %s23, 0
      %p106 = por %p104, %p105
      %p107 = scmp.ne.s32.totalorder %s99, %s101
      %p108 = scmp.eq.s32.totalorder %s28, 1
      %p109 = por %p107, %p108
      %p110 = scmp.ne.s32.totalorder %s101, %s102
      %p111 = scmp.eq.s32.totalorder %s28, 0
      %p112 = por %p110, %p111
      %p113 = scmp.ne.s32.totalorder %s101, %s102
      %p114 = scmp.eq.s32.totalorder %s29, 1
      %p115 = por %p113, %p114
      %p117 = scmp.ne.s32.totalorder %s102, %s116
      %p118 = scmp.eq.s32.totalorder %s29, 0
      %p119 = por %p117, %p118
      %s121 = sadd.s32 %s120, 1
      %p124 = scmp.eq.s32.totalorder %s23, 1
      %p125 = scmp.ne.s32.totalorder %s120, %s122
      %p126 = scmp.eq.s32.totalorder %s23, 0
      %p127 = por %p125, %p126
      %p128 = scmp.ne.s32.totalorder %s120, %s122
      %p129 = scmp.eq.s32.totalorder %s28, 1
      %p130 = por %p128, %p129
      %p131 = scmp.ne.s32.totalorder %s122, %s123
      %p132 = scmp.eq.s32.totalorder %s28, 0
      %p133 = por %p131, %p132
      %p134 = scmp.ne.s32.totalorder %s122, %s123
      %p135 = scmp.eq.s32.totalorder %s29, 1
      %p136 = por %p134, %p135
      %p138 = scmp.ne.s32.totalorder %s123, %s137
      %p139 = scmp.eq.s32.totalorder %s29, 0
      %p140 = por %p138, %p139
      %s142 = sadd.s32 %s141, 1
      %p145 = scmp.eq.s32.totalorder %s23, 1
      %p146 = scmp.ne.s32.totalorder %s141, %s143
      %p147 = scmp.eq.s32.totalorder %s23, 0
      %p148 = por %p146, %p147
      %p149 = scmp.ne.s32.totalorder %s141, %s143
      %p150 = scmp.eq.s32.totalorder %s28, 1
      %p151 = por %p149, %p150
      %p152 = scmp.ne.s32.totalorder %s143, %s144
      %p153 = scmp.eq.s32.totalorder %s28, 0
      %p154 = por %p152, %p153
      %p155 = scmp.ne.s32.totalorder %s143, %s144
      %p156 = scmp.eq.s32.totalorder %s29, 1
      %p157 = por %p155, %p156
      %p159 = scmp.ne.s32.totalorder %s144, %s158
      %p160 = scmp.eq.s32.totalorder %s29, 0
      %p161 = por %p159, %p160
      %s163 = sadd.s32 %s162, 1
      %p166 = scmp.eq.s32.totalorder %s23, 1
      %p167 = scmp.ne.s32.totalorder %s162, %s164
      %p168 = scmp.eq.s32.totalorder %s23, 0
      %p169 = por %p167, %p168
      %p170 = scmp.ne.s32.totalorder %s162, %s164
      %p171 = scmp.eq.s32.totalorder %s28, 1
      %p172 = por %p170, %p171
      %p173 = scmp.ne.s32.totalorder %s164, %s165
      %p174 = scmp.eq.s32.totalorder %s28, 0
      %p175 = por %p173, %p174
      %p176 = scmp.ne.s32.totalorder %s164, %s165
      %p177 = scmp.eq.s32.totalorder %s29, 1
      %p178 = por %p176, %p177
      %p180 = scmp.ne.s32.totalorder %s165, %s179
      %p181 = scmp.eq.s32.totalorder %s29, 0
      %p182 = por %p180, %p181
      %s184 = sadd.s32 %s183, 1
      %p187 = scmp.eq.s32.totalorder %s23, 1
      %p188 = scmp.ne.s32.totalorder %s183, %s185
      %p189 = scmp.eq.s32.totalorder %s23, 0
      %p190 = por %p188, %p189
      %p191 = scmp.ne.s32.totalorder %s183, %s185
      %p192 = scmp.eq.s32.totalorder %s28, 1
      %p193 = por %p191, %p192
      %p194 = scmp.ne.s32.totalorder %s185, %s186
      %p195 = scmp.eq.s32.totalorder %s28, 0
      %p196 = por %p194, %p195
      %p197 = scmp.ne.s32.totalorder %s185, %s186
      %p198 = scmp.eq.s32.totalorder %s29, 1
      %p199 = por %p197, %p198
      %p201 = scmp.ne.s32.totalorder %s186, %s200
      %p202 = scmp.eq.s32.totalorder %s29, 0
      %p203 = por %p201, %p202
      %s205 = sadd.s32 %s204, 1
      %p208 = scmp.eq.s32.totalorder %s23, 1
      %p209 = scmp.ne.s32.totalorder %s204, %s206
      %p210 = scmp.eq.s32.totalorder %s23, 0
      %p211 = por %p209, %p210
      %p212 = scmp.ne.s32.totalorder %s204, %s206
      %p213 = scmp.eq.s32.totalorder %s28, 1
      %p214 = por %p212, %p213
      %p215 = scmp.ne.s32.totalorder %s206, %s207
      %p216 = scmp.eq.s32.totalorder %s28, 0
      %p217 = por %p215, %p216
      %p218 = scmp.ne.s32.totalorder %s206, %s207
      %p219 = scmp.eq.s32.totalorder %s29, 1
      %p220 = por %p218, %p219
      %p222 = scmp.ne.s32.totalorder %s207, %s221
      %p223 = scmp.eq.s32.totalorder %s29, 0
      %p224 = por %p222, %p223
      %s226 = sadd.s32 %s225, 1
      %p229 = scmp.eq.s32.totalorder %s23, 1
      %p230 = scmp.ne.s32.totalorder %s225, %s227
      %p231 = scmp.eq.s32.totalorder %s23, 0
      %p232 = por %p230, %p231
      %p233 = scmp.ne.s32.totalorder %s225, %s227
      %p234 = scmp.eq.s32.totalorder %s28, 1
      %p235 = por %p233, %p234
      %p236 = scmp.ne.s32.totalorder %s227, %s228
      %p237 = scmp.eq.s32.totalorder %s28, 0
      %p238 = por %p236, %p237
      %p239 = scmp.ne.s32.totalorder %s227, %s228
      %p240 = scmp.eq.s32.totalorder %s29, 1
      %p241 = por %p239, %p240
      %p243 = scmp.ne.s32.totalorder %s228, %s242
      %p244 = scmp.eq.s32.totalorder %s29, 0
      %p245 = por %p243, %p244
      %s247 = sadd.s32 %s246, 1
      %p250 = scmp.eq.s32.totalorder %s23, 1
      %p251 = scmp.ne.s32.totalorder %s246, %s248
      %p252 = scmp.eq.s32.totalorder %s23, 0
      %p253 = por %p251, %p252
      %p254 = scmp.ne.s32.totalorder %s246, %s248
      %p255 = scmp.eq.s32.totalorder %s28, 1
      %p256 = por %p254, %p255
      %p257 = scmp.ne.s32.totalorder %s248, %s249
      %p258 = scmp.eq.s32.totalorder %s28, 0
      %p259 = por %p257, %p258
      %p260 = scmp.ne.s32.totalorder %s248, %s249
      %p261 = scmp.eq.s32.totalorder %s29, 1
      %p262 = por %p260, %p261
      %p264 = scmp.ne.s32.totalorder %s249, %s263
      %p265 = scmp.eq.s32.totalorder %s29, 0
      %p266 = por %p264, %p265
      %s268 = sadd.s32 %s267, 1
      %p271 = scmp.eq.s32.totalorder %s23, 1
      %p272 = scmp.ne.s32.totalorder %s267, %s269
      %p273 = scmp.eq.s32.totalorder %s23, 0
      %p274 = por %p272, %p273
      %p275 = scmp.ne.s32.totalorder %s267, %s269
      %p276 = scmp.eq.s32.totalorder %s28, 1
      %p277 = por %p275, %p276
      %p278 = scmp.ne.s32.totalorder %s269, %s270
      %p279 = scmp.eq.s32.totalorder %s28, 0
      %p280 = por %p278, %p279
      %p281 = scmp.ne.s32.totalorder %s269, %s270
      %p282 = scmp.eq.s32.totalorder %s29, 1
      %p283 = por %p281, %p282
      %p285 = scmp.ne.s32.totalorder %s270, %s284
      %p286 = scmp.eq.s32.totalorder %s29, 0
      %p287 = por %p285, %p286
      %s289 = sadd.s32 %s288, 1
      %p292 = scmp.eq.s32.totalorder %s23, 1
      %p293 = scmp.ne.s32.totalorder %s288, %s290
      %p294 = scmp.eq.s32.totalorder %s23, 0
      %p295 = por %p293, %p294
      %p296 = scmp.ne.s32.totalorder %s288, %s290
      %p297 = scmp.eq.s32.totalorder %s28, 1
      %p298 = por %p296, %p297
      %p299 = scmp.ne.s32.totalorder %s290, %s291
      %p300 = scmp.eq.s32.totalorder %s28, 0
      %p301 = por %p299, %p300
      %p302 = scmp.ne.s32.totalorder %s290, %s291
      %p303 = scmp.eq.s32.totalorder %s29, 1
      %p304 = por %p302, %p303
      %p306 = scmp.ne.s32.totalorder %s291, %s305
      %p307 = scmp.eq.s32.totalorder %s29, 0
      %p308 = por %p306, %p307
      %s310 = sadd.s32 %s309, 1
      %p313 = scmp.eq.s32.totalorder %s23, 1
      %p314 = scmp.ne.s32.totalorder %s309, %s311
      %p315 = scmp.eq.s32.totalorder %s23, 0
      %p316 = por %p314, %p315
      %p317 = scmp.ne.s32.totalorder %s309, %s311
      %p318 = scmp.eq.s32.totalorder %s28, 1
      %p319 = por %p317, %p318
      %p320 = scmp.ne.s32.totalorder %s311, %s312
      %p321 = scmp.eq.s32.totalorder %s28, 0
      %p322 = por %p320, %p321
      %p323 = scmp.ne.s32.totalorder %s311, %s312
      %p324 = scmp.eq.s32.totalorder %s29, 1
      %p325 = por %p323, %p324
      %p327 = scmp.ne.s32.totalorder %s312, %s326
      %p328 = scmp.eq.s32.totalorder %s29, 0
      %p329 = por %p327, %p328
      %s330 = ssub.s32 %s23, %s30
      %p331 = scmp.eq.s32.totalorder %s330, 0
      %s333 = sadd.s32 %s332, 1
      %s334 = scalar_select %p331, %s332, %s333
      %p337 = pneg %p331
      %p338 = scmp.eq.s32.totalorder %s23, 1
      %p339 = por %p337, %p338
      %p340 = scmp.ne.s32.totalorder %s332, %s335
      %p341 = scmp.eq.s32.totalorder %s23, 0
      %p342 = por %p340, %p341
      %p343 = scmp.ne.s32.totalorder %s332, %s335
      %p344 = scmp.eq.s32.totalorder %s28, 1
      %p345 = por %p343, %p344
      %p346 = scmp.ne.s32.totalorder %s335, %s336
      %p347 = scmp.eq.s32.totalorder %s28, 0
      %p348 = por %p346, %p347
      %p349 = scmp.ne.s32.totalorder %s335, %s336
      %p350 = scmp.eq.s32.totalorder %s29, 1
      %p351 = por %p349, %p350
      %p353 = scmp.ne.s32.totalorder %s336, %s352
      %p354 = scmp.eq.s32.totalorder %s29, 0
      %p355 = por %p353, %p354
      %p356 = scmp.le.s32.totalorder 1, %s23
      %p357 = scmp.lt.s32.totalorder %s23, 3
      %p358 = pnand %p356, %p357
      %p359 = pneg %p358
      // Predicated region
      $region9: #{lenet_forward.1} parent=5 // pred_check
        _
      $region10: #{lenet_forward.1} parent=5 // pred_check_branch
        %361 = sbr.rel (%p358) target = $region12
      $region11: #{lenet_forward.1} parent=5 // pred_region
        %s362 = ssub.s32 %s23, 1
        // Predicated region
        $region13: #{lenet_forward.1} parent=11 // pred_check
          %p363 = pneg %p70
        $region14: #{lenet_forward.1} parent=11 // pred_check_branch
          %365 = sbr.rel (%p363) target = $region16
        $region15: #{lenet_forward.1} parent=11 // pred_region
          _
        $region16: #{lenet_forward.1} parent=11 // pred_fallthru
          _
        // Predicated region
        $region17: #{lenet_forward.1} parent=11 // pred_check
          %p366 = pneg %p91
        $region18: #{lenet_forward.1} parent=11 // pred_check_branch
          %368 = sbr.rel (%p366) target = $region20
        $region19: #{lenet_forward.1} parent=11 // pred_region
          _
        $region20: #{lenet_forward.1} parent=11 // pred_fallthru
          _
        // Predicated region
        $region21: #{lenet_forward.1} parent=11 // pred_check
          %p369 = pneg %p112
        $region22: #{lenet_forward.1} parent=11 // pred_check_branch
          %371 = sbr.rel (%p369) target = $region24
        $region23: #{lenet_forward.1} parent=11 // pred_region
          _
        $region24: #{lenet_forward.1} parent=11 // pred_fallthru
          _
        // Predicated region
        $region25: #{lenet_forward.1} parent=11 // pred_check
          %p372 = pneg %p133
        $region26: #{lenet_forward.1} parent=11 // pred_check_branch
          %374 = sbr.rel (%p372) target = $region28
        $region27: #{lenet_forward.1} parent=11 // pred_region
          _
        $region28: #{lenet_forward.1} parent=11 // pred_fallthru
          _
        // Predicated region
        $region29: #{lenet_forward.1} parent=11 // pred_check
          %p375 = pneg %p154
        $region30: #{lenet_forward.1} parent=11 // pred_check_branch
          %377 = sbr.rel (%p375) target = $region32
        $region31: #{lenet_forward.1} parent=11 // pred_region
          _
        $region32: #{lenet_forward.1} parent=11 // pred_fallthru
          _
        // Predicated region
        $region33: #{lenet_forward.1} parent=11 // pred_check
          %p378 = pneg %p175
        $region34: #{lenet_forward.1} parent=11 // pred_check_branch
          %380 = sbr.rel (%p378) target = $region36
        $region35: #{lenet_forward.1} parent=11 // pred_region
          _
        $region36: #{lenet_forward.1} parent=11 // pred_fallthru
          _
        // Predicated region
        $region37: #{lenet_forward.1} parent=11 // pred_check
          %p381 = pneg %p196
        $region38: #{lenet_forward.1} parent=11 // pred_check_branch
          %383 = sbr.rel (%p381) target = $region40
        $region39: #{lenet_forward.1} parent=11 // pred_region
          _
        $region40: #{lenet_forward.1} parent=11 // pred_fallthru
          _
        // Predicated region
        $region41: #{lenet_forward.1} parent=11 // pred_check
          %p384 = pneg %p217
        $region42: #{lenet_forward.1} parent=11 // pred_check_branch
          %386 = sbr.rel (%p384) target = $region44
        $region43: #{lenet_forward.1} parent=11 // pred_region
          _
        $region44: #{lenet_forward.1} parent=11 // pred_fallthru
          _
        // Predicated region
        $region45: #{lenet_forward.1} parent=11 // pred_check
          %p387 = pneg %p238
        $region46: #{lenet_forward.1} parent=11 // pred_check_branch
          %389 = sbr.rel (%p387) target = $region48
        $region47: #{lenet_forward.1} parent=11 // pred_region
          _
        $region48: #{lenet_forward.1} parent=11 // pred_fallthru
          _
        // Predicated region
        $region49: #{lenet_forward.1} parent=11 // pred_check
          %p390 = pneg %p259
        $region50: #{lenet_forward.1} parent=11 // pred_check_branch
          %392 = sbr.rel (%p390) target = $region52
        $region51: #{lenet_forward.1} parent=11 // pred_region
          _
        $region52: #{lenet_forward.1} parent=11 // pred_fallthru
          _
        // Predicated region
        $region53: #{lenet_forward.1} parent=11 // pred_check
          %p393 = pneg %p280
        $region54: #{lenet_forward.1} parent=11 // pred_check_branch
          %395 = sbr.rel (%p393) target = $region56
        $region55: #{lenet_forward.1} parent=11 // pred_region
          _
        $region56: #{lenet_forward.1} parent=11 // pred_fallthru
          _
        // Predicated region
        $region57: #{lenet_forward.1} parent=11 // pred_check
          %p396 = pneg %p301
        $region58: #{lenet_forward.1} parent=11 // pred_check_branch
          %398 = sbr.rel (%p396) target = $region60
        $region59: #{lenet_forward.1} parent=11 // pred_region
          _
        $region60: #{lenet_forward.1} parent=11 // pred_fallthru
          _
        // Predicated region
        $region61: #{lenet_forward.1} parent=11 // pred_check
          %p399 = pneg %p322
        $region62: #{lenet_forward.1} parent=11 // pred_check_branch
          %401 = sbr.rel (%p399) target = $region64
        $region63: #{lenet_forward.1} parent=11 // pred_region
          _
        $region64: #{lenet_forward.1} parent=11 // pred_fallthru
          _
      $region12: #{lenet_forward.1} parent=5 // pred_fallthru
        _
      %p402 = scmp.lt.s32.totalorder %s23, 2
      // Predicated region
      $region65: #{lenet_forward.1} parent=5 // pred_check
        %p403 = pneg %p402
      $region66: #{lenet_forward.1} parent=5 // pred_check_branch
        %405 = sbr.rel (%p403) target = $region68
      $region67: #{lenet_forward.1} parent=5 // pred_region
        // Predicated region
        $region69: #{lenet_forward.1} parent=67 // pred_check
          %p406 = pneg %p43
        $region70: #{lenet_forward.1} parent=67 // pred_check_branch
          %408 = sbr.rel (%p406) target = $region72
        $region71: #{lenet_forward.1} parent=67 // pred_region
          %p409 = scmp.lt.s32.totalorder %s23, 1
          %s410 = scalar_select %p409, %s23, 1
          %s411 = smul.addr %s410, 4
          %s412 = smul.addr %s411, 8
          %s413 = scalar_lea.vmem %s0, %s412
        $region72: #{lenet_forward.1} parent=67 // pred_fallthru
          _
      $region68: #{lenet_forward.1} parent=5 // pred_fallthru
        _
      %p414 = scmp.le.s32.totalorder 1, %s23
      %p415 = scmp.lt.s32.totalorder %s23, 3
      %p416 = pnand %p414, %p415
      %p417 = pneg %p416
      // Predicated region
      $region73: #{lenet_forward.1} parent=5 // pred_check
        _
      $region74: #{lenet_forward.1} parent=5 // pred_check_branch
        %419 = sbr.rel (%p416) target = $region76
      $region75: #{lenet_forward.1} parent=5 // pred_region
        %s420 = ssub.s32 %s23, 1
        %p421 = scmp.lt.s32.totalorder %s28, 1
        %s422 = scalar_select %p421, %s28, 1
        %s423 = smul.addr %s422, 4
        %s424 = smul.addr %s423, 8
        %s425 = scalar_lea.vmem %s0, %s424
        %p426 = pneg %p49
        %p427 = pneg %p46
        %p428 = pneg %p70
        %p429 = pneg %p67
        %p430 = pneg %p91
        %p431 = pneg %p88
        %p432 = pneg %p112
        %p433 = pneg %p109
        %p434 = pneg %p133
        %p435 = pneg %p130
        %p436 = pneg %p154
        %p437 = pneg %p151
        %p438 = pneg %p175
        %p439 = pneg %p172
        %p440 = pneg %p196
        %p441 = pneg %p193
        %p442 = pneg %p217
        %p443 = pneg %p214
        %p444 = pneg %p238
        %p445 = pneg %p235
        %p446 = pneg %p259
        %p447 = pneg %p256
        %p448 = pneg %p280
        %p449 = pneg %p277
        %p450 = pneg %p301
        %p451 = pneg %p298
        %p452 = pneg %p322
        %p453 = pneg %p319
        %p454 = pneg %p348
        %p455 = pneg %p345
        %s456 = sand.u32 %s335, 1
        %s457 = scalar_lea.sflag [#allocation5], %s456
        %s458 = sand.u32 %s335, 1
        %s459 = scalar_lea.vmem [#allocation4], %s458
        %p460 = scmp.lt.s32.totalorder %s28, 1
        %s461 = scalar_select %p460, %s28, 1
        %s462 = smul.addr %s461, 4
        %s463 = smul.addr %s462, 8
        %s464 = scalar_lea.vmem %s0, %s463
        %v465 = vld [vmem:[%s464] sm:$0xff]
        %v466 = vld [vmem:[%s464 + $0x8] sm:$0xff]
        %v467 = vld [vmem:[%s464 + $0x10] sm:$0xff]
        %v468 = vld [vmem:[%s464 + $0x18] sm:$0xf]
        %v469 = vld [vmem:[%s464 + $0x1] sm:$0xff]
        %v470 = vld [vmem:[%s464 + $0x9] sm:$0xff]
        %v471 = vld [vmem:[%s464 + $0x11] sm:$0xff]
        %v472 = vld [vmem:[%s464 + $0x19] sm:$0xf]
        %v473 = vld [vmem:[%s464 + $0x2] sm:$0xff]
        %v474 = vld [vmem:[%s464 + $0xa] sm:$0xff]
        %v475 = vld [vmem:[%s464 + $0x12] sm:$0xff]
        %v476 = vld [vmem:[%s464 + $0x1a] sm:$0xf]
        %v477 = vld [vmem:[%s464 + $0x3] sm:$0xff]
        %v478 = vld [vmem:[%s464 + $0xb] sm:$0xff]
        %v479 = vld [vmem:[%s464 + $0x13] sm:$0xff]
        %v480 = vld [vmem:[%s464 + $0x1b] sm:$0xf]
        %v481 = vld [vmem:[%s464 + $0x4] sm:$0xff]
        %v482 = vld [vmem:[%s464 + $0xc] sm:$0xff]
        %v483 = vld [vmem:[%s464 + $0x14] sm:$0xff]
        %v484 = vld [vmem:[%s464 + $0x1c] sm:$0xf]
        %v485 = vld [vmem:[%s1] sm:$0xff]
        %v486 = vld [vmem:[%s1 + $0x8] sm:$0xff]
        %v487 = vld [vmem:[%s1 + $0x10] sm:$0xff]
        %v488 = vld [vmem:[%s1 + $0x18] sm:$0xff]
        %s489 = scalar_lea.vmem %s1, 32
        %v490 = vld [vmem:[%s489] sm:$0xff]
        %v491 = vld [vmem:[%s489 + $0x8] sm:$0xff]
        %v492 = vld [vmem:[%s489 + $0x10] sm:$0xff]
        %v493 = vld [vmem:[%s489 + $0x18] sm:$0xff]
        %vm494 = vcmask 261120
        %v496 = vsel %vm494, %v469, 0
        %v499 = vsel %vm494, %v470, 0
        %v502 = vsel %vm494, %v471, 0
        %v505 = vsel %vm494, %v472, 0
        %507 = vmatpush.msra.mxu0 0.0
        %508 = vmatpush.msra.mxu0 0.0
        %509 = vmatpush.msra.mxu0 0.0
        %510 = vmatpush.msra.mxu0 0.0
        %511 = vmatpush.msra.mxu0 0.0
        %512 = vmatpush.msra.mxu0 0.0
        %513 = vmatpush.msra.mxu0 0.0
        %514 = vmatpush.msra.mxu0 0.0
        %515 = vmatpush.msra.mxu0 0.0
        %516 = vmatpush.msra.mxu0 0.0
        %517 = vmatpush.msra.mxu0 0.0
        %518 = vmatpush.msra.mxu0 0.0
        %519 = vmatpush.msra.mxu0 %v493
        %520 = vmatpush.msra.mxu0 %v492
        %521 = vmatpush.msra.mxu0 %v491
        %522 = vmatpush.msra.mxu0 %v490
        %523 = vmatmul.f32.gmra.mxu0 %v496
        %v524 = vpop.f32.mrf.mxu0
        %v525 = vadd.f32 0.0, %v524
        %526 = vmatmul.f32.gmra.mxu0 %v499
        %v527 = vpop.f32.mrf.mxu0
        %v528 = vadd.f32 0.0, %v527
        %529 = vmatmul.f32.gmra.mxu0 %v502
        %v530 = vpop.f32.mrf.mxu0
        %v531 = vadd.f32 0.0, %v530
        %532 = vmatmul.f32.gmra.mxu0 %v505
        %v533 = vpop.f32.mrf.mxu0
        %v534 = vadd.f32 0.0, %v533
        %535 = vdwg.mxu0
        %v537 = vsel %vm494, %v465, 0
        %v540 = vsel %vm494, %v466, 0
        %v543 = vsel %vm494, %v467, 0
        %v546 = vsel %vm494, %v468, 0
        %548 = vmatpush.msra.mxu0 0.0
        %549 = vmatpush.msra.mxu0 0.0
        %550 = vmatpush.msra.mxu0 0.0
        %551 = vmatpush.msra.mxu0 0.0
        %552 = vmatpush.msra.mxu0 0.0
        %553 = vmatpush.msra.mxu0 0.0
        %554 = vmatpush.msra.mxu0 0.0
        %555 = vmatpush.msra.mxu0 0.0
        %556 = vmatpush.msra.mxu0 0.0
        %557 = vmatpush.msra.mxu0 0.0
        %558 = vmatpush.msra.mxu0 0.0
        %559 = vmatpush.msra.mxu0 0.0
        %560 = vmatpush.msra.mxu0 %v488
        %561 = vmatpush.msra.mxu0 %v487
        %562 = vmatpush.msra.mxu0 %v486
        %563 = vmatpush.msra.mxu0 %v485
        %564 = vmatmul.f32.gmra.mxu0 %v537
        %v565 = vpop.f32.mrf.mxu0
        %v566 = vadd.f32 %v525, %v565
        %567 = vmatmul.f32.gmra.mxu0 %v540
        %v568 = vpop.f32.mrf.mxu0
        %v569 = vadd.f32 %v528, %v568
        %570 = vmatmul.f32.gmra.mxu0 %v543
        %v571 = vpop.f32.mrf.mxu0
        %v572 = vadd.f32 %v531, %v571
        %573 = vmatmul.f32.gmra.mxu0 %v546
        %v574 = vpop.f32.mrf.mxu0
        %v575 = vadd.f32 %v534, %v574
        %576 = vdwg.mxu0
        %s577 = scalar_lea.vmem %s1, 64
        %v578 = vld [vmem:[%s577] sm:$0xff]
        %v579 = vld [vmem:[%s577 + $0x8] sm:$0xff]
        %v580 = vld [vmem:[%s577 + $0x10] sm:$0xff]
        %v581 = vld [vmem:[%s577 + $0x18] sm:$0xff]
        %v583 = vsel %vm494, %v473, 0
        %v586 = vsel %vm494, %v474, 0
        %v589 = vsel %vm494, %v475, 0
        %v592 = vsel %vm494, %v476, 0
        %594 = vmatpush.msra.mxu0 0.0
        %595 = vmatpush.msra.mxu0 0.0
        %596 = vmatpush.msra.mxu0 0.0
        %597 = vmatpush.msra.mxu0 0.0
        %598 = vmatpush.msra.mxu0 0.0
        %599 = vmatpush.msra.mxu0 0.0
        %600 = vmatpush.msra.mxu0 0.0
        %601 = vmatpush.msra.mxu0 0.0
        %602 = vmatpush.msra.mxu0 0.0
        %603 = vmatpush.msra.mxu0 0.0
        %604 = vmatpush.msra.mxu0 0.0
        %605 = vmatpush.msra.mxu0 0.0
        %606 = vmatpush.msra.mxu0 %v581
        %607 = vmatpush.msra.mxu0 %v580
        %608 = vmatpush.msra.mxu0 %v579
        %609 = vmatpush.msra.mxu0 %v578
        %610 = vmatmul.f32.gmra.mxu0 %v583
        %v611 = vpop.f32.mrf.mxu0
        %v612 = vadd.f32 0.0, %v611
        %613 = vmatmul.f32.gmra.mxu0 %v586
        %v614 = vpop.f32.mrf.mxu0
        %v615 = vadd.f32 0.0, %v614
        %616 = vmatmul.f32.gmra.mxu0 %v589
        %v617 = vpop.f32.mrf.mxu0
        %v618 = vadd.f32 0.0, %v617
        %619 = vmatmul.f32.gmra.mxu0 %v592
        %v620 = vpop.f32.mrf.mxu0
        %v621 = vadd.f32 0.0, %v620
        %622 = vdwg.mxu0
        %v623 = vadd.f32 %v566, %v612
        %v624 = vadd.f32 %v569, %v615
        %v625 = vadd.f32 %v572, %v618
        %v626 = vadd.f32 %v575, %v621
        %s627 = scalar_lea.vmem %s1, 96
        %v628 = vld [vmem:[%s627] sm:$0xff]
        %v629 = vld [vmem:[%s627 + $0x8] sm:$0xff]
        %v630 = vld [vmem:[%s627 + $0x10] sm:$0xff]
        %v631 = vld [vmem:[%s627 + $0x18] sm:$0xff]
        %v633 = vsel %vm494, %v477, 0
        %v636 = vsel %vm494, %v478, 0
        %v639 = vsel %vm494, %v479, 0
        %v642 = vsel %vm494, %v480, 0
        %644 = vmatpush.msra.mxu0 0.0
        %645 = vmatpush.msra.mxu0 0.0
        %646 = vmatpush.msra.mxu0 0.0
        %647 = vmatpush.msra.mxu0 0.0
        %648 = vmatpush.msra.mxu0 0.0
        %649 = vmatpush.msra.mxu0 0.0
        %650 = vmatpush.msra.mxu0 0.0
        %651 = vmatpush.msra.mxu0 0.0
        %652 = vmatpush.msra.mxu0 0.0
        %653 = vmatpush.msra.mxu0 0.0
        %654 = vmatpush.msra.mxu0 0.0
        %655 = vmatpush.msra.mxu0 0.0
        %656 = vmatpush.msra.mxu0 %v631
        %657 = vmatpush.msra.mxu0 %v630
        %658 = vmatpush.msra.mxu0 %v629
        %659 = vmatpush.msra.mxu0 %v628
        %660 = vmatmul.f32.gmra.mxu0 %v633
        %v661 = vpop.f32.mrf.mxu0
        %v662 = vadd.f32 0.0, %v661
        %663 = vmatmul.f32.gmra.mxu0 %v636
        %v664 = vpop.f32.mrf.mxu0
        %v665 = vadd.f32 0.0, %v664
        %666 = vmatmul.f32.gmra.mxu0 %v639
        %v667 = vpop.f32.mrf.mxu0
        %v668 = vadd.f32 0.0, %v667
        %669 = vmatmul.f32.gmra.mxu0 %v642
        %v670 = vpop.f32.mrf.mxu0
        %v671 = vadd.f32 0.0, %v670
        %672 = vdwg.mxu0
        %v673 = vadd.f32 %v623, %v662
        %v674 = vadd.f32 %v624, %v665
        %v675 = vadd.f32 %v625, %v668
        %v676 = vadd.f32 %v626, %v671
        %s677 = scalar_lea.vmem %s1, 128
        %v678 = vld [vmem:[%s677] sm:$0xff]
        %v679 = vld [vmem:[%s677 + $0x8] sm:$0xff]
        %v680 = vld [vmem:[%s677 + $0x10] sm:$0xff]
        %v681 = vld [vmem:[%s677 + $0x18] sm:$0xff]
        %v683 = vsel %vm494, %v481, 0
        %v686 = vsel %vm494, %v482, 0
        %v689 = vsel %vm494, %v483, 0
        %v692 = vsel %vm494, %v484, 0
        %694 = vmatpush.msra.mxu0 0.0
        %695 = vmatpush.msra.mxu0 0.0
        %696 = vmatpush.msra.mxu0 0.0
        %697 = vmatpush.msra.mxu0 0.0
        %698 = vmatpush.msra.mxu0 0.0
        %699 = vmatpush.msra.mxu0 0.0
        %700 = vmatpush.msra.mxu0 0.0
        %701 = vmatpush.msra.mxu0 0.0
        %702 = vmatpush.msra.mxu0 0.0
        %703 = vmatpush.msra.mxu0 0.0
        %704 = vmatpush.msra.mxu0 0.0
        %705 = vmatpush.msra.mxu0 0.0
        %706 = vmatpush.msra.mxu0 %v681
        %707 = vmatpush.msra.mxu0 %v680
        %708 = vmatpush.msra.mxu0 %v679
        %709 = vmatpush.msra.mxu0 %v678
        %710 = vmatmul.f32.gmra.mxu0 %v683
        %v711 = vpop.f32.mrf.mxu0
        %v712 = vadd.f32 0.0, %v711
        %713 = vmatmul.f32.gmra.mxu0 %v686
        %v714 = vpop.f32.mrf.mxu0
        %v715 = vadd.f32 0.0, %v714
        %716 = vmatmul.f32.gmra.mxu0 %v689
        %v717 = vpop.f32.mrf.mxu0
        %v718 = vadd.f32 0.0, %v717
        %719 = vmatmul.f32.gmra.mxu0 %v692
        %v720 = vpop.f32.mrf.mxu0
        %v721 = vadd.f32 0.0, %v720
        %722 = vdwg.mxu0
        %v723 = vadd.f32 %v673, %v712
        %v724 = vadd.f32 %v674, %v715
        %v725 = vadd.f32 %v675, %v718
        %v726 = vadd.f32 %v676, %v721
        %v727 = vld [vmem:[%s2] sm:$0x1]
        %s729 = vtos %v727
        %v730 = vstv %s729
        %v732 = vadd.f32 %v723, %v730
        %v733 = vadd.f32 %v724, %v730
        %v734 = vadd.f32 %v725, %v730
        %v735 = vadd.f32 %v726, %v730
        %v736 = vxor.u32 %v732, 2147483648
        %v737 = vxor.u32 %v733, 2147483648
        %v738 = vxor.u32 %v734, 2147483648
        %v739 = vxor.u32 %v735, 2147483648
        %v740 = vmul.f32 %v736, 1.442695
        %v741 = vpow.pop %v740
        %v742 = vmul.f32 %v737, 1.442695
        %v743 = vpow.pop %v742
        %v744 = vmul.f32 %v738, 1.442695
        %v745 = vpow.pop %v744
        %v746 = vmul.f32 %v739, 1.442695
        %v747 = vpow.pop %v746
        %v748 = vadd.f32 %v741, 1.0
        %v749 = vadd.f32 %v743, 1.0
        %v750 = vadd.f32 %v745, 1.0
        %v751 = vadd.f32 %v747, 1.0
        %v752 = vrcp.pop %v748
        %v753 = vmul.f32 %v748, %v752
        %v754 = vsub.f32 1.0, %v753
        %v755 = vmul.f32 %v752, %v754
        %v756 = vadd.f32 %v752, %v755
        %vm757 = vweird.f32 %v748
        %vm758 = vweird.f32 %v752
        %vm759 = vmor %vm757, %vm758
        %v760 = vsel %vm759, %v752, %v756
        %v761 = vand.u32 2147483647, %v748
        %vm762 = vcmp.eq.f32.partialorder %v761, 8.507059e+37
        %v763 = vand.u32 %v748, 2147483648
        %v764 = vor.u32 1.1754944e-38, %v763
        %v765 = vsel %vm762, %v764, %v760
        %v766 = vmul.f32 1.0, %v765
        %v767 = vrcp.pop %v749
        %v768 = vmul.f32 %v749, %v767
        %v769 = vsub.f32 1.0, %v768
        %v770 = vmul.f32 %v767, %v769
        %v771 = vadd.f32 %v767, %v770
        %vm772 = vweird.f32 %v749
        %vm773 = vweird.f32 %v767
        %vm774 = vmor %vm772, %vm773
        %v775 = vsel %vm774, %v767, %v771
        %v776 = vand.u32 2147483647, %v749
        %vm777 = vcmp.eq.f32.partialorder %v776, 8.507059e+37
        %v778 = vand.u32 %v749, 2147483648
        %v779 = vor.u32 1.1754944e-38, %v778
        %v780 = vsel %vm777, %v779, %v775
        %v781 = vmul.f32 1.0, %v780
        %v782 = vrcp.pop %v750
        %v783 = vmul.f32 %v750, %v782
        %v784 = vsub.f32 1.0, %v783
        %v785 = vmul.f32 %v782, %v784
        %v786 = vadd.f32 %v782, %v785
        %vm787 = vweird.f32 %v750
        %vm788 = vweird.f32 %v782
        %vm789 = vmor %vm787, %vm788
        %v790 = vsel %vm789, %v782, %v786
        %v791 = vand.u32 2147483647, %v750
        %vm792 = vcmp.eq.f32.partialorder %v791, 8.507059e+37
        %v793 = vand.u32 %v750, 2147483648
        %v794 = vor.u32 1.1754944e-38, %v793
        %v795 = vsel %vm792, %v794, %v790
        %v796 = vmul.f32 1.0, %v795
        %v797 = vrcp.pop %v751
        %v798 = vmul.f32 %v751, %v797
        %v799 = vsub.f32 1.0, %v798
        %v800 = vmul.f32 %v797, %v799
        %v801 = vadd.f32 %v797, %v800
        %vm802 = vweird.f32 %v751
        %vm803 = vweird.f32 %v797
        %vm804 = vmor %vm802, %vm803
        %v805 = vsel %vm804, %v797, %v801
        %v806 = vand.u32 2147483647, %v751
        %vm807 = vcmp.eq.f32.partialorder %v806, 8.507059e+37
        %v808 = vand.u32 %v751, 2147483648
        %v809 = vor.u32 1.1754944e-38, %v808
        %v810 = vsel %vm807, %v809, %v805
        %v811 = vmul.f32 1.0, %v810
        %v812 = vld [vmem:[%s3] sm:$0xff]
        %v813 = vld [vmem:[%s3 + $0x8] sm:$0x3f]
        %v814 = vld [vmem:[%s4] sm:$0xff]
        %v815 = vld [vmem:[%s4 + $0x8] sm:$0xff]
        %v816 = vld [vmem:[%s4 + $0x10] sm:$0xff]
        %v817 = vld [vmem:[%s4 + $0x18] sm:$0xf]
        %vm818 = vcmask 228352
        %v820 = vsel %vm818, %v766, 0
        %v823 = vsel %vm818, %v781, 0
        %v826 = vsel %vm818, %v796, 0
        %v829 = vsel %vm818, %v811, 0
        %vm831 = vcmask 1043456
        %v833 = vsel %vm831, %v817, 0
        %835 = vmatpush.msra.mxu0 0.0
        %836 = vmatpush.msra.mxu0 0.0
        %837 = vmatpush.msra.mxu0 0.0
        %838 = vmatpush.msra.mxu0 0.0
        %839 = vmatpush.msra.mxu0 0.0
        %840 = vmatpush.msra.mxu0 0.0
        %841 = vmatpush.msra.mxu0 0.0
        %842 = vmatpush.msra.mxu0 0.0
        %843 = vmatpush.msra.mxu0 0.0
        %844 = vmatpush.msra.mxu0 0.0
        %845 = vmatpush.msra.mxu0 0.0
        %846 = vmatpush.msra.mxu0 0.0
        %847 = vmatpush.msra.mxu0 %v833
        %848 = vmatpush.msra.mxu0 %v816
        %849 = vmatpush.msra.mxu0 %v815
        %850 = vmatpush.msra.mxu0 %v814
        %851 = vmatmul.f32.gmra.mxu0 %v820
        %v852 = vpop.f32.mrf.mxu0
        %v853 = vadd.f32 0.0, %v852
        %854 = vmatmul.f32.gmra.mxu0 %v823
        %v855 = vpop.f32.mrf.mxu0
        %v856 = vadd.f32 0.0, %v855
        %857 = vmatmul.f32.gmra.mxu0 %v826
        %v858 = vpop.f32.mrf.mxu0
        %v859 = vadd.f32 0.0, %v858
        %860 = vmatmul.f32.gmra.mxu0 %v829
        %v861 = vpop.f32.mrf.mxu0
        %v862 = vadd.f32 0.0, %v861
        %863 = vdwg.mxu0
        %v865 = vsel %vm818, %v812, 0
        %v868 = vsel %vm818, %v813, 0
        %v871 = vsel %vm831, %v862, 0
        %873 = vmatpush.msra.mxu0 0.0
        %874 = vmatpush.msra.mxu0 0.0
        %875 = vmatpush.msra.mxu0 0.0
        %876 = vmatpush.msra.mxu0 0.0
        %877 = vmatpush.msra.mxu0 0.0
        %878 = vmatpush.msra.mxu0 0.0
        %879 = vmatpush.msra.mxu0 0.0
        %880 = vmatpush.msra.mxu0 0.0
        %881 = vmatpush.msra.mxu0 0.0
        %882 = vmatpush.msra.mxu0 0.0
        %883 = vmatpush.msra.mxu0 0.0
        %884 = vmatpush.msra.mxu0 0.0
        %885 = vmatpush.msra.mxu0 %v871
        %886 = vmatpush.msra.mxu0 %v859
        %887 = vmatpush.msra.mxu0 %v856
        %888 = vmatpush.msra.mxu0 %v853
        %889 = vmatmul.f32.gmra.mxu0 %v865
        %v890 = vpop.f32.mrf.mxu0
        %v891 = vadd.f32 0.0, %v890
        %892 = vmatmul.f32.gmra.mxu0 %v868
        %v893 = vpop.f32.mrf.mxu0
        %v894 = vadd.f32 0.0, %v893
        %895 = vdwg.mxu0
        %vm896 = vcmask 106496
        %897 = vst.msk [vmem:[#allocation2] sm:$0x1] %vm896, %v891
        %v899 = vrot.slane %v891, 1
        %900 = vrot.lane.b32.xlu0 %v899, 14
        %v901 = vpop.permute.xlu0 %900
        %vm903 = vcmask 221296
        %904 = vst.msk [vmem:[#allocation2] sm:$0x1] %vm903, %v901
        %v905 = vrot.slane %v891, 2
        %906 = vrot.lane.b32.xlu0 %v905, 28
        %v907 = vpop.permute.xlu0 %906
        %vm909 = vcmask 336096
        %910 = vst.msk [vmem:[#allocation2] sm:$0x1] %vm909, %v907
        %v911 = vrot.slane %v891, 3
        %912 = vrot.lane.b32.xlu0 %v911, 42
        %v913 = vpop.permute.xlu0 %912
        %vm915 = vcmask 450896
        %916 = vst.msk [vmem:[#allocation2] sm:$0x1] %vm915, %v913
        %v917 = vrot.slane %v891, 4
        %918 = vrot.lane.b32.xlu0 %v917, 56
        %v919 = vpop.permute.xlu0 %918
        %vm921 = vcmask 565696
        %922 = vst.msk [vmem:[#allocation2] sm:$0x1] %vm921, %v919
        %v923 = vrot.slane %v891, 5
        %924 = vrot.lane.b32.xlu0 %v923, 70
        %v925 = vpop.permute.xlu0 %924
        %vm927 = vcmask 680496
        %928 = vst.msk [vmem:[#allocation2] sm:$0x1] %vm927, %v925
        %v929 = vrot.slane %v891, 6
        %930 = vrot.lane.b32.xlu0 %v929, 84
        %v931 = vpop.permute.xlu0 %930
        %vm933 = vcmask 795296
        %934 = vst.msk [vmem:[#allocation2] sm:$0x1] %vm933, %v931
        %v935 = vrot.slane %v891, 7
        %936 = vrot.lane.b32.xlu0 %v935, 98
        %v937 = vpop.permute.xlu0 %936
        %vm939 = vcmask 910096
        %940 = vst.msk [vmem:[#allocation2] sm:$0x1] %vm939, %v937
        %942 = vrot.lane.b32.xlu0 %v894, 112
        %v943 = vpop.permute.xlu0 %942
        %vm945 = vcmask 1024896
        %946 = vst.msk [vmem:[#allocation2] sm:$0x1] %vm945, %v943
        %v947 = vrot.slane %v894, 1
        %948 = vrot.lane.b32.xlu0 %v947, 126
        %v949 = vpop.permute.xlu0 %948
        %vm951 = vcmask 1041392
        %952 = vst.msk [vmem:[#allocation2] sm:$0x1] %vm951, %v949
        %vm953 = vcmask 90112
        %954 = vst.msk [vmem:[#allocation2 + $0x8] sm:$0x1] %vm953, %v949
        %v955 = vrot.slane %v894, 2
        %956 = vrot.lane.b32.xlu0 %v955, 12
        %v957 = vpop.permute.xlu0 %956
        %vm959 = vcmask 204896
        %960 = vst.msk [vmem:[#allocation2 + $0x8] sm:$0x1] %vm959, %v957
        %v961 = vrot.slane %v894, 3
        %962 = vrot.lane.b32.xlu0 %v961, 26
        %v963 = vpop.permute.xlu0 %962
        %vm965 = vcmask 319696
        %966 = vst.msk [vmem:[#allocation2 + $0x8] sm:$0x1] %vm965, %v963
        %v967 = vrot.slane %v894, 4
        %968 = vrot.lane.b32.xlu0 %v967, 40
        %v969 = vpop.permute.xlu0 %968
        %vm971 = vcmask 434496
        %972 = vst.msk [vmem:[#allocation2 + $0x8] sm:$0x1] %vm971, %v969
        %v973 = vrot.slane %v894, 5
        %974 = vrot.lane.b32.xlu0 %v973, 54
        %v975 = vpop.permute.xlu0 %974
        %vm977 = vcmask 549296
        %978 = vst.msk [vmem:[#allocation2 + $0x8] sm:$0x1] %vm977, %v975
        %s979 = scalar_lea.vmem %s1, 160
        %v980 = vld [vmem:[%s979] sm:$0xff]
        %v981 = vld [vmem:[%s979 + $0x8] sm:$0xff]
        %v982 = vld [vmem:[%s979 + $0x10] sm:$0xff]
        %v983 = vld [vmem:[%s979 + $0x18] sm:$0xff]
        %s984 = scalar_lea.vmem %s1, 192
        %v985 = vld [vmem:[%s984] sm:$0xff]
        %v986 = vld [vmem:[%s984 + $0x8] sm:$0xff]
        %v987 = vld [vmem:[%s984 + $0x10] sm:$0xff]
        %v988 = vld [vmem:[%s984 + $0x18] sm:$0xff]
        %989 = vmatpush.msra.mxu0 0.0
        %990 = vmatpush.msra.mxu0 0.0
        %991 = vmatpush.msra.mxu0 0.0
        %992 = vmatpush.msra.mxu0 0.0
        %993 = vmatpush.msra.mxu0 0.0
        %994 = vmatpush.msra.mxu0 0.0
        %995 = vmatpush.msra.mxu0 0.0
        %996 = vmatpush.msra.mxu0 0.0
        %997 = vmatpush.msra.mxu0 0.0
        %998 = vmatpush.msra.mxu0 0.0
        %999 = vmatpush.msra.mxu0 0.0
        %1000 = vmatpush.msra.mxu0 0.0
        %1001 = vmatpush.msra.mxu0 %v988
        %1002 = vmatpush.msra.mxu0 %v987
        %1003 = vmatpush.msra.mxu0 %v986
        %1004 = vmatpush.msra.mxu0 %v985
        %1005 = vmatmul.f32.gmra.mxu0 %v496
        %v1006 = vpop.f32.mrf.mxu0
        %v1007 = vadd.f32 0.0, %v1006
        %1008 = vmatmul.f32.gmra.mxu0 %v499
        %v1009 = vpop.f32.mrf.mxu0
        %v1010 = vadd.f32 0.0, %v1009
        %1011 = vmatmul.f32.gmra.mxu0 %v502
        %v1012 = vpop.f32.mrf.mxu0
        %v1013 = vadd.f32 0.0, %v1012
        %1014 = vmatmul.f32.gmra.mxu0 %v505
        %v1015 = vpop.f32.mrf.mxu0
        %v1016 = vadd.f32 0.0, %v1015
        %1017 = vdwg.mxu0
        %1018 = vmatpush.msra.mxu0 0.0
        %1019 = vmatpush.msra.mxu0 0.0
        %1020 = vmatpush.msra.mxu0 0.0
        %1021 = vmatpush.msra.mxu0 0.0
        %1022 = vmatpush.msra.mxu0 0.0
        %1023 = vmatpush.msra.mxu0 0.0
        %1024 = vmatpush.msra.mxu0 0.0
        %1025 = vmatpush.msra.mxu0 0.0
        %1026 = vmatpush.msra.mxu0 0.0
        %1027 = vmatpush.msra.mxu0 0.0
        %1028 = vmatpush.msra.mxu0 0.0
        %1029 = vmatpush.msra.mxu0 0.0
        %1030 = vmatpush.msra.mxu0 %v983
        %1031 = vmatpush.msra.mxu0 %v982
        %1032 = vmatpush.msra.mxu0 %v981
        %1033 = vmatpush.msra.mxu0 %v980
        %1034 = vmatmul.f32.gmra.mxu0 %v537
        %v1035 = vpop.f32.mrf.mxu0
        %v1036 = vadd.f32 %v1007, %v1035
        %1037 = vmatmul.f32.gmra.mxu0 %v540
        %v1038 = vpop.f32.mrf.mxu0
        %v1039 = vadd.f32 %v1010, %v1038
        %1040 = vmatmul.f32.gmra.mxu0 %v543
        %v1041 = vpop.f32.mrf.mxu0
        %v1042 = vadd.f32 %v1013, %v1041
        %1043 = vmatmul.f32.gmra.mxu0 %v546
        %v1044 = vpop.f32.mrf.mxu0
        %v1045 = vadd.f32 %v1016, %v1044
        %1046 = vdwg.mxu0
        %s1047 = scalar_lea.vmem %s1, 224
        %v1048 = vld [vmem:[%s1047] sm:$0xff]
        %v1049 = vld [vmem:[%s1047 + $0x8] sm:$0xff]
        %v1050 = vld [vmem:[%s1047 + $0x10] sm:$0xff]
        %v1051 = vld [vmem:[%s1047 + $0x18] sm:$0xff]
        %1052 = vmatpush.msra.mxu0 0.0
        %1053 = vmatpush.msra.mxu0 0.0
        %1054 = vmatpush.msra.mxu0 0.0
        %1055 = vmatpush.msra.mxu0 0.0
        %1056 = vmatpush.msra.mxu0 0.0
        %1057 = vmatpush.msra.mxu0 0.0
        %1058 = vmatpush.msra.mxu0 0.0
        %1059 = vmatpush.msra.mxu0 0.0
        %1060 = vmatpush.msra.mxu0 0.0
        %1061 = vmatpush.msra.mxu0 0.0
        %1062 = vmatpush.msra.mxu0 0.0
        %1063 = vmatpush.msra.mxu0 0.0
        %1064 = vmatpush.msra.mxu0 %v1051
        %1065 = vmatpush.msra.mxu0 %v1050
        %1066 = vmatpush.msra.mxu0 %v1049
        %1067 = vmatpush.msra.mxu0 %v1048
        %1068 = vmatmul.f32.gmra.mxu0 %v583
        %v1069 = vpop.f32.mrf.mxu0
        %v1070 = vadd.f32 0.0, %v1069
        %1071 = vmatmul.f32.gmra.mxu0 %v586
        %v1072 = vpop.f32.mrf.mxu0
        %v1073 = vadd.f32 0.0, %v1072
        %1074 = vmatmul.f32.gmra.mxu0 %v589
        %v1075 = vpop.f32.mrf.mxu0
        %v1076 = vadd.f32 0.0, %v1075
        %1077 = vmatmul.f32.gmra.mxu0 %v592
        %v1078 = vpop.f32.mrf.mxu0
        %v1079 = vadd.f32 0.0, %v1078
        %1080 = vdwg.mxu0
        %v1081 = vadd.f32 %v1036, %v1070
        %v1082 = vadd.f32 %v1039, %v1073
        %v1083 = vadd.f32 %v1042, %v1076
        %v1084 = vadd.f32 %v1045, %v1079
        %s1085 = scalar_lea.vmem %s1, 256
        %v1086 = vld [vmem:[%s1085] sm:$0xff]
        %v1087 = vld [vmem:[%s1085 + $0x8] sm:$0xff]
        %v1088 = vld [vmem:[%s1085 + $0x10] sm:$0xff]
        %v1089 = vld [vmem:[%s1085 + $0x18] sm:$0xff]
        %1090 = vmatpush.msra.mxu0 0.0
        %1091 = vmatpush.msra.mxu0 0.0
        %1092 = vmatpush.msra.mxu0 0.0
        %1093 = vmatpush.msra.mxu0 0.0
        %1094 = vmatpush.msra.mxu0 0.0
        %1095 = vmatpush.msra.mxu0 0.0
        %1096 = vmatpush.msra.mxu0 0.0
        %1097 = vmatpush.msra.mxu0 0.0
        %1098 = vmatpush.msra.mxu0 0.0
        %1099 = vmatpush.msra.mxu0 0.0
        %1100 = vmatpush.msra.mxu0 0.0
        %1101 = vmatpush.msra.mxu0 0.0
        %1102 = vmatpush.msra.mxu0 %v1089
        %1103 = vmatpush.msra.mxu0 %v1088
        %1104 = vmatpush.msra.mxu0 %v1087
        %1105 = vmatpush.msra.mxu0 %v1086
        %1106 = vmatmul.f32.gmra.mxu0 %v633
        %v1107 = vpop.f32.mrf.mxu0
        %v1108 = vadd.f32 0.0, %v1107
        %1109 = vmatmul.f32.gmra.mxu0 %v636
        %v1110 = vpop.f32.mrf.mxu0
        %v1111 = vadd.f32 0.0, %v1110
        %1112 = vmatmul.f32.gmra.mxu0 %v639
        %v1113 = vpop.f32.mrf.mxu0
        %v1114 = vadd.f32 0.0, %v1113
        %1115 = vmatmul.f32.gmra.mxu0 %v642
        %v1116 = vpop.f32.mrf.mxu0
        %v1117 = vadd.f32 0.0, %v1116
        %1118 = vdwg.mxu0
        %v1119 = vadd.f32 %v1081, %v1108
        %v1120 = vadd.f32 %v1082, %v1111
        %v1121 = vadd.f32 %v1083, %v1114
        %v1122 = vadd.f32 %v1084, %v1117
        %s1123 = scalar_lea.vmem %s1, 288
        %v1124 = vld [vmem:[%s1123] sm:$0xff]
        %v1125 = vld [vmem:[%s1123 + $0x8] sm:$0xff]
        %v1126 = vld [vmem:[%s1123 + $0x10] sm:$0xff]
        %v1127 = vld [vmem:[%s1123 + $0x18] sm:$0xff]
        %1128 = vmatpush.msra.mxu0 0.0
        %1129 = vmatpush.msra.mxu0 0.0
        %1130 = vmatpush.msra.mxu0 0.0
        %1131 = vmatpush.msra.mxu0 0.0
        %1132 = vmatpush.msra.mxu0 0.0
        %1133 = vmatpush.msra.mxu0 0.0
        %1134 = vmatpush.msra.mxu0 0.0
        %1135 = vmatpush.msra.mxu0 0.0
        %1136 = vmatpush.msra.mxu0 0.0
        %1137 = vmatpush.msra.mxu0 0.0
        %1138 = vmatpush.msra.mxu0 0.0
        %1139 = vmatpush.msra.mxu0 0.0
        %1140 = vmatpush.msra.mxu0 %v1127
        %1141 = vmatpush.msra.mxu0 %v1126
        %1142 = vmatpush.msra.mxu0 %v1125
        %1143 = vmatpush.msra.mxu0 %v1124
        %1144 = vmatmul.f32.gmra.mxu0 %v683
        %v1145 = vpop.f32.mrf.mxu0
        %v1146 = vadd.f32 0.0, %v1145
        %1147 = vmatmul.f32.gmra.mxu0 %v686
        %v1148 = vpop.f32.mrf.mxu0
        %v1149 = vadd.f32 0.0, %v1148
        %1150 = vmatmul.f32.gmra.mxu0 %v689
        %v1151 = vpop.f32.mrf.mxu0
        %v1152 = vadd.f32 0.0, %v1151
        %1153 = vmatmul.f32.gmra.mxu0 %v692
        %v1154 = vpop.f32.mrf.mxu0
        %v1155 = vadd.f32 0.0, %v1154
        %1156 = vdwg.mxu0
        %v1157 = vadd.f32 %v1119, %v1146
        %v1158 = vadd.f32 %v1120, %v1149
        %v1159 = vadd.f32 %v1121, %v1152
        %v1160 = vadd.f32 %v1122, %v1155
        %v1161 = vld [vmem:[%s2 + $0x1] sm:$0x1]
        %s1163 = vtos %v1161
        %v1164 = vstv %s1163
        %v1166 = vadd.f32 %v1157, %v1164
        %v1167 = vadd.f32 %v1158, %v1164
        %v1168 = vadd.f32 %v1159, %v1164
        %v1169 = vadd.f32 %v1160, %v1164
        %v1170 = vxor.u32 %v1166, 2147483648
        %v1171 = vxor.u32 %v1167, 2147483648
        %v1172 = vxor.u32 %v1168, 2147483648
        %v1173 = vxor.u32 %v1169, 2147483648
        %v1174 = vmul.f32 %v1170, 1.442695
        %v1175 = vpow.pop %v1174
        %v1176 = vmul.f32 %v1171, 1.442695
        %v1177 = vpow.pop %v1176
        %v1178 = vmul.f32 %v1172, 1.442695
        %v1179 = vpow.pop %v1178
        %v1180 = vmul.f32 %v1173, 1.442695
        %v1181 = vpow.pop %v1180
        %v1182 = vadd.f32 %v1175, 1.0
        %v1183 = vadd.f32 %v1177, 1.0
        %v1184 = vadd.f32 %v1179, 1.0
        %v1185 = vadd.f32 %v1181, 1.0
        %v1186 = vrcp.pop %v1182
        %v1187 = vmul.f32 %v1182, %v1186
        %v1188 = vsub.f32 1.0, %v1187
        %v1189 = vmul.f32 %v1186, %v1188
        %v1190 = vadd.f32 %v1186, %v1189
        %vm1191 = vweird.f32 %v1182
        %vm1192 = vweird.f32 %v1186
        %vm1193 = vmor %vm1191, %vm1192
        %v1194 = vsel %vm1193, %v1186, %v1190
        %v1195 = vand.u32 2147483647, %v1182
        %vm1196 = vcmp.eq.f32.partialorder %v1195, 8.507059e+37
        %v1197 = vand.u32 %v1182, 2147483648
        %v1198 = vor.u32 1.1754944e-38, %v1197
        %v1199 = vsel %vm1196, %v1198, %v1194
        %v1200 = vmul.f32 1.0, %v1199
        %v1201 = vrcp.pop %v1183
        %v1202 = vmul.f32 %v1183, %v1201
        %v1203 = vsub.f32 1.0, %v1202
        %v1204 = vmul.f32 %v1201, %v1203
        %v1205 = vadd.f32 %v1201, %v1204
        %vm1206 = vweird.f32 %v1183
        %vm1207 = vweird.f32 %v1201
        %vm1208 = vmor %vm1206, %vm1207
        %v1209 = vsel %vm1208, %v1201, %v1205
        %v1210 = vand.u32 2147483647, %v1183
        %vm1211 = vcmp.eq.f32.partialorder %v1210, 8.507059e+37
        %v1212 = vand.u32 %v1183, 2147483648
        %v1213 = vor.u32 1.1754944e-38, %v1212
        %v1214 = vsel %vm1211, %v1213, %v1209
        %v1215 = vmul.f32 1.0, %v1214
        %v1216 = vrcp.pop %v1184
        %v1217 = vmul.f32 %v1184, %v1216
        %v1218 = vsub.f32 1.0, %v1217
        %v1219 = vmul.f32 %v1216, %v1218
        %v1220 = vadd.f32 %v1216, %v1219
        %vm1221 = vweird.f32 %v1184
        %vm1222 = vweird.f32 %v1216
        %vm1223 = vmor %vm1221, %vm1222
        %v1224 = vsel %vm1223, %v1216, %v1220
        %v1225 = vand.u32 2147483647, %v1184
        %vm1226 = vcmp.eq.f32.partialorder %v1225, 8.507059e+37
        %v1227 = vand.u32 %v1184, 2147483648
        %v1228 = vor.u32 1.1754944e-38, %v1227
        %v1229 = vsel %vm1226, %v1228, %v1224
        %v1230 = vmul.f32 1.0, %v1229
        %v1231 = vrcp.pop %v1185
        %v1232 = vmul.f32 %v1185, %v1231
        %v1233 = vsub.f32 1.0, %v1232
        %v1234 = vmul.f32 %v1231, %v1233
        %v1235 = vadd.f32 %v1231, %v1234
        %vm1236 = vweird.f32 %v1185
        %vm1237 = vweird.f32 %v1231
        %vm1238 = vmor %vm1236, %vm1237
        %v1239 = vsel %vm1238, %v1231, %v1235
        %v1240 = vand.u32 2147483647, %v1185
        %vm1241 = vcmp.eq.f32.partialorder %v1240, 8.507059e+37
        %v1242 = vand.u32 %v1185, 2147483648
        %v1243 = vor.u32 1.1754944e-38, %v1242
        %v1244 = vsel %vm1241, %v1243, %v1239
        %v1245 = vmul.f32 1.0, %v1244
        %v1246 = vld [vmem:[%s3] sm:$0xff]
        %v1247 = vld [vmem:[%s3 + $0x8] sm:$0x3f]
        %v1248 = vld [vmem:[%s4] sm:$0xff]
        %v1249 = vld [vmem:[%s4 + $0x8] sm:$0xff]
        %v1250 = vld [vmem:[%s4 + $0x10] sm:$0xff]
        %v1251 = vld [vmem:[%s4 + $0x18] sm:$0xf]
        %v1253 = vsel %vm818, %v1200, 0
        %v1256 = vsel %vm818, %v1215, 0
        %v1259 = vsel %vm818, %v1230, 0
        %v1262 = vsel %vm818, %v1245, 0
        %v1265 = vsel %vm831, %v1251, 0
        %1267 = vmatpush.msra.mxu0 0.0
        %1268 = vmatpush.msra.mxu0 0.0
        %1269 = vmatpush.msra.mxu0 0.0
        %1270 = vmatpush.msra.mxu0 0.0
        %1271 = vmatpush.msra.mxu0 0.0
        %1272 = vmatpush.msra.mxu0 0.0
        %1273 = vmatpush.msra.mxu0 0.0
        %1274 = vmatpush.msra.mxu0 0.0
        %1275 = vmatpush.msra.mxu0 0.0
        %1276 = vmatpush.msra.mxu0 0.0
        %1277 = vmatpush.msra.mxu0 0.0
        %1278 = vmatpush.msra.mxu0 0.0
        %1279 = vmatpush.msra.mxu0 %v1265
        %1280 = vmatpush.msra.mxu0 %v1250
        %1281 = vmatpush.msra.mxu0 %v1249
        %1282 = vmatpush.msra.mxu0 %v1248
        %1283 = vmatmul.f32.gmra.mxu0 %v1253
        %v1284 = vpop.f32.mrf.mxu0
        %v1285 = vadd.f32 0.0, %v1284
        %1286 = vmatmul.f32.gmra.mxu0 %v1256
        %v1287 = vpop.f32.mrf.mxu0
        %v1288 = vadd.f32 0.0, %v1287
        %1289 = vmatmul.f32.gmra.mxu0 %v1259
        %v1290 = vpop.f32.mrf.mxu0
        %v1291 = vadd.f32 0.0, %v1290
        %1292 = vmatmul.f32.gmra.mxu0 %v1262
        %v1293 = vpop.f32.mrf.mxu0
        %v1294 = vadd.f32 0.0, %v1293
        %1295 = vdwg.mxu0
        %v1297 = vsel %vm818, %v1246, 0
        %v1300 = vsel %vm818, %v1247, 0
        %v1303 = vsel %vm831, %v1294, 0
        %1305 = vmatpush.msra.mxu0 0.0
        %1306 = vmatpush.msra.mxu0 0.0
        %1307 = vmatpush.msra.mxu0 0.0
        %1308 = vmatpush.msra.mxu0 0.0
        %1309 = vmatpush.msra.mxu0 0.0
        %1310 = vmatpush.msra.mxu0 0.0
        %1311 = vmatpush.msra.mxu0 0.0
        %1312 = vmatpush.msra.mxu0 0.0
        %1313 = vmatpush.msra.mxu0 0.0
        %1314 = vmatpush.msra.mxu0 0.0
        %1315 = vmatpush.msra.mxu0 0.0
        %1316 = vmatpush.msra.mxu0 0.0
        %1317 = vmatpush.msra.mxu0 %v1303
        %1318 = vmatpush.msra.mxu0 %v1291
        %1319 = vmatpush.msra.mxu0 %v1288
        %1320 = vmatpush.msra.mxu0 %v1285
        %1321 = vmatmul.f32.gmra.mxu0 %v1297
        %v1322 = vpop.f32.mrf.mxu0
        %v1323 = vadd.f32 0.0, %v1322
        %1324 = vmatmul.f32.gmra.mxu0 %v1300
        %v1325 = vpop.f32.mrf.mxu0
        %v1326 = vadd.f32 0.0, %v1325
        %1327 = vdwg.mxu0
        %1328 = vst.msk [vmem:[#allocation2 + $0x1] sm:$0x1] %vm896, %v1323
        %v1330 = vrot.slane %v1323, 1
        %1331 = vrot.lane.b32.xlu0 %v1330, 14
        %v1332 = vpop.permute.xlu0 %1331
        %1334 = vst.msk [vmem:[#allocation2 + $0x1] sm:$0x1] %vm903, %v1332
        %v1335 = vrot.slane %v1323, 2
        %1336 = vrot.lane.b32.xlu0 %v1335, 28
        %v1337 = vpop.permute.xlu0 %1336
        %1339 = vst.msk [vmem:[#allocation2 + $0x1] sm:$0x1] %vm909, %v1337
        %v1340 = vrot.slane %v1323, 3
        %1341 = vrot.lane.b32.xlu0 %v1340, 42
        %v1342 = vpop.permute.xlu0 %1341
        %1344 = vst.msk [vmem:[#allocation2 + $0x1] sm:$0x1] %vm915, %v1342
        %v1345 = vrot.slane %v1323, 4
        %1346 = vrot.lane.b32.xlu0 %v1345, 56
        %v1347 = vpop.permute.xlu0 %1346
        %1349 = vst.msk [vmem:[#allocation2 + $0x1] sm:$0x1] %vm921, %v1347
        %v1350 = vrot.slane %v1323, 5
        %1351 = vrot.lane.b32.xlu0 %v1350, 70
        %v1352 = vpop.permute.xlu0 %1351
        %1354 = vst.msk [vmem:[#allocation2 + $0x1] sm:$0x1] %vm927, %v1352
        %v1355 = vrot.slane %v1323, 6
        %1356 = vrot.lane.b32.xlu0 %v1355, 84
        %v1357 = vpop.permute.xlu0 %1356
        %1359 = vst.msk [vmem:[#allocation2 + $0x1] sm:$0x1] %vm933, %v1357
        %v1360 = vrot.slane %v1323, 7
        %1361 = vrot.lane.b32.xlu0 %v1360, 98
        %v1362 = vpop.permute.xlu0 %1361
        %1364 = vst.msk [vmem:[#allocation2 + $0x1] sm:$0x1] %vm939, %v1362
        %1366 = vrot.lane.b32.xlu0 %v1326, 112
        %v1367 = vpop.permute.xlu0 %1366
        %1369 = vst.msk [vmem:[#allocation2 + $0x1] sm:$0x1] %vm945, %v1367
        %v1370 = vrot.slane %v1326, 1
        %1371 = vrot.lane.b32.xlu0 %v1370, 126
        %v1372 = vpop.permute.xlu0 %1371
        %1374 = vst.msk [vmem:[#allocation2 + $0x1] sm:$0x1] %vm951, %v1372
        %1375 = vst.msk [vmem:[#allocation2 + $0x9] sm:$0x1] %vm953, %v1372
        %v1376 = vrot.slane %v1326, 2
        %1377 = vrot.lane.b32.xlu0 %v1376, 12
        %v1378 = vpop.permute.xlu0 %1377
        %1380 = vst.msk [vmem:[#allocation2 + $0x9] sm:$0x1] %vm959, %v1378
        %v1381 = vrot.slane %v1326, 3
        %1382 = vrot.lane.b32.xlu0 %v1381, 26
        %v1383 = vpop.permute.xlu0 %1382
        %1385 = vst.msk [vmem:[#allocation2 + $0x9] sm:$0x1] %vm965, %v1383
        %v1386 = vrot.slane %v1326, 4
        %1387 = vrot.lane.b32.xlu0 %v1386, 40
        %v1388 = vpop.permute.xlu0 %1387
        %1390 = vst.msk [vmem:[#allocation2 + $0x9] sm:$0x1] %vm971, %v1388
        %v1391 = vrot.slane %v1326, 5
        %1392 = vrot.lane.b32.xlu0 %v1391, 54
        %v1393 = vpop.permute.xlu0 %1392
        %1395 = vst.msk [vmem:[#allocation2 + $0x9] sm:$0x1] %vm977, %v1393
        %s1396 = scalar_lea.vmem %s1, 320
        %v1397 = vld [vmem:[%s1396] sm:$0xff]
        %v1398 = vld [vmem:[%s1396 + $0x8] sm:$0xff]
        %v1399 = vld [vmem:[%s1396 + $0x10] sm:$0xff]
        %v1400 = vld [vmem:[%s1396 + $0x18] sm:$0xff]
        %s1401 = scalar_lea.vmem %s1, 352
        %v1402 = vld [vmem:[%s1401] sm:$0xff]
        %v1403 = vld [vmem:[%s1401 + $0x8] sm:$0xff]
        %v1404 = vld [vmem:[%s1401 + $0x10] sm:$0xff]
        %v1405 = vld [vmem:[%s1401 + $0x18] sm:$0xff]
        %1406 = vmatpush.msra.mxu0 0.0
        %1407 = vmatpush.msra.mxu0 0.0
        %1408 = vmatpush.msra.mxu0 0.0
        %1409 = vmatpush.msra.mxu0 0.0
        %1410 = vmatpush.msra.mxu0 0.0
        %1411 = vmatpush.msra.mxu0 0.0
        %1412 = vmatpush.msra.mxu0 0.0
        %1413 = vmatpush.msra.mxu0 0.0
        %1414 = vmatpush.msra.mxu0 0.0
        %1415 = vmatpush.msra.mxu0 0.0
        %1416 = vmatpush.msra.mxu0 0.0
        %1417 = vmatpush.msra.mxu0 0.0
        %1418 = vmatpush.msra.mxu0 %v1405
        %1419 = vmatpush.msra.mxu0 %v1404
        %1420 = vmatpush.msra.mxu0 %v1403
        %1421 = vmatpush.msra.mxu0 %v1402
        %1422 = vmatmul.f32.gmra.mxu0 %v496
        %v1423 = vpop.f32.mrf.mxu0
        %v1424 = vadd.f32 0.0, %v1423
        %1425 = vmatmul.f32.gmra.mxu0 %v499
        %v1426 = vpop.f32.mrf.mxu0
        %v1427 = vadd.f32 0.0, %v1426
        %1428 = vmatmul.f32.gmra.mxu0 %v502
        %v1429 = vpop.f32.mrf.mxu0
        %v1430 = vadd.f32 0.0, %v1429
        %1431 = vmatmul.f32.gmra.mxu0 %v505
        %v1432 = vpop.f32.mrf.mxu0
        %v1433 = vadd.f32 0.0, %v1432
        %1434 = vdwg.mxu0
        %1435 = vmatpush.msra.mxu0 0.0
        %1436 = vmatpush.msra.mxu0 0.0
        %1437 = vmatpush.msra.mxu0 0.0
        %1438 = vmatpush.msra.mxu0 0.0
        %1439 = vmatpush.msra.mxu0 0.0
        %1440 = vmatpush.msra.mxu0 0.0
        %1441 = vmatpush.msra.mxu0 0.0
        %1442 = vmatpush.msra.mxu0 0.0
        %1443 = vmatpush.msra.mxu0 0.0
        %1444 = vmatpush.msra.mxu0 0.0
        %1445 = vmatpush.msra.mxu0 0.0
        %1446 = vmatpush.msra.mxu0 0.0
        %1447 = vmatpush.msra.mxu0 %v1400
        %1448 = vmatpush.msra.mxu0 %v1399
        %1449 = vmatpush.msra.mxu0 %v1398
        %1450 = vmatpush.msra.mxu0 %v1397
        %1451 = vmatmul.f32.gmra.mxu0 %v537
        %v1452 = vpop.f32.mrf.mxu0
        %v1453 = vadd.f32 %v1424, %v1452
        %1454 = vmatmul.f32.gmra.mxu0 %v540
        %v1455 = vpop.f32.mrf.mxu0
        %v1456 = vadd.f32 %v1427, %v1455
        %1457 = vmatmul.f32.gmra.mxu0 %v543
        %v1458 = vpop.f32.mrf.mxu0
        %v1459 = vadd.f32 %v1430, %v1458
        %1460 = vmatmul.f32.gmra.mxu0 %v546
        %v1461 = vpop.f32.mrf.mxu0
        %v1462 = vadd.f32 %v1433, %v1461
        %1463 = vdwg.mxu0
        %s1464 = scalar_lea.vmem %s1, 384
        %v1465 = vld [vmem:[%s1464] sm:$0xff]
        %v1466 = vld [vmem:[%s1464 + $0x8] sm:$0xff]
        %v1467 = vld [vmem:[%s1464 + $0x10] sm:$0xff]
        %v1468 = vld [vmem:[%s1464 + $0x18] sm:$0xff]
        %1469 = vmatpush.msra.mxu0 0.0
        %1470 = vmatpush.msra.mxu0 0.0
        %1471 = vmatpush.msra.mxu0 0.0
        %1472 = vmatpush.msra.mxu0 0.0
        %1473 = vmatpush.msra.mxu0 0.0
        %1474 = vmatpush.msra.mxu0 0.0
        %1475 = vmatpush.msra.mxu0 0.0
        %1476 = vmatpush.msra.mxu0 0.0
        %1477 = vmatpush.msra.mxu0 0.0
        %1478 = vmatpush.msra.mxu0 0.0
        %1479 = vmatpush.msra.mxu0 0.0
        %1480 = vmatpush.msra.mxu0 0.0
        %1481 = vmatpush.msra.mxu0 %v1468
        %1482 = vmatpush.msra.mxu0 %v1467
        %1483 = vmatpush.msra.mxu0 %v1466
        %1484 = vmatpush.msra.mxu0 %v1465
        %1485 = vmatmul.f32.gmra.mxu0 %v583
        %v1486 = vpop.f32.mrf.mxu0
        %v1487 = vadd.f32 0.0, %v1486
        %1488 = vmatmul.f32.gmra.mxu0 %v586
        %v1489 = vpop.f32.mrf.mxu0
        %v1490 = vadd.f32 0.0, %v1489
        %1491 = vmatmul.f32.gmra.mxu0 %v589
        %v1492 = vpop.f32.mrf.mxu0
        %v1493 = vadd.f32 0.0, %v1492
        %1494 = vmatmul.f32.gmra.mxu0 %v592
        %v1495 = vpop.f32.mrf.mxu0
        %v1496 = vadd.f32 0.0, %v1495
        %1497 = vdwg.mxu0
        %v1498 = vadd.f32 %v1453, %v1487
        %v1499 = vadd.f32 %v1456, %v1490
        %v1500 = vadd.f32 %v1459, %v1493
        %v1501 = vadd.f32 %v1462, %v1496
        %s1502 = scalar_lea.vmem %s1, 416
        %v1503 = vld [vmem:[%s1502] sm:$0xff]
        %v1504 = vld [vmem:[%s1502 + $0x8] sm:$0xff]
        %v1505 = vld [vmem:[%s1502 + $0x10] sm:$0xff]
        %v1506 = vld [vmem:[%s1502 + $0x18] sm:$0xff]
        %1507 = vmatpush.msra.mxu0 0.0
        %1508 = vmatpush.msra.mxu0 0.0
        %1509 = vmatpush.msra.mxu0 0.0
        %1510 = vmatpush.msra.mxu0 0.0
        %1511 = vmatpush.msra.mxu0 0.0
        %1512 = vmatpush.msra.mxu0 0.0
        %1513 = vmatpush.msra.mxu0 0.0
        %1514 = vmatpush.msra.mxu0 0.0
        %1515 = vmatpush.msra.mxu0 0.0
        %1516 = vmatpush.msra.mxu0 0.0
        %1517 = vmatpush.msra.mxu0 0.0
        %1518 = vmatpush.msra.mxu0 0.0
        %1519 = vmatpush.msra.mxu0 %v1506
        %1520 = vmatpush.msra.mxu0 %v1505
        %1521 = vmatpush.msra.mxu0 %v1504
        %1522 = vmatpush.msra.mxu0 %v1503
        %1523 = vmatmul.f32.gmra.mxu0 %v633
        %v1524 = vpop.f32.mrf.mxu0
        %v1525 = vadd.f32 0.0, %v1524
        %1526 = vmatmul.f32.gmra.mxu0 %v636
        %v1527 = vpop.f32.mrf.mxu0
        %v1528 = vadd.f32 0.0, %v1527
        %1529 = vmatmul.f32.gmra.mxu0 %v639
        %v1530 = vpop.f32.mrf.mxu0
        %v1531 = vadd.f32 0.0, %v1530
        %1532 = vmatmul.f32.gmra.mxu0 %v642
        %v1533 = vpop.f32.mrf.mxu0
        %v1534 = vadd.f32 0.0, %v1533
        %1535 = vdwg.mxu0
        %v1536 = vadd.f32 %v1498, %v1525
        %v1537 = vadd.f32 %v1499, %v1528
        %v1538 = vadd.f32 %v1500, %v1531
        %v1539 = vadd.f32 %v1501, %v1534
        %s1540 = scalar_lea.vmem %s1, 448
        %v1541 = vld [vmem:[%s1540] sm:$0xff]
        %v1542 = vld [vmem:[%s1540 + $0x8] sm:$0xff]
        %v1543 = vld [vmem:[%s1540 + $0x10] sm:$0xff]
        %v1544 = vld [vmem:[%s1540 + $0x18] sm:$0xff]
        %1545 = vmatpush.msra.mxu0 0.0
        %1546 = vmatpush.msra.mxu0 0.0
        %1547 = vmatpush.msra.mxu0 0.0
        %1548 = vmatpush.msra.mxu0 0.0
        %1549 = vmatpush.msra.mxu0 0.0
        %1550 = vmatpush.msra.mxu0 0.0
        %1551 = vmatpush.msra.mxu0 0.0
        %1552 = vmatpush.msra.mxu0 0.0
        %1553 = vmatpush.msra.mxu0 0.0
        %1554 = vmatpush.msra.mxu0 0.0
        %1555 = vmatpush.msra.mxu0 0.0
        %1556 = vmatpush.msra.mxu0 0.0
        %1557 = vmatpush.msra.mxu0 %v1544
        %1558 = vmatpush.msra.mxu0 %v1543
        %1559 = vmatpush.msra.mxu0 %v1542
        %1560 = vmatpush.msra.mxu0 %v1541
        %1561 = vmatmul.f32.gmra.mxu0 %v683
        %v1562 = vpop.f32.mrf.mxu0
        %v1563 = vadd.f32 0.0, %v1562
        %1564 = vmatmul.f32.gmra.mxu0 %v686
        %v1565 = vpop.f32.mrf.mxu0
        %v1566 = vadd.f32 0.0, %v1565
        %1567 = vmatmul.f32.gmra.mxu0 %v689
        %v1568 = vpop.f32.mrf.mxu0
        %v1569 = vadd.f32 0.0, %v1568
        %1570 = vmatmul.f32.gmra.mxu0 %v692
        %v1571 = vpop.f32.mrf.mxu0
        %v1572 = vadd.f32 0.0, %v1571
        %1573 = vdwg.mxu0
        %v1574 = vadd.f32 %v1536, %v1563
        %v1575 = vadd.f32 %v1537, %v1566
        %v1576 = vadd.f32 %v1538, %v1569
        %v1577 = vadd.f32 %v1539, %v1572
        %v1578 = vld [vmem:[%s2 + $0x2] sm:$0x1]
        %s1580 = vtos %v1578
        %v1581 = vstv %s1580
        %v1583 = vadd.f32 %v1574, %v1581
        %v1584 = vadd.f32 %v1575, %v1581
        %v1585 = vadd.f32 %v1576, %v1581
        %v1586 = vadd.f32 %v1577, %v1581
        %v1587 = vxor.u32 %v1583, 2147483648
        %v1588 = vxor.u32 %v1584, 2147483648
        %v1589 = vxor.u32 %v1585, 2147483648
        %v1590 = vxor.u32 %v1586, 2147483648
        %v1591 = vmul.f32 %v1587, 1.442695
        %v1592 = vpow.pop %v1591
        %v1593 = vmul.f32 %v1588, 1.442695
        %v1594 = vpow.pop %v1593
        %v1595 = vmul.f32 %v1589, 1.442695
        %v1596 = vpow.pop %v1595
        %v1597 = vmul.f32 %v1590, 1.442695
        %v1598 = vpow.pop %v1597
        %v1599 = vadd.f32 %v1592, 1.0
        %v1600 = vadd.f32 %v1594, 1.0
        %v1601 = vadd.f32 %v1596, 1.0
        %v1602 = vadd.f32 %v1598, 1.0
        %v1603 = vrcp.pop %v1599
        %v1604 = vmul.f32 %v1599, %v1603
        %v1605 = vsub.f32 1.0, %v1604
        %v1606 = vmul.f32 %v1603, %v1605
        %v1607 = vadd.f32 %v1603, %v1606
        %vm1608 = vweird.f32 %v1599
        %vm1609 = vweird.f32 %v1603
        %vm1610 = vmor %vm1608, %vm1609
        %v1611 = vsel %vm1610, %v1603, %v1607
        %v1612 = vand.u32 2147483647, %v1599
        %vm1613 = vcmp.eq.f32.partialorder %v1612, 8.507059e+37
        %v1614 = vand.u32 %v1599, 2147483648
        %v1615 = vor.u32 1.1754944e-38, %v1614
        %v1616 = vsel %vm1613, %v1615, %v1611
        %v1617 = vmul.f32 1.0, %v1616
        %v1618 = vrcp.pop %v1600
        %v1619 = vmul.f32 %v1600, %v1618
        %v1620 = vsub.f32 1.0, %v1619
        %v1621 = vmul.f32 %v1618, %v1620
        %v1622 = vadd.f32 %v1618, %v1621
        %vm1623 = vweird.f32 %v1600
        %vm1624 = vweird.f32 %v1618
        %vm1625 = vmor %vm1623, %vm1624
        %v1626 = vsel %vm1625, %v1618, %v1622
        %v1627 = vand.u32 2147483647, %v1600
        %vm1628 = vcmp.eq.f32.partialorder %v1627, 8.507059e+37
        %v1629 = vand.u32 %v1600, 2147483648
        %v1630 = vor.u32 1.1754944e-38, %v1629
        %v1631 = vsel %vm1628, %v1630, %v1626
        %v1632 = vmul.f32 1.0, %v1631
        %v1633 = vrcp.pop %v1601
        %v1634 = vmul.f32 %v1601, %v1633
        %v1635 = vsub.f32 1.0, %v1634
        %v1636 = vmul.f32 %v1633, %v1635
        %v1637 = vadd.f32 %v1633, %v1636
        %vm1638 = vweird.f32 %v1601
        %vm1639 = vweird.f32 %v1633
        %vm1640 = vmor %vm1638, %vm1639
        %v1641 = vsel %vm1640, %v1633, %v1637
        %v1642 = vand.u32 2147483647, %v1601
        %vm1643 = vcmp.eq.f32.partialorder %v1642, 8.507059e+37
        %v1644 = vand.u32 %v1601, 2147483648
        %v1645 = vor.u32 1.1754944e-38, %v1644
        %v1646 = vsel %vm1643, %v1645, %v1641
        %v1647 = vmul.f32 1.0, %v1646
        %v1648 = vrcp.pop %v1602
        %v1649 = vmul.f32 %v1602, %v1648
        %v1650 = vsub.f32 1.0, %v1649
        %v1651 = vmul.f32 %v1648, %v1650
        %v1652 = vadd.f32 %v1648, %v1651
        %vm1653 = vweird.f32 %v1602
        %vm1654 = vweird.f32 %v1648
        %vm1655 = vmor %vm1653, %vm1654
        %v1656 = vsel %vm1655, %v1648, %v1652
        %v1657 = vand.u32 2147483647, %v1602
        %vm1658 = vcmp.eq.f32.partialorder %v1657, 8.507059e+37
        %v1659 = vand.u32 %v1602, 2147483648
        %v1660 = vor.u32 1.1754944e-38, %v1659
        %v1661 = vsel %vm1658, %v1660, %v1656
        %v1662 = vmul.f32 1.0, %v1661
        %v1663 = vld [vmem:[%s3] sm:$0xff]
        %v1664 = vld [vmem:[%s3 + $0x8] sm:$0x3f]
        %v1665 = vld [vmem:[%s4] sm:$0xff]
        %v1666 = vld [vmem:[%s4 + $0x8] sm:$0xff]
        %v1667 = vld [vmem:[%s4 + $0x10] sm:$0xff]
        %v1668 = vld [vmem:[%s4 + $0x18] sm:$0xf]
        %v1670 = vsel %vm818, %v1617, 0
        %v1673 = vsel %vm818, %v1632, 0
        %v1676 = vsel %vm818, %v1647, 0
        %v1679 = vsel %vm818, %v1662, 0
        %v1682 = vsel %vm831, %v1668, 0
        %1684 = vmatpush.msra.mxu0 0.0
        %1685 = vmatpush.msra.mxu0 0.0
        %1686 = vmatpush.msra.mxu0 0.0
        %1687 = vmatpush.msra.mxu0 0.0
        %1688 = vmatpush.msra.mxu0 0.0
        %1689 = vmatpush.msra.mxu0 0.0
        %1690 = vmatpush.msra.mxu0 0.0
        %1691 = vmatpush.msra.mxu0 0.0
        %1692 = vmatpush.msra.mxu0 0.0
        %1693 = vmatpush.msra.mxu0 0.0
        %1694 = vmatpush.msra.mxu0 0.0
        %1695 = vmatpush.msra.mxu0 0.0
        %1696 = vmatpush.msra.mxu0 %v1682
        %1697 = vmatpush.msra.mxu0 %v1667
        %1698 = vmatpush.msra.mxu0 %v1666
        %1699 = vmatpush.msra.mxu0 %v1665
        %1700 = vmatmul.f32.gmra.mxu0 %v1670
        %v1701 = vpop.f32.mrf.mxu0
        %v1702 = vadd.f32 0.0, %v1701
        %1703 = vmatmul.f32.gmra.mxu0 %v1673
        %v1704 = vpop.f32.mrf.mxu0
        %v1705 = vadd.f32 0.0, %v1704
        %1706 = vmatmul.f32.gmra.mxu0 %v1676
        %v1707 = vpop.f32.mrf.mxu0
        %v1708 = vadd.f32 0.0, %v1707
        %1709 = vmatmul.f32.gmra.mxu0 %v1679
        %v1710 = vpop.f32.mrf.mxu0
        %v1711 = vadd.f32 0.0, %v1710
        %1712 = vdwg.mxu0
        %v1714 = vsel %vm818, %v1663, 0
        %v1717 = vsel %vm818, %v1664, 0
        %v1720 = vsel %vm831, %v1711, 0
        %1722 = vmatpush.msra.mxu0 0.0
        %1723 = vmatpush.msra.mxu0 0.0
        %1724 = vmatpush.msra.mxu0 0.0
        %1725 = vmatpush.msra.mxu0 0.0
        %1726 = vmatpush.msra.mxu0 0.0
        %1727 = vmatpush.msra.mxu0 0.0
        %1728 = vmatpush.msra.mxu0 0.0
        %1729 = vmatpush.msra.mxu0 0.0
        %1730 = vmatpush.msra.mxu0 0.0
        %1731 = vmatpush.msra.mxu0 0.0
        %1732 = vmatpush.msra.mxu0 0.0
        %1733 = vmatpush.msra.mxu0 0.0
        %1734 = vmatpush.msra.mxu0 %v1720
        %1735 = vmatpush.msra.mxu0 %v1708
        %1736 = vmatpush.msra.mxu0 %v1705
        %1737 = vmatpush.msra.mxu0 %v1702
        %1738 = vmatmul.f32.gmra.mxu0 %v1714
        %v1739 = vpop.f32.mrf.mxu0
        %v1740 = vadd.f32 0.0, %v1739
        %1741 = vmatmul.f32.gmra.mxu0 %v1717
        %v1742 = vpop.f32.mrf.mxu0
        %v1743 = vadd.f32 0.0, %v1742
        %1744 = vdwg.mxu0
        %1745 = vst.msk [vmem:[#allocation2 + $0x2] sm:$0x1] %vm896, %v1740
        %v1747 = vrot.slane %v1740, 1
        %1748 = vrot.lane.b32.xlu0 %v1747, 14
        %v1749 = vpop.permute.xlu0 %1748
        %1751 = vst.msk [vmem:[#allocation2 + $0x2] sm:$0x1] %vm903, %v1749
        %v1752 = vrot.slane %v1740, 2
        %1753 = vrot.lane.b32.xlu0 %v1752, 28
        %v1754 = vpop.permute.xlu0 %1753
        %1756 = vst.msk [vmem:[#allocation2 + $0x2] sm:$0x1] %vm909, %v1754
        %v1757 = vrot.slane %v1740, 3
        %1758 = vrot.lane.b32.xlu0 %v1757, 42
        %v1759 = vpop.permute.xlu0 %1758
        %1761 = vst.msk [vmem:[#allocation2 + $0x2] sm:$0x1] %vm915, %v1759
        %v1762 = vrot.slane %v1740, 4
        %1763 = vrot.lane.b32.xlu0 %v1762, 56
        %v1764 = vpop.permute.xlu0 %1763
        %1766 = vst.msk [vmem:[#allocation2 + $0x2] sm:$0x1] %vm921, %v1764
        %v1767 = vrot.slane %v1740, 5
        %1768 = vrot.lane.b32.xlu0 %v1767, 70
        %v1769 = vpop.permute.xlu0 %1768
        %1771 = vst.msk [vmem:[#allocation2 + $0x2] sm:$0x1] %vm927, %v1769
        %v1772 = vrot.slane %v1740, 6
        %1773 = vrot.lane.b32.xlu0 %v1772, 84
        %v1774 = vpop.permute.xlu0 %1773
        %1776 = vst.msk [vmem:[#allocation2 + $0x2] sm:$0x1] %vm933, %v1774
        %v1777 = vrot.slane %v1740, 7
        %1778 = vrot.lane.b32.xlu0 %v1777, 98
        %v1779 = vpop.permute.xlu0 %1778
        %1781 = vst.msk [vmem:[#allocation2 + $0x2] sm:$0x1] %vm939, %v1779
        %1783 = vrot.lane.b32.xlu0 %v1743, 112
        %v1784 = vpop.permute.xlu0 %1783
        %1786 = vst.msk [vmem:[#allocation2 + $0x2] sm:$0x1] %vm945, %v1784
        %v1787 = vrot.slane %v1743, 1
        %1788 = vrot.lane.b32.xlu0 %v1787, 126
        %v1789 = vpop.permute.xlu0 %1788
        %1791 = vst.msk [vmem:[#allocation2 + $0x2] sm:$0x1] %vm951, %v1789
        %1792 = vst.msk [vmem:[#allocation2 + $0xa] sm:$0x1] %vm953, %v1789
        %v1793 = vrot.slane %v1743, 2
        %1794 = vrot.lane.b32.xlu0 %v1793, 12
        %v1795 = vpop.permute.xlu0 %1794
        %1797 = vst.msk [vmem:[#allocation2 + $0xa] sm:$0x1] %vm959, %v1795
        %v1798 = vrot.slane %v1743, 3
        %1799 = vrot.lane.b32.xlu0 %v1798, 26
        %v1800 = vpop.permute.xlu0 %1799
        %1802 = vst.msk [vmem:[#allocation2 + $0xa] sm:$0x1] %vm965, %v1800
        %v1803 = vrot.slane %v1743, 4
        %1804 = vrot.lane.b32.xlu0 %v1803, 40
        %v1805 = vpop.permute.xlu0 %1804
        %1807 = vst.msk [vmem:[#allocation2 + $0xa] sm:$0x1] %vm971, %v1805
        %v1808 = vrot.slane %v1743, 5
        %1809 = vrot.lane.b32.xlu0 %v1808, 54
        %v1810 = vpop.permute.xlu0 %1809
        %1812 = vst.msk [vmem:[#allocation2 + $0xa] sm:$0x1] %vm977, %v1810
        %s1813 = scalar_lea.vmem %s1, 480
        %v1814 = vld [vmem:[%s1813] sm:$0xff]
        %v1815 = vld [vmem:[%s1813 + $0x8] sm:$0xff]
        %v1816 = vld [vmem:[%s1813 + $0x10] sm:$0xff]
        %v1817 = vld [vmem:[%s1813 + $0x18] sm:$0xff]
        %s1818 = scalar_lea.vmem %s1, 512
        %v1819 = vld [vmem:[%s1818] sm:$0xff]
        %v1820 = vld [vmem:[%s1818 + $0x8] sm:$0xff]
        %v1821 = vld [vmem:[%s1818 + $0x10] sm:$0xff]
        %v1822 = vld [vmem:[%s1818 + $0x18] sm:$0xff]
        %1823 = vmatpush.msra.mxu0 0.0
        %1824 = vmatpush.msra.mxu0 0.0
        %1825 = vmatpush.msra.mxu0 0.0
        %1826 = vmatpush.msra.mxu0 0.0
        %1827 = vmatpush.msra.mxu0 0.0
        %1828 = vmatpush.msra.mxu0 0.0
        %1829 = vmatpush.msra.mxu0 0.0
        %1830 = vmatpush.msra.mxu0 0.0
        %1831 = vmatpush.msra.mxu0 0.0
        %1832 = vmatpush.msra.mxu0 0.0
        %1833 = vmatpush.msra.mxu0 0.0
        %1834 = vmatpush.msra.mxu0 0.0
        %1835 = vmatpush.msra.mxu0 %v1822
        %1836 = vmatpush.msra.mxu0 %v1821
        %1837 = vmatpush.msra.mxu0 %v1820
        %1838 = vmatpush.msra.mxu0 %v1819
        %1839 = vmatmul.f32.gmra.mxu0 %v496
        %v1840 = vpop.f32.mrf.mxu0
        %v1841 = vadd.f32 0.0, %v1840
        %1842 = vmatmul.f32.gmra.mxu0 %v499
        %v1843 = vpop.f32.mrf.mxu0
        %v1844 = vadd.f32 0.0, %v1843
        %1845 = vmatmul.f32.gmra.mxu0 %v502
        %v1846 = vpop.f32.mrf.mxu0
        %v1847 = vadd.f32 0.0, %v1846
        %1848 = vmatmul.f32.gmra.mxu0 %v505
        %v1849 = vpop.f32.mrf.mxu0
        %v1850 = vadd.f32 0.0, %v1849
        %1851 = vdwg.mxu0
        %1852 = vmatpush.msra.mxu0 0.0
        %1853 = vmatpush.msra.mxu0 0.0
        %1854 = vmatpush.msra.mxu0 0.0
        %1855 = vmatpush.msra.mxu0 0.0
        %1856 = vmatpush.msra.mxu0 0.0
        %1857 = vmatpush.msra.mxu0 0.0
        %1858 = vmatpush.msra.mxu0 0.0
        %1859 = vmatpush.msra.mxu0 0.0
        %1860 = vmatpush.msra.mxu0 0.0
        %1861 = vmatpush.msra.mxu0 0.0
        %1862 = vmatpush.msra.mxu0 0.0
        %1863 = vmatpush.msra.mxu0 0.0
        %1864 = vmatpush.msra.mxu0 %v1817
        %1865 = vmatpush.msra.mxu0 %v1816
        %1866 = vmatpush.msra.mxu0 %v1815
        %1867 = vmatpush.msra.mxu0 %v1814
        %1868 = vmatmul.f32.gmra.mxu0 %v537
        %v1869 = vpop.f32.mrf.mxu0
        %v1870 = vadd.f32 %v1841, %v1869
        %1871 = vmatmul.f32.gmra.mxu0 %v540
        %v1872 = vpop.f32.mrf.mxu0
        %v1873 = vadd.f32 %v1844, %v1872
        %1874 = vmatmul.f32.gmra.mxu0 %v543
        %v1875 = vpop.f32.mrf.mxu0
        %v1876 = vadd.f32 %v1847, %v1875
        %1877 = vmatmul.f32.gmra.mxu0 %v546
        %v1878 = vpop.f32.mrf.mxu0
        %v1879 = vadd.f32 %v1850, %v1878
        %1880 = vdwg.mxu0
        %s1881 = scalar_lea.vmem %s1, 544
        %v1882 = vld [vmem:[%s1881] sm:$0xff]
        %v1883 = vld [vmem:[%s1881 + $0x8] sm:$0xff]
        %v1884 = vld [vmem:[%s1881 + $0x10] sm:$0xff]
        %v1885 = vld [vmem:[%s1881 + $0x18] sm:$0xff]
        %1886 = vmatpush.msra.mxu0 0.0
        %1887 = vmatpush.msra.mxu0 0.0
        %1888 = vmatpush.msra.mxu0 0.0
        %1889 = vmatpush.msra.mxu0 0.0
        %1890 = vmatpush.msra.mxu0 0.0
        %1891 = vmatpush.msra.mxu0 0.0
        %1892 = vmatpush.msra.mxu0 0.0
        %1893 = vmatpush.msra.mxu0 0.0
        %1894 = vmatpush.msra.mxu0 0.0
        %1895 = vmatpush.msra.mxu0 0.0
        %1896 = vmatpush.msra.mxu0 0.0
        %1897 = vmatpush.msra.mxu0 0.0
        %1898 = vmatpush.msra.mxu0 %v1885
        %1899 = vmatpush.msra.mxu0 %v1884
        %1900 = vmatpush.msra.mxu0 %v1883
        %1901 = vmatpush.msra.mxu0 %v1882
        %1902 = vmatmul.f32.gmra.mxu0 %v583
        %v1903 = vpop.f32.mrf.mxu0
        %v1904 = vadd.f32 0.0, %v1903
        %1905 = vmatmul.f32.gmra.mxu0 %v586
        %v1906 = vpop.f32.mrf.mxu0
        %v1907 = vadd.f32 0.0, %v1906
        %1908 = vmatmul.f32.gmra.mxu0 %v589
        %v1909 = vpop.f32.mrf.mxu0
        %v1910 = vadd.f32 0.0, %v1909
        %1911 = vmatmul.f32.gmra.mxu0 %v592
        %v1912 = vpop.f32.mrf.mxu0
        %v1913 = vadd.f32 0.0, %v1912
        %1914 = vdwg.mxu0
        %v1915 = vadd.f32 %v1870, %v1904
        %v1916 = vadd.f32 %v1873, %v1907
        %v1917 = vadd.f32 %v1876, %v1910
        %v1918 = vadd.f32 %v1879, %v1913
        %s1919 = scalar_lea.vmem %s1, 576
        %v1920 = vld [vmem:[%s1919] sm:$0xff]
        %v1921 = vld [vmem:[%s1919 + $0x8] sm:$0xff]
        %v1922 = vld [vmem:[%s1919 + $0x10] sm:$0xff]
        %v1923 = vld [vmem:[%s1919 + $0x18] sm:$0xff]
        %1924 = vmatpush.msra.mxu0 0.0
        %1925 = vmatpush.msra.mxu0 0.0
        %1926 = vmatpush.msra.mxu0 0.0
        %1927 = vmatpush.msra.mxu0 0.0
        %1928 = vmatpush.msra.mxu0 0.0
        %1929 = vmatpush.msra.mxu0 0.0
        %1930 = vmatpush.msra.mxu0 0.0
        %1931 = vmatpush.msra.mxu0 0.0
        %1932 = vmatpush.msra.mxu0 0.0
        %1933 = vmatpush.msra.mxu0 0.0
        %1934 = vmatpush.msra.mxu0 0.0
        %1935 = vmatpush.msra.mxu0 0.0
        %1936 = vmatpush.msra.mxu0 %v1923
        %1937 = vmatpush.msra.mxu0 %v1922
        %1938 = vmatpush.msra.mxu0 %v1921
        %1939 = vmatpush.msra.mxu0 %v1920
        %1940 = vmatmul.f32.gmra.mxu0 %v633
        %v1941 = vpop.f32.mrf.mxu0
        %v1942 = vadd.f32 0.0, %v1941
        %1943 = vmatmul.f32.gmra.mxu0 %v636
        %v1944 = vpop.f32.mrf.mxu0
        %v1945 = vadd.f32 0.0, %v1944
        %1946 = vmatmul.f32.gmra.mxu0 %v639
        %v1947 = vpop.f32.mrf.mxu0
        %v1948 = vadd.f32 0.0, %v1947
        %1949 = vmatmul.f32.gmra.mxu0 %v642
        %v1950 = vpop.f32.mrf.mxu0
        %v1951 = vadd.f32 0.0, %v1950
        %1952 = vdwg.mxu0
        %v1953 = vadd.f32 %v1915, %v1942
        %v1954 = vadd.f32 %v1916, %v1945
        %v1955 = vadd.f32 %v1917, %v1948
        %v1956 = vadd.f32 %v1918, %v1951
        %s1957 = scalar_lea.vmem %s1, 608
        %v1958 = vld [vmem:[%s1957] sm:$0xff]
        %v1959 = vld [vmem:[%s1957 + $0x8] sm:$0xff]
        %v1960 = vld [vmem:[%s1957 + $0x10] sm:$0xff]
        %v1961 = vld [vmem:[%s1957 + $0x18] sm:$0xff]
        %1962 = vmatpush.msra.mxu0 0.0
        %1963 = vmatpush.msra.mxu0 0.0
        %1964 = vmatpush.msra.mxu0 0.0
        %1965 = vmatpush.msra.mxu0 0.0
        %1966 = vmatpush.msra.mxu0 0.0
        %1967 = vmatpush.msra.mxu0 0.0
        %1968 = vmatpush.msra.mxu0 0.0
        %1969 = vmatpush.msra.mxu0 0.0
        %1970 = vmatpush.msra.mxu0 0.0
        %1971 = vmatpush.msra.mxu0 0.0
        %1972 = vmatpush.msra.mxu0 0.0
        %1973 = vmatpush.msra.mxu0 0.0
        %1974 = vmatpush.msra.mxu0 %v1961
        %1975 = vmatpush.msra.mxu0 %v1960
        %1976 = vmatpush.msra.mxu0 %v1959
        %1977 = vmatpush.msra.mxu0 %v1958
        %1978 = vmatmul.f32.gmra.mxu0 %v683
        %v1979 = vpop.f32.mrf.mxu0
        %v1980 = vadd.f32 0.0, %v1979
        %1981 = vmatmul.f32.gmra.mxu0 %v686
        %v1982 = vpop.f32.mrf.mxu0
        %v1983 = vadd.f32 0.0, %v1982
        %1984 = vmatmul.f32.gmra.mxu0 %v689
        %v1985 = vpop.f32.mrf.mxu0
        %v1986 = vadd.f32 0.0, %v1985
        %1987 = vmatmul.f32.gmra.mxu0 %v692
        %v1988 = vpop.f32.mrf.mxu0
        %v1989 = vadd.f32 0.0, %v1988
        %1990 = vdwg.mxu0
        %v1991 = vadd.f32 %v1953, %v1980
        %v1992 = vadd.f32 %v1954, %v1983
        %v1993 = vadd.f32 %v1955, %v1986
        %v1994 = vadd.f32 %v1956, %v1989
        %v1995 = vld [vmem:[%s2 + $0x3] sm:$0x1]
        %s1997 = vtos %v1995
        %v1998 = vstv %s1997
        %v2000 = vadd.f32 %v1991, %v1998
        %v2001 = vadd.f32 %v1992, %v1998
        %v2002 = vadd.f32 %v1993, %v1998
        %v2003 = vadd.f32 %v1994, %v1998
        %v2004 = vxor.u32 %v2000, 2147483648
        %v2005 = vxor.u32 %v2001, 2147483648
        %v2006 = vxor.u32 %v2002, 2147483648
        %v2007 = vxor.u32 %v2003, 2147483648
        %v2008 = vmul.f32 %v2004, 1.442695
        %v2009 = vpow.pop %v2008
        %v2010 = vmul.f32 %v2005, 1.442695
        %v2011 = vpow.pop %v2010
        %v2012 = vmul.f32 %v2006, 1.442695
        %v2013 = vpow.pop %v2012
        %v2014 = vmul.f32 %v2007, 1.442695
        %v2015 = vpow.pop %v2014
        %v2016 = vadd.f32 %v2009, 1.0
        %v2017 = vadd.f32 %v2011, 1.0
        %v2018 = vadd.f32 %v2013, 1.0
        %v2019 = vadd.f32 %v2015, 1.0
        %v2020 = vrcp.pop %v2016
        %v2021 = vmul.f32 %v2016, %v2020
        %v2022 = vsub.f32 1.0, %v2021
        %v2023 = vmul.f32 %v2020, %v2022
        %v2024 = vadd.f32 %v2020, %v2023
        %vm2025 = vweird.f32 %v2016
        %vm2026 = vweird.f32 %v2020
        %vm2027 = vmor %vm2025, %vm2026
        %v2028 = vsel %vm2027, %v2020, %v2024
        %v2029 = vand.u32 2147483647, %v2016
        %vm2030 = vcmp.eq.f32.partialorder %v2029, 8.507059e+37
        %v2031 = vand.u32 %v2016, 2147483648
        %v2032 = vor.u32 1.1754944e-38, %v2031
        %v2033 = vsel %vm2030, %v2032, %v2028
        %v2034 = vmul.f32 1.0, %v2033
        %v2035 = vrcp.pop %v2017
        %v2036 = vmul.f32 %v2017, %v2035
        %v2037 = vsub.f32 1.0, %v2036
        %v2038 = vmul.f32 %v2035, %v2037
        %v2039 = vadd.f32 %v2035, %v2038
        %vm2040 = vweird.f32 %v2017
        %vm2041 = vweird.f32 %v2035
        %vm2042 = vmor %vm2040, %vm2041
        %v2043 = vsel %vm2042, %v2035, %v2039
        %v2044 = vand.u32 2147483647, %v2017
        %vm2045 = vcmp.eq.f32.partialorder %v2044, 8.507059e+37
        %v2046 = vand.u32 %v2017, 2147483648
        %v2047 = vor.u32 1.1754944e-38, %v2046
        %v2048 = vsel %vm2045, %v2047, %v2043
        %v2049 = vmul.f32 1.0, %v2048
        %v2050 = vrcp.pop %v2018
        %v2051 = vmul.f32 %v2018, %v2050
        %v2052 = vsub.f32 1.0, %v2051
        %v2053 = vmul.f32 %v2050, %v2052
        %v2054 = vadd.f32 %v2050, %v2053
        %vm2055 = vweird.f32 %v2018
        %vm2056 = vweird.f32 %v2050
        %vm2057 = vmor %vm2055, %vm2056
        %v2058 = vsel %vm2057, %v2050, %v2054
        %v2059 = vand.u32 2147483647, %v2018
        %vm2060 = vcmp.eq.f32.partialorder %v2059, 8.507059e+37
        %v2061 = vand.u32 %v2018, 2147483648
        %v2062 = vor.u32 1.1754944e-38, %v2061
        %v2063 = vsel %vm2060, %v2062, %v2058
        %v2064 = vmul.f32 1.0, %v2063
        %v2065 = vrcp.pop %v2019
        %v2066 = vmul.f32 %v2019, %v2065
        %v2067 = vsub.f32 1.0, %v2066
        %v2068 = vmul.f32 %v2065, %v2067
        %v2069 = vadd.f32 %v2065, %v2068
        %vm2070 = vweird.f32 %v2019
        %vm2071 = vweird.f32 %v2065
        %vm2072 = vmor %vm2070, %vm2071
        %v2073 = vsel %vm2072, %v2065, %v2069
        %v2074 = vand.u32 2147483647, %v2019
        %vm2075 = vcmp.eq.f32.partialorder %v2074, 8.507059e+37
        %v2076 = vand.u32 %v2019, 2147483648
        %v2077 = vor.u32 1.1754944e-38, %v2076
        %v2078 = vsel %vm2075, %v2077, %v2073
        %v2079 = vmul.f32 1.0, %v2078
        %v2080 = vld [vmem:[%s3] sm:$0xff]
        %v2081 = vld [vmem:[%s3 + $0x8] sm:$0x3f]
        %v2082 = vld [vmem:[%s4] sm:$0xff]
        %v2083 = vld [vmem:[%s4 + $0x8] sm:$0xff]
        %v2084 = vld [vmem:[%s4 + $0x10] sm:$0xff]
        %v2085 = vld [vmem:[%s4 + $0x18] sm:$0xf]
        %v2087 = vsel %vm818, %v2034, 0
        %v2090 = vsel %vm818, %v2049, 0
        %v2093 = vsel %vm818, %v2064, 0
        %v2096 = vsel %vm818, %v2079, 0
        %v2099 = vsel %vm831, %v2085, 0
        %2101 = vmatpush.msra.mxu0 0.0
        %2102 = vmatpush.msra.mxu0 0.0
        %2103 = vmatpush.msra.mxu0 0.0
        %2104 = vmatpush.msra.mxu0 0.0
        %2105 = vmatpush.msra.mxu0 0.0
        %2106 = vmatpush.msra.mxu0 0.0
        %2107 = vmatpush.msra.mxu0 0.0
        %2108 = vmatpush.msra.mxu0 0.0
        %2109 = vmatpush.msra.mxu0 0.0
        %2110 = vmatpush.msra.mxu0 0.0
        %2111 = vmatpush.msra.mxu0 0.0
        %2112 = vmatpush.msra.mxu0 0.0
        %2113 = vmatpush.msra.mxu0 %v2099
        %2114 = vmatpush.msra.mxu0 %v2084
        %2115 = vmatpush.msra.mxu0 %v2083
        %2116 = vmatpush.msra.mxu0 %v2082
        %2117 = vmatmul.f32.gmra.mxu0 %v2087
        %v2118 = vpop.f32.mrf.mxu0
        %v2119 = vadd.f32 0.0, %v2118
        %2120 = vmatmul.f32.gmra.mxu0 %v2090
        %v2121 = vpop.f32.mrf.mxu0
        %v2122 = vadd.f32 0.0, %v2121
        %2123 = vmatmul.f32.gmra.mxu0 %v2093
        %v2124 = vpop.f32.mrf.mxu0
        %v2125 = vadd.f32 0.0, %v2124
        %2126 = vmatmul.f32.gmra.mxu0 %v2096
        %v2127 = vpop.f32.mrf.mxu0
        %v2128 = vadd.f32 0.0, %v2127
        %2129 = vdwg.mxu0
        %v2131 = vsel %vm818, %v2080, 0
        %v2134 = vsel %vm818, %v2081, 0
        %v2137 = vsel %vm831, %v2128, 0
        %2139 = vmatpush.msra.mxu0 0.0
        %2140 = vmatpush.msra.mxu0 0.0
        %2141 = vmatpush.msra.mxu0 0.0
        %2142 = vmatpush.msra.mxu0 0.0
        %2143 = vmatpush.msra.mxu0 0.0
        %2144 = vmatpush.msra.mxu0 0.0
        %2145 = vmatpush.msra.mxu0 0.0
        %2146 = vmatpush.msra.mxu0 0.0
        %2147 = vmatpush.msra.mxu0 0.0
        %2148 = vmatpush.msra.mxu0 0.0
        %2149 = vmatpush.msra.mxu0 0.0
        %2150 = vmatpush.msra.mxu0 0.0
        %2151 = vmatpush.msra.mxu0 %v2137
        %2152 = vmatpush.msra.mxu0 %v2125
        %2153 = vmatpush.msra.mxu0 %v2122
        %2154 = vmatpush.msra.mxu0 %v2119
        %2155 = vmatmul.f32.gmra.mxu0 %v2131
        %v2156 = vpop.f32.mrf.mxu0
        %v2157 = vadd.f32 0.0, %v2156
        %2158 = vmatmul.f32.gmra.mxu0 %v2134
        %v2159 = vpop.f32.mrf.mxu0
        %v2160 = vadd.f32 0.0, %v2159
        %2161 = vdwg.mxu0
        %2162 = vst.msk [vmem:[#allocation2 + $0x3] sm:$0x1] %vm896, %v2157
        %v2164 = vrot.slane %v2157, 1
        %2165 = vrot.lane.b32.xlu0 %v2164, 14
        %v2166 = vpop.permute.xlu0 %2165
        %2168 = vst.msk [vmem:[#allocation2 + $0x3] sm:$0x1] %vm903, %v2166
        %v2169 = vrot.slane %v2157, 2
        %2170 = vrot.lane.b32.xlu0 %v2169, 28
        %v2171 = vpop.permute.xlu0 %2170
        %2173 = vst.msk [vmem:[#allocation2 + $0x3] sm:$0x1] %vm909, %v2171
        %v2174 = vrot.slane %v2157, 3
        %2175 = vrot.lane.b32.xlu0 %v2174, 42
        %v2176 = vpop.permute.xlu0 %2175
        %2178 = vst.msk [vmem:[#allocation2 + $0x3] sm:$0x1] %vm915, %v2176
        %v2179 = vrot.slane %v2157, 4
        %2180 = vrot.lane.b32.xlu0 %v2179, 56
        %v2181 = vpop.permute.xlu0 %2180
        %2183 = vst.msk [vmem:[#allocation2 + $0x3] sm:$0x1] %vm921, %v2181
        %v2184 = vrot.slane %v2157, 5
        %2185 = vrot.lane.b32.xlu0 %v2184, 70
        %v2186 = vpop.permute.xlu0 %2185
        %2188 = vst.msk [vmem:[#allocation2 + $0x3] sm:$0x1] %vm927, %v2186
        %v2189 = vrot.slane %v2157, 6
        %2190 = vrot.lane.b32.xlu0 %v2189, 84
        %v2191 = vpop.permute.xlu0 %2190
        %2193 = vst.msk [vmem:[#allocation2 + $0x3] sm:$0x1] %vm933, %v2191
        %v2194 = vrot.slane %v2157, 7
        %2195 = vrot.lane.b32.xlu0 %v2194, 98
        %v2196 = vpop.permute.xlu0 %2195
        %2198 = vst.msk [vmem:[#allocation2 + $0x3] sm:$0x1] %vm939, %v2196
        %2200 = vrot.lane.b32.xlu0 %v2160, 112
        %v2201 = vpop.permute.xlu0 %2200
        %2203 = vst.msk [vmem:[#allocation2 + $0x3] sm:$0x1] %vm945, %v2201
        %v2204 = vrot.slane %v2160, 1
        %2205 = vrot.lane.b32.xlu0 %v2204, 126
        %v2206 = vpop.permute.xlu0 %2205
        %2208 = vst.msk [vmem:[#allocation2 + $0x3] sm:$0x1] %vm951, %v2206
        %2209 = vst.msk [vmem:[#allocation2 + $0xb] sm:$0x1] %vm953, %v2206
        %v2210 = vrot.slane %v2160, 2
        %2211 = vrot.lane.b32.xlu0 %v2210, 12
        %v2212 = vpop.permute.xlu0 %2211
        %2214 = vst.msk [vmem:[#allocation2 + $0xb] sm:$0x1] %vm959, %v2212
        %v2215 = vrot.slane %v2160, 3
        %2216 = vrot.lane.b32.xlu0 %v2215, 26
        %v2217 = vpop.permute.xlu0 %2216
        %2219 = vst.msk [vmem:[#allocation2 + $0xb] sm:$0x1] %vm965, %v2217
        %v2220 = vrot.slane %v2160, 4
        %2221 = vrot.lane.b32.xlu0 %v2220, 40
        %v2222 = vpop.permute.xlu0 %2221
        %2224 = vst.msk [vmem:[#allocation2 + $0xb] sm:$0x1] %vm971, %v2222
        %v2225 = vrot.slane %v2160, 5
        %2226 = vrot.lane.b32.xlu0 %v2225, 54
        %v2227 = vpop.permute.xlu0 %2226
        %2229 = vst.msk [vmem:[#allocation2 + $0xb] sm:$0x1] %vm977, %v2227
        %s2230 = scalar_lea.vmem %s1, 640
        %v2231 = vld [vmem:[%s2230] sm:$0xff]
        %v2232 = vld [vmem:[%s2230 + $0x8] sm:$0xff]
        %v2233 = vld [vmem:[%s2230 + $0x10] sm:$0xff]
        %v2234 = vld [vmem:[%s2230 + $0x18] sm:$0xff]
        %s2235 = scalar_lea.vmem %s1, 672
        %v2236 = vld [vmem:[%s2235] sm:$0xff]
        %v2237 = vld [vmem:[%s2235 + $0x8] sm:$0xff]
        %v2238 = vld [vmem:[%s2235 + $0x10] sm:$0xff]
        %v2239 = vld [vmem:[%s2235 + $0x18] sm:$0xff]
        %2240 = vmatpush.msra.mxu0 0.0
        %2241 = vmatpush.msra.mxu0 0.0
        %2242 = vmatpush.msra.mxu0 0.0
        %2243 = vmatpush.msra.mxu0 0.0
        %2244 = vmatpush.msra.mxu0 0.0
        %2245 = vmatpush.msra.mxu0 0.0
        %2246 = vmatpush.msra.mxu0 0.0
        %2247 = vmatpush.msra.mxu0 0.0
        %2248 = vmatpush.msra.mxu0 0.0
        %2249 = vmatpush.msra.mxu0 0.0
        %2250 = vmatpush.msra.mxu0 0.0
        %2251 = vmatpush.msra.mxu0 0.0
        %2252 = vmatpush.msra.mxu0 %v2239
        %2253 = vmatpush.msra.mxu0 %v2238
        %2254 = vmatpush.msra.mxu0 %v2237
        %2255 = vmatpush.msra.mxu0 %v2236
        %2256 = vmatmul.f32.gmra.mxu0 %v496
        %v2257 = vpop.f32.mrf.mxu0
        %v2258 = vadd.f32 0.0, %v2257
        %2259 = vmatmul.f32.gmra.mxu0 %v499
        %v2260 = vpop.f32.mrf.mxu0
        %v2261 = vadd.f32 0.0, %v2260
        %2262 = vmatmul.f32.gmra.mxu0 %v502
        %v2263 = vpop.f32.mrf.mxu0
        %v2264 = vadd.f32 0.0, %v2263
        %2265 = vmatmul.f32.gmra.mxu0 %v505
        %v2266 = vpop.f32.mrf.mxu0
        %v2267 = vadd.f32 0.0, %v2266
        %2268 = vdwg.mxu0
        %2269 = vmatpush.msra.mxu0 0.0
        %2270 = vmatpush.msra.mxu0 0.0
        %2271 = vmatpush.msra.mxu0 0.0
        %2272 = vmatpush.msra.mxu0 0.0
        %2273 = vmatpush.msra.mxu0 0.0
        %2274 = vmatpush.msra.mxu0 0.0
        %2275 = vmatpush.msra.mxu0 0.0
        %2276 = vmatpush.msra.mxu0 0.0
        %2277 = vmatpush.msra.mxu0 0.0
        %2278 = vmatpush.msra.mxu0 0.0
        %2279 = vmatpush.msra.mxu0 0.0
        %2280 = vmatpush.msra.mxu0 0.0
        %2281 = vmatpush.msra.mxu0 %v2234
        %2282 = vmatpush.msra.mxu0 %v2233
        %2283 = vmatpush.msra.mxu0 %v2232
        %2284 = vmatpush.msra.mxu0 %v2231
        %2285 = vmatmul.f32.gmra.mxu0 %v537
        %v2286 = vpop.f32.mrf.mxu0
        %v2287 = vadd.f32 %v2258, %v2286
        %2288 = vmatmul.f32.gmra.mxu0 %v540
        %v2289 = vpop.f32.mrf.mxu0
        %v2290 = vadd.f32 %v2261, %v2289
        %2291 = vmatmul.f32.gmra.mxu0 %v543
        %v2292 = vpop.f32.mrf.mxu0
        %v2293 = vadd.f32 %v2264, %v2292
        %2294 = vmatmul.f32.gmra.mxu0 %v546
        %v2295 = vpop.f32.mrf.mxu0
        %v2296 = vadd.f32 %v2267, %v2295
        %2297 = vdwg.mxu0
        %s2298 = scalar_lea.vmem %s1, 704
        %v2299 = vld [vmem:[%s2298] sm:$0xff]
        %v2300 = vld [vmem:[%s2298 + $0x8] sm:$0xff]
        %v2301 = vld [vmem:[%s2298 + $0x10] sm:$0xff]
        %v2302 = vld [vmem:[%s2298 + $0x18] sm:$0xff]
        %2303 = vmatpush.msra.mxu0 0.0
        %2304 = vmatpush.msra.mxu0 0.0
        %2305 = vmatpush.msra.mxu0 0.0
        %2306 = vmatpush.msra.mxu0 0.0
        %2307 = vmatpush.msra.mxu0 0.0
        %2308 = vmatpush.msra.mxu0 0.0
        %2309 = vmatpush.msra.mxu0 0.0
        %2310 = vmatpush.msra.mxu0 0.0
        %2311 = vmatpush.msra.mxu0 0.0
        %2312 = vmatpush.msra.mxu0 0.0
        %2313 = vmatpush.msra.mxu0 0.0
        %2314 = vmatpush.msra.mxu0 0.0
        %2315 = vmatpush.msra.mxu0 %v2302
        %2316 = vmatpush.msra.mxu0 %v2301
        %2317 = vmatpush.msra.mxu0 %v2300
        %2318 = vmatpush.msra.mxu0 %v2299
        %2319 = vmatmul.f32.gmra.mxu0 %v583
        %v2320 = vpop.f32.mrf.mxu0
        %v2321 = vadd.f32 0.0, %v2320
        %2322 = vmatmul.f32.gmra.mxu0 %v586
        %v2323 = vpop.f32.mrf.mxu0
        %v2324 = vadd.f32 0.0, %v2323
        %2325 = vmatmul.f32.gmra.mxu0 %v589
        %v2326 = vpop.f32.mrf.mxu0
        %v2327 = vadd.f32 0.0, %v2326
        %2328 = vmatmul.f32.gmra.mxu0 %v592
        %v2329 = vpop.f32.mrf.mxu0
        %v2330 = vadd.f32 0.0, %v2329
        %2331 = vdwg.mxu0
        %v2332 = vadd.f32 %v2287, %v2321
        %v2333 = vadd.f32 %v2290, %v2324
        %v2334 = vadd.f32 %v2293, %v2327
        %v2335 = vadd.f32 %v2296, %v2330
        %s2336 = scalar_lea.vmem %s1, 736
        %v2337 = vld [vmem:[%s2336] sm:$0xff]
        %v2338 = vld [vmem:[%s2336 + $0x8] sm:$0xff]
        %v2339 = vld [vmem:[%s2336 + $0x10] sm:$0xff]
        %v2340 = vld [vmem:[%s2336 + $0x18] sm:$0xff]
        %2341 = vmatpush.msra.mxu0 0.0
        %2342 = vmatpush.msra.mxu0 0.0
        %2343 = vmatpush.msra.mxu0 0.0
        %2344 = vmatpush.msra.mxu0 0.0
        %2345 = vmatpush.msra.mxu0 0.0
        %2346 = vmatpush.msra.mxu0 0.0
        %2347 = vmatpush.msra.mxu0 0.0
        %2348 = vmatpush.msra.mxu0 0.0
        %2349 = vmatpush.msra.mxu0 0.0
        %2350 = vmatpush.msra.mxu0 0.0
        %2351 = vmatpush.msra.mxu0 0.0
        %2352 = vmatpush.msra.mxu0 0.0
        %2353 = vmatpush.msra.mxu0 %v2340
        %2354 = vmatpush.msra.mxu0 %v2339
        %2355 = vmatpush.msra.mxu0 %v2338
        %2356 = vmatpush.msra.mxu0 %v2337
        %2357 = vmatmul.f32.gmra.mxu0 %v633
        %v2358 = vpop.f32.mrf.mxu0
        %v2359 = vadd.f32 0.0, %v2358
        %2360 = vmatmul.f32.gmra.mxu0 %v636
        %v2361 = vpop.f32.mrf.mxu0
        %v2362 = vadd.f32 0.0, %v2361
        %2363 = vmatmul.f32.gmra.mxu0 %v639
        %v2364 = vpop.f32.mrf.mxu0
        %v2365 = vadd.f32 0.0, %v2364
        %2366 = vmatmul.f32.gmra.mxu0 %v642
        %v2367 = vpop.f32.mrf.mxu0
        %v2368 = vadd.f32 0.0, %v2367
        %2369 = vdwg.mxu0
        %v2370 = vadd.f32 %v2332, %v2359
        %v2371 = vadd.f32 %v2333, %v2362
        %v2372 = vadd.f32 %v2334, %v2365
        %v2373 = vadd.f32 %v2335, %v2368
        %s2374 = scalar_lea.vmem %s1, 768
        %v2375 = vld [vmem:[%s2374] sm:$0xff]
        %v2376 = vld [vmem:[%s2374 + $0x8] sm:$0xff]
        %v2377 = vld [vmem:[%s2374 + $0x10] sm:$0xff]
        %v2378 = vld [vmem:[%s2374 + $0x18] sm:$0xff]
        %2379 = vmatpush.msra.mxu0 0.0
        %2380 = vmatpush.msra.mxu0 0.0
        %2381 = vmatpush.msra.mxu0 0.0
        %2382 = vmatpush.msra.mxu0 0.0
        %2383 = vmatpush.msra.mxu0 0.0
        %2384 = vmatpush.msra.mxu0 0.0
        %2385 = vmatpush.msra.mxu0 0.0
        %2386 = vmatpush.msra.mxu0 0.0
        %2387 = vmatpush.msra.mxu0 0.0
        %2388 = vmatpush.msra.mxu0 0.0
        %2389 = vmatpush.msra.mxu0 0.0
        %2390 = vmatpush.msra.mxu0 0.0
        %2391 = vmatpush.msra.mxu0 %v2378
        %2392 = vmatpush.msra.mxu0 %v2377
        %2393 = vmatpush.msra.mxu0 %v2376
        %2394 = vmatpush.msra.mxu0 %v2375
        %2395 = vmatmul.f32.gmra.mxu0 %v683
        %v2396 = vpop.f32.mrf.mxu0
        %v2397 = vadd.f32 0.0, %v2396
        %2398 = vmatmul.f32.gmra.mxu0 %v686
        %v2399 = vpop.f32.mrf.mxu0
        %v2400 = vadd.f32 0.0, %v2399
        %2401 = vmatmul.f32.gmra.mxu0 %v689
        %v2402 = vpop.f32.mrf.mxu0
        %v2403 = vadd.f32 0.0, %v2402
        %2404 = vmatmul.f32.gmra.mxu0 %v692
        %v2405 = vpop.f32.mrf.mxu0
        %v2406 = vadd.f32 0.0, %v2405
        %2407 = vdwg.mxu0
        %v2408 = vadd.f32 %v2370, %v2397
        %v2409 = vadd.f32 %v2371, %v2400
        %v2410 = vadd.f32 %v2372, %v2403
        %v2411 = vadd.f32 %v2373, %v2406
        %v2412 = vld [vmem:[%s2 + $0x4] sm:$0x1]
        %s2414 = vtos %v2412
        %v2415 = vstv %s2414
        %v2417 = vadd.f32 %v2408, %v2415
        %v2418 = vadd.f32 %v2409, %v2415
        %v2419 = vadd.f32 %v2410, %v2415
        %v2420 = vadd.f32 %v2411, %v2415
        %v2421 = vxor.u32 %v2417, 2147483648
        %v2422 = vxor.u32 %v2418, 2147483648
        %v2423 = vxor.u32 %v2419, 2147483648
        %v2424 = vxor.u32 %v2420, 2147483648
        %v2425 = vmul.f32 %v2421, 1.442695
        %v2426 = vpow.pop %v2425
        %v2427 = vmul.f32 %v2422, 1.442695
        %v2428 = vpow.pop %v2427
        %v2429 = vmul.f32 %v2423, 1.442695
        %v2430 = vpow.pop %v2429
        %v2431 = vmul.f32 %v2424, 1.442695
        %v2432 = vpow.pop %v2431
        %v2433 = vadd.f32 %v2426, 1.0
        %v2434 = vadd.f32 %v2428, 1.0
        %v2435 = vadd.f32 %v2430, 1.0
        %v2436 = vadd.f32 %v2432, 1.0
        %v2437 = vrcp.pop %v2433
        %v2438 = vmul.f32 %v2433, %v2437
        %v2439 = vsub.f32 1.0, %v2438
        %v2440 = vmul.f32 %v2437, %v2439
        %v2441 = vadd.f32 %v2437, %v2440
        %vm2442 = vweird.f32 %v2433
        %vm2443 = vweird.f32 %v2437
        %vm2444 = vmor %vm2442, %vm2443
        %v2445 = vsel %vm2444, %v2437, %v2441
        %v2446 = vand.u32 2147483647, %v2433
        %vm2447 = vcmp.eq.f32.partialorder %v2446, 8.507059e+37
        %v2448 = vand.u32 %v2433, 2147483648
        %v2449 = vor.u32 1.1754944e-38, %v2448
        %v2450 = vsel %vm2447, %v2449, %v2445
        %v2451 = vmul.f32 1.0, %v2450
        %v2452 = vrcp.pop %v2434
        %v2453 = vmul.f32 %v2434, %v2452
        %v2454 = vsub.f32 1.0, %v2453
        %v2455 = vmul.f32 %v2452, %v2454
        %v2456 = vadd.f32 %v2452, %v2455
        %vm2457 = vweird.f32 %v2434
        %vm2458 = vweird.f32 %v2452
        %vm2459 = vmor %vm2457, %vm2458
        %v2460 = vsel %vm2459, %v2452, %v2456
        %v2461 = vand.u32 2147483647, %v2434
        %vm2462 = vcmp.eq.f32.partialorder %v2461, 8.507059e+37
        %v2463 = vand.u32 %v2434, 2147483648
        %v2464 = vor.u32 1.1754944e-38, %v2463
        %v2465 = vsel %vm2462, %v2464, %v2460
        %v2466 = vmul.f32 1.0, %v2465
        %v2467 = vrcp.pop %v2435
        %v2468 = vmul.f32 %v2435, %v2467
        %v2469 = vsub.f32 1.0, %v2468
        %v2470 = vmul.f32 %v2467, %v2469
        %v2471 = vadd.f32 %v2467, %v2470
        %vm2472 = vweird.f32 %v2435
        %vm2473 = vweird.f32 %v2467
        %vm2474 = vmor %vm2472, %vm2473
        %v2475 = vsel %vm2474, %v2467, %v2471
        %v2476 = vand.u32 2147483647, %v2435
        %vm2477 = vcmp.eq.f32.partialorder %v2476, 8.507059e+37
        %v2478 = vand.u32 %v2435, 2147483648
        %v2479 = vor.u32 1.1754944e-38, %v2478
        %v2480 = vsel %vm2477, %v2479, %v2475
        %v2481 = vmul.f32 1.0, %v2480
        %v2482 = vrcp.pop %v2436
        %v2483 = vmul.f32 %v2436, %v2482
        %v2484 = vsub.f32 1.0, %v2483
        %v2485 = vmul.f32 %v2482, %v2484
        %v2486 = vadd.f32 %v2482, %v2485
        %vm2487 = vweird.f32 %v2436
        %vm2488 = vweird.f32 %v2482
        %vm2489 = vmor %vm2487, %vm2488
        %v2490 = vsel %vm2489, %v2482, %v2486
        %v2491 = vand.u32 2147483647, %v2436
        %vm2492 = vcmp.eq.f32.partialorder %v2491, 8.507059e+37
        %v2493 = vand.u32 %v2436, 2147483648
        %v2494 = vor.u32 1.1754944e-38, %v2493
        %v2495 = vsel %vm2492, %v2494, %v2490
        %v2496 = vmul.f32 1.0, %v2495
        %v2497 = vld [vmem:[%s3] sm:$0xff]
        %v2498 = vld [vmem:[%s3 + $0x8] sm:$0x3f]
        %v2499 = vld [vmem:[%s4] sm:$0xff]
        %v2500 = vld [vmem:[%s4 + $0x8] sm:$0xff]
        %v2501 = vld [vmem:[%s4 + $0x10] sm:$0xff]
        %v2502 = vld [vmem:[%s4 + $0x18] sm:$0xf]
        %v2504 = vsel %vm818, %v2451, 0
        %v2507 = vsel %vm818, %v2466, 0
        %v2510 = vsel %vm818, %v2481, 0
        %v2513 = vsel %vm818, %v2496, 0
        %v2516 = vsel %vm831, %v2502, 0
        %2518 = vmatpush.msra.mxu0 0.0
        %2519 = vmatpush.msra.mxu0 0.0
        %2520 = vmatpush.msra.mxu0 0.0
        %2521 = vmatpush.msra.mxu0 0.0
        %2522 = vmatpush.msra.mxu0 0.0
        %2523 = vmatpush.msra.mxu0 0.0
        %2524 = vmatpush.msra.mxu0 0.0
        %2525 = vmatpush.msra.mxu0 0.0
        %2526 = vmatpush.msra.mxu0 0.0
        %2527 = vmatpush.msra.mxu0 0.0
        %2528 = vmatpush.msra.mxu0 0.0
        %2529 = vmatpush.msra.mxu0 0.0
        %2530 = vmatpush.msra.mxu0 %v2516
        %2531 = vmatpush.msra.mxu0 %v2501
        %2532 = vmatpush.msra.mxu0 %v2500
        %2533 = vmatpush.msra.mxu0 %v2499
        %2534 = vmatmul.f32.gmra.mxu0 %v2504
        %v2535 = vpop.f32.mrf.mxu0
        %v2536 = vadd.f32 0.0, %v2535
        %2537 = vmatmul.f32.gmra.mxu0 %v2507
        %v2538 = vpop.f32.mrf.mxu0
        %v2539 = vadd.f32 0.0, %v2538
        %2540 = vmatmul.f32.gmra.mxu0 %v2510
        %v2541 = vpop.f32.mrf.mxu0
        %v2542 = vadd.f32 0.0, %v2541
        %2543 = vmatmul.f32.gmra.mxu0 %v2513
        %v2544 = vpop.f32.mrf.mxu0
        %v2545 = vadd.f32 0.0, %v2544
        %2546 = vdwg.mxu0
        %v2548 = vsel %vm818, %v2497, 0
        %v2551 = vsel %vm818, %v2498, 0
        %v2554 = vsel %vm831, %v2545, 0
        %2556 = vmatpush.msra.mxu0 0.0
        %2557 = vmatpush.msra.mxu0 0.0
        %2558 = vmatpush.msra.mxu0 0.0
        %2559 = vmatpush.msra.mxu0 0.0
        %2560 = vmatpush.msra.mxu0 0.0
        %2561 = vmatpush.msra.mxu0 0.0
        %2562 = vmatpush.msra.mxu0 0.0
        %2563 = vmatpush.msra.mxu0 0.0
        %2564 = vmatpush.msra.mxu0 0.0
        %2565 = vmatpush.msra.mxu0 0.0
        %2566 = vmatpush.msra.mxu0 0.0
        %2567 = vmatpush.msra.mxu0 0.0
        %2568 = vmatpush.msra.mxu0 %v2554
        %2569 = vmatpush.msra.mxu0 %v2542
        %2570 = vmatpush.msra.mxu0 %v2539
        %2571 = vmatpush.msra.mxu0 %v2536
        %2572 = vmatmul.f32.gmra.mxu0 %v2548
        %v2573 = vpop.f32.mrf.mxu0
        %v2574 = vadd.f32 0.0, %v2573
        %2575 = vmatmul.f32.gmra.mxu0 %v2551
        %v2576 = vpop.f32.mrf.mxu0
        %v2577 = vadd.f32 0.0, %v2576
        %2578 = vdwg.mxu0
        %2579 = vst.msk [vmem:[#allocation2 + $0x4] sm:$0x1] %vm896, %v2574
        %v2581 = vrot.slane %v2574, 1
        %2582 = vrot.lane.b32.xlu0 %v2581, 14
        %v2583 = vpop.permute.xlu0 %2582
        %2585 = vst.msk [vmem:[#allocation2 + $0x4] sm:$0x1] %vm903, %v2583
        %v2586 = vrot.slane %v2574, 2
        %2587 = vrot.lane.b32.xlu0 %v2586, 28
        %v2588 = vpop.permute.xlu0 %2587
        %2590 = vst.msk [vmem:[#allocation2 + $0x4] sm:$0x1] %vm909, %v2588
        %v2591 = vrot.slane %v2574, 3
        %2592 = vrot.lane.b32.xlu0 %v2591, 42
        %v2593 = vpop.permute.xlu0 %2592
        %2595 = vst.msk [vmem:[#allocation2 + $0x4] sm:$0x1] %vm915, %v2593
        %v2596 = vrot.slane %v2574, 4
        %2597 = vrot.lane.b32.xlu0 %v2596, 56
        %v2598 = vpop.permute.xlu0 %2597
        %2600 = vst.msk [vmem:[#allocation2 + $0x4] sm:$0x1] %vm921, %v2598
        %v2601 = vrot.slane %v2574, 5
        %2602 = vrot.lane.b32.xlu0 %v2601, 70
        %v2603 = vpop.permute.xlu0 %2602
        %2605 = vst.msk [vmem:[#allocation2 + $0x4] sm:$0x1] %vm927, %v2603
        %v2606 = vrot.slane %v2574, 6
        %2607 = vrot.lane.b32.xlu0 %v2606, 84
        %v2608 = vpop.permute.xlu0 %2607
        %2610 = vst.msk [vmem:[#allocation2 + $0x4] sm:$0x1] %vm933, %v2608
        %v2611 = vrot.slane %v2574, 7
        %2612 = vrot.lane.b32.xlu0 %v2611, 98
        %v2613 = vpop.permute.xlu0 %2612
        %2615 = vst.msk [vmem:[#allocation2 + $0x4] sm:$0x1] %vm939, %v2613
        %2617 = vrot.lane.b32.xlu0 %v2577, 112
        %v2618 = vpop.permute.xlu0 %2617
        %2620 = vst.msk [vmem:[#allocation2 + $0x4] sm:$0x1] %vm945, %v2618
        %v2621 = vrot.slane %v2577, 1
        %2622 = vrot.lane.b32.xlu0 %v2621, 126
        %v2623 = vpop.permute.xlu0 %2622
        %2625 = vst.msk [vmem:[#allocation2 + $0x4] sm:$0x1] %vm951, %v2623
        %2626 = vst.msk [vmem:[#allocation2 + $0xc] sm:$0x1] %vm953, %v2623
        %v2627 = vrot.slane %v2577, 2
        %2628 = vrot.lane.b32.xlu0 %v2627, 12
        %v2629 = vpop.permute.xlu0 %2628
        %2631 = vst.msk [vmem:[#allocation2 + $0xc] sm:$0x1] %vm959, %v2629
        %v2632 = vrot.slane %v2577, 3
        %2633 = vrot.lane.b32.xlu0 %v2632, 26
        %v2634 = vpop.permute.xlu0 %2633
        %2636 = vst.msk [vmem:[#allocation2 + $0xc] sm:$0x1] %vm965, %v2634
        %v2637 = vrot.slane %v2577, 4
        %2638 = vrot.lane.b32.xlu0 %v2637, 40
        %v2639 = vpop.permute.xlu0 %2638
        %2641 = vst.msk [vmem:[#allocation2 + $0xc] sm:$0x1] %vm971, %v2639
        %v2642 = vrot.slane %v2577, 5
        %2643 = vrot.lane.b32.xlu0 %v2642, 54
        %v2644 = vpop.permute.xlu0 %2643
        %2646 = vst.msk [vmem:[#allocation2 + $0xc] sm:$0x1] %vm977, %v2644
        %s2647 = scalar_lea.vmem %s1, 800
        %v2648 = vld [vmem:[%s2647] sm:$0xff]
        %v2649 = vld [vmem:[%s2647 + $0x8] sm:$0xff]
        %v2650 = vld [vmem:[%s2647 + $0x10] sm:$0xff]
        %v2651 = vld [vmem:[%s2647 + $0x18] sm:$0xff]
        %s2652 = scalar_lea.vmem %s1, 832
        %v2653 = vld [vmem:[%s2652] sm:$0xff]
        %v2654 = vld [vmem:[%s2652 + $0x8] sm:$0xff]
        %v2655 = vld [vmem:[%s2652 + $0x10] sm:$0xff]
        %v2656 = vld [vmem:[%s2652 + $0x18] sm:$0xff]
        %2657 = vmatpush.msra.mxu0 0.0
        %2658 = vmatpush.msra.mxu0 0.0
        %2659 = vmatpush.msra.mxu0 0.0
        %2660 = vmatpush.msra.mxu0 0.0
        %2661 = vmatpush.msra.mxu0 0.0
        %2662 = vmatpush.msra.mxu0 0.0
        %2663 = vmatpush.msra.mxu0 0.0
        %2664 = vmatpush.msra.mxu0 0.0
        %2665 = vmatpush.msra.mxu0 0.0
        %2666 = vmatpush.msra.mxu0 0.0
        %2667 = vmatpush.msra.mxu0 0.0
        %2668 = vmatpush.msra.mxu0 0.0
        %2669 = vmatpush.msra.mxu0 %v2656
        %2670 = vmatpush.msra.mxu0 %v2655
        %2671 = vmatpush.msra.mxu0 %v2654
        %2672 = vmatpush.msra.mxu0 %v2653
        %2673 = vmatmul.f32.gmra.mxu0 %v496
        %v2674 = vpop.f32.mrf.mxu0
        %v2675 = vadd.f32 0.0, %v2674
        %2676 = vmatmul.f32.gmra.mxu0 %v499
        %v2677 = vpop.f32.mrf.mxu0
        %v2678 = vadd.f32 0.0, %v2677
        %2679 = vmatmul.f32.gmra.mxu0 %v502
        %v2680 = vpop.f32.mrf.mxu0
        %v2681 = vadd.f32 0.0, %v2680
        %2682 = vmatmul.f32.gmra.mxu0 %v505
        %v2683 = vpop.f32.mrf.mxu0
        %v2684 = vadd.f32 0.0, %v2683
        %2685 = vdwg.mxu0
        %2686 = vmatpush.msra.mxu0 0.0
        %2687 = vmatpush.msra.mxu0 0.0
        %2688 = vmatpush.msra.mxu0 0.0
        %2689 = vmatpush.msra.mxu0 0.0
        %2690 = vmatpush.msra.mxu0 0.0
        %2691 = vmatpush.msra.mxu0 0.0
        %2692 = vmatpush.msra.mxu0 0.0
        %2693 = vmatpush.msra.mxu0 0.0
        %2694 = vmatpush.msra.mxu0 0.0
        %2695 = vmatpush.msra.mxu0 0.0
        %2696 = vmatpush.msra.mxu0 0.0
        %2697 = vmatpush.msra.mxu0 0.0
        %2698 = vmatpush.msra.mxu0 %v2651
        %2699 = vmatpush.msra.mxu0 %v2650
        %2700 = vmatpush.msra.mxu0 %v2649
        %2701 = vmatpush.msra.mxu0 %v2648
        %2702 = vmatmul.f32.gmra.mxu0 %v537
        %v2703 = vpop.f32.mrf.mxu0
        %v2704 = vadd.f32 %v2675, %v2703
        %2705 = vmatmul.f32.gmra.mxu0 %v540
        %v2706 = vpop.f32.mrf.mxu0
        %v2707 = vadd.f32 %v2678, %v2706
        %2708 = vmatmul.f32.gmra.mxu0 %v543
        %v2709 = vpop.f32.mrf.mxu0
        %v2710 = vadd.f32 %v2681, %v2709
        %2711 = vmatmul.f32.gmra.mxu0 %v546
        %v2712 = vpop.f32.mrf.mxu0
        %v2713 = vadd.f32 %v2684, %v2712
        %2714 = vdwg.mxu0
        %s2715 = scalar_lea.vmem %s1, 864
        %v2716 = vld [vmem:[%s2715] sm:$0xff]
        %v2717 = vld [vmem:[%s2715 + $0x8] sm:$0xff]
        %v2718 = vld [vmem:[%s2715 + $0x10] sm:$0xff]
        %v2719 = vld [vmem:[%s2715 + $0x18] sm:$0xff]
        %2720 = vmatpush.msra.mxu0 0.0
        %2721 = vmatpush.msra.mxu0 0.0
        %2722 = vmatpush.msra.mxu0 0.0
        %2723 = vmatpush.msra.mxu0 0.0
        %2724 = vmatpush.msra.mxu0 0.0
        %2725 = vmatpush.msra.mxu0 0.0
        %2726 = vmatpush.msra.mxu0 0.0
        %2727 = vmatpush.msra.mxu0 0.0
        %2728 = vmatpush.msra.mxu0 0.0
        %2729 = vmatpush.msra.mxu0 0.0
        %2730 = vmatpush.msra.mxu0 0.0
        %2731 = vmatpush.msra.mxu0 0.0
        %2732 = vmatpush.msra.mxu0 %v2719
        %2733 = vmatpush.msra.mxu0 %v2718
        %2734 = vmatpush.msra.mxu0 %v2717
        %2735 = vmatpush.msra.mxu0 %v2716
        %2736 = vmatmul.f32.gmra.mxu0 %v583
        %v2737 = vpop.f32.mrf.mxu0
        %v2738 = vadd.f32 0.0, %v2737
        %2739 = vmatmul.f32.gmra.mxu0 %v586
        %v2740 = vpop.f32.mrf.mxu0
        %v2741 = vadd.f32 0.0, %v2740
        %2742 = vmatmul.f32.gmra.mxu0 %v589
        %v2743 = vpop.f32.mrf.mxu0
        %v2744 = vadd.f32 0.0, %v2743
        %2745 = vmatmul.f32.gmra.mxu0 %v592
        %v2746 = vpop.f32.mrf.mxu0
        %v2747 = vadd.f32 0.0, %v2746
        %2748 = vdwg.mxu0
        %v2749 = vadd.f32 %v2704, %v2738
        %v2750 = vadd.f32 %v2707, %v2741
        %v2751 = vadd.f32 %v2710, %v2744
        %v2752 = vadd.f32 %v2713, %v2747
        %s2753 = scalar_lea.vmem %s1, 896
        %v2754 = vld [vmem:[%s2753] sm:$0xff]
        %v2755 = vld [vmem:[%s2753 + $0x8] sm:$0xff]
        %v2756 = vld [vmem:[%s2753 + $0x10] sm:$0xff]
        %v2757 = vld [vmem:[%s2753 + $0x18] sm:$0xff]
        %2758 = vmatpush.msra.mxu0 0.0
        %2759 = vmatpush.msra.mxu0 0.0
        %2760 = vmatpush.msra.mxu0 0.0
        %2761 = vmatpush.msra.mxu0 0.0
        %2762 = vmatpush.msra.mxu0 0.0
        %2763 = vmatpush.msra.mxu0 0.0
        %2764 = vmatpush.msra.mxu0 0.0
        %2765 = vmatpush.msra.mxu0 0.0
        %2766 = vmatpush.msra.mxu0 0.0
        %2767 = vmatpush.msra.mxu0 0.0
        %2768 = vmatpush.msra.mxu0 0.0
        %2769 = vmatpush.msra.mxu0 0.0
        %2770 = vmatpush.msra.mxu0 %v2757
        %2771 = vmatpush.msra.mxu0 %v2756
        %2772 = vmatpush.msra.mxu0 %v2755
        %2773 = vmatpush.msra.mxu0 %v2754
        %2774 = vmatmul.f32.gmra.mxu0 %v633
        %v2775 = vpop.f32.mrf.mxu0
        %v2776 = vadd.f32 0.0, %v2775
        %2777 = vmatmul.f32.gmra.mxu0 %v636
        %v2778 = vpop.f32.mrf.mxu0
        %v2779 = vadd.f32 0.0, %v2778
        %2780 = vmatmul.f32.gmra.mxu0 %v639
        %v2781 = vpop.f32.mrf.mxu0
        %v2782 = vadd.f32 0.0, %v2781
        %2783 = vmatmul.f32.gmra.mxu0 %v642
        %v2784 = vpop.f32.mrf.mxu0
        %v2785 = vadd.f32 0.0, %v2784
        %2786 = vdwg.mxu0
        %v2787 = vadd.f32 %v2749, %v2776
        %v2788 = vadd.f32 %v2750, %v2779
        %v2789 = vadd.f32 %v2751, %v2782
        %v2790 = vadd.f32 %v2752, %v2785
        %s2791 = scalar_lea.vmem %s1, 928
        %v2792 = vld [vmem:[%s2791] sm:$0xff]
        %v2793 = vld [vmem:[%s2791 + $0x8] sm:$0xff]
        %v2794 = vld [vmem:[%s2791 + $0x10] sm:$0xff]
        %v2795 = vld [vmem:[%s2791 + $0x18] sm:$0xff]
        %2796 = vmatpush.msra.mxu0 0.0
        %2797 = vmatpush.msra.mxu0 0.0
        %2798 = vmatpush.msra.mxu0 0.0
        %2799 = vmatpush.msra.mxu0 0.0
        %2800 = vmatpush.msra.mxu0 0.0
        %2801 = vmatpush.msra.mxu0 0.0
        %2802 = vmatpush.msra.mxu0 0.0
        %2803 = vmatpush.msra.mxu0 0.0
        %2804 = vmatpush.msra.mxu0 0.0
        %2805 = vmatpush.msra.mxu0 0.0
        %2806 = vmatpush.msra.mxu0 0.0
        %2807 = vmatpush.msra.mxu0 0.0
        %2808 = vmatpush.msra.mxu0 %v2795
        %2809 = vmatpush.msra.mxu0 %v2794
        %2810 = vmatpush.msra.mxu0 %v2793
        %2811 = vmatpush.msra.mxu0 %v2792
        %2812 = vmatmul.f32.gmra.mxu0 %v683
        %v2813 = vpop.f32.mrf.mxu0
        %v2814 = vadd.f32 0.0, %v2813
        %2815 = vmatmul.f32.gmra.mxu0 %v686
        %v2816 = vpop.f32.mrf.mxu0
        %v2817 = vadd.f32 0.0, %v2816
        %2818 = vmatmul.f32.gmra.mxu0 %v689
        %v2819 = vpop.f32.mrf.mxu0
        %v2820 = vadd.f32 0.0, %v2819
        %2821 = vmatmul.f32.gmra.mxu0 %v692
        %v2822 = vpop.f32.mrf.mxu0
        %v2823 = vadd.f32 0.0, %v2822
        %2824 = vdwg.mxu0
        %v2825 = vadd.f32 %v2787, %v2814
        %v2826 = vadd.f32 %v2788, %v2817
        %v2827 = vadd.f32 %v2789, %v2820
        %v2828 = vadd.f32 %v2790, %v2823
        %v2829 = vld [vmem:[%s2 + $0x5] sm:$0x1]
        %s2831 = vtos %v2829
        %v2832 = vstv %s2831
        %v2834 = vadd.f32 %v2825, %v2832
        %v2835 = vadd.f32 %v2826, %v2832
        %v2836 = vadd.f32 %v2827, %v2832
        %v2837 = vadd.f32 %v2828, %v2832
        %v2838 = vxor.u32 %v2834, 2147483648
        %v2839 = vxor.u32 %v2835, 2147483648
        %v2840 = vxor.u32 %v2836, 2147483648
        %v2841 = vxor.u32 %v2837, 2147483648
        %v2842 = vmul.f32 %v2838, 1.442695
        %v2843 = vpow.pop %v2842
        %v2844 = vmul.f32 %v2839, 1.442695
        %v2845 = vpow.pop %v2844
        %v2846 = vmul.f32 %v2840, 1.442695
        %v2847 = vpow.pop %v2846
        %v2848 = vmul.f32 %v2841, 1.442695
        %v2849 = vpow.pop %v2848
        %v2850 = vadd.f32 %v2843, 1.0
        %v2851 = vadd.f32 %v2845, 1.0
        %v2852 = vadd.f32 %v2847, 1.0
        %v2853 = vadd.f32 %v2849, 1.0
        %v2854 = vrcp.pop %v2850
        %v2855 = vmul.f32 %v2850, %v2854
        %v2856 = vsub.f32 1.0, %v2855
        %v2857 = vmul.f32 %v2854, %v2856
        %v2858 = vadd.f32 %v2854, %v2857
        %vm2859 = vweird.f32 %v2850
        %vm2860 = vweird.f32 %v2854
        %vm2861 = vmor %vm2859, %vm2860
        %v2862 = vsel %vm2861, %v2854, %v2858
        %v2863 = vand.u32 2147483647, %v2850
        %vm2864 = vcmp.eq.f32.partialorder %v2863, 8.507059e+37
        %v2865 = vand.u32 %v2850, 2147483648
        %v2866 = vor.u32 1.1754944e-38, %v2865
        %v2867 = vsel %vm2864, %v2866, %v2862
        %v2868 = vmul.f32 1.0, %v2867
        %v2869 = vrcp.pop %v2851
        %v2870 = vmul.f32 %v2851, %v2869
        %v2871 = vsub.f32 1.0, %v2870
        %v2872 = vmul.f32 %v2869, %v2871
        %v2873 = vadd.f32 %v2869, %v2872
        %vm2874 = vweird.f32 %v2851
        %vm2875 = vweird.f32 %v2869
        %vm2876 = vmor %vm2874, %vm2875
        %v2877 = vsel %vm2876, %v2869, %v2873
        %v2878 = vand.u32 2147483647, %v2851
        %vm2879 = vcmp.eq.f32.partialorder %v2878, 8.507059e+37
        %v2880 = vand.u32 %v2851, 2147483648
        %v2881 = vor.u32 1.1754944e-38, %v2880
        %v2882 = vsel %vm2879, %v2881, %v2877
        %v2883 = vmul.f32 1.0, %v2882
        %v2884 = vrcp.pop %v2852
        %v2885 = vmul.f32 %v2852, %v2884
        %v2886 = vsub.f32 1.0, %v2885
        %v2887 = vmul.f32 %v2884, %v2886
        %v2888 = vadd.f32 %v2884, %v2887
        %vm2889 = vweird.f32 %v2852
        %vm2890 = vweird.f32 %v2884
        %vm2891 = vmor %vm2889, %vm2890
        %v2892 = vsel %vm2891, %v2884, %v2888
        %v2893 = vand.u32 2147483647, %v2852
        %vm2894 = vcmp.eq.f32.partialorder %v2893, 8.507059e+37
        %v2895 = vand.u32 %v2852, 2147483648
        %v2896 = vor.u32 1.1754944e-38, %v2895
        %v2897 = vsel %vm2894, %v2896, %v2892
        %v2898 = vmul.f32 1.0, %v2897
        %v2899 = vrcp.pop %v2853
        %v2900 = vmul.f32 %v2853, %v2899
        %v2901 = vsub.f32 1.0, %v2900
        %v2902 = vmul.f32 %v2899, %v2901
        %v2903 = vadd.f32 %v2899, %v2902
        %vm2904 = vweird.f32 %v2853
        %vm2905 = vweird.f32 %v2899
        %vm2906 = vmor %vm2904, %vm2905
        %v2907 = vsel %vm2906, %v2899, %v2903
        %v2908 = vand.u32 2147483647, %v2853
        %vm2909 = vcmp.eq.f32.partialorder %v2908, 8.507059e+37
        %v2910 = vand.u32 %v2853, 2147483648
        %v2911 = vor.u32 1.1754944e-38, %v2910
        %v2912 = vsel %vm2909, %v2911, %v2907
        %v2913 = vmul.f32 1.0, %v2912
        %v2914 = vld [vmem:[%s3] sm:$0xff]
        %v2915 = vld [vmem:[%s3 + $0x8] sm:$0x3f]
        %v2916 = vld [vmem:[%s4] sm:$0xff]
        %v2917 = vld [vmem:[%s4 + $0x8] sm:$0xff]
        %v2918 = vld [vmem:[%s4 + $0x10] sm:$0xff]
        %v2919 = vld [vmem:[%s4 + $0x18] sm:$0xf]
        %v2921 = vsel %vm818, %v2868, 0
        %v2924 = vsel %vm818, %v2883, 0
        %v2927 = vsel %vm818, %v2898, 0
        %v2930 = vsel %vm818, %v2913, 0
        %v2933 = vsel %vm831, %v2919, 0
        %2935 = vmatpush.msra.mxu0 0.0
        %2936 = vmatpush.msra.mxu0 0.0
        %2937 = vmatpush.msra.mxu0 0.0
        %2938 = vmatpush.msra.mxu0 0.0
        %2939 = vmatpush.msra.mxu0 0.0
        %2940 = vmatpush.msra.mxu0 0.0
        %2941 = vmatpush.msra.mxu0 0.0
        %2942 = vmatpush.msra.mxu0 0.0
        %2943 = vmatpush.msra.mxu0 0.0
        %2944 = vmatpush.msra.mxu0 0.0
        %2945 = vmatpush.msra.mxu0 0.0
        %2946 = vmatpush.msra.mxu0 0.0
        %2947 = vmatpush.msra.mxu0 %v2933
        %2948 = vmatpush.msra.mxu0 %v2918
        %2949 = vmatpush.msra.mxu0 %v2917
        %2950 = vmatpush.msra.mxu0 %v2916
        %2951 = vmatmul.f32.gmra.mxu0 %v2921
        %v2952 = vpop.f32.mrf.mxu0
        %v2953 = vadd.f32 0.0, %v2952
        %2954 = vmatmul.f32.gmra.mxu0 %v2924
        %v2955 = vpop.f32.mrf.mxu0
        %v2956 = vadd.f32 0.0, %v2955
        %2957 = vmatmul.f32.gmra.mxu0 %v2927
        %v2958 = vpop.f32.mrf.mxu0
        %v2959 = vadd.f32 0.0, %v2958
        %2960 = vmatmul.f32.gmra.mxu0 %v2930
        %v2961 = vpop.f32.mrf.mxu0
        %v2962 = vadd.f32 0.0, %v2961
        %2963 = vdwg.mxu0
        %v2965 = vsel %vm818, %v2914, 0
        %v2968 = vsel %vm818, %v2915, 0
        %v2971 = vsel %vm831, %v2962, 0
        %2973 = vmatpush.msra.mxu0 0.0
        %2974 = vmatpush.msra.mxu0 0.0
        %2975 = vmatpush.msra.mxu0 0.0
        %2976 = vmatpush.msra.mxu0 0.0
        %2977 = vmatpush.msra.mxu0 0.0
        %2978 = vmatpush.msra.mxu0 0.0
        %2979 = vmatpush.msra.mxu0 0.0
        %2980 = vmatpush.msra.mxu0 0.0
        %2981 = vmatpush.msra.mxu0 0.0
        %2982 = vmatpush.msra.mxu0 0.0
        %2983 = vmatpush.msra.mxu0 0.0
        %2984 = vmatpush.msra.mxu0 0.0
        %2985 = vmatpush.msra.mxu0 %v2971
        %2986 = vmatpush.msra.mxu0 %v2959
        %2987 = vmatpush.msra.mxu0 %v2956
        %2988 = vmatpush.msra.mxu0 %v2953
        %2989 = vmatmul.f32.gmra.mxu0 %v2965
        %v2990 = vpop.f32.mrf.mxu0
        %v2991 = vadd.f32 0.0, %v2990
        %2992 = vmatmul.f32.gmra.mxu0 %v2968
        %v2993 = vpop.f32.mrf.mxu0
        %v2994 = vadd.f32 0.0, %v2993
        %2995 = vdwg.mxu0
        %2996 = vst.msk [vmem:[#allocation2 + $0x5] sm:$0x1] %vm896, %v2991
        %v2998 = vrot.slane %v2991, 1
        %2999 = vrot.lane.b32.xlu0 %v2998, 14
        %v3000 = vpop.permute.xlu0 %2999
        %3002 = vst.msk [vmem:[#allocation2 + $0x5] sm:$0x1] %vm903, %v3000
        %v3003 = vrot.slane %v2991, 2
        %3004 = vrot.lane.b32.xlu0 %v3003, 28
        %v3005 = vpop.permute.xlu0 %3004
        %3007 = vst.msk [vmem:[#allocation2 + $0x5] sm:$0x1] %vm909, %v3005
        %v3008 = vrot.slane %v2991, 3
        %3009 = vrot.lane.b32.xlu0 %v3008, 42
        %v3010 = vpop.permute.xlu0 %3009
        %3012 = vst.msk [vmem:[#allocation2 + $0x5] sm:$0x1] %vm915, %v3010
        %v3013 = vrot.slane %v2991, 4
        %3014 = vrot.lane.b32.xlu0 %v3013, 56
        %v3015 = vpop.permute.xlu0 %3014
        %3017 = vst.msk [vmem:[#allocation2 + $0x5] sm:$0x1] %vm921, %v3015
        %v3018 = vrot.slane %v2991, 5
        %3019 = vrot.lane.b32.xlu0 %v3018, 70
        %v3020 = vpop.permute.xlu0 %3019
        %3022 = vst.msk [vmem:[#allocation2 + $0x5] sm:$0x1] %vm927, %v3020
        %v3023 = vrot.slane %v2991, 6
        %3024 = vrot.lane.b32.xlu0 %v3023, 84
        %v3025 = vpop.permute.xlu0 %3024
        %3027 = vst.msk [vmem:[#allocation2 + $0x5] sm:$0x1] %vm933, %v3025
        %v3028 = vrot.slane %v2991, 7
        %3029 = vrot.lane.b32.xlu0 %v3028, 98
        %v3030 = vpop.permute.xlu0 %3029
        %3032 = vst.msk [vmem:[#allocation2 + $0x5] sm:$0x1] %vm939, %v3030
        %3034 = vrot.lane.b32.xlu0 %v2994, 112
        %v3035 = vpop.permute.xlu0 %3034
        %3037 = vst.msk [vmem:[#allocation2 + $0x5] sm:$0x1] %vm945, %v3035
        %v3038 = vrot.slane %v2994, 1
        %3039 = vrot.lane.b32.xlu0 %v3038, 126
        %v3040 = vpop.permute.xlu0 %3039
        %3042 = vst.msk [vmem:[#allocation2 + $0x5] sm:$0x1] %vm951, %v3040
        %3043 = vst.msk [vmem:[#allocation2 + $0xd] sm:$0x1] %vm953, %v3040
        %v3044 = vrot.slane %v2994, 2
        %3045 = vrot.lane.b32.xlu0 %v3044, 12
        %v3046 = vpop.permute.xlu0 %3045
        %3048 = vst.msk [vmem:[#allocation2 + $0xd] sm:$0x1] %vm959, %v3046
        %v3049 = vrot.slane %v2994, 3
        %3050 = vrot.lane.b32.xlu0 %v3049, 26
        %v3051 = vpop.permute.xlu0 %3050
        %3053 = vst.msk [vmem:[#allocation2 + $0xd] sm:$0x1] %vm965, %v3051
        %v3054 = vrot.slane %v2994, 4
        %3055 = vrot.lane.b32.xlu0 %v3054, 40
        %v3056 = vpop.permute.xlu0 %3055
        %3058 = vst.msk [vmem:[#allocation2 + $0xd] sm:$0x1] %vm971, %v3056
        %v3059 = vrot.slane %v2994, 5
        %3060 = vrot.lane.b32.xlu0 %v3059, 54
        %v3061 = vpop.permute.xlu0 %3060
        %3063 = vst.msk [vmem:[#allocation2 + $0xd] sm:$0x1] %vm977, %v3061
        %v3064 = vld [vmem:[#allocation2] sm:$0x3f]
        %v3066 = vrot.slane %v3064, 2
        %3067 = vrot.lane.b32.xlu0 %v3066, 127
        %v3068 = vpop.permute.xlu0 %3067
        %v3070 = vrot.slane %v3064, 4
        %3071 = vrot.lane.b32.xlu0 %v3070, 126
        %v3072 = vpop.permute.xlu0 %3071
        %v3074 = vrot.slane %v3064, 6
        %3075 = vrot.lane.b32.xlu0 %v3074, 125
        %v3076 = vpop.permute.xlu0 %3075
        %3078 = vrot.lane.b32.xlu0 %v3064, 124
        %v3079 = vpop.permute.xlu0 %3078
        %3081 = vrot.lane.b32.xlu0 %v3066, 114
        %v3082 = vpop.permute.xlu0 %3081
        %3084 = vrot.lane.b32.xlu0 %v3070, 113
        %v3085 = vpop.permute.xlu0 %3084
        %3087 = vrot.lane.b32.xlu0 %v3074, 112
        %v3088 = vpop.permute.xlu0 %3087
        %3090 = vrot.lane.b32.xlu0 %v3064, 111
        %v3091 = vpop.permute.xlu0 %3090
        %3093 = vrot.lane.b32.xlu0 %v3066, 110
        %v3094 = vpop.permute.xlu0 %3093
        %3096 = vrot.lane.b32.xlu0 %v3070, 100
        %v3097 = vpop.permute.xlu0 %3096
        %3099 = vrot.lane.b32.xlu0 %v3074, 99
        %v3100 = vpop.permute.xlu0 %3099
        %3102 = vrot.lane.b32.xlu0 %v3064, 98
        %v3103 = vpop.permute.xlu0 %3102
        %3105 = vrot.lane.b32.xlu0 %v3066, 97
        %v3106 = vpop.permute.xlu0 %3105
        %3108 = vrot.lane.b32.xlu0 %v3070, 96
        %v3109 = vpop.permute.xlu0 %3108
        %3111 = vrot.lane.b32.xlu0 %v3074, 86
        %v3112 = vpop.permute.xlu0 %3111
        %vm3114 = vcmask 1045504
        %v3115 = vsel %vm3114, %v3064, %v3068
        %v3116 = vsel %vm831, %v3068, %v3072
        %vm3117 = vcmask 1041408
        %v3118 = vsel %vm3117, %v3072, %v3076
        %v3119 = vsel %vm3114, %v3079, %v3082
        %v3120 = vsel %vm831, %v3082, %v3085
        %v3121 = vsel %vm3117, %v3085, %v3088
        %v3122 = vsel %vm3114, %v3091, %v3094
        %v3123 = vsel %vm831, %v3094, %v3097
        %v3124 = vsel %vm3117, %v3097, %v3100
        %v3125 = vsel %vm3114, %v3103, %v3106
        %v3126 = vsel %vm831, %v3106, %v3109
        %v3127 = vsel %vm3117, %v3109, %v3112
        %3128 = vrot.lane.b32.xlu0 %v3064, 115
        %v3129 = vpop.permute.xlu0 %3128
        %v3131 = vsel %vm3114, %v3129, %v3082
        %3138 = vrot.lane.b32.xlu0 %v3115, 85
        %v3139 = vpop.permute.xlu0 %3138
        %3140 = vrot.lane.b32.xlu0 %v3116, 85
        %v3141 = vpop.permute.xlu0 %3140
        %3142 = vrot.lane.b32.xlu0 %v3118, 85
        %v3143 = vpop.permute.xlu0 %3142
        %3144 = vrot.lane.b32.xlu0 %v3131, 85
        %v3145 = vpop.permute.xlu0 %3144
        %3146 = vrot.lane.b32.xlu0 %v3120, 85
        %v3147 = vpop.permute.xlu0 %3146
        %3148 = vrot.lane.b32.xlu0 %v3121, 85
        %v3149 = vpop.permute.xlu0 %3148
        %3150 = vrot.lane.b32.xlu0 %v3091, 85
        %v3151 = vpop.permute.xlu0 %3150
        %v3158 = vld [vmem:[%s5] sm:$0xff]
        %v3159 = vld [vmem:[%s5 + $0x8] sm:$0xff]
        %v3160 = vld [vmem:[%s5 + $0x10] sm:$0xff]
        %v3161 = vld [vmem:[%s5 + $0x18] sm:$0xff]
        %v3162 = vld [vmem:[%s6] sm:$0xff]
        %v3163 = vld [vmem:[%s6 + $0x8] sm:$0xff]
        %3165 = vset.pattern.permute.xlu0 0
        %3166 = vperm.xlu0 %3165, %v3162
        %v3167 = vpop.permute.xlu0 %3166
        %3170 = vset.pattern.permute.xlu0 0
        %3171 = vperm.xlu0 %3170, %v3163
        %v3172 = vpop.permute.xlu0 %3171
        %vm3174 = vcmask 179200
        %v3176 = vsel %vm3174, %v3159, 0
        %v3179 = vsel %vm3174, %v3161, 0
        %v3181 = vsel %vm3114, %v3151, 0
        %3183 = vmatpush.msra.mxu0 %v3145
        %3184 = vmatpush.msra.mxu0 %v3143
        %3185 = vmatpush.msra.mxu0 %v3141
        %3186 = vmatpush.msra.mxu0 %v3139
        %3187 = vmatpush.msra.mxu0 %v3127
        %3188 = vmatpush.msra.mxu0 %v3126
        %3189 = vmatpush.msra.mxu0 %v3125
        %3190 = vmatpush.msra.mxu0 %v3124
        %3191 = vmatpush.msra.mxu0 %v3123
        %3192 = vmatpush.msra.mxu0 %v3122
        %3193 = vmatpush.msra.mxu0 %v3121
        %3194 = vmatpush.msra.mxu0 %v3120
        %3195 = vmatpush.msra.mxu0 %v3119
        %3196 = vmatpush.msra.mxu0 %v3118
        %3197 = vmatpush.msra.mxu0 %v3116
        %3198 = vmatpush.msra.mxu0 %v3115
        %3199 = vmatmul.f32.gmra.mxu0 %v3158
        %v3200 = vpop.f32.mrf.mxu0
        %v3201 = vadd.f32 %v3167, %v3200
        %3202 = vmatmul.f32.gmra.mxu0 %v3160
        %v3203 = vpop.f32.mrf.mxu0
        %v3204 = vadd.f32 %v3172, %v3203
        %3205 = vdwg.mxu0
        %3206 = vmatpush.msra.mxu0 0.0
        %3207 = vmatpush.msra.mxu0 0.0
        %3208 = vmatpush.msra.mxu0 0.0
        %3209 = vmatpush.msra.mxu0 0.0
        %3210 = vmatpush.msra.mxu0 0.0
        %3211 = vmatpush.msra.mxu0 0.0
        %3212 = vmatpush.msra.mxu0 0.0
        %3213 = vmatpush.msra.mxu0 0.0
        %3214 = vmatpush.msra.mxu0 0.0
        %3215 = vmatpush.msra.mxu0 0.0
        %3216 = vmatpush.msra.mxu0 0.0
        %3217 = vmatpush.msra.mxu0 0.0
        %3218 = vmatpush.msra.mxu0 0.0
        %3219 = vmatpush.msra.mxu0 %v3181
        %3220 = vmatpush.msra.mxu0 %v3149
        %3221 = vmatpush.msra.mxu0 %v3147
        %3222 = vmatmul.f32.gmra.mxu0 %v3176
        %v3223 = vpop.f32.mrf.mxu0
        %v3224 = vadd.f32 %v3201, %v3223
        %3225 = vmatmul.f32.gmra.mxu0 %v3179
        %v3226 = vpop.f32.mrf.mxu0
        %v3227 = vadd.f32 %v3204, %v3226
        %3228 = vdwg.mxu0
        %v3229 = vxor.u32 %v3224, 2147483648
        %v3230 = vxor.u32 %v3227, 2147483648
        %v3231 = vmul.f32 %v3229, 1.442695
        %v3232 = vpow.pop %v3231
        %v3233 = vmul.f32 %v3230, 1.442695
        %v3234 = vpow.pop %v3233
        %v3235 = vadd.f32 %v3232, 1.0
        %v3236 = vadd.f32 %v3234, 1.0
        %v3237 = vrcp.pop %v3235
        %v3238 = vmul.f32 %v3235, %v3237
        %v3239 = vsub.f32 1.0, %v3238
        %v3240 = vmul.f32 %v3237, %v3239
        %v3241 = vadd.f32 %v3237, %v3240
        %vm3242 = vweird.f32 %v3235
        %vm3243 = vweird.f32 %v3237
        %vm3244 = vmor %vm3242, %vm3243
        %v3245 = vsel %vm3244, %v3237, %v3241
        %v3246 = vand.u32 2147483647, %v3235
        %vm3247 = vcmp.eq.f32.partialorder %v3246, 8.507059e+37
        %v3248 = vand.u32 %v3235, 2147483648
        %v3249 = vor.u32 1.1754944e-38, %v3248
        %v3250 = vsel %vm3247, %v3249, %v3245
        %v3251 = vmul.f32 1.0, %v3250
        %v3252 = vrcp.pop %v3236
        %v3253 = vmul.f32 %v3236, %v3252
        %v3254 = vsub.f32 1.0, %v3253
        %v3255 = vmul.f32 %v3252, %v3254
        %v3256 = vadd.f32 %v3252, %v3255
        %vm3257 = vweird.f32 %v3236
        %vm3258 = vweird.f32 %v3252
        %vm3259 = vmor %vm3257, %vm3258
        %v3260 = vsel %vm3259, %v3252, %v3256
        %v3261 = vand.u32 2147483647, %v3236
        %vm3262 = vcmp.eq.f32.partialorder %v3261, 8.507059e+37
        %v3263 = vand.u32 %v3236, 2147483648
        %v3264 = vor.u32 1.1754944e-38, %v3263
        %v3265 = vsel %vm3262, %v3264, %v3260
        %v3266 = vmul.f32 1.0, %v3265
        %3274 = vrot.lane.b32.xlu0 %v3115, 114
        %v3275 = vpop.permute.xlu0 %3274
        %3276 = vrot.lane.b32.xlu0 %v3116, 114
        %v3277 = vpop.permute.xlu0 %3276
        %3278 = vrot.lane.b32.xlu0 %v3118, 114
        %v3279 = vpop.permute.xlu0 %3278
        %3280 = vrot.lane.b32.xlu0 %v3119, 114
        %v3281 = vpop.permute.xlu0 %3280
        %3282 = vrot.lane.b32.xlu0 %v3120, 114
        %v3283 = vpop.permute.xlu0 %3282
        %3284 = vrot.lane.b32.xlu0 %v3121, 114
        %v3285 = vpop.permute.xlu0 %3284
        %3286 = vrot.lane.b32.xlu0 %v3122, 114
        %v3287 = vpop.permute.xlu0 %3286
        %3288 = vrot.lane.b32.xlu0 %v3123, 114
        %v3289 = vpop.permute.xlu0 %3288
        %3290 = vrot.lane.b32.xlu0 %v3124, 114
        %v3291 = vpop.permute.xlu0 %3290
        %3292 = vrot.lane.b32.xlu0 %v3125, 114
        %v3293 = vpop.permute.xlu0 %3292
        %3294 = vrot.lane.b32.xlu0 %v3126, 114
        %v3295 = vpop.permute.xlu0 %3294
        %3296 = vrot.lane.b32.xlu0 %v3127, 114
        %v3297 = vpop.permute.xlu0 %3296
        %3298 = vrot.lane.b32.xlu0 %v3139, 114
        %v3299 = vpop.permute.xlu0 %3298
        %3300 = vrot.lane.b32.xlu0 %v3141, 114
        %v3301 = vpop.permute.xlu0 %3300
        %3302 = vrot.lane.b32.xlu0 %v3143, 114
        %v3303 = vpop.permute.xlu0 %3302
        %3304 = vrot.lane.b32.xlu0 %v3145, 114
        %v3305 = vpop.permute.xlu0 %3304
        %3306 = vrot.lane.b32.xlu0 %v3147, 114
        %v3307 = vpop.permute.xlu0 %3306
        %3308 = vrot.lane.b32.xlu0 %v3149, 114
        %v3309 = vpop.permute.xlu0 %3308
        %3310 = vrot.lane.b32.xlu0 %v3151, 114
        %v3311 = vpop.permute.xlu0 %3310
        %v3330 = vsel %vm3114, %v3311, 0
        %3332 = vmatpush.msra.mxu0 %v3305
        %3333 = vmatpush.msra.mxu0 %v3303
        %3334 = vmatpush.msra.mxu0 %v3301
        %3335 = vmatpush.msra.mxu0 %v3299
        %3336 = vmatpush.msra.mxu0 %v3297
        %3337 = vmatpush.msra.mxu0 %v3295
        %3338 = vmatpush.msra.mxu0 %v3293
        %3339 = vmatpush.msra.mxu0 %v3291
        %3340 = vmatpush.msra.mxu0 %v3289
        %3341 = vmatpush.msra.mxu0 %v3287
        %3342 = vmatpush.msra.mxu0 %v3285
        %3343 = vmatpush.msra.mxu0 %v3283
        %3344 = vmatpush.msra.mxu0 %v3281
        %3345 = vmatpush.msra.mxu0 %v3279
        %3346 = vmatpush.msra.mxu0 %v3277
        %3347 = vmatpush.msra.mxu0 %v3275
        %3348 = vmatmul.f32.gmra.mxu0 %v3158
        %v3349 = vpop.f32.mrf.mxu0
        %v3350 = vadd.f32 %v3167, %v3349
        %3351 = vmatmul.f32.gmra.mxu0 %v3160
        %v3352 = vpop.f32.mrf.mxu0
        %v3353 = vadd.f32 %v3172, %v3352
        %3354 = vdwg.mxu0
        %3355 = vmatpush.msra.mxu0 0.0
        %3356 = vmatpush.msra.mxu0 0.0
        %3357 = vmatpush.msra.mxu0 0.0
        %3358 = vmatpush.msra.mxu0 0.0
        %3359 = vmatpush.msra.mxu0 0.0
        %3360 = vmatpush.msra.mxu0 0.0
        %3361 = vmatpush.msra.mxu0 0.0
        %3362 = vmatpush.msra.mxu0 0.0
        %3363 = vmatpush.msra.mxu0 0.0
        %3364 = vmatpush.msra.mxu0 0.0
        %3365 = vmatpush.msra.mxu0 0.0
        %3366 = vmatpush.msra.mxu0 0.0
        %3367 = vmatpush.msra.mxu0 0.0
        %3368 = vmatpush.msra.mxu0 %v3330
        %3369 = vmatpush.msra.mxu0 %v3309
        %3370 = vmatpush.msra.mxu0 %v3307
        %3371 = vmatmul.f32.gmra.mxu0 %v3176
        %v3372 = vpop.f32.mrf.mxu0
        %v3373 = vadd.f32 %v3350, %v3372
        %3374 = vmatmul.f32.gmra.mxu0 %v3179
        %v3375 = vpop.f32.mrf.mxu0
        %v3376 = vadd.f32 %v3353, %v3375
        %3377 = vdwg.mxu0
        %v3378 = vxor.u32 %v3373, 2147483648
        %v3379 = vxor.u32 %v3376, 2147483648
        %v3380 = vmul.f32 %v3378, 1.442695
        %v3381 = vpow.pop %v3380
        %v3382 = vmul.f32 %v3379, 1.442695
        %v3383 = vpow.pop %v3382
        %v3384 = vadd.f32 %v3381, 1.0
        %v3385 = vadd.f32 %v3383, 1.0
        %v3386 = vrcp.pop %v3384
        %v3387 = vmul.f32 %v3384, %v3386
        %v3388 = vsub.f32 1.0, %v3387
        %v3389 = vmul.f32 %v3386, %v3388
        %v3390 = vadd.f32 %v3386, %v3389
        %vm3391 = vweird.f32 %v3384
        %vm3392 = vweird.f32 %v3386
        %vm3393 = vmor %vm3391, %vm3392
        %v3394 = vsel %vm3393, %v3386, %v3390
        %v3395 = vand.u32 2147483647, %v3384
        %vm3396 = vcmp.eq.f32.partialorder %v3395, 8.507059e+37
        %v3397 = vand.u32 %v3384, 2147483648
        %v3398 = vor.u32 1.1754944e-38, %v3397
        %v3399 = vsel %vm3396, %v3398, %v3394
        %v3400 = vmul.f32 1.0, %v3399
        %v3401 = vrcp.pop %v3385
        %v3402 = vmul.f32 %v3385, %v3401
        %v3403 = vsub.f32 1.0, %v3402
        %v3404 = vmul.f32 %v3401, %v3403
        %v3405 = vadd.f32 %v3401, %v3404
        %vm3406 = vweird.f32 %v3385
        %vm3407 = vweird.f32 %v3401
        %vm3408 = vmor %vm3406, %vm3407
        %v3409 = vsel %vm3408, %v3401, %v3405
        %v3410 = vand.u32 2147483647, %v3385
        %vm3411 = vcmp.eq.f32.partialorder %v3410, 8.507059e+37
        %v3412 = vand.u32 %v3385, 2147483648
        %v3413 = vor.u32 1.1754944e-38, %v3412
        %v3414 = vsel %vm3411, %v3413, %v3409
        %v3415 = vmul.f32 1.0, %v3414
        %v3416 = vadd.f32 %v3251, %v3400
        %v3417 = vadd.f32 %v3266, %v3415
        %v3418 = vld [vmem:[%s7] sm:$0xff]
        %v3419 = vld [vmem:[%s7 + $0x8] sm:$0x3]
        %vm3420 = vcmask 80896
        %v3422 = vsel %vm3420, %v3416, 0
        %v3425 = vsel %vm3420, %v3417, 0
        %v3428 = vsel %vm3117, %v3419, 0
        %3430 = vmatpush.msra.mxu0 0.0
        %3431 = vmatpush.msra.mxu0 0.0
        %3432 = vmatpush.msra.mxu0 0.0
        %3433 = vmatpush.msra.mxu0 0.0
        %3434 = vmatpush.msra.mxu0 0.0
        %3435 = vmatpush.msra.mxu0 0.0
        %3436 = vmatpush.msra.mxu0 0.0
        %3437 = vmatpush.msra.mxu0 0.0
        %3438 = vmatpush.msra.mxu0 0.0
        %3439 = vmatpush.msra.mxu0 0.0
        %3440 = vmatpush.msra.mxu0 0.0
        %3441 = vmatpush.msra.mxu0 0.0
        %3442 = vmatpush.msra.mxu0 0.0
        %3443 = vmatpush.msra.mxu0 0.0
        %3444 = vmatpush.msra.mxu0 %v3428
        %3445 = vmatpush.msra.mxu0 %v3418
        %3446 = vmatmul.f32.gmra.mxu0 %v3422
        %v3447 = vpop.f32.mrf.mxu0
        %v3448 = vadd.f32 0.0, %v3447
        %3449 = vmatmul.f32.gmra.mxu0 %v3425
        %v3450 = vpop.f32.mrf.mxu0
        %v3451 = vadd.f32 0.0, %v3450
        %3452 = vdwg.mxu0
        %vm3453 = vcmask 39936
        %3454 = vst.msk [vmem:[#allocation3] sm:$0xff] %vm3453, %v3448
        %3455 = vst.msk [vmem:[#allocation3 + $0x8] sm:$0xff] %vm3453, %v3451
        %v3456 = vld [vmem:[#allocation2] sm:$0x3f]
        %v3458 = vrot.slane %v3456, 2
        %3459 = vrot.lane.b32.xlu0 %v3458, 127
        %v3460 = vpop.permute.xlu0 %3459
        %v3462 = vrot.slane %v3456, 4
        %3463 = vrot.lane.b32.xlu0 %v3462, 126
        %v3464 = vpop.permute.xlu0 %3463
        %v3466 = vrot.slane %v3456, 6
        %3467 = vrot.lane.b32.xlu0 %v3466, 125
        %v3468 = vpop.permute.xlu0 %3467
        %3470 = vrot.lane.b32.xlu0 %v3456, 124
        %v3471 = vpop.permute.xlu0 %3470
        %3473 = vrot.lane.b32.xlu0 %v3458, 114
        %v3474 = vpop.permute.xlu0 %3473
        %3476 = vrot.lane.b32.xlu0 %v3462, 113
        %v3477 = vpop.permute.xlu0 %3476
        %3479 = vrot.lane.b32.xlu0 %v3466, 112
        %v3480 = vpop.permute.xlu0 %3479
        %3482 = vrot.lane.b32.xlu0 %v3456, 111
        %v3483 = vpop.permute.xlu0 %3482
        %3485 = vrot.lane.b32.xlu0 %v3458, 110
        %v3486 = vpop.permute.xlu0 %3485
        %3488 = vrot.lane.b32.xlu0 %v3462, 100
        %v3489 = vpop.permute.xlu0 %3488
        %3491 = vrot.lane.b32.xlu0 %v3466, 99
        %v3492 = vpop.permute.xlu0 %3491
        %3494 = vrot.lane.b32.xlu0 %v3456, 98
        %v3495 = vpop.permute.xlu0 %3494
        %3497 = vrot.lane.b32.xlu0 %v3458, 97
        %v3498 = vpop.permute.xlu0 %3497
        %3500 = vrot.lane.b32.xlu0 %v3462, 96
        %v3501 = vpop.permute.xlu0 %3500
        %3503 = vrot.lane.b32.xlu0 %v3466, 86
        %v3504 = vpop.permute.xlu0 %3503
        %v3506 = vsel %vm3114, %v3456, %v3460
        %v3507 = vsel %vm831, %v3460, %v3464
        %v3508 = vsel %vm3117, %v3464, %v3468
        %v3509 = vsel %vm3114, %v3471, %v3474
        %v3510 = vsel %vm831, %v3474, %v3477
        %v3511 = vsel %vm3117, %v3477, %v3480
        %v3512 = vsel %vm3114, %v3483, %v3486
        %v3513 = vsel %vm831, %v3486, %v3489
        %v3514 = vsel %vm3117, %v3489, %v3492
        %v3515 = vsel %vm3114, %v3495, %v3498
        %v3516 = vsel %vm831, %v3498, %v3501
        %v3517 = vsel %vm3117, %v3501, %v3504
        %3518 = vrot.lane.b32.xlu0 %v3456, 115
        %v3519 = vpop.permute.xlu0 %3518
        %v3521 = vsel %vm3114, %v3519, %v3474
        %3528 = vrot.lane.b32.xlu0 %v3506, 85
        %v3529 = vpop.permute.xlu0 %3528
        %3530 = vrot.lane.b32.xlu0 %v3507, 85
        %v3531 = vpop.permute.xlu0 %3530
        %3532 = vrot.lane.b32.xlu0 %v3508, 85
        %v3533 = vpop.permute.xlu0 %3532
        %3534 = vrot.lane.b32.xlu0 %v3521, 85
        %v3535 = vpop.permute.xlu0 %3534
        %3536 = vrot.lane.b32.xlu0 %v3510, 85
        %v3537 = vpop.permute.xlu0 %3536
        %3538 = vrot.lane.b32.xlu0 %v3511, 85
        %v3539 = vpop.permute.xlu0 %3538
        %3540 = vrot.lane.b32.xlu0 %v3483, 85
        %v3541 = vpop.permute.xlu0 %3540
        %v3542 = vld [vmem:[%s5] sm:$0xff]
        %v3543 = vld [vmem:[%s5 + $0x8] sm:$0xff]
        %v3544 = vld [vmem:[%s5 + $0x10] sm:$0xff]
        %v3545 = vld [vmem:[%s5 + $0x18] sm:$0xff]
        %v3546 = vld [vmem:[%s6] sm:$0xff]
        %v3547 = vld [vmem:[%s6 + $0x8] sm:$0xff]
        %3549 = vset.pattern.permute.xlu0 0
        %3550 = vperm.xlu0 %3549, %v3546
        %v3551 = vpop.permute.xlu0 %3550
        %3554 = vset.pattern.permute.xlu0 0
        %3555 = vperm.xlu0 %3554, %v3547
        %v3556 = vpop.permute.xlu0 %3555
        %3565 = vrot.lane.b32.xlu0 %v3506, 100
        %v3566 = vpop.permute.xlu0 %3565
        %3567 = vrot.lane.b32.xlu0 %v3507, 100
        %v3568 = vpop.permute.xlu0 %3567
        %3569 = vrot.lane.b32.xlu0 %v3508, 100
        %v3570 = vpop.permute.xlu0 %3569
        %3571 = vrot.lane.b32.xlu0 %v3509, 100
        %v3572 = vpop.permute.xlu0 %3571
        %3573 = vrot.lane.b32.xlu0 %v3510, 100
        %v3574 = vpop.permute.xlu0 %3573
        %3575 = vrot.lane.b32.xlu0 %v3511, 100
        %v3576 = vpop.permute.xlu0 %3575
        %3577 = vrot.lane.b32.xlu0 %v3512, 100
        %v3578 = vpop.permute.xlu0 %3577
        %3579 = vrot.lane.b32.xlu0 %v3513, 100
        %v3580 = vpop.permute.xlu0 %3579
        %3581 = vrot.lane.b32.xlu0 %v3514, 100
        %v3582 = vpop.permute.xlu0 %3581
        %3583 = vrot.lane.b32.xlu0 %v3515, 100
        %v3584 = vpop.permute.xlu0 %3583
        %3585 = vrot.lane.b32.xlu0 %v3516, 100
        %v3586 = vpop.permute.xlu0 %3585
        %3587 = vrot.lane.b32.xlu0 %v3517, 100
        %v3588 = vpop.permute.xlu0 %3587
        %3589 = vrot.lane.b32.xlu0 %v3529, 100
        %v3590 = vpop.permute.xlu0 %3589
        %3591 = vrot.lane.b32.xlu0 %v3531, 100
        %v3592 = vpop.permute.xlu0 %3591
        %3593 = vrot.lane.b32.xlu0 %v3533, 100
        %v3594 = vpop.permute.xlu0 %3593
        %3595 = vrot.lane.b32.xlu0 %v3535, 100
        %v3596 = vpop.permute.xlu0 %3595
        %3597 = vrot.lane.b32.xlu0 %v3537, 100
        %v3598 = vpop.permute.xlu0 %3597
        %3599 = vrot.lane.b32.xlu0 %v3539, 100
        %v3600 = vpop.permute.xlu0 %3599
        %3601 = vrot.lane.b32.xlu0 %v3541, 100
        %v3602 = vpop.permute.xlu0 %3601
        %v3622 = vsel %vm3174, %v3543, 0
        %v3625 = vsel %vm3174, %v3545, 0
        %v3627 = vsel %vm3114, %v3602, 0
        %3629 = vmatpush.msra.mxu0 %v3596
        %3630 = vmatpush.msra.mxu0 %v3594
        %3631 = vmatpush.msra.mxu0 %v3592
        %3632 = vmatpush.msra.mxu0 %v3590
        %3633 = vmatpush.msra.mxu0 %v3588
        %3634 = vmatpush.msra.mxu0 %v3586
        %3635 = vmatpush.msra.mxu0 %v3584
        %3636 = vmatpush.msra.mxu0 %v3582
        %3637 = vmatpush.msra.mxu0 %v3580
        %3638 = vmatpush.msra.mxu0 %v3578
        %3639 = vmatpush.msra.mxu0 %v3576
        %3640 = vmatpush.msra.mxu0 %v3574
        %3641 = vmatpush.msra.mxu0 %v3572
        %3642 = vmatpush.msra.mxu0 %v3570
        %3643 = vmatpush.msra.mxu0 %v3568
        %3644 = vmatpush.msra.mxu0 %v3566
        %3645 = vmatmul.f32.gmra.mxu0 %v3542
        %v3646 = vpop.f32.mrf.mxu0
        %v3647 = vadd.f32 %v3551, %v3646
        %3648 = vmatmul.f32.gmra.mxu0 %v3544
        %v3649 = vpop.f32.mrf.mxu0
        %v3650 = vadd.f32 %v3556, %v3649
        %3651 = vdwg.mxu0
        %3652 = vmatpush.msra.mxu0 0.0
        %3653 = vmatpush.msra.mxu0 0.0
        %3654 = vmatpush.msra.mxu0 0.0
        %3655 = vmatpush.msra.mxu0 0.0
        %3656 = vmatpush.msra.mxu0 0.0
        %3657 = vmatpush.msra.mxu0 0.0
        %3658 = vmatpush.msra.mxu0 0.0
        %3659 = vmatpush.msra.mxu0 0.0
        %3660 = vmatpush.msra.mxu0 0.0
        %3661 = vmatpush.msra.mxu0 0.0
        %3662 = vmatpush.msra.mxu0 0.0
        %3663 = vmatpush.msra.mxu0 0.0
        %3664 = vmatpush.msra.mxu0 0.0
        %3665 = vmatpush.msra.mxu0 %v3627
        %3666 = vmatpush.msra.mxu0 %v3600
        %3667 = vmatpush.msra.mxu0 %v3598
        %3668 = vmatmul.f32.gmra.mxu0 %v3622
        %v3669 = vpop.f32.mrf.mxu0
        %v3670 = vadd.f32 %v3647, %v3669
        %3671 = vmatmul.f32.gmra.mxu0 %v3625
        %v3672 = vpop.f32.mrf.mxu0
        %v3673 = vadd.f32 %v3650, %v3672
        %3674 = vdwg.mxu0
        %v3675 = vxor.u32 %v3670, 2147483648
        %v3676 = vxor.u32 %v3673, 2147483648
        %v3677 = vmul.f32 %v3675, 1.442695
        %v3678 = vpow.pop %v3677
        %v3679 = vmul.f32 %v3676, 1.442695
        %v3680 = vpow.pop %v3679
        %v3681 = vadd.f32 %v3678, 1.0
        %v3682 = vadd.f32 %v3680, 1.0
        %v3683 = vrcp.pop %v3681
        %v3684 = vmul.f32 %v3681, %v3683
        %v3685 = vsub.f32 1.0, %v3684
        %v3686 = vmul.f32 %v3683, %v3685
        %v3687 = vadd.f32 %v3683, %v3686
        %vm3688 = vweird.f32 %v3681
        %vm3689 = vweird.f32 %v3683
        %vm3690 = vmor %vm3688, %vm3689
        %v3691 = vsel %vm3690, %v3683, %v3687
        %v3692 = vand.u32 2147483647, %v3681
        %vm3693 = vcmp.eq.f32.partialorder %v3692, 8.507059e+37
        %v3694 = vand.u32 %v3681, 2147483648
        %v3695 = vor.u32 1.1754944e-38, %v3694
        %v3696 = vsel %vm3693, %v3695, %v3691
        %v3697 = vmul.f32 1.0, %v3696
        %v3698 = vrcp.pop %v3682
        %v3699 = vmul.f32 %v3682, %v3698
        %v3700 = vsub.f32 1.0, %v3699
        %v3701 = vmul.f32 %v3698, %v3700
        %v3702 = vadd.f32 %v3698, %v3701
        %vm3703 = vweird.f32 %v3682
        %vm3704 = vweird.f32 %v3698
        %vm3705 = vmor %vm3703, %vm3704
        %v3706 = vsel %vm3705, %v3698, %v3702
        %v3707 = vand.u32 2147483647, %v3682
        %vm3708 = vcmp.eq.f32.partialorder %v3707, 8.507059e+37
        %v3709 = vand.u32 %v3682, 2147483648
        %v3710 = vor.u32 1.1754944e-38, %v3709
        %v3711 = vsel %vm3708, %v3710, %v3706
        %v3712 = vmul.f32 1.0, %v3711
        %3713 = vrot.lane.b32.xlu0 %v3506, 86
        %v3714 = vpop.permute.xlu0 %3713
        %3715 = vrot.lane.b32.xlu0 %v3507, 86
        %v3716 = vpop.permute.xlu0 %3715
        %3717 = vrot.lane.b32.xlu0 %v3508, 86
        %v3718 = vpop.permute.xlu0 %3717
        %3719 = vrot.lane.b32.xlu0 %v3509, 86
        %v3720 = vpop.permute.xlu0 %3719
        %3721 = vrot.lane.b32.xlu0 %v3510, 86
        %v3722 = vpop.permute.xlu0 %3721
        %3723 = vrot.lane.b32.xlu0 %v3511, 86
        %v3724 = vpop.permute.xlu0 %3723
        %3725 = vrot.lane.b32.xlu0 %v3512, 86
        %v3726 = vpop.permute.xlu0 %3725
        %3727 = vrot.lane.b32.xlu0 %v3513, 86
        %v3728 = vpop.permute.xlu0 %3727
        %3729 = vrot.lane.b32.xlu0 %v3514, 86
        %v3730 = vpop.permute.xlu0 %3729
        %3731 = vrot.lane.b32.xlu0 %v3515, 86
        %v3732 = vpop.permute.xlu0 %3731
        %3733 = vrot.lane.b32.xlu0 %v3516, 86
        %v3734 = vpop.permute.xlu0 %3733
        %3735 = vrot.lane.b32.xlu0 %v3517, 86
        %v3736 = vpop.permute.xlu0 %3735
        %3737 = vrot.lane.b32.xlu0 %v3529, 86
        %v3738 = vpop.permute.xlu0 %3737
        %3739 = vrot.lane.b32.xlu0 %v3531, 86
        %v3740 = vpop.permute.xlu0 %3739
        %3741 = vrot.lane.b32.xlu0 %v3533, 86
        %v3742 = vpop.permute.xlu0 %3741
        %3743 = vrot.lane.b32.xlu0 %v3535, 86
        %v3744 = vpop.permute.xlu0 %3743
        %3745 = vrot.lane.b32.xlu0 %v3537, 86
        %v3746 = vpop.permute.xlu0 %3745
        %3747 = vrot.lane.b32.xlu0 %v3539, 86
        %v3748 = vpop.permute.xlu0 %3747
        %3749 = vrot.lane.b32.xlu0 %v3541, 86
        %v3750 = vpop.permute.xlu0 %3749
        %v3769 = vsel %vm3114, %v3750, 0
        %3771 = vmatpush.msra.mxu0 %v3744
        %3772 = vmatpush.msra.mxu0 %v3742
        %3773 = vmatpush.msra.mxu0 %v3740
        %3774 = vmatpush.msra.mxu0 %v3738
        %3775 = vmatpush.msra.mxu0 %v3736
        %3776 = vmatpush.msra.mxu0 %v3734
        %3777 = vmatpush.msra.mxu0 %v3732
        %3778 = vmatpush.msra.mxu0 %v3730
        %3779 = vmatpush.msra.mxu0 %v3728
        %3780 = vmatpush.msra.mxu0 %v3726
        %3781 = vmatpush.msra.mxu0 %v3724
        %3782 = vmatpush.msra.mxu0 %v3722
        %3783 = vmatpush.msra.mxu0 %v3720
        %3784 = vmatpush.msra.mxu0 %v3718
        %3785 = vmatpush.msra.mxu0 %v3716
        %3786 = vmatpush.msra.mxu0 %v3714
        %3787 = vmatmul.f32.gmra.mxu0 %v3542
        %v3788 = vpop.f32.mrf.mxu0
        %v3789 = vadd.f32 %v3551, %v3788
        %3790 = vmatmul.f32.gmra.mxu0 %v3544
        %v3791 = vpop.f32.mrf.mxu0
        %v3792 = vadd.f32 %v3556, %v3791
        %3793 = vdwg.mxu0
        %3794 = vmatpush.msra.mxu0 0.0
        %3795 = vmatpush.msra.mxu0 0.0
        %3796 = vmatpush.msra.mxu0 0.0
        %3797 = vmatpush.msra.mxu0 0.0
        %3798 = vmatpush.msra.mxu0 0.0
        %3799 = vmatpush.msra.mxu0 0.0
        %3800 = vmatpush.msra.mxu0 0.0
        %3801 = vmatpush.msra.mxu0 0.0
        %3802 = vmatpush.msra.mxu0 0.0
        %3803 = vmatpush.msra.mxu0 0.0
        %3804 = vmatpush.msra.mxu0 0.0
        %3805 = vmatpush.msra.mxu0 0.0
        %3806 = vmatpush.msra.mxu0 0.0
        %3807 = vmatpush.msra.mxu0 %v3769
        %3808 = vmatpush.msra.mxu0 %v3748
        %3809 = vmatpush.msra.mxu0 %v3746
        %3810 = vmatmul.f32.gmra.mxu0 %v3622
        %v3811 = vpop.f32.mrf.mxu0
        %v3812 = vadd.f32 %v3789, %v3811
        %3813 = vmatmul.f32.gmra.mxu0 %v3625
        %v3814 = vpop.f32.mrf.mxu0
        %v3815 = vadd.f32 %v3792, %v3814
        %3816 = vdwg.mxu0
        %v3817 = vxor.u32 %v3812, 2147483648
        %v3818 = vxor.u32 %v3815, 2147483648
        %v3819 = vmul.f32 %v3817, 1.442695
        %v3820 = vpow.pop %v3819
        %v3821 = vmul.f32 %v3818, 1.442695
        %v3822 = vpow.pop %v3821
        %v3823 = vadd.f32 %v3820, 1.0
        %v3824 = vadd.f32 %v3822, 1.0
        %v3825 = vrcp.pop %v3823
        %v3826 = vmul.f32 %v3823, %v3825
        %v3827 = vsub.f32 1.0, %v3826
        %v3828 = vmul.f32 %v3825, %v3827
        %v3829 = vadd.f32 %v3825, %v3828
        %vm3830 = vweird.f32 %v3823
        %vm3831 = vweird.f32 %v3825
        %vm3832 = vmor %vm3830, %vm3831
        %v3833 = vsel %vm3832, %v3825, %v3829
        %v3834 = vand.u32 2147483647, %v3823
        %vm3835 = vcmp.eq.f32.partialorder %v3834, 8.507059e+37
        %v3836 = vand.u32 %v3823, 2147483648
        %v3837 = vor.u32 1.1754944e-38, %v3836
        %v3838 = vsel %vm3835, %v3837, %v3833
        %v3839 = vmul.f32 1.0, %v3838
        %v3840 = vrcp.pop %v3824
        %v3841 = vmul.f32 %v3824, %v3840
        %v3842 = vsub.f32 1.0, %v3841
        %v3843 = vmul.f32 %v3840, %v3842
        %v3844 = vadd.f32 %v3840, %v3843
        %vm3845 = vweird.f32 %v3824
        %vm3846 = vweird.f32 %v3840
        %vm3847 = vmor %vm3845, %vm3846
        %v3848 = vsel %vm3847, %v3840, %v3844
        %v3849 = vand.u32 2147483647, %v3824
        %vm3850 = vcmp.eq.f32.partialorder %v3849, 8.507059e+37
        %v3851 = vand.u32 %v3824, 2147483648
        %v3852 = vor.u32 1.1754944e-38, %v3851
        %v3853 = vsel %vm3850, %v3852, %v3848
        %v3854 = vmul.f32 1.0, %v3853
        %v3855 = vadd.f32 %v3697, %v3839
        %v3856 = vadd.f32 %v3712, %v3854
        %v3857 = vld [vmem:[%s7] sm:$0xff]
        %v3858 = vld [vmem:[%s7 + $0x8] sm:$0x3]
        %v3860 = vsel %vm3420, %v3855, 0
        %v3863 = vsel %vm3420, %v3856, 0
        %v3866 = vsel %vm3117, %v3858, 0
        %3868 = vmatpush.msra.mxu0 0.0
        %3869 = vmatpush.msra.mxu0 0.0
        %3870 = vmatpush.msra.mxu0 0.0
        %3871 = vmatpush.msra.mxu0 0.0
        %3872 = vmatpush.msra.mxu0 0.0
        %3873 = vmatpush.msra.mxu0 0.0
        %3874 = vmatpush.msra.mxu0 0.0
        %3875 = vmatpush.msra.mxu0 0.0
        %3876 = vmatpush.msra.mxu0 0.0
        %3877 = vmatpush.msra.mxu0 0.0
        %3878 = vmatpush.msra.mxu0 0.0
        %3879 = vmatpush.msra.mxu0 0.0
        %3880 = vmatpush.msra.mxu0 0.0
        %3881 = vmatpush.msra.mxu0 0.0
        %3882 = vmatpush.msra.mxu0 %v3866
        %3883 = vmatpush.msra.mxu0 %v3857
        %3884 = vmatmul.f32.gmra.mxu0 %v3860
        %v3885 = vpop.f32.mrf.mxu0
        %v3886 = vadd.f32 0.0, %v3885
        %3887 = vmatmul.f32.gmra.mxu0 %v3863
        %v3888 = vpop.f32.mrf.mxu0
        %v3889 = vadd.f32 0.0, %v3888
        %3890 = vdwg.mxu0
        %3893 = vrot.lane.b32.xlu0 %v3886, 5
        %v3894 = vpop.permute.xlu0 %3893
        %3895 = vrot.lane.b32.xlu0 %v3889, 5
        %v3896 = vpop.permute.xlu0 %3895
        %vm3899 = vcmask 80936
        %3900 = vst.msk [vmem:[#allocation3] sm:$0xff] %vm3899, %v3894
        %3901 = vst.msk [vmem:[#allocation3 + $0x8] sm:$0xff] %vm3899, %v3896
        %v3902 = vld [vmem:[#allocation2] sm:$0x3f]
        %v3904 = vrot.slane %v3902, 2
        %3905 = vrot.lane.b32.xlu0 %v3904, 127
        %v3906 = vpop.permute.xlu0 %3905
        %v3908 = vrot.slane %v3902, 4
        %3909 = vrot.lane.b32.xlu0 %v3908, 126
        %v3910 = vpop.permute.xlu0 %3909
        %v3912 = vrot.slane %v3902, 6
        %3913 = vrot.lane.b32.xlu0 %v3912, 125
        %v3914 = vpop.permute.xlu0 %3913
        %3916 = vrot.lane.b32.xlu0 %v3902, 124
        %v3917 = vpop.permute.xlu0 %3916
        %3919 = vrot.lane.b32.xlu0 %v3904, 114
        %v3920 = vpop.permute.xlu0 %3919
        %3922 = vrot.lane.b32.xlu0 %v3908, 113
        %v3923 = vpop.permute.xlu0 %3922
        %3925 = vrot.lane.b32.xlu0 %v3912, 112
        %v3926 = vpop.permute.xlu0 %3925
        %3928 = vrot.lane.b32.xlu0 %v3902, 111
        %v3929 = vpop.permute.xlu0 %3928
        %3931 = vrot.lane.b32.xlu0 %v3904, 110
        %v3932 = vpop.permute.xlu0 %3931
        %3934 = vrot.lane.b32.xlu0 %v3908, 100
        %v3935 = vpop.permute.xlu0 %3934
        %3937 = vrot.lane.b32.xlu0 %v3912, 99
        %v3938 = vpop.permute.xlu0 %3937
        %3940 = vrot.lane.b32.xlu0 %v3902, 98
        %v3941 = vpop.permute.xlu0 %3940
        %3943 = vrot.lane.b32.xlu0 %v3904, 97
        %v3944 = vpop.permute.xlu0 %3943
        %3946 = vrot.lane.b32.xlu0 %v3908, 96
        %v3947 = vpop.permute.xlu0 %3946
        %3949 = vrot.lane.b32.xlu0 %v3912, 86
        %v3950 = vpop.permute.xlu0 %3949
        %v3952 = vsel %vm3114, %v3902, %v3906
        %v3953 = vsel %vm831, %v3906, %v3910
        %v3954 = vsel %vm3117, %v3910, %v3914
        %v3955 = vsel %vm3114, %v3917, %v3920
        %v3956 = vsel %vm831, %v3920, %v3923
        %v3957 = vsel %vm3117, %v3923, %v3926
        %v3958 = vsel %vm3114, %v3929, %v3932
        %v3959 = vsel %vm831, %v3932, %v3935
        %v3960 = vsel %vm3117, %v3935, %v3938
        %v3961 = vsel %vm3114, %v3941, %v3944
        %v3962 = vsel %vm831, %v3944, %v3947
        %v3963 = vsel %vm3117, %v3947, %v3950
        %3964 = vrot.lane.b32.xlu0 %v3902, 115
        %v3965 = vpop.permute.xlu0 %3964
        %v3967 = vsel %vm3114, %v3965, %v3920
        %3974 = vrot.lane.b32.xlu0 %v3952, 85
        %v3975 = vpop.permute.xlu0 %3974
        %3976 = vrot.lane.b32.xlu0 %v3953, 85
        %v3977 = vpop.permute.xlu0 %3976
        %3978 = vrot.lane.b32.xlu0 %v3954, 85
        %v3979 = vpop.permute.xlu0 %3978
        %3980 = vrot.lane.b32.xlu0 %v3967, 85
        %v3981 = vpop.permute.xlu0 %3980
        %3982 = vrot.lane.b32.xlu0 %v3956, 85
        %v3983 = vpop.permute.xlu0 %3982
        %3984 = vrot.lane.b32.xlu0 %v3957, 85
        %v3985 = vpop.permute.xlu0 %3984
        %3986 = vrot.lane.b32.xlu0 %v3929, 85
        %v3987 = vpop.permute.xlu0 %3986
        %v3988 = vld [vmem:[%s5] sm:$0xff]
        %v3989 = vld [vmem:[%s5 + $0x8] sm:$0xff]
        %v3990 = vld [vmem:[%s5 + $0x10] sm:$0xff]
        %v3991 = vld [vmem:[%s5 + $0x18] sm:$0xff]
        %v3992 = vld [vmem:[%s6] sm:$0xff]
        %v3993 = vld [vmem:[%s6 + $0x8] sm:$0xff]
        %3995 = vset.pattern.permute.xlu0 0
        %3996 = vperm.xlu0 %3995, %v3992
        %v3997 = vpop.permute.xlu0 %3996
        %4000 = vset.pattern.permute.xlu0 0
        %4001 = vperm.xlu0 %4000, %v3993
        %v4002 = vpop.permute.xlu0 %4001
        %4011 = vrot.lane.b32.xlu0 %v3952, 72
        %v4012 = vpop.permute.xlu0 %4011
        %4013 = vrot.lane.b32.xlu0 %v3953, 72
        %v4014 = vpop.permute.xlu0 %4013
        %4015 = vrot.lane.b32.xlu0 %v3954, 72
        %v4016 = vpop.permute.xlu0 %4015
        %4017 = vrot.lane.b32.xlu0 %v3955, 72
        %v4018 = vpop.permute.xlu0 %4017
        %4019 = vrot.lane.b32.xlu0 %v3956, 72
        %v4020 = vpop.permute.xlu0 %4019
        %4021 = vrot.lane.b32.xlu0 %v3957, 72
        %v4022 = vpop.permute.xlu0 %4021
        %4023 = vrot.lane.b32.xlu0 %v3958, 72
        %v4024 = vpop.permute.xlu0 %4023
        %4025 = vrot.lane.b32.xlu0 %v3959, 72
        %v4026 = vpop.permute.xlu0 %4025
        %4027 = vrot.lane.b32.xlu0 %v3960, 72
        %v4028 = vpop.permute.xlu0 %4027
        %4029 = vrot.lane.b32.xlu0 %v3961, 72
        %v4030 = vpop.permute.xlu0 %4029
        %4031 = vrot.lane.b32.xlu0 %v3962, 72
        %v4032 = vpop.permute.xlu0 %4031
        %4033 = vrot.lane.b32.xlu0 %v3963, 72
        %v4034 = vpop.permute.xlu0 %4033
        %4035 = vrot.lane.b32.xlu0 %v3975, 72
        %v4036 = vpop.permute.xlu0 %4035
        %4037 = vrot.lane.b32.xlu0 %v3977, 72
        %v4038 = vpop.permute.xlu0 %4037
        %4039 = vrot.lane.b32.xlu0 %v3979, 72
        %v4040 = vpop.permute.xlu0 %4039
        %4041 = vrot.lane.b32.xlu0 %v3981, 72
        %v4042 = vpop.permute.xlu0 %4041
        %4043 = vrot.lane.b32.xlu0 %v3983, 72
        %v4044 = vpop.permute.xlu0 %4043
        %4045 = vrot.lane.b32.xlu0 %v3985, 72
        %v4046 = vpop.permute.xlu0 %4045
        %4047 = vrot.lane.b32.xlu0 %v3987, 72
        %v4048 = vpop.permute.xlu0 %4047
        %v4068 = vsel %vm3174, %v3989, 0
        %v4071 = vsel %vm3174, %v3991, 0
        %v4073 = vsel %vm3114, %v4048, 0
        %4075 = vmatpush.msra.mxu0 %v4042
        %4076 = vmatpush.msra.mxu0 %v4040
        %4077 = vmatpush.msra.mxu0 %v4038
        %4078 = vmatpush.msra.mxu0 %v4036
        %4079 = vmatpush.msra.mxu0 %v4034
        %4080 = vmatpush.msra.mxu0 %v4032
        %4081 = vmatpush.msra.mxu0 %v4030
        %4082 = vmatpush.msra.mxu0 %v4028
        %4083 = vmatpush.msra.mxu0 %v4026
        %4084 = vmatpush.msra.mxu0 %v4024
        %4085 = vmatpush.msra.mxu0 %v4022
        %4086 = vmatpush.msra.mxu0 %v4020
        %4087 = vmatpush.msra.mxu0 %v4018
        %4088 = vmatpush.msra.mxu0 %v4016
        %4089 = vmatpush.msra.mxu0 %v4014
        %4090 = vmatpush.msra.mxu0 %v4012
        %4091 = vmatmul.f32.gmra.mxu0 %v3988
        %v4092 = vpop.f32.mrf.mxu0
        %v4093 = vadd.f32 %v3997, %v4092
        %4094 = vmatmul.f32.gmra.mxu0 %v3990
        %v4095 = vpop.f32.mrf.mxu0
        %v4096 = vadd.f32 %v4002, %v4095
        %4097 = vdwg.mxu0
        %4098 = vmatpush.msra.mxu0 0.0
        %4099 = vmatpush.msra.mxu0 0.0
        %4100 = vmatpush.msra.mxu0 0.0
        %4101 = vmatpush.msra.mxu0 0.0
        %4102 = vmatpush.msra.mxu0 0.0
        %4103 = vmatpush.msra.mxu0 0.0
        %4104 = vmatpush.msra.mxu0 0.0
        %4105 = vmatpush.msra.mxu0 0.0
        %4106 = vmatpush.msra.mxu0 0.0
        %4107 = vmatpush.msra.mxu0 0.0
        %4108 = vmatpush.msra.mxu0 0.0
        %4109 = vmatpush.msra.mxu0 0.0
        %4110 = vmatpush.msra.mxu0 0.0
        %4111 = vmatpush.msra.mxu0 %v4073
        %4112 = vmatpush.msra.mxu0 %v4046
        %4113 = vmatpush.msra.mxu0 %v4044
        %4114 = vmatmul.f32.gmra.mxu0 %v4068
        %v4115 = vpop.f32.mrf.mxu0
        %v4116 = vadd.f32 %v4093, %v4115
        %4117 = vmatmul.f32.gmra.mxu0 %v4071
        %v4118 = vpop.f32.mrf.mxu0
        %v4119 = vadd.f32 %v4096, %v4118
        %4120 = vdwg.mxu0
        %v4121 = vxor.u32 %v4116, 2147483648
        %v4122 = vxor.u32 %v4119, 2147483648
        %v4123 = vmul.f32 %v4121, 1.442695
        %v4124 = vpow.pop %v4123
        %v4125 = vmul.f32 %v4122, 1.442695
        %v4126 = vpow.pop %v4125
        %v4127 = vadd.f32 %v4124, 1.0
        %v4128 = vadd.f32 %v4126, 1.0
        %v4129 = vrcp.pop %v4127
        %v4130 = vmul.f32 %v4127, %v4129
        %v4131 = vsub.f32 1.0, %v4130
        %v4132 = vmul.f32 %v4129, %v4131
        %v4133 = vadd.f32 %v4129, %v4132
        %vm4134 = vweird.f32 %v4127
        %vm4135 = vweird.f32 %v4129
        %vm4136 = vmor %vm4134, %vm4135
        %v4137 = vsel %vm4136, %v4129, %v4133
        %v4138 = vand.u32 2147483647, %v4127
        %vm4139 = vcmp.eq.f32.partialorder %v4138, 8.507059e+37
        %v4140 = vand.u32 %v4127, 2147483648
        %v4141 = vor.u32 1.1754944e-38, %v4140
        %v4142 = vsel %vm4139, %v4141, %v4137
        %v4143 = vmul.f32 1.0, %v4142
        %v4144 = vrcp.pop %v4128
        %v4145 = vmul.f32 %v4128, %v4144
        %v4146 = vsub.f32 1.0, %v4145
        %v4147 = vmul.f32 %v4144, %v4146
        %v4148 = vadd.f32 %v4144, %v4147
        %vm4149 = vweird.f32 %v4128
        %vm4150 = vweird.f32 %v4144
        %vm4151 = vmor %vm4149, %vm4150
        %v4152 = vsel %vm4151, %v4144, %v4148
        %v4153 = vand.u32 2147483647, %v4128
        %vm4154 = vcmp.eq.f32.partialorder %v4153, 8.507059e+37
        %v4155 = vand.u32 %v4128, 2147483648
        %v4156 = vor.u32 1.1754944e-38, %v4155
        %v4157 = vsel %vm4154, %v4156, %v4152
        %v4158 = vmul.f32 1.0, %v4157
        %v4159 = vld [vmem:[#allocation2] sm:$0x3f]
        %v4160 = vld [vmem:[#allocation2 + $0x8] sm:$0x3f]
        %4163 = vrot.lane.b32.xlu0 %v4159, 115
        %v4164 = vpop.permute.xlu0 %4163
        %4165 = vrot.lane.b32.xlu0 %v4160, 115
        %v4166 = vpop.permute.xlu0 %4165
        %vm4167 = vcmask 941056
        %v4168 = vsel %vm4167, %v4164, %v4166
        %v4170 = vrot.slane %v4159, 2
        %v4171 = vrot.slane %v4160, 2
        %4172 = vrot.lane.b32.xlu0 %v4170, 114
        %v4173 = vpop.permute.xlu0 %4172
        %4174 = vrot.lane.b32.xlu0 %v4171, 114
        %v4175 = vpop.permute.xlu0 %4174
        %vm4176 = vcmask 932864
        %v4177 = vsel %vm4176, %v4173, %v4175
        %v4179 = vrot.slane %v4160, 4
        %4180 = vrot.lane.b32.xlu0 %v4179, 113
        %v4181 = vpop.permute.xlu0 %4180
        %v4183 = vrot.slane %v4160, 6
        %4184 = vrot.lane.b32.xlu0 %v4183, 112
        %v4185 = vpop.permute.xlu0 %4184
        %4187 = vrot.lane.b32.xlu0 %v4160, 111
        %v4188 = vpop.permute.xlu0 %4187
        %v4189 = vsel %vm3114, %v4168, %v4177
        %v4190 = vsel %vm831, %v4177, %v4181
        %v4191 = vsel %vm3117, %v4181, %v4185
        %4195 = vrot.lane.b32.xlu0 %v4189, 85
        %v4196 = vpop.permute.xlu0 %4195
        %4197 = vrot.lane.b32.xlu0 %v4190, 85
        %v4198 = vpop.permute.xlu0 %4197
        %4199 = vrot.lane.b32.xlu0 %v4191, 85
        %v4200 = vpop.permute.xlu0 %4199
        %4201 = vrot.lane.b32.xlu0 %v4188, 85
        %v4202 = vpop.permute.xlu0 %4201
        %4203 = vrot.lane.b32.xlu0 %v3952, 58
        %v4204 = vpop.permute.xlu0 %4203
        %4205 = vrot.lane.b32.xlu0 %v3953, 58
        %v4206 = vpop.permute.xlu0 %4205
        %4207 = vrot.lane.b32.xlu0 %v3954, 58
        %v4208 = vpop.permute.xlu0 %4207
        %4209 = vrot.lane.b32.xlu0 %v3955, 58
        %v4210 = vpop.permute.xlu0 %4209
        %4211 = vrot.lane.b32.xlu0 %v3956, 58
        %v4212 = vpop.permute.xlu0 %4211
        %4213 = vrot.lane.b32.xlu0 %v3957, 58
        %v4214 = vpop.permute.xlu0 %4213
        %4215 = vrot.lane.b32.xlu0 %v3958, 58
        %v4216 = vpop.permute.xlu0 %4215
        %4217 = vrot.lane.b32.xlu0 %v3959, 58
        %v4218 = vpop.permute.xlu0 %4217
        %4219 = vrot.lane.b32.xlu0 %v3960, 58
        %v4220 = vpop.permute.xlu0 %4219
        %4221 = vrot.lane.b32.xlu0 %v3961, 58
        %v4222 = vpop.permute.xlu0 %4221
        %4223 = vrot.lane.b32.xlu0 %v3962, 58
        %v4224 = vpop.permute.xlu0 %4223
        %4225 = vrot.lane.b32.xlu0 %v3963, 58
        %v4226 = vpop.permute.xlu0 %4225
        %4227 = vrot.lane.b32.xlu0 %v3975, 58
        %v4228 = vpop.permute.xlu0 %4227
        %4229 = vrot.lane.b32.xlu0 %v3977, 58
        %v4230 = vpop.permute.xlu0 %4229
        %4231 = vrot.lane.b32.xlu0 %v3979, 58
        %v4232 = vpop.permute.xlu0 %4231
        %4233 = vrot.lane.b32.xlu0 %v4196, 58
        %v4234 = vpop.permute.xlu0 %4233
        %4235 = vrot.lane.b32.xlu0 %v4198, 58
        %v4236 = vpop.permute.xlu0 %4235
        %4237 = vrot.lane.b32.xlu0 %v4200, 58
        %v4238 = vpop.permute.xlu0 %4237
        %4239 = vrot.lane.b32.xlu0 %v4202, 58
        %v4240 = vpop.permute.xlu0 %4239
        %v4259 = vsel %vm3114, %v4240, 0
        %4261 = vmatpush.msra.mxu0 %v4234
        %4262 = vmatpush.msra.mxu0 %v4232
        %4263 = vmatpush.msra.mxu0 %v4230
        %4264 = vmatpush.msra.mxu0 %v4228
        %4265 = vmatpush.msra.mxu0 %v4226
        %4266 = vmatpush.msra.mxu0 %v4224
        %4267 = vmatpush.msra.mxu0 %v4222
        %4268 = vmatpush.msra.mxu0 %v4220
        %4269 = vmatpush.msra.mxu0 %v4218
        %4270 = vmatpush.msra.mxu0 %v4216
        %4271 = vmatpush.msra.mxu0 %v4214
        %4272 = vmatpush.msra.mxu0 %v4212
        %4273 = vmatpush.msra.mxu0 %v4210
        %4274 = vmatpush.msra.mxu0 %v4208
        %4275 = vmatpush.msra.mxu0 %v4206
        %4276 = vmatpush.msra.mxu0 %v4204
        %4277 = vmatmul.f32.gmra.mxu0 %v3988
        %v4278 = vpop.f32.mrf.mxu0
        %v4279 = vadd.f32 %v3997, %v4278
        %4280 = vmatmul.f32.gmra.mxu0 %v3990
        %v4281 = vpop.f32.mrf.mxu0
        %v4282 = vadd.f32 %v4002, %v4281
        %4283 = vdwg.mxu0
        %4284 = vmatpush.msra.mxu0 0.0
        %4285 = vmatpush.msra.mxu0 0.0
        %4286 = vmatpush.msra.mxu0 0.0
        %4287 = vmatpush.msra.mxu0 0.0
        %4288 = vmatpush.msra.mxu0 0.0
        %4289 = vmatpush.msra.mxu0 0.0
        %4290 = vmatpush.msra.mxu0 0.0
        %4291 = vmatpush.msra.mxu0 0.0
        %4292 = vmatpush.msra.mxu0 0.0
        %4293 = vmatpush.msra.mxu0 0.0
        %4294 = vmatpush.msra.mxu0 0.0
        %4295 = vmatpush.msra.mxu0 0.0
        %4296 = vmatpush.msra.mxu0 0.0
        %4297 = vmatpush.msra.mxu0 %v4259
        %4298 = vmatpush.msra.mxu0 %v4238
        %4299 = vmatpush.msra.mxu0 %v4236
        %4300 = vmatmul.f32.gmra.mxu0 %v4068
        %v4301 = vpop.f32.mrf.mxu0
        %v4302 = vadd.f32 %v4279, %v4301
        %4303 = vmatmul.f32.gmra.mxu0 %v4071
        %v4304 = vpop.f32.mrf.mxu0
        %v4305 = vadd.f32 %v4282, %v4304
        %4306 = vdwg.mxu0
        %v4307 = vxor.u32 %v4302, 2147483648
        %v4308 = vxor.u32 %v4305, 2147483648
        %v4309 = vmul.f32 %v4307, 1.442695
        %v4310 = vpow.pop %v4309
        %v4311 = vmul.f32 %v4308, 1.442695
        %v4312 = vpow.pop %v4311
        %v4313 = vadd.f32 %v4310, 1.0
        %v4314 = vadd.f32 %v4312, 1.0
        %v4315 = vrcp.pop %v4313
        %v4316 = vmul.f32 %v4313, %v4315
        %v4317 = vsub.f32 1.0, %v4316
        %v4318 = vmul.f32 %v4315, %v4317
        %v4319 = vadd.f32 %v4315, %v4318
        %vm4320 = vweird.f32 %v4313
        %vm4321 = vweird.f32 %v4315
        %vm4322 = vmor %vm4320, %vm4321
        %v4323 = vsel %vm4322, %v4315, %v4319
        %v4324 = vand.u32 2147483647, %v4313
        %vm4325 = vcmp.eq.f32.partialorder %v4324, 8.507059e+37
        %v4326 = vand.u32 %v4313, 2147483648
        %v4327 = vor.u32 1.1754944e-38, %v4326
        %v4328 = vsel %vm4325, %v4327, %v4323
        %v4329 = vmul.f32 1.0, %v4328
        %v4330 = vrcp.pop %v4314
        %v4331 = vmul.f32 %v4314, %v4330
        %v4332 = vsub.f32 1.0, %v4331
        %v4333 = vmul.f32 %v4330, %v4332
        %v4334 = vadd.f32 %v4330, %v4333
        %vm4335 = vweird.f32 %v4314
        %vm4336 = vweird.f32 %v4330
        %vm4337 = vmor %vm4335, %vm4336
        %v4338 = vsel %vm4337, %v4330, %v4334
        %v4339 = vand.u32 2147483647, %v4314
        %vm4340 = vcmp.eq.f32.partialorder %v4339, 8.507059e+37
        %v4341 = vand.u32 %v4314, 2147483648
        %v4342 = vor.u32 1.1754944e-38, %v4341
        %v4343 = vsel %vm4340, %v4342, %v4338
        %v4344 = vmul.f32 1.0, %v4343
        %v4345 = vadd.f32 %v4143, %v4329
        %v4346 = vadd.f32 %v4158, %v4344
        %v4347 = vld [vmem:[%s7] sm:$0xff]
        %v4348 = vld [vmem:[%s7 + $0x8] sm:$0x3]
        %v4350 = vsel %vm3420, %v4345, 0
        %v4353 = vsel %vm3420, %v4346, 0
        %v4356 = vsel %vm3117, %v4348, 0
        %4358 = vmatpush.msra.mxu0 0.0
        %4359 = vmatpush.msra.mxu0 0.0
        %4360 = vmatpush.msra.mxu0 0.0
        %4361 = vmatpush.msra.mxu0 0.0
        %4362 = vmatpush.msra.mxu0 0.0
        %4363 = vmatpush.msra.mxu0 0.0
        %4364 = vmatpush.msra.mxu0 0.0
        %4365 = vmatpush.msra.mxu0 0.0
        %4366 = vmatpush.msra.mxu0 0.0
        %4367 = vmatpush.msra.mxu0 0.0
        %4368 = vmatpush.msra.mxu0 0.0
        %4369 = vmatpush.msra.mxu0 0.0
        %4370 = vmatpush.msra.mxu0 0.0
        %4371 = vmatpush.msra.mxu0 0.0
        %4372 = vmatpush.msra.mxu0 %v4356
        %4373 = vmatpush.msra.mxu0 %v4347
        %4374 = vmatmul.f32.gmra.mxu0 %v4350
        %v4375 = vpop.f32.mrf.mxu0
        %v4376 = vadd.f32 0.0, %v4375
        %4377 = vmatmul.f32.gmra.mxu0 %v4353
        %v4378 = vpop.f32.mrf.mxu0
        %v4379 = vadd.f32 0.0, %v4378
        %4380 = vdwg.mxu0
        %4383 = vrot.lane.b32.xlu0 %v4376, 10
        %v4384 = vpop.permute.xlu0 %4383
        %4385 = vrot.lane.b32.xlu0 %v4379, 10
        %v4386 = vpop.permute.xlu0 %4385
        %vm4389 = vcmask 121936
        %4390 = vst.msk [vmem:[#allocation3] sm:$0xff] %vm4389, %v4384
        %4391 = vst.msk [vmem:[#allocation3 + $0x8] sm:$0xff] %vm4389, %v4386
        %v4392 = vld [vmem:[#allocation2] sm:$0x3f]
        %v4393 = vld [vmem:[#allocation2 + $0x8] sm:$0x3f]
        %v4395 = vrot.slane %v4392, 2
        %4396 = vrot.lane.b32.xlu0 %v4395, 127
        %v4397 = vpop.permute.xlu0 %4396
        %v4399 = vrot.slane %v4392, 4
        %4400 = vrot.lane.b32.xlu0 %v4399, 126
        %v4401 = vpop.permute.xlu0 %4400
        %v4403 = vrot.slane %v4392, 6
        %4404 = vrot.lane.b32.xlu0 %v4403, 125
        %v4405 = vpop.permute.xlu0 %4404
        %4407 = vrot.lane.b32.xlu0 %v4392, 124
        %v4408 = vpop.permute.xlu0 %4407
        %4410 = vrot.lane.b32.xlu0 %v4395, 114
        %v4411 = vpop.permute.xlu0 %4410
        %4413 = vrot.lane.b32.xlu0 %v4399, 113
        %v4414 = vpop.permute.xlu0 %4413
        %4416 = vrot.lane.b32.xlu0 %v4403, 112
        %v4417 = vpop.permute.xlu0 %4416
        %4419 = vrot.lane.b32.xlu0 %v4392, 111
        %v4420 = vpop.permute.xlu0 %4419
        %4422 = vrot.lane.b32.xlu0 %v4395, 110
        %v4423 = vpop.permute.xlu0 %4422
        %4425 = vrot.lane.b32.xlu0 %v4399, 100
        %v4426 = vpop.permute.xlu0 %4425
        %4428 = vrot.lane.b32.xlu0 %v4403, 99
        %v4429 = vpop.permute.xlu0 %4428
        %4431 = vrot.lane.b32.xlu0 %v4392, 98
        %v4432 = vpop.permute.xlu0 %4431
        %4434 = vrot.lane.b32.xlu0 %v4395, 97
        %v4435 = vpop.permute.xlu0 %4434
        %4437 = vrot.lane.b32.xlu0 %v4399, 96
        %v4438 = vpop.permute.xlu0 %4437
        %v4441 = vrot.slane %v4393, 6
        %4442 = vrot.lane.b32.xlu0 %v4403, 86
        %v4443 = vpop.permute.xlu0 %4442
        %4444 = vrot.lane.b32.xlu0 %v4441, 86
        %v4445 = vpop.permute.xlu0 %4444
        %vm4446 = vcmask 703488
        %v4447 = vsel %vm4446, %v4443, %v4445
        %v4449 = vsel %vm3114, %v4392, %v4397
        %v4450 = vsel %vm831, %v4397, %v4401
        %v4451 = vsel %vm3117, %v4401, %v4405
        %v4452 = vsel %vm3114, %v4408, %v4411
        %v4453 = vsel %vm831, %v4411, %v4414
        %v4454 = vsel %vm3117, %v4414, %v4417
        %v4455 = vsel %vm3114, %v4420, %v4423
        %v4456 = vsel %vm831, %v4423, %v4426
        %v4457 = vsel %vm3117, %v4426, %v4429
        %v4458 = vsel %vm3114, %v4432, %v4435
        %v4459 = vsel %vm831, %v4435, %v4438
        %v4460 = vsel %vm3117, %v4438, %v4447
        %v4461 = vrot.slane %v4393, 2
        %4462 = vrot.lane.b32.xlu0 %v4461, 127
        %v4463 = vpop.permute.xlu0 %4462
        %v4465 = vrot.slane %v4393, 4
        %4466 = vrot.lane.b32.xlu0 %v4465, 126
        %v4467 = vpop.permute.xlu0 %4466
        %4469 = vrot.lane.b32.xlu0 %v4441, 125
        %v4470 = vpop.permute.xlu0 %4469
        %4472 = vrot.lane.b32.xlu0 %v4393, 115
        %v4473 = vpop.permute.xlu0 %4472
        %4475 = vrot.lane.b32.xlu0 %v4461, 114
        %v4476 = vpop.permute.xlu0 %4475
        %4478 = vrot.lane.b32.xlu0 %v4465, 113
        %v4479 = vpop.permute.xlu0 %4478
        %4481 = vrot.lane.b32.xlu0 %v4441, 112
        %v4482 = vpop.permute.xlu0 %4481
        %4484 = vrot.lane.b32.xlu0 %v4393, 111
        %v4485 = vpop.permute.xlu0 %4484
        %v4486 = vsel %vm3114, %v4392, %v4463
        %v4487 = vsel %vm3114, %v4393, %v4463
        %v4488 = vsel %vm831, %v4463, %v4467
        %v4489 = vsel %vm3117, %v4467, %v4470
        %v4490 = vsel %vm3114, %v4473, %v4476
        %v4491 = vsel %vm831, %v4476, %v4479
        %v4492 = vsel %vm3117, %v4479, %v4482
        %4500 = vrot.lane.b32.xlu0 %v4486, 85
        %v4501 = vpop.permute.xlu0 %4500
        %4502 = vrot.lane.b32.xlu0 %v4487, 85
        %v4503 = vpop.permute.xlu0 %4502
        %4504 = vrot.lane.b32.xlu0 %v4488, 85
        %v4505 = vpop.permute.xlu0 %4504
        %4506 = vrot.lane.b32.xlu0 %v4489, 85
        %v4507 = vpop.permute.xlu0 %4506
        %4508 = vrot.lane.b32.xlu0 %v4490, 85
        %v4509 = vpop.permute.xlu0 %4508
        %4510 = vrot.lane.b32.xlu0 %v4491, 85
        %v4511 = vpop.permute.xlu0 %4510
        %4512 = vrot.lane.b32.xlu0 %v4492, 85
        %v4513 = vpop.permute.xlu0 %4512
        %4514 = vrot.lane.b32.xlu0 %v4485, 85
        %v4515 = vpop.permute.xlu0 %4514
        %vm4516 = vcmask 695296
        %v4517 = vsel %vm4516, %v4501, %v4503
        %v4518 = vld [vmem:[%s5] sm:$0xff]
        %v4519 = vld [vmem:[%s5 + $0x8] sm:$0xff]
        %v4520 = vld [vmem:[%s5 + $0x10] sm:$0xff]
        %v4521 = vld [vmem:[%s5 + $0x18] sm:$0xff]
        %v4522 = vld [vmem:[%s6] sm:$0xff]
        %v4523 = vld [vmem:[%s6 + $0x8] sm:$0xff]
        %4525 = vset.pattern.permute.xlu0 0
        %4526 = vperm.xlu0 %4525, %v4522
        %v4527 = vpop.permute.xlu0 %4526
        %4530 = vset.pattern.permute.xlu0 0
        %4531 = vperm.xlu0 %4530, %v4523
        %v4532 = vpop.permute.xlu0 %4531
        %4546 = vrot.lane.b32.xlu0 %v4449, 44
        %v4547 = vpop.permute.xlu0 %4546
        %4548 = vrot.lane.b32.xlu0 %v4450, 44
        %v4549 = vpop.permute.xlu0 %4548
        %4550 = vrot.lane.b32.xlu0 %v4451, 44
        %v4551 = vpop.permute.xlu0 %4550
        %4552 = vrot.lane.b32.xlu0 %v4452, 44
        %v4553 = vpop.permute.xlu0 %4552
        %4554 = vrot.lane.b32.xlu0 %v4453, 44
        %v4555 = vpop.permute.xlu0 %4554
        %4556 = vrot.lane.b32.xlu0 %v4454, 44
        %v4557 = vpop.permute.xlu0 %4556
        %4558 = vrot.lane.b32.xlu0 %v4455, 44
        %v4559 = vpop.permute.xlu0 %4558
        %4560 = vrot.lane.b32.xlu0 %v4456, 44
        %v4561 = vpop.permute.xlu0 %4560
        %4562 = vrot.lane.b32.xlu0 %v4457, 44
        %v4563 = vpop.permute.xlu0 %4562
        %4564 = vrot.lane.b32.xlu0 %v4458, 44
        %v4565 = vpop.permute.xlu0 %4564
        %4566 = vrot.lane.b32.xlu0 %v4459, 44
        %v4567 = vpop.permute.xlu0 %4566
        %4568 = vrot.lane.b32.xlu0 %v4460, 44
        %v4569 = vpop.permute.xlu0 %4568
        %4570 = vrot.lane.b32.xlu0 %v4517, 44
        %v4571 = vpop.permute.xlu0 %4570
        %4572 = vrot.lane.b32.xlu0 %v4505, 44
        %v4573 = vpop.permute.xlu0 %4572
        %4574 = vrot.lane.b32.xlu0 %v4507, 44
        %v4575 = vpop.permute.xlu0 %4574
        %4576 = vrot.lane.b32.xlu0 %v4509, 44
        %v4577 = vpop.permute.xlu0 %4576
        %4578 = vrot.lane.b32.xlu0 %v4511, 44
        %v4579 = vpop.permute.xlu0 %4578
        %4580 = vrot.lane.b32.xlu0 %v4513, 44
        %v4581 = vpop.permute.xlu0 %4580
        %4582 = vrot.lane.b32.xlu0 %v4515, 44
        %v4583 = vpop.permute.xlu0 %4582
        %v4603 = vsel %vm3174, %v4519, 0
        %v4606 = vsel %vm3174, %v4521, 0
        %v4608 = vsel %vm3114, %v4583, 0
        %4610 = vmatpush.msra.mxu0 %v4577
        %4611 = vmatpush.msra.mxu0 %v4575
        %4612 = vmatpush.msra.mxu0 %v4573
        %4613 = vmatpush.msra.mxu0 %v4571
        %4614 = vmatpush.msra.mxu0 %v4569
        %4615 = vmatpush.msra.mxu0 %v4567
        %4616 = vmatpush.msra.mxu0 %v4565
        %4617 = vmatpush.msra.mxu0 %v4563
        %4618 = vmatpush.msra.mxu0 %v4561
        %4619 = vmatpush.msra.mxu0 %v4559
        %4620 = vmatpush.msra.mxu0 %v4557
        %4621 = vmatpush.msra.mxu0 %v4555
        %4622 = vmatpush.msra.mxu0 %v4553
        %4623 = vmatpush.msra.mxu0 %v4551
        %4624 = vmatpush.msra.mxu0 %v4549
        %4625 = vmatpush.msra.mxu0 %v4547
        %4626 = vmatmul.f32.gmra.mxu0 %v4518
        %v4627 = vpop.f32.mrf.mxu0
        %v4628 = vadd.f32 %v4527, %v4627
        %4629 = vmatmul.f32.gmra.mxu0 %v4520
        %v4630 = vpop.f32.mrf.mxu0
        %v4631 = vadd.f32 %v4532, %v4630
        %4632 = vdwg.mxu0
        %4633 = vmatpush.msra.mxu0 0.0
        %4634 = vmatpush.msra.mxu0 0.0
        %4635 = vmatpush.msra.mxu0 0.0
        %4636 = vmatpush.msra.mxu0 0.0
        %4637 = vmatpush.msra.mxu0 0.0
        %4638 = vmatpush.msra.mxu0 0.0
        %4639 = vmatpush.msra.mxu0 0.0
        %4640 = vmatpush.msra.mxu0 0.0
        %4641 = vmatpush.msra.mxu0 0.0
        %4642 = vmatpush.msra.mxu0 0.0
        %4643 = vmatpush.msra.mxu0 0.0
        %4644 = vmatpush.msra.mxu0 0.0
        %4645 = vmatpush.msra.mxu0 0.0
        %4646 = vmatpush.msra.mxu0 %v4608
        %4647 = vmatpush.msra.mxu0 %v4581
        %4648 = vmatpush.msra.mxu0 %v4579
        %4649 = vmatmul.f32.gmra.mxu0 %v4603
        %v4650 = vpop.f32.mrf.mxu0
        %v4651 = vadd.f32 %v4628, %v4650
        %4652 = vmatmul.f32.gmra.mxu0 %v4606
        %v4653 = vpop.f32.mrf.mxu0
        %v4654 = vadd.f32 %v4631, %v4653
        %4655 = vdwg.mxu0
        %v4656 = vxor.u32 %v4651, 2147483648
        %v4657 = vxor.u32 %v4654, 2147483648
        %v4658 = vmul.f32 %v4656, 1.442695
        %v4659 = vpow.pop %v4658
        %v4660 = vmul.f32 %v4657, 1.442695
        %v4661 = vpow.pop %v4660
        %v4662 = vadd.f32 %v4659, 1.0
        %v4663 = vadd.f32 %v4661, 1.0
        %v4664 = vrcp.pop %v4662
        %v4665 = vmul.f32 %v4662, %v4664
        %v4666 = vsub.f32 1.0, %v4665
        %v4667 = vmul.f32 %v4664, %v4666
        %v4668 = vadd.f32 %v4664, %v4667
        %vm4669 = vweird.f32 %v4662
        %vm4670 = vweird.f32 %v4664
        %vm4671 = vmor %vm4669, %vm4670
        %v4672 = vsel %vm4671, %v4664, %v4668
        %v4673 = vand.u32 2147483647, %v4662
        %vm4674 = vcmp.eq.f32.partialorder %v4673, 8.507059e+37
        %v4675 = vand.u32 %v4662, 2147483648
        %v4676 = vor.u32 1.1754944e-38, %v4675
        %v4677 = vsel %vm4674, %v4676, %v4672
        %v4678 = vmul.f32 1.0, %v4677
        %v4679 = vrcp.pop %v4663
        %v4680 = vmul.f32 %v4663, %v4679
        %v4681 = vsub.f32 1.0, %v4680
        %v4682 = vmul.f32 %v4679, %v4681
        %v4683 = vadd.f32 %v4679, %v4682
        %vm4684 = vweird.f32 %v4663
        %vm4685 = vweird.f32 %v4679
        %vm4686 = vmor %vm4684, %vm4685
        %v4687 = vsel %vm4686, %v4679, %v4683
        %v4688 = vand.u32 2147483647, %v4663
        %vm4689 = vcmp.eq.f32.partialorder %v4688, 8.507059e+37
        %v4690 = vand.u32 %v4663, 2147483648
        %v4691 = vor.u32 1.1754944e-38, %v4690
        %v4692 = vsel %vm4689, %v4691, %v4687
        %v4693 = vmul.f32 1.0, %v4692
        %4694 = vrot.lane.b32.xlu0 %v4465, 100
        %v4695 = vpop.permute.xlu0 %4694
        %vm4696 = vcmask 818176
        %v4697 = vsel %vm4696, %v4426, %v4695
        %4699 = vrot.lane.b32.xlu0 %v4441, 99
        %v4700 = vpop.permute.xlu0 %4699
        %vm4701 = vcmask 809984
        %v4702 = vsel %vm4701, %v4429, %v4700
        %4704 = vrot.lane.b32.xlu0 %v4393, 98
        %v4705 = vpop.permute.xlu0 %4704
        %4707 = vrot.lane.b32.xlu0 %v4461, 97
        %v4708 = vpop.permute.xlu0 %4707
        %4710 = vrot.lane.b32.xlu0 %v4465, 96
        %v4711 = vpop.permute.xlu0 %4710
        %v4714 = vsel %vm831, %v4423, %v4697
        %v4715 = vsel %vm3117, %v4697, %v4702
        %v4716 = vsel %vm3114, %v4705, %v4708
        %v4717 = vsel %vm831, %v4708, %v4711
        %v4718 = vsel %vm3117, %v4711, %v4445
        %4724 = vrot.lane.b32.xlu0 %v4449, 30
        %v4725 = vpop.permute.xlu0 %4724
        %4726 = vrot.lane.b32.xlu0 %v4450, 30
        %v4727 = vpop.permute.xlu0 %4726
        %4728 = vrot.lane.b32.xlu0 %v4451, 30
        %v4729 = vpop.permute.xlu0 %4728
        %4730 = vrot.lane.b32.xlu0 %v4452, 30
        %v4731 = vpop.permute.xlu0 %4730
        %4732 = vrot.lane.b32.xlu0 %v4453, 30
        %v4733 = vpop.permute.xlu0 %4732
        %4734 = vrot.lane.b32.xlu0 %v4454, 30
        %v4735 = vpop.permute.xlu0 %4734
        %4736 = vrot.lane.b32.xlu0 %v4455, 30
        %v4737 = vpop.permute.xlu0 %4736
        %4738 = vrot.lane.b32.xlu0 %v4714, 30
        %v4739 = vpop.permute.xlu0 %4738
        %4740 = vrot.lane.b32.xlu0 %v4715, 30
        %v4741 = vpop.permute.xlu0 %4740
        %4742 = vrot.lane.b32.xlu0 %v4716, 30
        %v4743 = vpop.permute.xlu0 %4742
        %4744 = vrot.lane.b32.xlu0 %v4717, 30
        %v4745 = vpop.permute.xlu0 %4744
        %4746 = vrot.lane.b32.xlu0 %v4718, 30
        %v4747 = vpop.permute.xlu0 %4746
        %4748 = vrot.lane.b32.xlu0 %v4503, 30
        %v4749 = vpop.permute.xlu0 %4748
        %4750 = vrot.lane.b32.xlu0 %v4505, 30
        %v4751 = vpop.permute.xlu0 %4750
        %4752 = vrot.lane.b32.xlu0 %v4507, 30
        %v4753 = vpop.permute.xlu0 %4752
        %4754 = vrot.lane.b32.xlu0 %v4509, 30
        %v4755 = vpop.permute.xlu0 %4754
        %4756 = vrot.lane.b32.xlu0 %v4511, 30
        %v4757 = vpop.permute.xlu0 %4756
        %4758 = vrot.lane.b32.xlu0 %v4513, 30
        %v4759 = vpop.permute.xlu0 %4758
        %4760 = vrot.lane.b32.xlu0 %v4515, 30
        %v4761 = vpop.permute.xlu0 %4760
        %v4780 = vsel %vm3114, %v4761, 0
        %4782 = vmatpush.msra.mxu0 %v4755
        %4783 = vmatpush.msra.mxu0 %v4753
        %4784 = vmatpush.msra.mxu0 %v4751
        %4785 = vmatpush.msra.mxu0 %v4749
        %4786 = vmatpush.msra.mxu0 %v4747
        %4787 = vmatpush.msra.mxu0 %v4745
        %4788 = vmatpush.msra.mxu0 %v4743
        %4789 = vmatpush.msra.mxu0 %v4741
        %4790 = vmatpush.msra.mxu0 %v4739
        %4791 = vmatpush.msra.mxu0 %v4737
        %4792 = vmatpush.msra.mxu0 %v4735
        %4793 = vmatpush.msra.mxu0 %v4733
        %4794 = vmatpush.msra.mxu0 %v4731
        %4795 = vmatpush.msra.mxu0 %v4729
        %4796 = vmatpush.msra.mxu0 %v4727
        %4797 = vmatpush.msra.mxu0 %v4725
        %4798 = vmatmul.f32.gmra.mxu0 %v4518
        %v4799 = vpop.f32.mrf.mxu0
        %v4800 = vadd.f32 %v4527, %v4799
        %4801 = vmatmul.f32.gmra.mxu0 %v4520
        %v4802 = vpop.f32.mrf.mxu0
        %v4803 = vadd.f32 %v4532, %v4802
        %4804 = vdwg.mxu0
        %4805 = vmatpush.msra.mxu0 0.0
        %4806 = vmatpush.msra.mxu0 0.0
        %4807 = vmatpush.msra.mxu0 0.0
        %4808 = vmatpush.msra.mxu0 0.0
        %4809 = vmatpush.msra.mxu0 0.0
        %4810 = vmatpush.msra.mxu0 0.0
        %4811 = vmatpush.msra.mxu0 0.0
        %4812 = vmatpush.msra.mxu0 0.0
        %4813 = vmatpush.msra.mxu0 0.0
        %4814 = vmatpush.msra.mxu0 0.0
        %4815 = vmatpush.msra.mxu0 0.0
        %4816 = vmatpush.msra.mxu0 0.0
        %4817 = vmatpush.msra.mxu0 0.0
        %4818 = vmatpush.msra.mxu0 %v4780
        %4819 = vmatpush.msra.mxu0 %v4759
        %4820 = vmatpush.msra.mxu0 %v4757
        %4821 = vmatmul.f32.gmra.mxu0 %v4603
        %v4822 = vpop.f32.mrf.mxu0
        %v4823 = vadd.f32 %v4800, %v4822
        %4824 = vmatmul.f32.gmra.mxu0 %v4606
        %v4825 = vpop.f32.mrf.mxu0
        %v4826 = vadd.f32 %v4803, %v4825
        %4827 = vdwg.mxu0
        %v4828 = vxor.u32 %v4823, 2147483648
        %v4829 = vxor.u32 %v4826, 2147483648
        %v4830 = vmul.f32 %v4828, 1.442695
        %v4831 = vpow.pop %v4830
        %v4832 = vmul.f32 %v4829, 1.442695
        %v4833 = vpow.pop %v4832
        %v4834 = vadd.f32 %v4831, 1.0
        %v4835 = vadd.f32 %v4833, 1.0
        %v4836 = vrcp.pop %v4834
        %v4837 = vmul.f32 %v4834, %v4836
        %v4838 = vsub.f32 1.0, %v4837
        %v4839 = vmul.f32 %v4836, %v4838
        %v4840 = vadd.f32 %v4836, %v4839
        %vm4841 = vweird.f32 %v4834
        %vm4842 = vweird.f32 %v4836
        %vm4843 = vmor %vm4841, %vm4842
        %v4844 = vsel %vm4843, %v4836, %v4840
        %v4845 = vand.u32 2147483647, %v4834
        %vm4846 = vcmp.eq.f32.partialorder %v4845, 8.507059e+37
        %v4847 = vand.u32 %v4834, 2147483648
        %v4848 = vor.u32 1.1754944e-38, %v4847
        %v4849 = vsel %vm4846, %v4848, %v4844
        %v4850 = vmul.f32 1.0, %v4849
        %v4851 = vrcp.pop %v4835
        %v4852 = vmul.f32 %v4835, %v4851
        %v4853 = vsub.f32 1.0, %v4852
        %v4854 = vmul.f32 %v4851, %v4853
        %v4855 = vadd.f32 %v4851, %v4854
        %vm4856 = vweird.f32 %v4835
        %vm4857 = vweird.f32 %v4851
        %vm4858 = vmor %vm4856, %vm4857
        %v4859 = vsel %vm4858, %v4851, %v4855
        %v4860 = vand.u32 2147483647, %v4835
        %vm4861 = vcmp.eq.f32.partialorder %v4860, 8.507059e+37
        %v4862 = vand.u32 %v4835, 2147483648
        %v4863 = vor.u32 1.1754944e-38, %v4862
        %v4864 = vsel %vm4861, %v4863, %v4859
        %v4865 = vmul.f32 1.0, %v4864
        %v4866 = vadd.f32 %v4678, %v4850
        %v4867 = vadd.f32 %v4693, %v4865
        %v4868 = vld [vmem:[%s7] sm:$0xff]
        %v4869 = vld [vmem:[%s7 + $0x8] sm:$0x3]
        %v4871 = vsel %vm3420, %v4866, 0
        %v4874 = vsel %vm3420, %v4867, 0
        %v4877 = vsel %vm3117, %v4869, 0
        %4879 = vmatpush.msra.mxu0 0.0
        %4880 = vmatpush.msra.mxu0 0.0
        %4881 = vmatpush.msra.mxu0 0.0
        %4882 = vmatpush.msra.mxu0 0.0
        %4883 = vmatpush.msra.mxu0 0.0
        %4884 = vmatpush.msra.mxu0 0.0
        %4885 = vmatpush.msra.mxu0 0.0
        %4886 = vmatpush.msra.mxu0 0.0
        %4887 = vmatpush.msra.mxu0 0.0
        %4888 = vmatpush.msra.mxu0 0.0
        %4889 = vmatpush.msra.mxu0 0.0
        %4890 = vmatpush.msra.mxu0 0.0
        %4891 = vmatpush.msra.mxu0 0.0
        %4892 = vmatpush.msra.mxu0 0.0
        %4893 = vmatpush.msra.mxu0 %v4877
        %4894 = vmatpush.msra.mxu0 %v4868
        %4895 = vmatmul.f32.gmra.mxu0 %v4871
        %v4896 = vpop.f32.mrf.mxu0
        %v4897 = vadd.f32 0.0, %v4896
        %4898 = vmatmul.f32.gmra.mxu0 %v4874
        %v4899 = vpop.f32.mrf.mxu0
        %v4900 = vadd.f32 0.0, %v4899
        %4901 = vdwg.mxu0
        %4904 = vrot.lane.b32.xlu0 %v4897, 15
        %v4905 = vpop.permute.xlu0 %4904
        %4906 = vrot.lane.b32.xlu0 %v4900, 15
        %v4907 = vpop.permute.xlu0 %4906
        %vm4910 = vcmask 162936
        %4911 = vst.msk [vmem:[#allocation3] sm:$0xff] %vm4910, %v4905
        %4912 = vst.msk [vmem:[#allocation3 + $0x8] sm:$0xff] %vm4910, %v4907
        %v4913 = vld [vmem:[#allocation2] sm:$0x3f]
        %v4914 = vld [vmem:[#allocation2 + $0x8] sm:$0x3f]
        %v4916 = vrot.slane %v4913, 2
        %4917 = vrot.lane.b32.xlu0 %v4916, 127
        %v4918 = vpop.permute.xlu0 %4917
        %v4920 = vrot.slane %v4913, 4
        %4921 = vrot.lane.b32.xlu0 %v4920, 126
        %v4922 = vpop.permute.xlu0 %4921
        %v4924 = vrot.slane %v4913, 6
        %4925 = vrot.lane.b32.xlu0 %v4924, 125
        %v4926 = vpop.permute.xlu0 %4925
        %4928 = vrot.lane.b32.xlu0 %v4913, 124
        %v4929 = vpop.permute.xlu0 %4928
        %v4932 = vrot.slane %v4914, 2
        %4933 = vrot.lane.b32.xlu0 %v4916, 114
        %v4934 = vpop.permute.xlu0 %4933
        %4935 = vrot.lane.b32.xlu0 %v4932, 114
        %v4936 = vpop.permute.xlu0 %4935
        %v4937 = vsel %vm4176, %v4934, %v4936
        %v4939 = vrot.slane %v4914, 4
        %4940 = vrot.lane.b32.xlu0 %v4920, 113
        %v4941 = vpop.permute.xlu0 %4940
        %4942 = vrot.lane.b32.xlu0 %v4939, 113
        %v4943 = vpop.permute.xlu0 %4942
        %vm4944 = vcmask 924672
        %v4945 = vsel %vm4944, %v4941, %v4943
        %v4947 = vrot.slane %v4914, 6
        %4948 = vrot.lane.b32.xlu0 %v4947, 112
        %v4949 = vpop.permute.xlu0 %4948
        %4951 = vrot.lane.b32.xlu0 %v4914, 111
        %v4952 = vpop.permute.xlu0 %4951
        %4954 = vrot.lane.b32.xlu0 %v4932, 110
        %v4955 = vpop.permute.xlu0 %4954
        %4957 = vrot.lane.b32.xlu0 %v4939, 100
        %v4958 = vpop.permute.xlu0 %4957
        %4960 = vrot.lane.b32.xlu0 %v4947, 99
        %v4961 = vpop.permute.xlu0 %4960
        %4963 = vrot.lane.b32.xlu0 %v4914, 98
        %v4964 = vpop.permute.xlu0 %4963
        %4966 = vrot.lane.b32.xlu0 %v4932, 97
        %v4967 = vpop.permute.xlu0 %4966
        %4969 = vrot.lane.b32.xlu0 %v4939, 96
        %v4970 = vpop.permute.xlu0 %4969
        %4972 = vrot.lane.b32.xlu0 %v4947, 86
        %v4973 = vpop.permute.xlu0 %4972
        %v4975 = vsel %vm3114, %v4913, %v4918
        %v4976 = vsel %vm831, %v4918, %v4922
        %v4977 = vsel %vm3117, %v4922, %v4926
        %v4978 = vsel %vm3114, %v4929, %v4937
        %v4979 = vsel %vm831, %v4937, %v4945
        %v4980 = vsel %vm3117, %v4945, %v4949
        %v4981 = vsel %vm3114, %v4952, %v4955
        %v4982 = vsel %vm831, %v4955, %v4958
        %v4983 = vsel %vm3117, %v4958, %v4961
        %v4984 = vsel %vm3114, %v4964, %v4967
        %v4985 = vsel %vm831, %v4967, %v4970
        %v4986 = vsel %vm3117, %v4970, %v4973
        %4987 = vrot.lane.b32.xlu0 %v4932, 127
        %v4988 = vpop.permute.xlu0 %4987
        %4990 = vrot.lane.b32.xlu0 %v4939, 126
        %v4991 = vpop.permute.xlu0 %4990
        %4993 = vrot.lane.b32.xlu0 %v4947, 125
        %v4994 = vpop.permute.xlu0 %4993
        %4996 = vrot.lane.b32.xlu0 %v4914, 115
        %v4997 = vpop.permute.xlu0 %4996
        %v5001 = vsel %vm3114, %v4914, %v4988
        %v5002 = vsel %vm831, %v4988, %v4991
        %v5003 = vsel %vm3117, %v4991, %v4994
        %v5004 = vsel %vm3114, %v4997, %v4936
        %v5005 = vsel %vm831, %v4936, %v4943
        %v5006 = vsel %vm3117, %v4943, %v4949
        %5013 = vrot.lane.b32.xlu0 %v5001, 85
        %v5014 = vpop.permute.xlu0 %5013
        %5015 = vrot.lane.b32.xlu0 %v5002, 85
        %v5016 = vpop.permute.xlu0 %5015
        %5017 = vrot.lane.b32.xlu0 %v5003, 85
        %v5018 = vpop.permute.xlu0 %5017
        %5019 = vrot.lane.b32.xlu0 %v5004, 85
        %v5020 = vpop.permute.xlu0 %5019
        %5021 = vrot.lane.b32.xlu0 %v5005, 85
        %v5022 = vpop.permute.xlu0 %5021
        %5023 = vrot.lane.b32.xlu0 %v5006, 85
        %v5024 = vpop.permute.xlu0 %5023
        %5025 = vrot.lane.b32.xlu0 %v4952, 85
        %v5026 = vpop.permute.xlu0 %5025
        %v5027 = vld [vmem:[%s5] sm:$0xff]
        %v5028 = vld [vmem:[%s5 + $0x8] sm:$0xff]
        %v5029 = vld [vmem:[%s5 + $0x10] sm:$0xff]
        %v5030 = vld [vmem:[%s5 + $0x18] sm:$0xff]
        %v5031 = vld [vmem:[%s6] sm:$0xff]
        %v5032 = vld [vmem:[%s6 + $0x8] sm:$0xff]
        %5034 = vset.pattern.permute.xlu0 0
        %5035 = vperm.xlu0 %5034, %v5031
        %v5036 = vpop.permute.xlu0 %5035
        %5039 = vset.pattern.permute.xlu0 0
        %5040 = vperm.xlu0 %5039, %v5032
        %v5041 = vpop.permute.xlu0 %5040
        %5055 = vrot.lane.b32.xlu0 %v4975, 16
        %v5056 = vpop.permute.xlu0 %5055
        %5057 = vrot.lane.b32.xlu0 %v4976, 16
        %v5058 = vpop.permute.xlu0 %5057
        %5059 = vrot.lane.b32.xlu0 %v4977, 16
        %v5060 = vpop.permute.xlu0 %5059
        %5061 = vrot.lane.b32.xlu0 %v4978, 16
        %v5062 = vpop.permute.xlu0 %5061
        %5063 = vrot.lane.b32.xlu0 %v4979, 16
        %v5064 = vpop.permute.xlu0 %5063
        %5065 = vrot.lane.b32.xlu0 %v4980, 16
        %v5066 = vpop.permute.xlu0 %5065
        %5067 = vrot.lane.b32.xlu0 %v4981, 16
        %v5068 = vpop.permute.xlu0 %5067
        %5069 = vrot.lane.b32.xlu0 %v4982, 16
        %v5070 = vpop.permute.xlu0 %5069
        %5071 = vrot.lane.b32.xlu0 %v4983, 16
        %v5072 = vpop.permute.xlu0 %5071
        %5073 = vrot.lane.b32.xlu0 %v4984, 16
        %v5074 = vpop.permute.xlu0 %5073
        %5075 = vrot.lane.b32.xlu0 %v4985, 16
        %v5076 = vpop.permute.xlu0 %5075
        %5077 = vrot.lane.b32.xlu0 %v4986, 16
        %v5078 = vpop.permute.xlu0 %5077
        %5079 = vrot.lane.b32.xlu0 %v5014, 16
        %v5080 = vpop.permute.xlu0 %5079
        %5081 = vrot.lane.b32.xlu0 %v5016, 16
        %v5082 = vpop.permute.xlu0 %5081
        %5083 = vrot.lane.b32.xlu0 %v5018, 16
        %v5084 = vpop.permute.xlu0 %5083
        %5085 = vrot.lane.b32.xlu0 %v5020, 16
        %v5086 = vpop.permute.xlu0 %5085
        %5087 = vrot.lane.b32.xlu0 %v5022, 16
        %v5088 = vpop.permute.xlu0 %5087
        %5089 = vrot.lane.b32.xlu0 %v5024, 16
        %v5090 = vpop.permute.xlu0 %5089
        %5091 = vrot.lane.b32.xlu0 %v5026, 16
        %v5092 = vpop.permute.xlu0 %5091
        %v5112 = vsel %vm3174, %v5028, 0
        %v5115 = vsel %vm3174, %v5030, 0
        %v5117 = vsel %vm3114, %v5092, 0
        %5119 = vmatpush.msra.mxu0 %v5086
        %5120 = vmatpush.msra.mxu0 %v5084
        %5121 = vmatpush.msra.mxu0 %v5082
        %5122 = vmatpush.msra.mxu0 %v5080
        %5123 = vmatpush.msra.mxu0 %v5078
        %5124 = vmatpush.msra.mxu0 %v5076
        %5125 = vmatpush.msra.mxu0 %v5074
        %5126 = vmatpush.msra.mxu0 %v5072
        %5127 = vmatpush.msra.mxu0 %v5070
        %5128 = vmatpush.msra.mxu0 %v5068
        %5129 = vmatpush.msra.mxu0 %v5066
        %5130 = vmatpush.msra.mxu0 %v5064
        %5131 = vmatpush.msra.mxu0 %v5062
        %5132 = vmatpush.msra.mxu0 %v5060
        %5133 = vmatpush.msra.mxu0 %v5058
        %5134 = vmatpush.msra.mxu0 %v5056
        %5135 = vmatmul.f32.gmra.mxu0 %v5027
        %v5136 = vpop.f32.mrf.mxu0
        %v5137 = vadd.f32 %v5036, %v5136
        %5138 = vmatmul.f32.gmra.mxu0 %v5029
        %v5139 = vpop.f32.mrf.mxu0
        %v5140 = vadd.f32 %v5041, %v5139
        %5141 = vdwg.mxu0
        %5142 = vmatpush.msra.mxu0 0.0
        %5143 = vmatpush.msra.mxu0 0.0
        %5144 = vmatpush.msra.mxu0 0.0
        %5145 = vmatpush.msra.mxu0 0.0
        %5146 = vmatpush.msra.mxu0 0.0
        %5147 = vmatpush.msra.mxu0 0.0
        %5148 = vmatpush.msra.mxu0 0.0
        %5149 = vmatpush.msra.mxu0 0.0
        %5150 = vmatpush.msra.mxu0 0.0
        %5151 = vmatpush.msra.mxu0 0.0
        %5152 = vmatpush.msra.mxu0 0.0
        %5153 = vmatpush.msra.mxu0 0.0
        %5154 = vmatpush.msra.mxu0 0.0
        %5155 = vmatpush.msra.mxu0 %v5117
        %5156 = vmatpush.msra.mxu0 %v5090
        %5157 = vmatpush.msra.mxu0 %v5088
        %5158 = vmatmul.f32.gmra.mxu0 %v5112
        %v5159 = vpop.f32.mrf.mxu0
        %v5160 = vadd.f32 %v5137, %v5159
        %5161 = vmatmul.f32.gmra.mxu0 %v5115
        %v5162 = vpop.f32.mrf.mxu0
        %v5163 = vadd.f32 %v5140, %v5162
        %5164 = vdwg.mxu0
        %v5165 = vxor.u32 %v5160, 2147483648
        %v5166 = vxor.u32 %v5163, 2147483648
        %v5167 = vmul.f32 %v5165, 1.442695
        %v5168 = vpow.pop %v5167
        %v5169 = vmul.f32 %v5166, 1.442695
        %v5170 = vpow.pop %v5169
        %v5171 = vadd.f32 %v5168, 1.0
        %v5172 = vadd.f32 %v5170, 1.0
        %v5173 = vrcp.pop %v5171
        %v5174 = vmul.f32 %v5171, %v5173
        %v5175 = vsub.f32 1.0, %v5174
        %v5176 = vmul.f32 %v5173, %v5175
        %v5177 = vadd.f32 %v5173, %v5176
        %vm5178 = vweird.f32 %v5171
        %vm5179 = vweird.f32 %v5173
        %vm5180 = vmor %vm5178, %vm5179
        %v5181 = vsel %vm5180, %v5173, %v5177
        %v5182 = vand.u32 2147483647, %v5171
        %vm5183 = vcmp.eq.f32.partialorder %v5182, 8.507059e+37
        %v5184 = vand.u32 %v5171, 2147483648
        %v5185 = vor.u32 1.1754944e-38, %v5184
        %v5186 = vsel %vm5183, %v5185, %v5181
        %v5187 = vmul.f32 1.0, %v5186
        %v5188 = vrcp.pop %v5172
        %v5189 = vmul.f32 %v5172, %v5188
        %v5190 = vsub.f32 1.0, %v5189
        %v5191 = vmul.f32 %v5188, %v5190
        %v5192 = vadd.f32 %v5188, %v5191
        %vm5193 = vweird.f32 %v5172
        %vm5194 = vweird.f32 %v5188
        %vm5195 = vmor %vm5193, %vm5194
        %v5196 = vsel %vm5195, %v5188, %v5192
        %v5197 = vand.u32 2147483647, %v5172
        %vm5198 = vcmp.eq.f32.partialorder %v5197, 8.507059e+37
        %v5199 = vand.u32 %v5172, 2147483648
        %v5200 = vor.u32 1.1754944e-38, %v5199
        %v5201 = vsel %vm5198, %v5200, %v5196
        %v5202 = vmul.f32 1.0, %v5201
        %vm5203 = vcmask 1039360
        %v5204 = vsel %vm5203, %v4918, %v4988
        %5206 = vrot.lane.b32.xlu0 %v4914, 124
        %v5207 = vpop.permute.xlu0 %5206
        %v5209 = vsel %vm3114, %v4913, %v5204
        %v5210 = vsel %vm831, %v5204, %v4991
        %v5211 = vsel %vm3114, %v5207, %v4936
        %5215 = vrot.lane.b32.xlu0 %v5209, 2
        %v5216 = vpop.permute.xlu0 %5215
        %5217 = vrot.lane.b32.xlu0 %v5001, 2
        %v5218 = vpop.permute.xlu0 %5217
        %5219 = vrot.lane.b32.xlu0 %v5210, 2
        %v5220 = vpop.permute.xlu0 %5219
        %5221 = vrot.lane.b32.xlu0 %v5002, 2
        %v5222 = vpop.permute.xlu0 %5221
        %5223 = vrot.lane.b32.xlu0 %v5003, 2
        %v5224 = vpop.permute.xlu0 %5223
        %5225 = vrot.lane.b32.xlu0 %v5211, 2
        %v5226 = vpop.permute.xlu0 %5225
        %5227 = vrot.lane.b32.xlu0 %v5005, 2
        %v5228 = vpop.permute.xlu0 %5227
        %5229 = vrot.lane.b32.xlu0 %v5006, 2
        %v5230 = vpop.permute.xlu0 %5229
        %5231 = vrot.lane.b32.xlu0 %v4981, 2
        %v5232 = vpop.permute.xlu0 %5231
        %5233 = vrot.lane.b32.xlu0 %v4982, 2
        %v5234 = vpop.permute.xlu0 %5233
        %5235 = vrot.lane.b32.xlu0 %v4983, 2
        %v5236 = vpop.permute.xlu0 %5235
        %5237 = vrot.lane.b32.xlu0 %v4984, 2
        %v5238 = vpop.permute.xlu0 %5237
        %5239 = vrot.lane.b32.xlu0 %v4985, 2
        %v5240 = vpop.permute.xlu0 %5239
        %5241 = vrot.lane.b32.xlu0 %v4986, 2
        %v5242 = vpop.permute.xlu0 %5241
        %5243 = vrot.lane.b32.xlu0 %v5014, 2
        %v5244 = vpop.permute.xlu0 %5243
        %5245 = vrot.lane.b32.xlu0 %v5016, 2
        %v5246 = vpop.permute.xlu0 %5245
        %5247 = vrot.lane.b32.xlu0 %v5018, 2
        %v5248 = vpop.permute.xlu0 %5247
        %5249 = vrot.lane.b32.xlu0 %v5020, 2
        %v5250 = vpop.permute.xlu0 %5249
        %5251 = vrot.lane.b32.xlu0 %v5022, 2
        %v5252 = vpop.permute.xlu0 %5251
        %5253 = vrot.lane.b32.xlu0 %v5024, 2
        %v5254 = vpop.permute.xlu0 %5253
        %5255 = vrot.lane.b32.xlu0 %v5026, 2
        %v5256 = vpop.permute.xlu0 %5255
        %vm5257 = vcmask 15360
        %v5258 = vsel %vm5257, %v5216, %v5218
        %v5259 = vsel %vm5257, %v5220, %v5222
        %v5278 = vsel %vm3114, %v5256, 0
        %5280 = vmatpush.msra.mxu0 %v5250
        %5281 = vmatpush.msra.mxu0 %v5248
        %5282 = vmatpush.msra.mxu0 %v5246
        %5283 = vmatpush.msra.mxu0 %v5244
        %5284 = vmatpush.msra.mxu0 %v5242
        %5285 = vmatpush.msra.mxu0 %v5240
        %5286 = vmatpush.msra.mxu0 %v5238
        %5287 = vmatpush.msra.mxu0 %v5236
        %5288 = vmatpush.msra.mxu0 %v5234
        %5289 = vmatpush.msra.mxu0 %v5232
        %5290 = vmatpush.msra.mxu0 %v5230
        %5291 = vmatpush.msra.mxu0 %v5228
        %5292 = vmatpush.msra.mxu0 %v5226
        %5293 = vmatpush.msra.mxu0 %v5224
        %5294 = vmatpush.msra.mxu0 %v5259
        %5295 = vmatpush.msra.mxu0 %v5258
        %5296 = vmatmul.f32.gmra.mxu0 %v5027
        %v5297 = vpop.f32.mrf.mxu0
        %v5298 = vadd.f32 %v5036, %v5297
        %5299 = vmatmul.f32.gmra.mxu0 %v5029
        %v5300 = vpop.f32.mrf.mxu0
        %v5301 = vadd.f32 %v5041, %v5300
        %5302 = vdwg.mxu0
        %5303 = vmatpush.msra.mxu0 0.0
        %5304 = vmatpush.msra.mxu0 0.0
        %5305 = vmatpush.msra.mxu0 0.0
        %5306 = vmatpush.msra.mxu0 0.0
        %5307 = vmatpush.msra.mxu0 0.0
        %5308 = vmatpush.msra.mxu0 0.0
        %5309 = vmatpush.msra.mxu0 0.0
        %5310 = vmatpush.msra.mxu0 0.0
        %5311 = vmatpush.msra.mxu0 0.0
        %5312 = vmatpush.msra.mxu0 0.0
        %5313 = vmatpush.msra.mxu0 0.0
        %5314 = vmatpush.msra.mxu0 0.0
        %5315 = vmatpush.msra.mxu0 0.0
        %5316 = vmatpush.msra.mxu0 %v5278
        %5317 = vmatpush.msra.mxu0 %v5254
        %5318 = vmatpush.msra.mxu0 %v5252
        %5319 = vmatmul.f32.gmra.mxu0 %v5112
        %v5320 = vpop.f32.mrf.mxu0
        %v5321 = vadd.f32 %v5298, %v5320
        %5322 = vmatmul.f32.gmra.mxu0 %v5115
        %v5323 = vpop.f32.mrf.mxu0
        %v5324 = vadd.f32 %v5301, %v5323
        %5325 = vdwg.mxu0
        %v5326 = vxor.u32 %v5321, 2147483648
        %v5327 = vxor.u32 %v5324, 2147483648
        %v5328 = vmul.f32 %v5326, 1.442695
        %v5329 = vpow.pop %v5328
        %v5330 = vmul.f32 %v5327, 1.442695
        %v5331 = vpow.pop %v5330
        %v5332 = vadd.f32 %v5329, 1.0
        %v5333 = vadd.f32 %v5331, 1.0
        %v5334 = vrcp.pop %v5332
        %v5335 = vmul.f32 %v5332, %v5334
        %v5336 = vsub.f32 1.0, %v5335
        %v5337 = vmul.f32 %v5334, %v5336
        %v5338 = vadd.f32 %v5334, %v5337
        %vm5339 = vweird.f32 %v5332
        %vm5340 = vweird.f32 %v5334
        %vm5341 = vmor %vm5339, %vm5340
        %v5342 = vsel %vm5341, %v5334, %v5338
        %v5343 = vand.u32 2147483647, %v5332
        %vm5344 = vcmp.eq.f32.partialorder %v5343, 8.507059e+37
        %v5345 = vand.u32 %v5332, 2147483648
        %v5346 = vor.u32 1.1754944e-38, %v5345
        %v5347 = vsel %vm5344, %v5346, %v5342
        %v5348 = vmul.f32 1.0, %v5347
        %v5349 = vrcp.pop %v5333
        %v5350 = vmul.f32 %v5333, %v5349
        %v5351 = vsub.f32 1.0, %v5350
        %v5352 = vmul.f32 %v5349, %v5351
        %v5353 = vadd.f32 %v5349, %v5352
        %vm5354 = vweird.f32 %v5333
        %vm5355 = vweird.f32 %v5349
        %vm5356 = vmor %vm5354, %vm5355
        %v5357 = vsel %vm5356, %v5349, %v5353
        %v5358 = vand.u32 2147483647, %v5333
        %vm5359 = vcmp.eq.f32.partialorder %v5358, 8.507059e+37
        %v5360 = vand.u32 %v5333, 2147483648
        %v5361 = vor.u32 1.1754944e-38, %v5360
        %v5362 = vsel %vm5359, %v5361, %v5357
        %v5363 = vmul.f32 1.0, %v5362
        %v5364 = vadd.f32 %v5187, %v5348
        %v5365 = vadd.f32 %v5202, %v5363
        %v5366 = vld [vmem:[%s7] sm:$0xff]
        %v5367 = vld [vmem:[%s7 + $0x8] sm:$0x3]
        %v5369 = vsel %vm3420, %v5364, 0
        %v5372 = vsel %vm3420, %v5365, 0
        %v5375 = vsel %vm3117, %v5367, 0
        %5377 = vmatpush.msra.mxu0 0.0
        %5378 = vmatpush.msra.mxu0 0.0
        %5379 = vmatpush.msra.mxu0 0.0
        %5380 = vmatpush.msra.mxu0 0.0
        %5381 = vmatpush.msra.mxu0 0.0
        %5382 = vmatpush.msra.mxu0 0.0
        %5383 = vmatpush.msra.mxu0 0.0
        %5384 = vmatpush.msra.mxu0 0.0
        %5385 = vmatpush.msra.mxu0 0.0
        %5386 = vmatpush.msra.mxu0 0.0
        %5387 = vmatpush.msra.mxu0 0.0
        %5388 = vmatpush.msra.mxu0 0.0
        %5389 = vmatpush.msra.mxu0 0.0
        %5390 = vmatpush.msra.mxu0 0.0
        %5391 = vmatpush.msra.mxu0 %v5375
        %5392 = vmatpush.msra.mxu0 %v5366
        %5393 = vmatmul.f32.gmra.mxu0 %v5369
        %v5394 = vpop.f32.mrf.mxu0
        %v5395 = vadd.f32 0.0, %v5394
        %5396 = vmatmul.f32.gmra.mxu0 %v5372
        %v5397 = vpop.f32.mrf.mxu0
        %v5398 = vadd.f32 0.0, %v5397
        %5399 = vdwg.mxu0
        %5402 = vrot.lane.b32.xlu0 %v5395, 20
        %v5403 = vpop.permute.xlu0 %5402
        %5404 = vrot.lane.b32.xlu0 %v5398, 20
        %v5405 = vpop.permute.xlu0 %5404
        %vm5408 = vcmask 203936
        %5409 = vst.msk [vmem:[#allocation3] sm:$0xff] %vm5408, %v5403
        %5410 = vst.msk [vmem:[#allocation3 + $0x8] sm:$0xff] %vm5408, %v5405
        %v5411 = vld [vmem:[%s9] sm:$0x1]
        %v5412 = vld [vmem:[#allocation3] sm:$0x1]
        %v5413 = vld [vmem:[%s8] sm:$0xff]
        %v5414 = vld [vmem:[%s8 + $0x8] sm:$0xff]
        %v5415 = vld [vmem:[%s8 + $0x10] sm:$0xff]
        %v5416 = vld [vmem:[%s8 + $0x18] sm:$0x1]
        %vm5417 = vcmask 203776
        %v5419 = vsel %vm5417, %v5412, 0
        %vm5421 = vcmask 1040384
        %v5423 = vsel %vm5421, %v5416, 0
        %5425 = vmatpush.msra.mxu0 0.0
        %5426 = vmatpush.msra.mxu0 0.0
        %5427 = vmatpush.msra.mxu0 0.0
        %5428 = vmatpush.msra.mxu0 0.0
        %5429 = vmatpush.msra.mxu0 0.0
        %5430 = vmatpush.msra.mxu0 0.0
        %5431 = vmatpush.msra.mxu0 0.0
        %5432 = vmatpush.msra.mxu0 0.0
        %5433 = vmatpush.msra.mxu0 0.0
        %5434 = vmatpush.msra.mxu0 0.0
        %5435 = vmatpush.msra.mxu0 0.0
        %5436 = vmatpush.msra.mxu0 0.0
        %5437 = vmatpush.msra.mxu0 %v5423
        %5438 = vmatpush.msra.mxu0 %v5415
        %5439 = vmatpush.msra.mxu0 %v5414
        %5440 = vmatpush.msra.mxu0 %v5413
        %5441 = vmatmul.f32.gmra.mxu0 %v5419
        %v5442 = vpop.f32.mrf.mxu0
        %v5443 = vadd.f32 0.0, %v5442
        %5444 = vdwg.mxu0
        %v5445 = vadd.f32 %v5411, %v5443
        %v5446 = vld [vmem:[#allocation3 + $0x1] sm:$0x1]
        %s5447 = scalar_lea.vmem %s8, 32
        %v5448 = vld [vmem:[%s5447] sm:$0xff]
        %v5449 = vld [vmem:[%s5447 + $0x8] sm:$0xff]
        %v5450 = vld [vmem:[%s5447 + $0x10] sm:$0xff]
        %v5451 = vld [vmem:[%s5447 + $0x18] sm:$0x1]
        %v5453 = vsel %vm5417, %v5446, 0
        %v5456 = vsel %vm5421, %v5451, 0
        %5458 = vmatpush.msra.mxu0 0.0
        %5459 = vmatpush.msra.mxu0 0.0
        %5460 = vmatpush.msra.mxu0 0.0
        %5461 = vmatpush.msra.mxu0 0.0
        %5462 = vmatpush.msra.mxu0 0.0
        %5463 = vmatpush.msra.mxu0 0.0
        %5464 = vmatpush.msra.mxu0 0.0
        %5465 = vmatpush.msra.mxu0 0.0
        %5466 = vmatpush.msra.mxu0 0.0
        %5467 = vmatpush.msra.mxu0 0.0
        %5468 = vmatpush.msra.mxu0 0.0
        %5469 = vmatpush.msra.mxu0 0.0
        %5470 = vmatpush.msra.mxu0 %v5456
        %5471 = vmatpush.msra.mxu0 %v5450
        %5472 = vmatpush.msra.mxu0 %v5449
        %5473 = vmatpush.msra.mxu0 %v5448
        %5474 = vmatmul.f32.gmra.mxu0 %v5453
        %v5475 = vpop.f32.mrf.mxu0
        %v5476 = vadd.f32 0.0, %v5475
        %5477 = vdwg.mxu0
        %v5478 = vadd.f32 %v5445, %v5476
        %v5479 = vld [vmem:[#allocation3 + $0x2] sm:$0x1]
        %s5480 = scalar_lea.vmem %s8, 64
        %v5481 = vld [vmem:[%s5480] sm:$0xff]
        %v5482 = vld [vmem:[%s5480 + $0x8] sm:$0xff]
        %v5483 = vld [vmem:[%s5480 + $0x10] sm:$0xff]
        %v5484 = vld [vmem:[%s5480 + $0x18] sm:$0x1]
        %v5486 = vsel %vm5417, %v5479, 0
        %v5489 = vsel %vm5421, %v5484, 0
        %5491 = vmatpush.msra.mxu0 0.0
        %5492 = vmatpush.msra.mxu0 0.0
        %5493 = vmatpush.msra.mxu0 0.0
        %5494 = vmatpush.msra.mxu0 0.0
        %5495 = vmatpush.msra.mxu0 0.0
        %5496 = vmatpush.msra.mxu0 0.0
        %5497 = vmatpush.msra.mxu0 0.0
        %5498 = vmatpush.msra.mxu0 0.0
        %5499 = vmatpush.msra.mxu0 0.0
        %5500 = vmatpush.msra.mxu0 0.0
        %5501 = vmatpush.msra.mxu0 0.0
        %5502 = vmatpush.msra.mxu0 0.0
        %5503 = vmatpush.msra.mxu0 %v5489
        %5504 = vmatpush.msra.mxu0 %v5483
        %5505 = vmatpush.msra.mxu0 %v5482
        %5506 = vmatpush.msra.mxu0 %v5481
        %5507 = vmatmul.f32.gmra.mxu0 %v5486
        %v5508 = vpop.f32.mrf.mxu0
        %v5509 = vadd.f32 0.0, %v5508
        %5510 = vdwg.mxu0
        %v5511 = vadd.f32 %v5478, %v5509
        %v5512 = vld [vmem:[#allocation3 + $0x3] sm:$0x1]
        %s5513 = scalar_lea.vmem %s8, 96
        %v5514 = vld [vmem:[%s5513] sm:$0xff]
        %v5515 = vld [vmem:[%s5513 + $0x8] sm:$0xff]
        %v5516 = vld [vmem:[%s5513 + $0x10] sm:$0xff]
        %v5517 = vld [vmem:[%s5513 + $0x18] sm:$0x1]
        %v5519 = vsel %vm5417, %v5512, 0
        %v5522 = vsel %vm5421, %v5517, 0
        %5524 = vmatpush.msra.mxu0 0.0
        %5525 = vmatpush.msra.mxu0 0.0
        %5526 = vmatpush.msra.mxu0 0.0
        %5527 = vmatpush.msra.mxu0 0.0
        %5528 = vmatpush.msra.mxu0 0.0
        %5529 = vmatpush.msra.mxu0 0.0
        %5530 = vmatpush.msra.mxu0 0.0
        %5531 = vmatpush.msra.mxu0 0.0
        %5532 = vmatpush.msra.mxu0 0.0
        %5533 = vmatpush.msra.mxu0 0.0
        %5534 = vmatpush.msra.mxu0 0.0
        %5535 = vmatpush.msra.mxu0 0.0
        %5536 = vmatpush.msra.mxu0 %v5522
        %5537 = vmatpush.msra.mxu0 %v5516
        %5538 = vmatpush.msra.mxu0 %v5515
        %5539 = vmatpush.msra.mxu0 %v5514
        %5540 = vmatmul.f32.gmra.mxu0 %v5519
        %v5541 = vpop.f32.mrf.mxu0
        %v5542 = vadd.f32 0.0, %v5541
        %5543 = vdwg.mxu0
        %v5544 = vadd.f32 %v5511, %v5542
        %v5545 = vld [vmem:[#allocation3 + $0x4] sm:$0x1]
        %s5546 = scalar_lea.vmem %s8, 128
        %v5547 = vld [vmem:[%s5546] sm:$0xff]
        %v5548 = vld [vmem:[%s5546 + $0x8] sm:$0xff]
        %v5549 = vld [vmem:[%s5546 + $0x10] sm:$0xff]
        %v5550 = vld [vmem:[%s5546 + $0x18] sm:$0x1]
        %v5552 = vsel %vm5417, %v5545, 0
        %v5555 = vsel %vm5421, %v5550, 0
        %5557 = vmatpush.msra.mxu0 0.0
        %5558 = vmatpush.msra.mxu0 0.0
        %5559 = vmatpush.msra.mxu0 0.0
        %5560 = vmatpush.msra.mxu0 0.0
        %5561 = vmatpush.msra.mxu0 0.0
        %5562 = vmatpush.msra.mxu0 0.0
        %5563 = vmatpush.msra.mxu0 0.0
        %5564 = vmatpush.msra.mxu0 0.0
        %5565 = vmatpush.msra.mxu0 0.0
        %5566 = vmatpush.msra.mxu0 0.0
        %5567 = vmatpush.msra.mxu0 0.0
        %5568 = vmatpush.msra.mxu0 0.0
        %5569 = vmatpush.msra.mxu0 %v5555
        %5570 = vmatpush.msra.mxu0 %v5549
        %5571 = vmatpush.msra.mxu0 %v5548
        %5572 = vmatpush.msra.mxu0 %v5547
        %5573 = vmatmul.f32.gmra.mxu0 %v5552
        %v5574 = vpop.f32.mrf.mxu0
        %v5575 = vadd.f32 0.0, %v5574
        %5576 = vdwg.mxu0
        %v5577 = vadd.f32 %v5544, %v5575
        %v5578 = vld [vmem:[#allocation3 + $0x5] sm:$0x1]
        %s5579 = scalar_lea.vmem %s8, 160
        %v5580 = vld [vmem:[%s5579] sm:$0xff]
        %v5581 = vld [vmem:[%s5579 + $0x8] sm:$0xff]
        %v5582 = vld [vmem:[%s5579 + $0x10] sm:$0xff]
        %v5583 = vld [vmem:[%s5579 + $0x18] sm:$0x1]
        %v5585 = vsel %vm5417, %v5578, 0
        %v5588 = vsel %vm5421, %v5583, 0
        %5590 = vmatpush.msra.mxu0 0.0
        %5591 = vmatpush.msra.mxu0 0.0
        %5592 = vmatpush.msra.mxu0 0.0
        %5593 = vmatpush.msra.mxu0 0.0
        %5594 = vmatpush.msra.mxu0 0.0
        %5595 = vmatpush.msra.mxu0 0.0
        %5596 = vmatpush.msra.mxu0 0.0
        %5597 = vmatpush.msra.mxu0 0.0
        %5598 = vmatpush.msra.mxu0 0.0
        %5599 = vmatpush.msra.mxu0 0.0
        %5600 = vmatpush.msra.mxu0 0.0
        %5601 = vmatpush.msra.mxu0 0.0
        %5602 = vmatpush.msra.mxu0 %v5588
        %5603 = vmatpush.msra.mxu0 %v5582
        %5604 = vmatpush.msra.mxu0 %v5581
        %5605 = vmatpush.msra.mxu0 %v5580
        %5606 = vmatmul.f32.gmra.mxu0 %v5585
        %v5607 = vpop.f32.mrf.mxu0
        %v5608 = vadd.f32 0.0, %v5607
        %5609 = vdwg.mxu0
        %v5610 = vadd.f32 %v5577, %v5608
        %v5611 = vld [vmem:[#allocation3 + $0x6] sm:$0x1]
        %s5612 = scalar_lea.vmem %s8, 192
        %v5613 = vld [vmem:[%s5612] sm:$0xff]
        %v5614 = vld [vmem:[%s5612 + $0x8] sm:$0xff]
        %v5615 = vld [vmem:[%s5612 + $0x10] sm:$0xff]
        %v5616 = vld [vmem:[%s5612 + $0x18] sm:$0x1]
        %v5618 = vsel %vm5417, %v5611, 0
        %v5621 = vsel %vm5421, %v5616, 0
        %5623 = vmatpush.msra.mxu0 0.0
        %5624 = vmatpush.msra.mxu0 0.0
        %5625 = vmatpush.msra.mxu0 0.0
        %5626 = vmatpush.msra.mxu0 0.0
        %5627 = vmatpush.msra.mxu0 0.0
        %5628 = vmatpush.msra.mxu0 0.0
        %5629 = vmatpush.msra.mxu0 0.0
        %5630 = vmatpush.msra.mxu0 0.0
        %5631 = vmatpush.msra.mxu0 0.0
        %5632 = vmatpush.msra.mxu0 0.0
        %5633 = vmatpush.msra.mxu0 0.0
        %5634 = vmatpush.msra.mxu0 0.0
        %5635 = vmatpush.msra.mxu0 %v5621
        %5636 = vmatpush.msra.mxu0 %v5615
        %5637 = vmatpush.msra.mxu0 %v5614
        %5638 = vmatpush.msra.mxu0 %v5613
        %5639 = vmatmul.f32.gmra.mxu0 %v5618
        %v5640 = vpop.f32.mrf.mxu0
        %v5641 = vadd.f32 0.0, %v5640
        %5642 = vdwg.mxu0
        %v5643 = vadd.f32 %v5610, %v5641
        %v5644 = vld [vmem:[#allocation3 + $0x7] sm:$0x1]
        %s5645 = scalar_lea.vmem %s8, 224
        %v5646 = vld [vmem:[%s5645] sm:$0xff]
        %v5647 = vld [vmem:[%s5645 + $0x8] sm:$0xff]
        %v5648 = vld [vmem:[%s5645 + $0x10] sm:$0xff]
        %v5649 = vld [vmem:[%s5645 + $0x18] sm:$0x1]
        %v5651 = vsel %vm5417, %v5644, 0
        %v5654 = vsel %vm5421, %v5649, 0
        %5656 = vmatpush.msra.mxu0 0.0
        %5657 = vmatpush.msra.mxu0 0.0
        %5658 = vmatpush.msra.mxu0 0.0
        %5659 = vmatpush.msra.mxu0 0.0
        %5660 = vmatpush.msra.mxu0 0.0
        %5661 = vmatpush.msra.mxu0 0.0
        %5662 = vmatpush.msra.mxu0 0.0
        %5663 = vmatpush.msra.mxu0 0.0
        %5664 = vmatpush.msra.mxu0 0.0
        %5665 = vmatpush.msra.mxu0 0.0
        %5666 = vmatpush.msra.mxu0 0.0
        %5667 = vmatpush.msra.mxu0 0.0
        %5668 = vmatpush.msra.mxu0 %v5654
        %5669 = vmatpush.msra.mxu0 %v5648
        %5670 = vmatpush.msra.mxu0 %v5647
        %5671 = vmatpush.msra.mxu0 %v5646
        %5672 = vmatmul.f32.gmra.mxu0 %v5651
        %v5673 = vpop.f32.mrf.mxu0
        %v5674 = vadd.f32 0.0, %v5673
        %5675 = vdwg.mxu0
        %v5676 = vadd.f32 %v5643, %v5674
        %v5677 = vld [vmem:[#allocation3 + $0x8] sm:$0x1]
        %s5678 = scalar_lea.vmem %s8, 256
        %v5679 = vld [vmem:[%s5678] sm:$0xff]
        %v5680 = vld [vmem:[%s5678 + $0x8] sm:$0xff]
        %v5681 = vld [vmem:[%s5678 + $0x10] sm:$0xff]
        %v5682 = vld [vmem:[%s5678 + $0x18] sm:$0x1]
        %v5684 = vsel %vm5417, %v5677, 0
        %v5687 = vsel %vm5421, %v5682, 0
        %5689 = vmatpush.msra.mxu0 0.0
        %5690 = vmatpush.msra.mxu0 0.0
        %5691 = vmatpush.msra.mxu0 0.0
        %5692 = vmatpush.msra.mxu0 0.0
        %5693 = vmatpush.msra.mxu0 0.0
        %5694 = vmatpush.msra.mxu0 0.0
        %5695 = vmatpush.msra.mxu0 0.0
        %5696 = vmatpush.msra.mxu0 0.0
        %5697 = vmatpush.msra.mxu0 0.0
        %5698 = vmatpush.msra.mxu0 0.0
        %5699 = vmatpush.msra.mxu0 0.0
        %5700 = vmatpush.msra.mxu0 0.0
        %5701 = vmatpush.msra.mxu0 %v5687
        %5702 = vmatpush.msra.mxu0 %v5681
        %5703 = vmatpush.msra.mxu0 %v5680
        %5704 = vmatpush.msra.mxu0 %v5679
        %5705 = vmatmul.f32.gmra.mxu0 %v5684
        %v5706 = vpop.f32.mrf.mxu0
        %v5707 = vadd.f32 0.0, %v5706
        %5708 = vdwg.mxu0
        %v5709 = vadd.f32 %v5676, %v5707
        %v5710 = vld [vmem:[#allocation3 + $0x9] sm:$0x1]
        %s5711 = scalar_lea.vmem %s8, 288
        %v5712 = vld [vmem:[%s5711] sm:$0xff]
        %v5713 = vld [vmem:[%s5711 + $0x8] sm:$0xff]
        %v5714 = vld [vmem:[%s5711 + $0x10] sm:$0xff]
        %v5715 = vld [vmem:[%s5711 + $0x18] sm:$0x1]
        %v5717 = vsel %vm5417, %v5710, 0
        %v5720 = vsel %vm5421, %v5715, 0
        %5722 = vmatpush.msra.mxu0 0.0
        %5723 = vmatpush.msra.mxu0 0.0
        %5724 = vmatpush.msra.mxu0 0.0
        %5725 = vmatpush.msra.mxu0 0.0
        %5726 = vmatpush.msra.mxu0 0.0
        %5727 = vmatpush.msra.mxu0 0.0
        %5728 = vmatpush.msra.mxu0 0.0
        %5729 = vmatpush.msra.mxu0 0.0
        %5730 = vmatpush.msra.mxu0 0.0
        %5731 = vmatpush.msra.mxu0 0.0
        %5732 = vmatpush.msra.mxu0 0.0
        %5733 = vmatpush.msra.mxu0 0.0
        %5734 = vmatpush.msra.mxu0 %v5720
        %5735 = vmatpush.msra.mxu0 %v5714
        %5736 = vmatpush.msra.mxu0 %v5713
        %5737 = vmatpush.msra.mxu0 %v5712
        %5738 = vmatmul.f32.gmra.mxu0 %v5717
        %v5739 = vpop.f32.mrf.mxu0
        %v5740 = vadd.f32 0.0, %v5739
        %5741 = vdwg.mxu0
        %v5742 = vadd.f32 %v5709, %v5740
        %v5743 = vld [vmem:[#allocation3 + $0xa] sm:$0x1]
        %s5744 = scalar_lea.vmem %s8, 320
        %v5745 = vld [vmem:[%s5744] sm:$0xff]
        %v5746 = vld [vmem:[%s5744 + $0x8] sm:$0xff]
        %v5747 = vld [vmem:[%s5744 + $0x10] sm:$0xff]
        %v5748 = vld [vmem:[%s5744 + $0x18] sm:$0x1]
        %v5750 = vsel %vm5417, %v5743, 0
        %v5753 = vsel %vm5421, %v5748, 0
        %5755 = vmatpush.msra.mxu0 0.0
        %5756 = vmatpush.msra.mxu0 0.0
        %5757 = vmatpush.msra.mxu0 0.0
        %5758 = vmatpush.msra.mxu0 0.0
        %5759 = vmatpush.msra.mxu0 0.0
        %5760 = vmatpush.msra.mxu0 0.0
        %5761 = vmatpush.msra.mxu0 0.0
        %5762 = vmatpush.msra.mxu0 0.0
        %5763 = vmatpush.msra.mxu0 0.0
        %5764 = vmatpush.msra.mxu0 0.0
        %5765 = vmatpush.msra.mxu0 0.0
        %5766 = vmatpush.msra.mxu0 0.0
        %5767 = vmatpush.msra.mxu0 %v5753
        %5768 = vmatpush.msra.mxu0 %v5747
        %5769 = vmatpush.msra.mxu0 %v5746
        %5770 = vmatpush.msra.mxu0 %v5745
        %5771 = vmatmul.f32.gmra.mxu0 %v5750
        %v5772 = vpop.f32.mrf.mxu0
        %v5773 = vadd.f32 0.0, %v5772
        %5774 = vdwg.mxu0
        %v5775 = vadd.f32 %v5742, %v5773
        %v5776 = vld [vmem:[#allocation3 + $0xb] sm:$0x1]
        %s5777 = scalar_lea.vmem %s8, 352
        %v5778 = vld [vmem:[%s5777] sm:$0xff]
        %v5779 = vld [vmem:[%s5777 + $0x8] sm:$0xff]
        %v5780 = vld [vmem:[%s5777 + $0x10] sm:$0xff]
        %v5781 = vld [vmem:[%s5777 + $0x18] sm:$0x1]
        %v5783 = vsel %vm5417, %v5776, 0
        %v5786 = vsel %vm5421, %v5781, 0
        %5788 = vmatpush.msra.mxu0 0.0
        %5789 = vmatpush.msra.mxu0 0.0
        %5790 = vmatpush.msra.mxu0 0.0
        %5791 = vmatpush.msra.mxu0 0.0
        %5792 = vmatpush.msra.mxu0 0.0
        %5793 = vmatpush.msra.mxu0 0.0
        %5794 = vmatpush.msra.mxu0 0.0
        %5795 = vmatpush.msra.mxu0 0.0
        %5796 = vmatpush.msra.mxu0 0.0
        %5797 = vmatpush.msra.mxu0 0.0
        %5798 = vmatpush.msra.mxu0 0.0
        %5799 = vmatpush.msra.mxu0 0.0
        %5800 = vmatpush.msra.mxu0 %v5786
        %5801 = vmatpush.msra.mxu0 %v5780
        %5802 = vmatpush.msra.mxu0 %v5779
        %5803 = vmatpush.msra.mxu0 %v5778
        %5804 = vmatmul.f32.gmra.mxu0 %v5783
        %v5805 = vpop.f32.mrf.mxu0
        %v5806 = vadd.f32 0.0, %v5805
        %5807 = vdwg.mxu0
        %v5808 = vadd.f32 %v5775, %v5806
        %v5809 = vld [vmem:[#allocation3 + $0xc] sm:$0x1]
        %s5810 = scalar_lea.vmem %s8, 384
        %v5811 = vld [vmem:[%s5810] sm:$0xff]
        %v5812 = vld [vmem:[%s5810 + $0x8] sm:$0xff]
        %v5813 = vld [vmem:[%s5810 + $0x10] sm:$0xff]
        %v5814 = vld [vmem:[%s5810 + $0x18] sm:$0x1]
        %v5816 = vsel %vm5417, %v5809, 0
        %v5819 = vsel %vm5421, %v5814, 0
        %5821 = vmatpush.msra.mxu0 0.0
        %5822 = vmatpush.msra.mxu0 0.0
        %5823 = vmatpush.msra.mxu0 0.0
        %5824 = vmatpush.msra.mxu0 0.0
        %5825 = vmatpush.msra.mxu0 0.0
        %5826 = vmatpush.msra.mxu0 0.0
        %5827 = vmatpush.msra.mxu0 0.0
        %5828 = vmatpush.msra.mxu0 0.0
        %5829 = vmatpush.msra.mxu0 0.0
        %5830 = vmatpush.msra.mxu0 0.0
        %5831 = vmatpush.msra.mxu0 0.0
        %5832 = vmatpush.msra.mxu0 0.0
        %5833 = vmatpush.msra.mxu0 %v5819
        %5834 = vmatpush.msra.mxu0 %v5813
        %5835 = vmatpush.msra.mxu0 %v5812
        %5836 = vmatpush.msra.mxu0 %v5811
        %5837 = vmatmul.f32.gmra.mxu0 %v5816
        %v5838 = vpop.f32.mrf.mxu0
        %v5839 = vadd.f32 0.0, %v5838
        %5840 = vdwg.mxu0
        %v5841 = vadd.f32 %v5808, %v5839
        %v5842 = vld [vmem:[#allocation3 + $0xd] sm:$0x1]
        %s5843 = scalar_lea.vmem %s8, 416
        %v5844 = vld [vmem:[%s5843] sm:$0xff]
        %v5845 = vld [vmem:[%s5843 + $0x8] sm:$0xff]
        %v5846 = vld [vmem:[%s5843 + $0x10] sm:$0xff]
        %v5847 = vld [vmem:[%s5843 + $0x18] sm:$0x1]
        %v5849 = vsel %vm5417, %v5842, 0
        %v5852 = vsel %vm5421, %v5847, 0
        %5854 = vmatpush.msra.mxu0 0.0
        %5855 = vmatpush.msra.mxu0 0.0
        %5856 = vmatpush.msra.mxu0 0.0
        %5857 = vmatpush.msra.mxu0 0.0
        %5858 = vmatpush.msra.mxu0 0.0
        %5859 = vmatpush.msra.mxu0 0.0
        %5860 = vmatpush.msra.mxu0 0.0
        %5861 = vmatpush.msra.mxu0 0.0
        %5862 = vmatpush.msra.mxu0 0.0
        %5863 = vmatpush.msra.mxu0 0.0
        %5864 = vmatpush.msra.mxu0 0.0
        %5865 = vmatpush.msra.mxu0 0.0
        %5866 = vmatpush.msra.mxu0 %v5852
        %5867 = vmatpush.msra.mxu0 %v5846
        %5868 = vmatpush.msra.mxu0 %v5845
        %5869 = vmatpush.msra.mxu0 %v5844
        %5870 = vmatmul.f32.gmra.mxu0 %v5849
        %v5871 = vpop.f32.mrf.mxu0
        %v5872 = vadd.f32 0.0, %v5871
        %5873 = vdwg.mxu0
        %v5874 = vadd.f32 %v5841, %v5872
        %v5875 = vld [vmem:[#allocation3 + $0xe] sm:$0x1]
        %s5876 = scalar_lea.vmem %s8, 448
        %v5877 = vld [vmem:[%s5876] sm:$0xff]
        %v5878 = vld [vmem:[%s5876 + $0x8] sm:$0xff]
        %v5879 = vld [vmem:[%s5876 + $0x10] sm:$0xff]
        %v5880 = vld [vmem:[%s5876 + $0x18] sm:$0x1]
        %v5882 = vsel %vm5417, %v5875, 0
        %v5885 = vsel %vm5421, %v5880, 0
        %5887 = vmatpush.msra.mxu0 0.0
        %5888 = vmatpush.msra.mxu0 0.0
        %5889 = vmatpush.msra.mxu0 0.0
        %5890 = vmatpush.msra.mxu0 0.0
        %5891 = vmatpush.msra.mxu0 0.0
        %5892 = vmatpush.msra.mxu0 0.0
        %5893 = vmatpush.msra.mxu0 0.0
        %5894 = vmatpush.msra.mxu0 0.0
        %5895 = vmatpush.msra.mxu0 0.0
        %5896 = vmatpush.msra.mxu0 0.0
        %5897 = vmatpush.msra.mxu0 0.0
        %5898 = vmatpush.msra.mxu0 0.0
        %5899 = vmatpush.msra.mxu0 %v5885
        %5900 = vmatpush.msra.mxu0 %v5879
        %5901 = vmatpush.msra.mxu0 %v5878
        %5902 = vmatpush.msra.mxu0 %v5877
        %5903 = vmatmul.f32.gmra.mxu0 %v5882
        %v5904 = vpop.f32.mrf.mxu0
        %v5905 = vadd.f32 0.0, %v5904
        %5906 = vdwg.mxu0
        %v5907 = vadd.f32 %v5874, %v5905
        %v5908 = vld [vmem:[#allocation3 + $0xf] sm:$0x1]
        %s5909 = scalar_lea.vmem %s8, 480
        %v5910 = vld [vmem:[%s5909] sm:$0xff]
        %v5911 = vld [vmem:[%s5909 + $0x8] sm:$0xff]
        %v5912 = vld [vmem:[%s5909 + $0x10] sm:$0xff]
        %v5913 = vld [vmem:[%s5909 + $0x18] sm:$0x1]
        %v5915 = vsel %vm5417, %v5908, 0
        %v5918 = vsel %vm5421, %v5913, 0
        %5920 = vmatpush.msra.mxu0 0.0
        %5921 = vmatpush.msra.mxu0 0.0
        %5922 = vmatpush.msra.mxu0 0.0
        %5923 = vmatpush.msra.mxu0 0.0
        %5924 = vmatpush.msra.mxu0 0.0
        %5925 = vmatpush.msra.mxu0 0.0
        %5926 = vmatpush.msra.mxu0 0.0
        %5927 = vmatpush.msra.mxu0 0.0
        %5928 = vmatpush.msra.mxu0 0.0
        %5929 = vmatpush.msra.mxu0 0.0
        %5930 = vmatpush.msra.mxu0 0.0
        %5931 = vmatpush.msra.mxu0 0.0
        %5932 = vmatpush.msra.mxu0 %v5918
        %5933 = vmatpush.msra.mxu0 %v5912
        %5934 = vmatpush.msra.mxu0 %v5911
        %5935 = vmatpush.msra.mxu0 %v5910
        %5936 = vmatmul.f32.gmra.mxu0 %v5915
        %v5937 = vpop.f32.mrf.mxu0
        %v5938 = vadd.f32 0.0, %v5937
        %5939 = vdwg.mxu0
        %v5940 = vadd.f32 %v5907, %v5938
        %v5941 = vxor.u32 %v5940, 2147483648
        %v5942 = vmul.f32 %v5941, 1.442695
        %v5943 = vpow.pop %v5942
        %v5944 = vadd.f32 %v5943, 1.0
        %v5945 = vrcp.pop %v5944
        %v5946 = vmul.f32 %v5944, %v5945
        %v5947 = vsub.f32 1.0, %v5946
        %v5948 = vmul.f32 %v5945, %v5947
        %v5949 = vadd.f32 %v5945, %v5948
        %vm5950 = vweird.f32 %v5944
        %vm5951 = vweird.f32 %v5945
        %vm5952 = vmor %vm5950, %vm5951
        %v5953 = vsel %vm5952, %v5945, %v5949
        %v5954 = vand.u32 2147483647, %v5944
        %vm5955 = vcmp.eq.f32.partialorder %v5954, 8.507059e+37
        %v5956 = vand.u32 %v5944, 2147483648
        %v5957 = vor.u32 1.1754944e-38, %v5956
        %v5958 = vsel %vm5955, %v5957, %v5953
        %v5959 = vmul.f32 1.0, %v5958
        %v5960 = vld [vmem:[%s10] sm:$0xff]
        %v5961 = vld [vmem:[%s10 + $0x8] sm:$0xff]
        %v5962 = vld [vmem:[%s10 + $0x10] sm:$0xff]
        %v5963 = vld [vmem:[%s10 + $0x18] sm:$0xff]
        %v5964 = vld [vmem:[%s10 + $0x20] sm:$0xff]
        %v5965 = vld [vmem:[%s10 + $0x28] sm:$0xff]
        %v5966 = vld [vmem:[%s10 + $0x30] sm:$0xff]
        %v5967 = vld [vmem:[%s10 + $0x38] sm:$0xff]
        %v5968 = vld [vmem:[%s10 + $0x40] sm:$0xff]
        %v5969 = vld [vmem:[%s10 + $0x48] sm:$0xff]
        %v5970 = vld [vmem:[%s10 + $0x50] sm:$0xff]
        %v5971 = vld [vmem:[%s10 + $0x58] sm:$0xff]
        %v5972 = vld [vmem:[%s10 + $0x60] sm:$0xff]
        %v5973 = vld [vmem:[%s10 + $0x68] sm:$0xff]
        %v5974 = vld [vmem:[%s10 + $0x70] sm:$0xff]
        %v5975 = vld [vmem:[%s11] sm:$0x1]
        %vm5976 = vcmask 982016
        %v5978 = vsel %vm5976, %v5959, 0
        %5980 = vmatpush.msra.mxu0 0.0
        %5981 = vmatpush.msra.mxu0 %v5974
        %5982 = vmatpush.msra.mxu0 %v5973
        %5983 = vmatpush.msra.mxu0 %v5972
        %5984 = vmatpush.msra.mxu0 %v5971
        %5985 = vmatpush.msra.mxu0 %v5970
        %5986 = vmatpush.msra.mxu0 %v5969
        %5987 = vmatpush.msra.mxu0 %v5968
        %5988 = vmatpush.msra.mxu0 %v5967
        %5989 = vmatpush.msra.mxu0 %v5966
        %5990 = vmatpush.msra.mxu0 %v5965
        %5991 = vmatpush.msra.mxu0 %v5964
        %5992 = vmatpush.msra.mxu0 %v5963
        %5993 = vmatpush.msra.mxu0 %v5962
        %5994 = vmatpush.msra.mxu0 %v5961
        %5995 = vmatpush.msra.mxu0 %v5960
        %5996 = vmatmul.f32.gmra.mxu0 %v5978
        %v5997 = vpop.f32.mrf.mxu0
        %v5998 = vadd.f32 %v5975, %v5997
        %5999 = vdwg.mxu0
        %v6000 = vxor.u32 %v5998, 2147483648
        %v6001 = vmul.f32 %v6000, 1.442695
        %v6002 = vpow.pop %v6001
        %v6003 = vadd.f32 %v6002, 1.0
        %v6004 = vrcp.pop %v6003
        %v6005 = vmul.f32 %v6003, %v6004
        %v6006 = vsub.f32 1.0, %v6005
        %v6007 = vmul.f32 %v6004, %v6006
        %v6008 = vadd.f32 %v6004, %v6007
        %vm6009 = vweird.f32 %v6003
        %vm6010 = vweird.f32 %v6004
        %vm6011 = vmor %vm6009, %vm6010
        %v6012 = vsel %vm6011, %v6004, %v6008
        %v6013 = vand.u32 2147483647, %v6003
        %vm6014 = vcmp.eq.f32.partialorder %v6013, 8.507059e+37
        %v6015 = vand.u32 %v6003, 2147483648
        %v6016 = vor.u32 1.1754944e-38, %v6015
        %v6017 = vsel %vm6014, %v6016, %v6012
        %v6018 = vmul.f32 1.0, %v6017
        %v6019 = vld [vmem:[%s12] sm:$0xff]
        %v6020 = vld [vmem:[%s12 + $0x8] sm:$0xff]
        %v6021 = vld [vmem:[%s12 + $0x10] sm:$0xff]
        %v6022 = vld [vmem:[%s12 + $0x18] sm:$0xff]
        %v6023 = vld [vmem:[%s12 + $0x20] sm:$0xff]
        %v6024 = vld [vmem:[%s12 + $0x28] sm:$0xff]
        %v6025 = vld [vmem:[%s12 + $0x30] sm:$0xff]
        %v6026 = vld [vmem:[%s12 + $0x38] sm:$0xff]
        %v6027 = vld [vmem:[%s12 + $0x40] sm:$0xff]
        %v6028 = vld [vmem:[%s12 + $0x48] sm:$0xff]
        %v6029 = vld [vmem:[%s12 + $0x50] sm:$0xf]
        %v6030 = vld [vmem:[%s13] sm:$0x1]
        %vm6031 = vcmask 687104
        %v6033 = vsel %vm6031, %v6018, 0
        %v6036 = vsel %vm831, %v6029, 0
        %6038 = vmatpush.msra.mxu0 0.0
        %6039 = vmatpush.msra.mxu0 0.0
        %6040 = vmatpush.msra.mxu0 0.0
        %6041 = vmatpush.msra.mxu0 0.0
        %6042 = vmatpush.msra.mxu0 0.0
        %6043 = vmatpush.msra.mxu0 %v6036
        %6044 = vmatpush.msra.mxu0 %v6028
        %6045 = vmatpush.msra.mxu0 %v6027
        %6046 = vmatpush.msra.mxu0 %v6026
        %6047 = vmatpush.msra.mxu0 %v6025
        %6048 = vmatpush.msra.mxu0 %v6024
        %6049 = vmatpush.msra.mxu0 %v6023
        %6050 = vmatpush.msra.mxu0 %v6022
        %6051 = vmatpush.msra.mxu0 %v6021
        %6052 = vmatpush.msra.mxu0 %v6020
        %6053 = vmatpush.msra.mxu0 %v6019
        %6054 = vmatmul.f32.gmra.mxu0 %v6033
        %v6055 = vpop.f32.mrf.mxu0
        %v6056 = vadd.f32 %v6030, %v6055
        %6057 = vdwg.mxu0
        %vm6058 = vcmask 73728
        %6059 = vst.msk [vmem:[%s459] sm:$0x1] %vm6058, %v6056
        %s6060 = sand.u32 %s335, 1
        %s6061 = scalar_lea.sflag [#allocation5], %s6060
        %s6062 = sand.u32 %s335, 1
        %s6063 = scalar_lea.vmem [#allocation4], %s6062
        // Predicated region
        $region77: #{lenet_forward.1} parent=75 // pred_check
          %p6064 = pneg %p345
        $region78: #{lenet_forward.1} parent=75 // pred_check_branch
          %6066 = sbr.rel (%p6064) target = $region80
        $region79: #{lenet_forward.1} parent=75 // pred_region
          %6068 = vsyncadd %s6061, 0
          %s6069 = scalar_lea.hbm %s14, %s28
          %s6071 = sshll.u32 %s6063, 4
          %s6072 = int_to_ptr.vmem [resolvable:$true] %s6071
          %s6073 = sshll.u32 %s6069, 4
          %s6074 = int_to_ptr.hbm [resolvable:$true] %s6073
          %6076 = dma.vmem_to_hbm [thread:$0]  %s6072, 16, %s6074, %s6061
        $region80: #{lenet_forward.1} parent=75 // pred_fallthru
          _
      $region76: #{lenet_forward.1} parent=5 // pred_fallthru
        _
      %p6077 = scmp.le.s32.totalorder 2, %s23
      // Predicated region
      $region81: #{lenet_forward.1} parent=5 // pred_check
        %p6078 = pneg %p6077
      $region82: #{lenet_forward.1} parent=5 // pred_check_branch
        %6080 = sbr.rel (%p6078) target = $region84
      $region83: #{lenet_forward.1} parent=5 // pred_region
        %s6081 = ssub.s32 %s23, 2
        // Predicated region
        $region85: #{lenet_forward.1} parent=83 // pred_check
          %p6082 = pneg %p351
        $region86: #{lenet_forward.1} parent=83 // pred_check_branch
          %6084 = sbr.rel (%p6082) target = $region88
        $region87: #{lenet_forward.1} parent=83 // pred_region
          %s6085 = sand.u32 %s336, 1
          %s6086 = scalar_lea.sflag [#allocation5], %s6085
          %s6087 = sand.u32 %s336, 1
          %s6088 = scalar_lea.vmem [#allocation4], %s6087
          %6090 = dma.done %s6086, 16
        $region88: #{lenet_forward.1} parent=83 // pred_fallthru
          _
      $region84: #{lenet_forward.1} parent=5 // pred_fallthru
        _
    $region6: #{lenet_forward.1} parent=1 // loop_footer
      %s27 = sadd.s32 1, %s23
    $region7: #{lenet_forward.1} parent=1 // loop_footer_branch
      %22 = sbr.rel target = $region3
    $region8: #{lenet_forward.1} parent=1 // loop_exit
      _
    %6091 = vsyncpa [#allocation5], 1
    %s6092 = scalar_lea.sflag [#allocation5], 1
    %6093 = vsyncpa %s6092, 1

</llo_original>
